<compile_context>
chip_gen: v7x
topology: tpu7x:2x2x1
jax: 0.10.0
libtpu: 0.0.40
codegen_flags: <defaults>
</compile_context>

<pallas_src>
import numpy as np
import jax
import jax.numpy as jnp
from jax.experimental import pallas as pl
from jax.experimental.pallas import tpu as pltpu

C_FMAP = 512                  # encoder output channels (fixed by Pretrain.__init__)
N_CLS = 1000                  # head output channels
N_PAD = 1024                  # 1000 padded up to a multiple of 128 lanes
N_SLOTS = 14                  # number of gathered (head, position) slots
HEAD_KS = (1, 2, 3)           # kernel sizes of head0 / head1 / head2
K_SIZES = tuple(C_FMAP * ks * ks for ks in HEAD_KS)   # (512, 2048, 4608)
K_OFFS = (0, K_SIZES[0], K_SIZES[0] + K_SIZES[1])     # (0, 512, 2560)
K_TOT = sum(K_SIZES)                                  # 7168
K_TILE = 3584                 # 7168 / 2, multiple of 128
N_TILE = 512                  # 1024 / 2  (2-way parallel -> megacore on v7x)

# (head, row, col) for each of the 14 stacked outputs, in torch.stack order.
_SLOT_LAYOUT = (
    [(2, 0, 0)]
    + [(1, i, j) for i in range(2) for j in range(2)]
    + [(0, i, j) for i in range(3) for j in range(3)]
)


def _round_up(x, m):
    return ((x + m - 1) // m) * m


def _head_matmul_kernel(a_ref, w_ref, b_ref, o_ref, acc_ref):
    """bf16 x bf16 matmul with f32 accumulator; bias folded into k==0 init."""
    k = pl.program_id(1)

    @pl.when(k == 0)
    def _():
        acc_ref[...] = b_ref[...]          # accumulator starts at the bias

    acc_ref[...] += jnp.dot(a_ref[...], w_ref[...],
                            preferred_element_type=jnp.float32)

    @pl.when(k == pl.num_programs(1) - 1)
    def _():
        o_ref[...] = acc_ref[...].astype(o_ref.dtype)


def _pallas_heads(a, w, bias, m_pad):
    """a: (m_pad, K_TOT) bf16, w: (K_TOT, N_PAD) bf16, bias: (m_pad, N_PAD) f32."""
    return pl.pallas_call(
        _head_matmul_kernel,
        out_shape=jax.ShapeDtypeStruct((m_pad, N_PAD), jnp.float32),
        grid=(N_PAD // N_TILE, K_TOT // K_TILE),      # (2, 2)
        in_specs=[
            pl.BlockSpec((m_pad, K_TILE), lambda n, k: (0, k)),
            pl.BlockSpec((K_TILE, N_TILE), lambda n, k: (k, n)),
            pl.BlockSpec((m_pad, N_TILE), lambda n, k: (0, n)),
        ],
        out_specs=pl.BlockSpec((m_pad, N_TILE), lambda n, k: (0, n)),
        scratch_shapes=[pltpu.VMEM((m_pad, N_TILE), jnp.float32)],
        compiler_params=pltpu.CompilerParams(
            dimension_semantics=("parallel", "arbitrary")),
    )(a, w, bias)


def pack_head_params(head_ws, head_bs, batch):
    """Pack the UNIQUE head weights along K (no per-position duplication) in
    bf16, plus a per-(slot, batch)-row bias matrix in f32.

    head_ws[h]: (1000, 512, ks, ks) PyTorch OIHW; head_bs[h]: (1000,).
    K-row index inside head h's segment = c*ks*ks + r*ks + col.
    """
    w = np.zeros((K_TOT, N_PAD), np.float32)
    for h, hw in enumerate(head_ws):
        hw = np.asarray(hw)                               # (1000, 512, ks, ks)
        k_size = K_SIZES[h]
        w[K_OFFS[h]:K_OFFS[h] + k_size, :N_CLS] = hw.reshape(N_CLS, k_size).T

    m_tot = N_SLOTS * batch
    m_pad = _round_up(max(m_tot, 16), 16)
    b_mat = np.zeros((m_pad, N_PAD), np.float32)
    for s, (h, _, _) in enumerate(_SLOT_LAYOUT):
        b_mat[s * batch:(s + 1) * batch, :N_CLS] = np.asarray(head_bs[h])[None, :]
    return jnp.asarray(w, jnp.bfloat16), jnp.asarray(b_mat)


def _build_activation(patch):
    """patch: (B, 512, 3, 3).  Returns (14*B, K_TOT): row (slot*B + b) holds the
    flattened conv window for that slot, placed in its head's K segment."""
    b = patch.shape[0]
    rows = []
    for (h, i, j) in _SLOT_LAYOUT:
        ks = HEAD_KS[h]
        win = patch[:, :, i:i + ks, j:j + ks].reshape(b, K_SIZES[h])
        row = jnp.zeros((b, K_TOT), patch.dtype)
        rows.append(row.at[:, K_OFFS[h]:K_OFFS[h] + K_SIZES[h]].set(win))
    return jnp.concatenate(rows, axis=0)                  # slot-major (14*B, K_TOT)


def pretrain_forward(x, enc_w, enc_b, w_packed, bias_mat):
    """x: (B, C_in, H, W) NCHW.  Returns (B, 1000, 14), matching the PyTorch module."""
    batch = x.shape[0]
    m_pad = bias_mat.shape[0]

    # ---- encoder stand-in (glue; IE120L unavailable): 1x1 conv + ReLU ----
    # Only the top-left 3x3 window of the feature map feeds the 14 outputs, and
    # the stand-in is pointwise, so only x[:, :, :3, :3] needs encoding.
    x_win = x[:, :, :3, :3]
    patch = jnp.einsum('bchw,oc->bohw', x_win, enc_w) + enc_b[None, :, None, None]
    patch = jnp.maximum(patch, 0.0)                                   # (B, 512, 3, 3)

    a = _build_activation(patch)                                      # (14*B, 7168)
    a = jnp.pad(a, ((0, m_pad - a.shape[0]), (0, 0))).astype(jnp.bfloat16)

    out = _pallas_heads(a, w_packed, bias_mat, m_pad)                 # (m_pad, 1024)
    out = out[:N_SLOTS * batch, :N_CLS].reshape(N_SLOTS, batch, N_CLS)
    return jnp.transpose(out, (1, 2, 0))                              # (B, 1000, 14)


def _reference_forward(x, enc_w, enc_b, head_ws, head_bs):
    """Pure-JAX (f32) reference replicating Pretrain.forward slot-by-slot."""
    fmap = jnp.einsum('bchw,oc->bohw', x, enc_w) + enc_b[None, :, None, None]
    fmap = jnp.maximum(fmap, 0.0)
    ys = []
    for (h, i, j) in _SLOT_LAYOUT:
        w = head_ws[h]
        ks = w.shape[2]
        p = fmap[:, :, i:i + ks, j:j + ks]
        ys.append(jnp.einsum('bcij,ocij->bo', p, w,
                             precision=jax.lax.Precision.HIGHEST) + head_bs[h])
    return jnp.stack(ys, axis=-1)


if __name__ == "__main__":
    key = jax.random.PRNGKey(0)
    k_x, k_ew, k_eb, k0, k1, k2, kb0, kb1, kb2 = jax.random.split(key, 9)

    B, C_IN, H, W = 2, 3, 8, 8
    x = jax.random.normal(k_x, (B, C_IN, H, W), jnp.float32)

    # encoder stand-in params
    enc_w = jax.random.normal(k_ew, (C_FMAP, C_IN), jnp.float32) / np.sqrt(C_IN)
    enc_b = jax.random.normal(k_eb, (C_FMAP,), jnp.float32) * 0.1

    # head params (PyTorch OIHW), deterministic
    head_ws = [
        jax.random.normal(k0, (N_CLS, C_FMAP, 1, 1), jnp.float32) / np.sqrt(C_FMAP * 1),
        jax.random.normal(k1, (N_CLS, C_FMAP, 2, 2), jnp.float32) / np.sqrt(C_FMAP * 4),
        jax.random.normal(k2, (N_CLS, C_FMAP, 3, 3), jnp.float32) / np.sqrt(C_FMAP * 9),
    ]
    head_bs = [
        jax.random.normal(kb0, (N_CLS,), jnp.float32) * 0.1,
        jax.random.normal(kb1, (N_CLS,), jnp.float32) * 0.1,
        jax.random.normal(kb2, (N_CLS,), jnp.float32) * 0.1,
    ]

    w_packed, bias_mat = pack_head_params(head_ws, head_bs, B)

    fwd = jax.jit(pretrain_forward)
    y = jax.block_until_ready(fwd(x, enc_w, enc_b, w_packed, bias_mat))
    assert y.shape == (B, N_CLS, N_SLOTS), y.shape

    y_ref = jax.block_until_ready(_reference_forward(x, enc_w, enc_b, head_ws, head_bs))
    # bf16 weight/activation stream with f32 accumulation -> bf16-level tolerance.
    np.testing.assert_allclose(np.asarray(y), np.asarray(y_ref), rtol=2e-2, atol=2e-2)

    print("KERNEL_OK")
</pallas_src>

<mosaic_0001>
module attributes {stable_mosaic.version = 11 : i64} {
  func.func @_head_matmul_kernel(%arg0: i32, %arg1: i32, %arg2: memref<32x3584xbf16, #tpu.memory_space<vmem>>, %arg3: memref<3584x512xbf16, #tpu.memory_space<vmem>>, %arg4: memref<32x512xf32, #tpu.memory_space<vmem>>, %arg5: memref<32x512xf32, #tpu.memory_space<vmem>>, %arg6: memref<32x512xf32, #tpu.memory_space<vmem>>) attributes {dimension_semantics = [#tpu.dimension_semantics<parallel>, #tpu.dimension_semantics<arbitrary>], iteration_bounds = array<i64: 2, 2>, scalar_prefetch = 0 : i64, scratch_operands = 1 : i64, tpu.core_type = #tpu.core_type<tc>, window_params = [{transform_indices = @transform_0, window_bounds = array<i64: 32, 3584>}, {transform_indices = @transform_1, window_bounds = array<i64: 3584, 512>}, {transform_indices = @transform_2, window_bounds = array<i64: 32, 512>}, {transform_indices = @transform_3, window_bounds = array<i64: 32, 512>}]} {
    %c0_i32 = arith.constant 0 : i32
    %0 = arith.cmpi eq, %arg1, %c0_i32 : i32
    %1 = arith.extui %0 : i1 to i32
    %c0_i32_0 = arith.constant 0 : i32
    %2 = arith.cmpi ne, %1, %c0_i32_0 : i32
    scf.if %2 {
      %c0_9 = arith.constant 0 : index
      %c0_10 = arith.constant 0 : index
      %12 = vector.load %arg4[%c0_9, %c0_10] : memref<32x512xf32, #tpu.memory_space<vmem>>, vector<32x512xf32>
      %c0_11 = arith.constant 0 : index
      %c0_12 = arith.constant 0 : index
      %13 = vector.load %arg6[%c0_11, %c0_12] : memref<32x512xf32, #tpu.memory_space<vmem>>, vector<32x512xf32>
      tpu.vector_store %arg6[%c0_11, %c0_12], %12 {strides = array<i32>} : memref<32x512xf32, #tpu.memory_space<vmem>>, vector<32x512xf32>,
    } else {
    }
    %c0 = arith.constant 0 : index
    %c0_1 = arith.constant 0 : index
    %3 = vector.load %arg6[%c0, %c0_1] : memref<32x512xf32, #tpu.memory_space<vmem>>, vector<32x512xf32>
    %c0_2 = arith.constant 0 : index
    %c0_3 = arith.constant 0 : index
    %4 = vector.load %arg2[%c0_2, %c0_3] : memref<32x3584xbf16, #tpu.memory_space<vmem>>, vector<32x3584xbf16>
    %c0_4 = arith.constant 0 : index
    %c0_5 = arith.constant 0 : index
    %5 = vector.load %arg3[%c0_4, %c0_5] : memref<3584x512xbf16, #tpu.memory_space<vmem>>, vector<3584x512xbf16>
    %cst = arith.constant dense<0.000000e+00> : vector<32x512xf32>
    %6 = tpu.matmul %4, %5, %cst {dimension_numbers = #tpu.dot_dimension_numbers<[1], [0], [0], [1], [0, 0, 1, 1], [], []>} : vector<32x3584xbf16>, vector<3584x512xbf16>, vector<32x512xf32> -> vector<32x512xf32>
    %7 = arith.addf %3, %6 : vector<32x512xf32>
    %c0_6 = arith.constant 0 : index
    %c0_7 = arith.constant 0 : index
    %8 = vector.load %arg6[%c0_6, %c0_7] : memref<32x512xf32, #tpu.memory_space<vmem>>, vector<32x512xf32>
    tpu.vector_store %arg6[%c0_6, %c0_7], %7 {strides = array<i32>} : memref<32x512xf32, #tpu.memory_space<vmem>>, vector<32x512xf32>,
    %c1_i32 = arith.constant 1 : i32
    %9 = arith.cmpi eq, %arg1, %c1_i32 : i32
    %10 = arith.extui %9 : i1 to i32
    %c0_i32_8 = arith.constant 0 : i32
    %11 = arith.cmpi ne, %10, %c0_i32_8 : i32
    scf.if %11 {
      %c0_9 = arith.constant 0 : index
      %c0_10 = arith.constant 0 : index
      %12 = vector.load %arg6[%c0_9, %c0_10] : memref<32x512xf32, #tpu.memory_space<vmem>>, vector<32x512xf32>
      %c0_11 = arith.constant 0 : index
      %c0_12 = arith.constant 0 : index
      %13 = vector.load %arg5[%c0_11, %c0_12] : memref<32x512xf32, #tpu.memory_space<vmem>>, vector<32x512xf32>
      tpu.vector_store %arg5[%c0_11, %c0_12], %12 {strides = array<i32>} : memref<32x512xf32, #tpu.memory_space<vmem>>, vector<32x512xf32>,
    } else {
    }
    return
  }
  func.func @transform_0(%arg0: i32, %arg1: i32) -> (i32, i32) {
    %c0_i32 = arith.constant 0 : i32
    %c0_i32_0 = arith.constant 0 : i32
    return %c0_i32, %arg1 : i32, i32
  }
  func.func @transform_1(%arg0: i32, %arg1: i32) -> (i32, i32) {
    %c0_i32 = arith.constant 0 : i32
    return %arg1, %arg0 : i32, i32
  }
  func.func @transform_2(%arg0: i32, %arg1: i32) -> (i32, i32) {
    %c0_i32 = arith.constant 0 : i32
    %c0_i32_0 = arith.constant 0 : i32
    return %c0_i32, %arg0 : i32, i32
  }
  func.func @transform_3(%arg0: i32, %arg1: i32) -> (i32, i32) {
    %c0_i32 = arith.constant 0 : i32
    %c0_i32_0 = arith.constant 0 : i32
    return %c0_i32, %arg0 : i32, i32
  }
}

</mosaic_0001>

<llo_original>
// kernel: pretrain_forward.1
$region0: #{pretrain_forward.1}
  #allocation0 [shape = 'u32[]', space=smem, size = 0x4, offset = 0x4, fixed_abs, tag = 'smem constant byte address 0x4 - core index']
  #allocation1 [shape = 'u32[144,128]{1,0:T(1,128)}', space=vmem, size = 0x12000, scoped, tag = 'internal scratch']
  #allocation2 [shape = 'f32[32,512]{1,0:T(8,128)}', space=vmem, size = 0x10000, scoped, tag = 'scratch operand']
  %s0 = inlined_call_operand.vmem [shape: bf16[32,7168], index: 0, kind: input, shape index: {}]
  %s1 = inlined_call_operand.hbm [shape: bf16[7168,1024], index: 1, kind: input, shape index: {}]
  %s2 = inlined_call_operand.hbm [shape: f32[32,1024], index: 2, kind: input, shape index: {}]
  %s3 = inlined_call_operand.vmem [shape: f32[32,1024], index: 3, kind: output, shape index: {}]
  %s4 = sld [smem:[#allocation0]]
  $region103: #{pretrain_forward.1} parent=0
    _
  %s6 = ssub.s32 1, %s4
  %s7 = scalar_select 0, %s6, %s4
  $region1: #{pretrain_forward.1} parent=0
    #allocation3 [shape = 'u8[458752]{0}', space=vmem, size = 0x70000, scoped, tag = 'input window, operand 0']
    #allocation4 [shape = 'u8[7340032]{0}', space=vmem, size = 0x700000, scoped, tag = 'input window, operand 1']
    #allocation5 [shape = 's32[2]{0}', space=sflag, size = 0x8, scoped, tag = 'scoped memory for pretrain_forward.1']
    #allocation6 [shape = 'u8[131072]{0}', space=vmem, size = 0x20000, scoped, tag = 'input window, operand 2']
    #allocation7 [shape = 's32[2]{0}', space=sflag, size = 0x8, scoped, tag = 'scoped memory for pretrain_forward.1']
    #allocation8 [shape = 'u8[131072]{0}', space=vmem, size = 0x20000, scoped, tag = 'output window, operand 0']
    %8 = vsyncpa [#allocation5], 0
    %s9 = scalar_lea.sflag [#allocation5], 1
    %10 = vsyncpa %s9, 0
    %11 = vsyncpa [#allocation7], 0
    %s12 = scalar_lea.sflag [#allocation7], 1
    %13 = vsyncpa %s12, 0
    loop: start=0, step=1, limit=6
    $region2: #{pretrain_forward.1} parent=1 // loop_pre_header
      _
    $region3: #{pretrain_forward.1} parent=1 // loop_header
      %s15 = sphi 0, %s19
      %p16 = scmp.ge.s32.totalorder %s15, 6
      %s22 = sphi 0, %s34
      %s23 = sphi 0, %s30
      %s24 = sphi 0, %s22
      %s25 = sphi 0, %s23
      %s26 = sphi 0, %s24
      %s27 = sphi 0, %s25
      %s37 = sphi 0, %s39
      %s40 = sphi 0, %s37
      %s41 = sphi 0, %s40
      %s57 = sphi 0, %s41
      %s65 = sphi 0, %s67
      %s68 = sphi 0, %s65
      %s69 = sphi 0, %s68
      %s85 = sphi 0, %s69
      %s91 = sphi 0, %s93
      %s94 = sphi 0, %s91
      %s95 = sphi 0, %s94
      %s111 = sphi 0, %s95
      %s117 = sphi 0, %s119
      %s120 = sphi 0, %s117
      %s121 = sphi 0, %s120
      %s137 = sphi 0, %s121
    $region4: #{pretrain_forward.1} parent=1 // loop_header_branch
      %18 = sbr.rel (%p16) target = $region8
    $region5: #{pretrain_forward.1} parent=1 // loop_body
      %s20 = ssub.s32 %s15, 1
      %s21 = ssub.s32 %s15, 2
      %s28 = sadd.s32 1, %s23
      %p29 = scmp.ge.s32.totalorder %s28, 2
      %s30 = scalar_select %p29, 0, %s28
      %s31 = sadd.s32 1, %s22
      %s32 = scalar_select %p29, %s31, %s22
      %p33 = scmp.ge.s32.totalorder %s32, 2
      %s34 = scalar_select %p33, 0, %s32
      %s35 = ssub.s32 %s23, %s30
      %p36 = scmp.eq.s32.totalorder %s35, 0
      %s38 = sadd.s32 %s37, 1
      %s39 = scalar_select %p36, %s37, %s38
      %p42 = pneg %p36
      %p43 = scmp.eq.s32.totalorder %s15, 3
      %p44 = por %p42, %p43
      %p45 = scmp.ne.s32.totalorder %s37, %s40
      %p46 = scmp.eq.s32.totalorder %s15, 0
      %p47 = por %p45, %p46
      %p48 = scmp.ne.s32.totalorder %s37, %s40
      %p49 = scmp.eq.s32.totalorder %s20, 3
      %p50 = por %p48, %p49
      %p51 = scmp.ne.s32.totalorder %s40, %s41
      %p52 = scmp.eq.s32.totalorder %s20, 0
      %p53 = por %p51, %p52
      %p54 = scmp.ne.s32.totalorder %s40, %s41
      %p55 = scmp.eq.s32.totalorder %s21, 3
      %p56 = por %p54, %p55
      %p58 = scmp.ne.s32.totalorder %s41, %s57
      %p59 = scmp.eq.s32.totalorder %s21, 0
      %p60 = por %p58, %p59
      %s61 = ssub.s32 %s23, %s30
      %s62 = ssub.s32 %s22, %s34
      %s63 = sor.u32 %s61, %s62
      %p64 = scmp.eq.s32.totalorder %s63, 0
      %s66 = sadd.s32 %s65, 1
      %s67 = scalar_select %p64, %s65, %s66
      %p70 = pneg %p64
      %p71 = scmp.eq.s32.totalorder %s15, 3
      %p72 = por %p70, %p71
      %p73 = scmp.ne.s32.totalorder %s65, %s68
      %p74 = scmp.eq.s32.totalorder %s15, 0
      %p75 = por %p73, %p74
      %p76 = scmp.ne.s32.totalorder %s65, %s68
      %p77 = scmp.eq.s32.totalorder %s20, 3
      %p78 = por %p76, %p77
      %p79 = scmp.ne.s32.totalorder %s68, %s69
      %p80 = scmp.eq.s32.totalorder %s20, 0
      %p81 = por %p79, %p80
      %p82 = scmp.ne.s32.totalorder %s68, %s69
      %p83 = scmp.eq.s32.totalorder %s21, 3
      %p84 = por %p82, %p83
      %p86 = scmp.ne.s32.totalorder %s69, %s85
      %p87 = scmp.eq.s32.totalorder %s21, 0
      %p88 = por %p86, %p87
      %s89 = ssub.s32 %s22, %s34
      %p90 = scmp.eq.s32.totalorder %s89, 0
      %s92 = sadd.s32 %s91, 1
      %s93 = scalar_select %p90, %s91, %s92
      %p96 = pneg %p90
      %p97 = scmp.eq.s32.totalorder %s15, 3
      %p98 = por %p96, %p97
      %p99 = scmp.ne.s32.totalorder %s91, %s94
      %p100 = scmp.eq.s32.totalorder %s15, 0
      %p101 = por %p99, %p100
      %p102 = scmp.ne.s32.totalorder %s91, %s94
      %p103 = scmp.eq.s32.totalorder %s20, 3
      %p104 = por %p102, %p103
      %p105 = scmp.ne.s32.totalorder %s94, %s95
      %p106 = scmp.eq.s32.totalorder %s20, 0
      %p107 = por %p105, %p106
      %p108 = scmp.ne.s32.totalorder %s94, %s95
      %p109 = scmp.eq.s32.totalorder %s21, 3
      %p110 = por %p108, %p109
      %p112 = scmp.ne.s32.totalorder %s95, %s111
      %p113 = scmp.eq.s32.totalorder %s21, 0
      %p114 = por %p112, %p113
      %s115 = ssub.s32 %s22, %s34
      %p116 = scmp.eq.s32.totalorder %s115, 0
      %s118 = sadd.s32 %s117, 1
      %s119 = scalar_select %p116, %s117, %s118
      %p122 = pneg %p116
      %p123 = scmp.eq.s32.totalorder %s15, 3
      %p124 = por %p122, %p123
      %p125 = scmp.ne.s32.totalorder %s117, %s120
      %p126 = scmp.eq.s32.totalorder %s15, 0
      %p127 = por %p125, %p126
      %p128 = scmp.ne.s32.totalorder %s117, %s120
      %p129 = scmp.eq.s32.totalorder %s20, 3
      %p130 = por %p128, %p129
      %p131 = scmp.ne.s32.totalorder %s120, %s121
      %p132 = scmp.eq.s32.totalorder %s20, 0
      %p133 = por %p131, %p132
      %p134 = scmp.ne.s32.totalorder %s120, %s121
      %p135 = scmp.eq.s32.totalorder %s21, 3
      %p136 = por %p134, %p135
      %p138 = scmp.ne.s32.totalorder %s121, %s137
      %p139 = scmp.eq.s32.totalorder %s21, 0
      %p140 = por %p138, %p139
      %p141 = scmp.le.s32.totalorder 1, %s15
      %p142 = scmp.lt.s32.totalorder %s15, 5
      %p143 = pnand %p141, %p142
      %p144 = pneg %p143
      // Predicated region
      $region9: #{pretrain_forward.1} parent=5 // pred_check
        _
      $region10: #{pretrain_forward.1} parent=5 // pred_check_branch
        %146 = sbr.rel (%p143) target = $region12
      $region11: #{pretrain_forward.1} parent=5 // pred_region
        %s147 = ssub.s32 %s15, 1
      $region12: #{pretrain_forward.1} parent=5 // pred_fallthru
        _
      %p148 = scmp.lt.s32.totalorder %s15, 4
      // Predicated region
      $region13: #{pretrain_forward.1} parent=5 // pred_check
        %p149 = pneg %p148
      $region14: #{pretrain_forward.1} parent=5 // pred_check_branch
        %151 = sbr.rel (%p149) target = $region16
      $region15: #{pretrain_forward.1} parent=5 // pred_region
        // Predicated region
        $region17: #{pretrain_forward.1} parent=15 // pred_check
          %p152 = pneg %p47
        $region18: #{pretrain_forward.1} parent=15 // pred_check_branch
          %154 = sbr.rel (%p152) target = $region20
        $region19: #{pretrain_forward.1} parent=15 // pred_region
          %s155 = sand.u32 %s37, 1
          %s156 = sand.u32 %s37, 1
          %s157 = smul.addr %s156, 448
          %s158 = scalar_lea.vmem [#allocation3], %s157
          %s159 = smul.u32 28, %s23
          %s160 = smul.addr %s159, 4
          %s161 = scalar_lea.vmem %s0, %s160
          // Predicated region
          $region21: #{pretrain_forward.1} parent=19 // pred_check
            _
          $region22: #{pretrain_forward.1} parent=19 // pred_check_branch
            %163 = sbr.rel (0) target = $region24
          $region23: #{pretrain_forward.1} parent=19 // pred_region
            // Predicated region
            $region25: #{pretrain_forward.1} parent=23 // pred_check
              _
            $region26: #{pretrain_forward.1} parent=23 // pred_check_branch
              %165 = sbr.rel (0) target = $region28
            $region27: #{pretrain_forward.1} parent=23 // pred_region
              loop: start=0, step=1, limit=1
              $region29: #{pretrain_forward.1} parent=27 // loop_pre_header
                _
              $region30: #{pretrain_forward.1} parent=27 // loop_header
                %s167 = sphi 0, %s171
                %p168 = scmp.ge.s32.totalorder %s167, 1
                %s172 = sphi %s161, %s161
                %s173 = sphi %s158, %s158
              $region31: #{pretrain_forward.1} parent=27 // loop_header_branch
                %170 = sbr.rel (%p168) target = $region35
              $region32: #{pretrain_forward.1} parent=27 // loop_body
                %v174 = vld [vmem:[%s172] sm:$0xff]
                %175 = vst [vmem:[%s173] sm:$0xff] %v174
                %v176 = vld [vmem:[%s172 + $0x8] sm:$0xff]
                %177 = vst [vmem:[%s173 + $0x8] sm:$0xff] %v176
                %v178 = vld [vmem:[%s172 + $0x10] sm:$0xff]
                %179 = vst [vmem:[%s173 + $0x10] sm:$0xff] %v178
                %v180 = vld [vmem:[%s172 + $0x18] sm:$0xff]
                %181 = vst [vmem:[%s173 + $0x18] sm:$0xff] %v180
                %v182 = vld [vmem:[%s172 + $0x20] sm:$0xff]
                %183 = vst [vmem:[%s173 + $0x20] sm:$0xff] %v182
                %v184 = vld [vmem:[%s172 + $0x28] sm:$0xff]
                %185 = vst [vmem:[%s173 + $0x28] sm:$0xff] %v184
                %v186 = vld [vmem:[%s172 + $0x30] sm:$0xff]
                %187 = vst [vmem:[%s173 + $0x30] sm:$0xff] %v186
                %v188 = vld [vmem:[%s172 + $0x38] sm:$0xff]
                %189 = vst [vmem:[%s173 + $0x38] sm:$0xff] %v188
                %v190 = vld [vmem:[%s172 + $0x40] sm:$0xff]
                %191 = vst [vmem:[%s173 + $0x40] sm:$0xff] %v190
                %v192 = vld [vmem:[%s172 + $0x48] sm:$0xff]
                %193 = vst [vmem:[%s173 + $0x48] sm:$0xff] %v192
                %v194 = vld [vmem:[%s172 + $0x50] sm:$0xff]
                %195 = vst [vmem:[%s173 + $0x50] sm:$0xff] %v194
                %v196 = vld [vmem:[%s172 + $0x58] sm:$0xff]
                %197 = vst [vmem:[%s173 + $0x58] sm:$0xff] %v196
                %v198 = vld [vmem:[%s172 + $0x60] sm:$0xff]
                %199 = vst [vmem:[%s173 + $0x60] sm:$0xff] %v198
                %v200 = vld [vmem:[%s172 + $0x68] sm:$0xff]
                %201 = vst [vmem:[%s173 + $0x68] sm:$0xff] %v200
                %v202 = vld [vmem:[%s172 + $0xe0] sm:$0xff]
                %203 = vst [vmem:[%s173 + $0x70] sm:$0xff] %v202
                %v204 = vld [vmem:[%s172 + $0xe8] sm:$0xff]
                %205 = vst [vmem:[%s173 + $0x78] sm:$0xff] %v204
                %v206 = vld [vmem:[%s172 + $0xf0] sm:$0xff]
                %207 = vst [vmem:[%s173 + $0x80] sm:$0xff] %v206
                %v208 = vld [vmem:[%s172 + $0xf8] sm:$0xff]
                %209 = vst [vmem:[%s173 + $0x88] sm:$0xff] %v208
                %v210 = vld [vmem:[%s172 + $0x100] sm:$0xff]
                %211 = vst [vmem:[%s173 + $0x90] sm:$0xff] %v210
                %v212 = vld [vmem:[%s172 + $0x108] sm:$0xff]
                %213 = vst [vmem:[%s173 + $0x98] sm:$0xff] %v212
                %v214 = vld [vmem:[%s172 + $0x110] sm:$0xff]
                %215 = vst [vmem:[%s173 + $0xa0] sm:$0xff] %v214
                %v216 = vld [vmem:[%s172 + $0x118] sm:$0xff]
                %217 = vst [vmem:[%s173 + $0xa8] sm:$0xff] %v216
                %v218 = vld [vmem:[%s172 + $0x120] sm:$0xff]
                %219 = vst [vmem:[%s173 + $0xb0] sm:$0xff] %v218
                %v220 = vld [vmem:[%s172 + $0x128] sm:$0xff]
                %221 = vst [vmem:[%s173 + $0xb8] sm:$0xff] %v220
                %v222 = vld [vmem:[%s172 + $0x130] sm:$0xff]
                %223 = vst [vmem:[%s173 + $0xc0] sm:$0xff] %v222
                %v224 = vld [vmem:[%s172 + $0x138] sm:$0xff]
                %225 = vst [vmem:[%s173 + $0xc8] sm:$0xff] %v224
                %v226 = vld [vmem:[%s172 + $0x140] sm:$0xff]
                %227 = vst [vmem:[%s173 + $0xd0] sm:$0xff] %v226
                %v228 = vld [vmem:[%s172 + $0x148] sm:$0xff]
                %229 = vst [vmem:[%s173 + $0xd8] sm:$0xff] %v228
                %v230 = vld [vmem:[%s172 + $0x1c0] sm:$0xff]
                %231 = vst [vmem:[%s173 + $0xe0] sm:$0xff] %v230
                %v232 = vld [vmem:[%s172 + $0x1c8] sm:$0xff]
                %233 = vst [vmem:[%s173 + $0xe8] sm:$0xff] %v232
                %v234 = vld [vmem:[%s172 + $0x1d0] sm:$0xff]
                %235 = vst [vmem:[%s173 + $0xf0] sm:$0xff] %v234
                %v236 = vld [vmem:[%s172 + $0x1d8] sm:$0xff]
                %237 = vst [vmem:[%s173 + $0xf8] sm:$0xff] %v236
                %v238 = vld [vmem:[%s172 + $0x1e0] sm:$0xff]
                %239 = vst [vmem:[%s173 + $0x100] sm:$0xff] %v238
                %v240 = vld [vmem:[%s172 + $0x1e8] sm:$0xff]
                %241 = vst [vmem:[%s173 + $0x108] sm:$0xff] %v240
                %v242 = vld [vmem:[%s172 + $0x1f0] sm:$0xff]
                %243 = vst [vmem:[%s173 + $0x110] sm:$0xff] %v242
                %v244 = vld [vmem:[%s172 + $0x1f8] sm:$0xff]
                %245 = vst [vmem:[%s173 + $0x118] sm:$0xff] %v244
                %v246 = vld [vmem:[%s172 + $0x200] sm:$0xff]
                %247 = vst [vmem:[%s173 + $0x120] sm:$0xff] %v246
                %v248 = vld [vmem:[%s172 + $0x208] sm:$0xff]
                %249 = vst [vmem:[%s173 + $0x128] sm:$0xff] %v248
                %v250 = vld [vmem:[%s172 + $0x210] sm:$0xff]
                %251 = vst [vmem:[%s173 + $0x130] sm:$0xff] %v250
                %v252 = vld [vmem:[%s172 + $0x218] sm:$0xff]
                %253 = vst [vmem:[%s173 + $0x138] sm:$0xff] %v252
                %v254 = vld [vmem:[%s172 + $0x220] sm:$0xff]
                %255 = vst [vmem:[%s173 + $0x140] sm:$0xff] %v254
                %v256 = vld [vmem:[%s172 + $0x228] sm:$0xff]
                %257 = vst [vmem:[%s173 + $0x148] sm:$0xff] %v256
                %v258 = vld [vmem:[%s172 + $0x2a0] sm:$0xff]
                %259 = vst [vmem:[%s173 + $0x150] sm:$0xff] %v258
                %v260 = vld [vmem:[%s172 + $0x2a8] sm:$0xff]
                %261 = vst [vmem:[%s173 + $0x158] sm:$0xff] %v260
                %v262 = vld [vmem:[%s172 + $0x2b0] sm:$0xff]
                %263 = vst [vmem:[%s173 + $0x160] sm:$0xff] %v262
                %v264 = vld [vmem:[%s172 + $0x2b8] sm:$0xff]
                %265 = vst [vmem:[%s173 + $0x168] sm:$0xff] %v264
                %v266 = vld [vmem:[%s172 + $0x2c0] sm:$0xff]
                %267 = vst [vmem:[%s173 + $0x170] sm:$0xff] %v266
                %v268 = vld [vmem:[%s172 + $0x2c8] sm:$0xff]
                %269 = vst [vmem:[%s173 + $0x178] sm:$0xff] %v268
                %v270 = vld [vmem:[%s172 + $0x2d0] sm:$0xff]
                %271 = vst [vmem:[%s173 + $0x180] sm:$0xff] %v270
                %v272 = vld [vmem:[%s172 + $0x2d8] sm:$0xff]
                %273 = vst [vmem:[%s173 + $0x188] sm:$0xff] %v272
                %v274 = vld [vmem:[%s172 + $0x2e0] sm:$0xff]
                %275 = vst [vmem:[%s173 + $0x190] sm:$0xff] %v274
                %v276 = vld [vmem:[%s172 + $0x2e8] sm:$0xff]
                %277 = vst [vmem:[%s173 + $0x198] sm:$0xff] %v276
                %v278 = vld [vmem:[%s172 + $0x2f0] sm:$0xff]
                %279 = vst [vmem:[%s173 + $0x1a0] sm:$0xff] %v278
                %v280 = vld [vmem:[%s172 + $0x2f8] sm:$0xff]
                %281 = vst [vmem:[%s173 + $0x1a8] sm:$0xff] %v280
                %v282 = vld [vmem:[%s172 + $0x300] sm:$0xff]
                %283 = vst [vmem:[%s173 + $0x1b0] sm:$0xff] %v282
                %v284 = vld [vmem:[%s172 + $0x308] sm:$0xff]
                %285 = vst [vmem:[%s173 + $0x1b8] sm:$0xff] %v284
              $region33: #{pretrain_forward.1} parent=27 // loop_footer
                %s171 = sadd.s32 1, %s167
              $region34: #{pretrain_forward.1} parent=27 // loop_footer_branch
                %166 = sbr.rel target = $region30
              $region35: #{pretrain_forward.1} parent=27 // loop_exit
                _
            $region28: #{pretrain_forward.1} parent=23 // pred_fallthru
              _
            // Predicated region
            $region36: #{pretrain_forward.1} parent=23 // pred_check
              _
            $region37: #{pretrain_forward.1} parent=23 // pred_check_branch
              %287 = sbr.rel target = $region39
            $region38: #{pretrain_forward.1} parent=23 // pred_region
              _
            $region39: #{pretrain_forward.1} parent=23 // pred_fallthru
              _
          $region24: #{pretrain_forward.1} parent=19 // pred_fallthru
            _
          %288 = vnop
        $region20: #{pretrain_forward.1} parent=15 // pred_fallthru
          _
        // Predicated region
        $region40: #{pretrain_forward.1} parent=15 // pred_check
          %p289 = pneg %p75
        $region41: #{pretrain_forward.1} parent=15 // pred_check_branch
          %291 = sbr.rel (%p289) target = $region43
        $region42: #{pretrain_forward.1} parent=15 // pred_region
          %s292 = sand.u32 %s65, 1
          %s293 = scalar_lea.sflag [#allocation5], %s292
          %s294 = sand.u32 %s65, 1
          %s295 = smul.addr %s294, 7168
          %s296 = scalar_lea.vmem [#allocation4], %s295
          %s297 = smul.u32 448, %s23
          %s298 = smul.u32 4, %s22
          %s300 = ssub.s32 114688, 114688
          %301 = vsyncadd %s293, %s300
          %s302 = smul.addr %s297, 8
          %s303 = sadd.s32 %s298, %s302
          %s304 = smul.addr %s303, 64
          %s305 = scalar_lea.hbm %s1, %s304
          %s306 = sshll.u32 %s296, 4
          %s307 = int_to_ptr.vmem [resolvable:$true] %s306
          %312 = dma.hbm_to_vmem [thread:$0]  %s305, 114688, %s307, %s293, 512, 256, 16
        $region43: #{pretrain_forward.1} parent=15 // pred_fallthru
          _
        // Predicated region
        $region44: #{pretrain_forward.1} parent=15 // pred_check
          %p313 = pneg %p101
        $region45: #{pretrain_forward.1} parent=15 // pred_check_branch
          %315 = sbr.rel (%p313) target = $region47
        $region46: #{pretrain_forward.1} parent=15 // pred_region
          %s316 = sand.u32 %s91, 1
          %s317 = scalar_lea.sflag [#allocation7], %s316
          %s318 = sand.u32 %s91, 1
          %s319 = smul.addr %s318, 128
          %s320 = scalar_lea.vmem [#allocation6], %s319
          %s321 = smul.u32 4, %s22
          %s323 = ssub.s32 2048, 2048
          %324 = vsyncadd %s317, %s323
          %s325 = smul.addr %s321, 128
          %s326 = scalar_lea.hbm %s2, %s325
          %s327 = sshll.u32 %s320, 4
          %s328 = int_to_ptr.vmem [resolvable:$true] %s327
          %333 = dma.hbm_to_vmem [thread:$0]  %s326, 2048, %s328, %s317, 1024, 512, 32
        $region47: #{pretrain_forward.1} parent=15 // pred_fallthru
          _
      $region16: #{pretrain_forward.1} parent=5 // pred_fallthru
        _
      %p334 = scmp.le.s32.totalorder 1, %s15
      %p335 = scmp.lt.s32.totalorder %s15, 5
      %p336 = pnand %p334, %p335
      %p337 = pneg %p336
      // Predicated region
      $region48: #{pretrain_forward.1} parent=5 // pred_check
        _
      $region49: #{pretrain_forward.1} parent=5 // pred_check_branch
        %339 = sbr.rel (%p336) target = $region51
      $region50: #{pretrain_forward.1} parent=5 // pred_region
        %s340 = ssub.s32 %s15, 1
        %s341 = sand.u32 %s40, 1
        %s342 = sand.u32 %s40, 1
        %s343 = smul.addr %s342, 448
        %s344 = scalar_lea.vmem [#allocation3], %s343
        // Predicated region
        $region52: #{pretrain_forward.1} parent=50 // pred_check
          %p345 = pneg %p53
        $region53: #{pretrain_forward.1} parent=50 // pred_check_branch
          %347 = sbr.rel (%p345) target = $region55
        $region54: #{pretrain_forward.1} parent=50 // pred_region
          _
        $region55: #{pretrain_forward.1} parent=50 // pred_fallthru
          _
        %s348 = sand.u32 %s68, 1
        %s349 = scalar_lea.sflag [#allocation5], %s348
        %s350 = sand.u32 %s68, 1
        %s351 = smul.addr %s350, 7168
        %s352 = scalar_lea.vmem [#allocation4], %s351
        // Predicated region
        $region56: #{pretrain_forward.1} parent=50 // pred_check
          %p353 = pneg %p81
        $region57: #{pretrain_forward.1} parent=50 // pred_check_branch
          %355 = sbr.rel (%p353) target = $region59
        $region58: #{pretrain_forward.1} parent=50 // pred_region
          %356 = dma.done %s349, 114688
        $region59: #{pretrain_forward.1} parent=50 // pred_fallthru
          _
        %s357 = sand.u32 %s94, 1
        %s358 = scalar_lea.sflag [#allocation7], %s357
        %s359 = sand.u32 %s94, 1
        %s360 = smul.addr %s359, 128
        %s361 = scalar_lea.vmem [#allocation6], %s360
        // Predicated region
        $region60: #{pretrain_forward.1} parent=50 // pred_check
          %p362 = pneg %p107
        $region61: #{pretrain_forward.1} parent=50 // pred_check_branch
          %364 = sbr.rel (%p362) target = $region63
        $region62: #{pretrain_forward.1} parent=50 // pred_region
          %365 = dma.done %s358, 2048
        $region63: #{pretrain_forward.1} parent=50 // pred_fallthru
          _
        %s366 = sand.u32 %s40, 1
        %s367 = sand.u32 %s40, 1
        %s368 = smul.addr %s367, 448
        %s369 = scalar_lea.vmem [#allocation3], %s368
        %p370 = pneg %p53
        %p371 = pneg %p50
        %s372 = sand.u32 %s68, 1
        %s373 = scalar_lea.sflag [#allocation5], %s372
        %s374 = sand.u32 %s68, 1
        %s375 = smul.addr %s374, 7168
        %s376 = scalar_lea.vmem [#allocation4], %s375
        %p377 = pneg %p81
        %p378 = pneg %p78
        %s379 = sand.u32 %s94, 1
        %s380 = scalar_lea.sflag [#allocation7], %s379
        %s381 = sand.u32 %s94, 1
        %s382 = smul.addr %s381, 128
        %s383 = scalar_lea.vmem [#allocation6], %s382
        %p384 = pneg %p107
        %p385 = pneg %p104
        %p386 = pneg %p133
        %p387 = pneg %p130
        %s388 = sand.u32 %s120, 1
        %s389 = sand.u32 %s120, 1
        %s390 = smul.addr %s389, 128
        %s391 = scalar_lea.vmem [#allocation8], %s390
        %s392 = smul.u32 28, %s25
        %s393 = smul.u32 448, %s25
        %s394 = smul.u32 4, %s24
        %s395 = smul.u32 4, %s24
        %s396 = smul.u32 4, %s24
        %p397 = scmp.eq.s32.totalorder %s25, 0
        // Predicated region
        $region64: #{pretrain_forward.1} parent=50 // pred_check
          %p398 = pneg %p397
        $region65: #{pretrain_forward.1} parent=50 // pred_check_branch
          %400 = sbr.rel (%p398) target = $region67
        $region66: #{pretrain_forward.1} parent=50 // pred_region
          %v401 = vld [vmem:[%s361] sm:$0xff]
          %v402 = vld [vmem:[%s361 + $0x8] sm:$0xff]
          %v403 = vld [vmem:[%s361 + $0x10] sm:$0xff]
          %v404 = vld [vmem:[%s361 + $0x18] sm:$0xff]
          %v405 = vld [vmem:[%s361 + $0x20] sm:$0xff]
          %v406 = vld [vmem:[%s361 + $0x28] sm:$0xff]
          %v407 = vld [vmem:[%s361 + $0x30] sm:$0xff]
          %v408 = vld [vmem:[%s361 + $0x38] sm:$0xff]
          %v409 = vld [vmem:[%s361 + $0x40] sm:$0xff]
          %v410 = vld [vmem:[%s361 + $0x48] sm:$0xff]
          %v411 = vld [vmem:[%s361 + $0x50] sm:$0xff]
          %v412 = vld [vmem:[%s361 + $0x58] sm:$0xff]
          %v413 = vld [vmem:[%s361 + $0x60] sm:$0xff]
          %v414 = vld [vmem:[%s361 + $0x68] sm:$0xff]
          %v415 = vld [vmem:[%s361 + $0x70] sm:$0xff]
          %v416 = vld [vmem:[%s361 + $0x78] sm:$0xff]
          %417 = vst [vmem:[#allocation2] sm:$0xff] %v401
          %418 = vst [vmem:[#allocation2 + $0x8] sm:$0xff] %v402
          %419 = vst [vmem:[#allocation2 + $0x10] sm:$0xff] %v403
          %420 = vst [vmem:[#allocation2 + $0x18] sm:$0xff] %v404
          %421 = vst [vmem:[#allocation2 + $0x20] sm:$0xff] %v405
          %422 = vst [vmem:[#allocation2 + $0x28] sm:$0xff] %v406
          %423 = vst [vmem:[#allocation2 + $0x30] sm:$0xff] %v407
          %424 = vst [vmem:[#allocation2 + $0x38] sm:$0xff] %v408
          %425 = vst [vmem:[#allocation2 + $0x40] sm:$0xff] %v409
          %426 = vst [vmem:[#allocation2 + $0x48] sm:$0xff] %v410
          %427 = vst [vmem:[#allocation2 + $0x50] sm:$0xff] %v411
          %428 = vst [vmem:[#allocation2 + $0x58] sm:$0xff] %v412
          %429 = vst [vmem:[#allocation2 + $0x60] sm:$0xff] %v413
          %430 = vst [vmem:[#allocation2 + $0x68] sm:$0xff] %v414
          %431 = vst [vmem:[#allocation2 + $0x70] sm:$0xff] %v415
          %432 = vst [vmem:[#allocation2 + $0x78] sm:$0xff] %v416
        $region67: #{pretrain_forward.1} parent=50 // pred_fallthru
          _
        %v433 = vld [vmem:[#allocation2] sm:$0xff]
        %v434 = vld [vmem:[#allocation2 + $0x8] sm:$0xff]
        %v435 = vld [vmem:[#allocation2 + $0x10] sm:$0xff]
        %v436 = vld [vmem:[#allocation2 + $0x18] sm:$0xff]
        %v437 = vld [vmem:[#allocation2 + $0x20] sm:$0xff]
        %v438 = vld [vmem:[#allocation2 + $0x28] sm:$0xff]
        %v439 = vld [vmem:[#allocation2 + $0x30] sm:$0xff]
        %v440 = vld [vmem:[#allocation2 + $0x38] sm:$0xff]
        %v441 = vld [vmem:[#allocation2 + $0x40] sm:$0xff]
        %v442 = vld [vmem:[#allocation2 + $0x48] sm:$0xff]
        %v443 = vld [vmem:[#allocation2 + $0x50] sm:$0xff]
        %v444 = vld [vmem:[#allocation2 + $0x58] sm:$0xff]
        %v445 = vld [vmem:[#allocation2 + $0x60] sm:$0xff]
        %v446 = vld [vmem:[#allocation2 + $0x68] sm:$0xff]
        %v447 = vld [vmem:[#allocation2 + $0x70] sm:$0xff]
        %v448 = vld [vmem:[#allocation2 + $0x78] sm:$0xff]
        %v449 = vld [vmem:[%s344] sm:$0xff]
        %v450 = vld [vmem:[%s344 + $0x8] sm:$0xff]
        %v451 = vld [vmem:[%s344 + $0x10] sm:$0xff]
        %v452 = vld [vmem:[%s344 + $0x18] sm:$0xff]
        %v453 = vld [vmem:[%s344 + $0x20] sm:$0xff]
        %v454 = vld [vmem:[%s344 + $0x28] sm:$0xff]
        %v455 = vld [vmem:[%s344 + $0x30] sm:$0xff]
        %v456 = vld [vmem:[%s344 + $0x38] sm:$0xff]
        %v457 = vld [vmem:[%s344 + $0x40] sm:$0xff]
        %v458 = vld [vmem:[%s344 + $0x48] sm:$0xff]
        %v459 = vld [vmem:[%s344 + $0x50] sm:$0xff]
        %v460 = vld [vmem:[%s344 + $0x58] sm:$0xff]
        %v461 = vld [vmem:[%s344 + $0x60] sm:$0xff]
        %v462 = vld [vmem:[%s344 + $0x68] sm:$0xff]
        %v463 = vld [vmem:[%s344 + $0x70] sm:$0xff]
        %v464 = vld [vmem:[%s344 + $0x78] sm:$0xff]
        %v465 = vld [vmem:[%s344 + $0x80] sm:$0xff]
        %v466 = vld [vmem:[%s344 + $0x88] sm:$0xff]
        %v467 = vld [vmem:[%s344 + $0x90] sm:$0xff]
        %v468 = vld [vmem:[%s344 + $0x98] sm:$0xff]
        %v469 = vld [vmem:[%s344 + $0xa0] sm:$0xff]
        %v470 = vld [vmem:[%s344 + $0xa8] sm:$0xff]
        %v471 = vld [vmem:[%s344 + $0xb0] sm:$0xff]
        %v472 = vld [vmem:[%s344 + $0xb8] sm:$0xff]
        %v473 = vld [vmem:[%s344 + $0xc0] sm:$0xff]
        %v474 = vld [vmem:[%s344 + $0xc8] sm:$0xff]
        %v475 = vld [vmem:[%s344 + $0xd0] sm:$0xff]
        %v476 = vld [vmem:[%s344 + $0xd8] sm:$0xff]
        %v477 = vld [vmem:[%s344 + $0xe0] sm:$0xff]
        %v478 = vld [vmem:[%s344 + $0xe8] sm:$0xff]
        %v479 = vld [vmem:[%s344 + $0xf0] sm:$0xff]
        %v480 = vld [vmem:[%s344 + $0xf8] sm:$0xff]
        %v481 = vld [vmem:[%s344 + $0x100] sm:$0xff]
        %v482 = vld [vmem:[%s344 + $0x108] sm:$0xff]
        %v483 = vld [vmem:[%s344 + $0x110] sm:$0xff]
        %v484 = vld [vmem:[%s344 + $0x118] sm:$0xff]
        %v485 = vld [vmem:[%s344 + $0x120] sm:$0xff]
        %v486 = vld [vmem:[%s344 + $0x128] sm:$0xff]
        %v487 = vld [vmem:[%s344 + $0x130] sm:$0xff]
        %v488 = vld [vmem:[%s344 + $0x138] sm:$0xff]
        %v489 = vld [vmem:[%s344 + $0x140] sm:$0xff]
        %v490 = vld [vmem:[%s344 + $0x148] sm:$0xff]
        %v491 = vld [vmem:[%s344 + $0x150] sm:$0xff]
        %v492 = vld [vmem:[%s344 + $0x158] sm:$0xff]
        %v493 = vld [vmem:[%s344 + $0x160] sm:$0xff]
        %v494 = vld [vmem:[%s344 + $0x168] sm:$0xff]
        %v495 = vld [vmem:[%s344 + $0x170] sm:$0xff]
        %v496 = vld [vmem:[%s344 + $0x178] sm:$0xff]
        %v497 = vld [vmem:[%s344 + $0x180] sm:$0xff]
        %v498 = vld [vmem:[%s344 + $0x188] sm:$0xff]
        %v499 = vld [vmem:[%s344 + $0x190] sm:$0xff]
        %v500 = vld [vmem:[%s344 + $0x198] sm:$0xff]
        %v501 = vld [vmem:[%s344 + $0x1a0] sm:$0xff]
        %v502 = vld [vmem:[%s344 + $0x1a8] sm:$0xff]
        %v503 = vld [vmem:[%s344 + $0x1b0] sm:$0xff]
        %v504 = vld [vmem:[%s344 + $0x1b8] sm:$0xff]
        %v505 = vld [vmem:[%s352] sm:$0xff]
        %v506 = vld [vmem:[%s352 + $0x8] sm:$0xff]
        %v507 = vld [vmem:[%s352 + $0x10] sm:$0xff]
        %v508 = vld [vmem:[%s352 + $0x18] sm:$0xff]
        %v509 = vld [vmem:[%s352 + $0x20] sm:$0xff]
        %v510 = vld [vmem:[%s352 + $0x28] sm:$0xff]
        %v511 = vld [vmem:[%s352 + $0x30] sm:$0xff]
        %v512 = vld [vmem:[%s352 + $0x38] sm:$0xff]
        %v513 = vld [vmem:[%s352 + $0x40] sm:$0xff]
        %v514 = vld [vmem:[%s352 + $0x48] sm:$0xff]
        %v515 = vld [vmem:[%s352 + $0x50] sm:$0xff]
        %v516 = vld [vmem:[%s352 + $0x58] sm:$0xff]
        %v517 = vld [vmem:[%s352 + $0x60] sm:$0xff]
        %v518 = vld [vmem:[%s352 + $0x68] sm:$0xff]
        %v519 = vld [vmem:[%s352 + $0x70] sm:$0xff]
        %v520 = vld [vmem:[%s352 + $0x78] sm:$0xff]
        %v521 = vld [vmem:[%s352 + $0x80] sm:$0xff]
        %v522 = vld [vmem:[%s352 + $0x88] sm:$0xff]
        %v523 = vld [vmem:[%s352 + $0x90] sm:$0xff]
        %v524 = vld [vmem:[%s352 + $0x98] sm:$0xff]
        %v525 = vld [vmem:[%s352 + $0xa0] sm:$0xff]
        %v526 = vld [vmem:[%s352 + $0xa8] sm:$0xff]
        %v527 = vld [vmem:[%s352 + $0xb0] sm:$0xff]
        %v528 = vld [vmem:[%s352 + $0xb8] sm:$0xff]
        %v529 = vld [vmem:[%s352 + $0xc0] sm:$0xff]
        %v530 = vld [vmem:[%s352 + $0xc8] sm:$0xff]
        %v531 = vld [vmem:[%s352 + $0xd0] sm:$0xff]
        %v532 = vld [vmem:[%s352 + $0xd8] sm:$0xff]
        %v533 = vld [vmem:[%s352 + $0xe0] sm:$0xff]
        %v534 = vld [vmem:[%s352 + $0xe8] sm:$0xff]
        %v535 = vld [vmem:[%s352 + $0xf0] sm:$0xff]
        %v536 = vld [vmem:[%s352 + $0xf8] sm:$0xff]
        %v537 = vld [vmem:[%s352 + $0x100] sm:$0xff]
        %v538 = vld [vmem:[%s352 + $0x108] sm:$0xff]
        %v539 = vld [vmem:[%s352 + $0x110] sm:$0xff]
        %v540 = vld [vmem:[%s352 + $0x118] sm:$0xff]
        %v541 = vld [vmem:[%s352 + $0x120] sm:$0xff]
        %v542 = vld [vmem:[%s352 + $0x128] sm:$0xff]
        %v543 = vld [vmem:[%s352 + $0x130] sm:$0xff]
        %v544 = vld [vmem:[%s352 + $0x138] sm:$0xff]
        %v545 = vld [vmem:[%s352 + $0x140] sm:$0xff]
        %v546 = vld [vmem:[%s352 + $0x148] sm:$0xff]
        %v547 = vld [vmem:[%s352 + $0x150] sm:$0xff]
        %v548 = vld [vmem:[%s352 + $0x158] sm:$0xff]
        %v549 = vld [vmem:[%s352 + $0x160] sm:$0xff]
        %v550 = vld [vmem:[%s352 + $0x168] sm:$0xff]
        %v551 = vld [vmem:[%s352 + $0x170] sm:$0xff]
        %v552 = vld [vmem:[%s352 + $0x178] sm:$0xff]
        %v553 = vld [vmem:[%s352 + $0x180] sm:$0xff]
        %v554 = vld [vmem:[%s352 + $0x188] sm:$0xff]
        %v555 = vld [vmem:[%s352 + $0x190] sm:$0xff]
        %v556 = vld [vmem:[%s352 + $0x198] sm:$0xff]
        %v557 = vld [vmem:[%s352 + $0x1a0] sm:$0xff]
        %v558 = vld [vmem:[%s352 + $0x1a8] sm:$0xff]
        %v559 = vld [vmem:[%s352 + $0x1b0] sm:$0xff]
        %v560 = vld [vmem:[%s352 + $0x1b8] sm:$0xff]
        %v561 = vld [vmem:[%s352 + $0x1c0] sm:$0xff]
        %v562 = vld [vmem:[%s352 + $0x1c8] sm:$0xff]
        %v563 = vld [vmem:[%s352 + $0x1d0] sm:$0xff]
        %v564 = vld [vmem:[%s352 + $0x1d8] sm:$0xff]
        %v565 = vld [vmem:[%s352 + $0x1e0] sm:$0xff]
        %v566 = vld [vmem:[%s352 + $0x1e8] sm:$0xff]
        %v567 = vld [vmem:[%s352 + $0x1f0] sm:$0xff]
        %v568 = vld [vmem:[%s352 + $0x1f8] sm:$0xff]
        %v569 = vld [vmem:[%s352 + $0x200] sm:$0xff]
        %v570 = vld [vmem:[%s352 + $0x208] sm:$0xff]
        %v571 = vld [vmem:[%s352 + $0x210] sm:$0xff]
        %v572 = vld [vmem:[%s352 + $0x218] sm:$0xff]
        %v573 = vld [vmem:[%s352 + $0x220] sm:$0xff]
        %v574 = vld [vmem:[%s352 + $0x228] sm:$0xff]
        %v575 = vld [vmem:[%s352 + $0x230] sm:$0xff]
        %v576 = vld [vmem:[%s352 + $0x238] sm:$0xff]
        %v577 = vld [vmem:[%s352 + $0x240] sm:$0xff]
        %v578 = vld [vmem:[%s352 + $0x248] sm:$0xff]
        %v579 = vld [vmem:[%s352 + $0x250] sm:$0xff]
        %v580 = vld [vmem:[%s352 + $0x258] sm:$0xff]
        %v581 = vld [vmem:[%s352 + $0x260] sm:$0xff]
        %v582 = vld [vmem:[%s352 + $0x268] sm:$0xff]
        %v583 = vld [vmem:[%s352 + $0x270] sm:$0xff]
        %v584 = vld [vmem:[%s352 + $0x278] sm:$0xff]
        %v585 = vld [vmem:[%s352 + $0x280] sm:$0xff]
        %v586 = vld [vmem:[%s352 + $0x288] sm:$0xff]
        %v587 = vld [vmem:[%s352 + $0x290] sm:$0xff]
        %v588 = vld [vmem:[%s352 + $0x298] sm:$0xff]
        %v589 = vld [vmem:[%s352 + $0x2a0] sm:$0xff]
        %v590 = vld [vmem:[%s352 + $0x2a8] sm:$0xff]
        %v591 = vld [vmem:[%s352 + $0x2b0] sm:$0xff]
        %v592 = vld [vmem:[%s352 + $0x2b8] sm:$0xff]
        %v593 = vld [vmem:[%s352 + $0x2c0] sm:$0xff]
        %v594 = vld [vmem:[%s352 + $0x2c8] sm:$0xff]
        %v595 = vld [vmem:[%s352 + $0x2d0] sm:$0xff]
        %v596 = vld [vmem:[%s352 + $0x2d8] sm:$0xff]
        %v597 = vld [vmem:[%s352 + $0x2e0] sm:$0xff]
        %v598 = vld [vmem:[%s352 + $0x2e8] sm:$0xff]
        %v599 = vld [vmem:[%s352 + $0x2f0] sm:$0xff]
        %v600 = vld [vmem:[%s352 + $0x2f8] sm:$0xff]
        %v601 = vld [vmem:[%s352 + $0x300] sm:$0xff]
        %v602 = vld [vmem:[%s352 + $0x308] sm:$0xff]
        %v603 = vld [vmem:[%s352 + $0x310] sm:$0xff]
        %v604 = vld [vmem:[%s352 + $0x318] sm:$0xff]
        %v605 = vld [vmem:[%s352 + $0x320] sm:$0xff]
        %v606 = vld [vmem:[%s352 + $0x328] sm:$0xff]
        %v607 = vld [vmem:[%s352 + $0x330] sm:$0xff]
        %v608 = vld [vmem:[%s352 + $0x338] sm:$0xff]
        %v609 = vld [vmem:[%s352 + $0x340] sm:$0xff]
        %v610 = vld [vmem:[%s352 + $0x348] sm:$0xff]
        %v611 = vld [vmem:[%s352 + $0x350] sm:$0xff]
        %v612 = vld [vmem:[%s352 + $0x358] sm:$0xff]
        %v613 = vld [vmem:[%s352 + $0x360] sm:$0xff]
        %v614 = vld [vmem:[%s352 + $0x368] sm:$0xff]
        %v615 = vld [vmem:[%s352 + $0x370] sm:$0xff]
        %v616 = vld [vmem:[%s352 + $0x378] sm:$0xff]
        %v617 = vld [vmem:[%s352 + $0x380] sm:$0xff]
        %v618 = vld [vmem:[%s352 + $0x388] sm:$0xff]
        %v619 = vld [vmem:[%s352 + $0x390] sm:$0xff]
        %v620 = vld [vmem:[%s352 + $0x398] sm:$0xff]
        %v621 = vld [vmem:[%s352 + $0x3a0] sm:$0xff]
        %v622 = vld [vmem:[%s352 + $0x3a8] sm:$0xff]
        %v623 = vld [vmem:[%s352 + $0x3b0] sm:$0xff]
        %v624 = vld [vmem:[%s352 + $0x3b8] sm:$0xff]
        %v625 = vld [vmem:[%s352 + $0x3c0] sm:$0xff]
        %v626 = vld [vmem:[%s352 + $0x3c8] sm:$0xff]
        %v627 = vld [vmem:[%s352 + $0x3d0] sm:$0xff]
        %v628 = vld [vmem:[%s352 + $0x3d8] sm:$0xff]
        %v629 = vld [vmem:[%s352 + $0x3e0] sm:$0xff]
        %v630 = vld [vmem:[%s352 + $0x3e8] sm:$0xff]
        %v631 = vld [vmem:[%s352 + $0x3f0] sm:$0xff]
        %v632 = vld [vmem:[%s352 + $0x3f8] sm:$0xff]
        %v633 = vld [vmem:[%s352 + $0x400] sm:$0xff]
        %v634 = vld [vmem:[%s352 + $0x408] sm:$0xff]
        %v635 = vld [vmem:[%s352 + $0x410] sm:$0xff]
        %v636 = vld [vmem:[%s352 + $0x418] sm:$0xff]
        %v637 = vld [vmem:[%s352 + $0x420] sm:$0xff]
        %v638 = vld [vmem:[%s352 + $0x428] sm:$0xff]
        %v639 = vld [vmem:[%s352 + $0x430] sm:$0xff]
        %v640 = vld [vmem:[%s352 + $0x438] sm:$0xff]
        %v641 = vld [vmem:[%s352 + $0x440] sm:$0xff]
        %v642 = vld [vmem:[%s352 + $0x448] sm:$0xff]
        %v643 = vld [vmem:[%s352 + $0x450] sm:$0xff]
        %v644 = vld [vmem:[%s352 + $0x458] sm:$0xff]
        %v645 = vld [vmem:[%s352 + $0x460] sm:$0xff]
        %v646 = vld [vmem:[%s352 + $0x468] sm:$0xff]
        %v647 = vld [vmem:[%s352 + $0x470] sm:$0xff]
        %v648 = vld [vmem:[%s352 + $0x478] sm:$0xff]
        %v649 = vld [vmem:[%s352 + $0x480] sm:$0xff]
        %v650 = vld [vmem:[%s352 + $0x488] sm:$0xff]
        %v651 = vld [vmem:[%s352 + $0x490] sm:$0xff]
        %v652 = vld [vmem:[%s352 + $0x498] sm:$0xff]
        %v653 = vld [vmem:[%s352 + $0x4a0] sm:$0xff]
        %v654 = vld [vmem:[%s352 + $0x4a8] sm:$0xff]
        %v655 = vld [vmem:[%s352 + $0x4b0] sm:$0xff]
        %v656 = vld [vmem:[%s352 + $0x4b8] sm:$0xff]
        %v657 = vld [vmem:[%s352 + $0x4c0] sm:$0xff]
        %v658 = vld [vmem:[%s352 + $0x4c8] sm:$0xff]
        %v659 = vld [vmem:[%s352 + $0x4d0] sm:$0xff]
        %v660 = vld [vmem:[%s352 + $0x4d8] sm:$0xff]
        %v661 = vld [vmem:[%s352 + $0x4e0] sm:$0xff]
        %v662 = vld [vmem:[%s352 + $0x4e8] sm:$0xff]
        %v663 = vld [vmem:[%s352 + $0x4f0] sm:$0xff]
        %v664 = vld [vmem:[%s352 + $0x4f8] sm:$0xff]
        %v665 = vld [vmem:[%s352 + $0x500] sm:$0xff]
        %v666 = vld [vmem:[%s352 + $0x508] sm:$0xff]
        %v667 = vld [vmem:[%s352 + $0x510] sm:$0xff]
        %v668 = vld [vmem:[%s352 + $0x518] sm:$0xff]
        %v669 = vld [vmem:[%s352 + $0x520] sm:$0xff]
        %v670 = vld [vmem:[%s352 + $0x528] sm:$0xff]
        %v671 = vld [vmem:[%s352 + $0x530] sm:$0xff]
        %v672 = vld [vmem:[%s352 + $0x538] sm:$0xff]
        %v673 = vld [vmem:[%s352 + $0x540] sm:$0xff]
        %v674 = vld [vmem:[%s352 + $0x548] sm:$0xff]
        %v675 = vld [vmem:[%s352 + $0x550] sm:$0xff]
        %v676 = vld [vmem:[%s352 + $0x558] sm:$0xff]
        %v677 = vld [vmem:[%s352 + $0x560] sm:$0xff]
        %v678 = vld [vmem:[%s352 + $0x568] sm:$0xff]
        %v679 = vld [vmem:[%s352 + $0x570] sm:$0xff]
        %v680 = vld [vmem:[%s352 + $0x578] sm:$0xff]
        %v681 = vld [vmem:[%s352 + $0x580] sm:$0xff]
        %v682 = vld [vmem:[%s352 + $0x588] sm:$0xff]
        %v683 = vld [vmem:[%s352 + $0x590] sm:$0xff]
        %v684 = vld [vmem:[%s352 + $0x598] sm:$0xff]
        %v685 = vld [vmem:[%s352 + $0x5a0] sm:$0xff]
        %v686 = vld [vmem:[%s352 + $0x5a8] sm:$0xff]
        %v687 = vld [vmem:[%s352 + $0x5b0] sm:$0xff]
        %v688 = vld [vmem:[%s352 + $0x5b8] sm:$0xff]
        %v689 = vld [vmem:[%s352 + $0x5c0] sm:$0xff]
        %v690 = vld [vmem:[%s352 + $0x5c8] sm:$0xff]
        %v691 = vld [vmem:[%s352 + $0x5d0] sm:$0xff]
        %v692 = vld [vmem:[%s352 + $0x5d8] sm:$0xff]
        %v693 = vld [vmem:[%s352 + $0x5e0] sm:$0xff]
        %v694 = vld [vmem:[%s352 + $0x5e8] sm:$0xff]
        %v695 = vld [vmem:[%s352 + $0x5f0] sm:$0xff]
        %v696 = vld [vmem:[%s352 + $0x5f8] sm:$0xff]
        %v697 = vld [vmem:[%s352 + $0x600] sm:$0xff]
        %v698 = vld [vmem:[%s352 + $0x608] sm:$0xff]
        %v699 = vld [vmem:[%s352 + $0x610] sm:$0xff]
        %v700 = vld [vmem:[%s352 + $0x618] sm:$0xff]
        %v701 = vld [vmem:[%s352 + $0x620] sm:$0xff]
        %v702 = vld [vmem:[%s352 + $0x628] sm:$0xff]
        %v703 = vld [vmem:[%s352 + $0x630] sm:$0xff]
        %v704 = vld [vmem:[%s352 + $0x638] sm:$0xff]
        %v705 = vld [vmem:[%s352 + $0x640] sm:$0xff]
        %v706 = vld [vmem:[%s352 + $0x648] sm:$0xff]
        %v707 = vld [vmem:[%s352 + $0x650] sm:$0xff]
        %v708 = vld [vmem:[%s352 + $0x658] sm:$0xff]
        %v709 = vld [vmem:[%s352 + $0x660] sm:$0xff]
        %v710 = vld [vmem:[%s352 + $0x668] sm:$0xff]
        %v711 = vld [vmem:[%s352 + $0x670] sm:$0xff]
        %v712 = vld [vmem:[%s352 + $0x678] sm:$0xff]
        %v713 = vld [vmem:[%s352 + $0x680] sm:$0xff]
        %v714 = vld [vmem:[%s352 + $0x688] sm:$0xff]
        %v715 = vld [vmem:[%s352 + $0x690] sm:$0xff]
        %v716 = vld [vmem:[%s352 + $0x698] sm:$0xff]
        %v717 = vld [vmem:[%s352 + $0x6a0] sm:$0xff]
        %v718 = vld [vmem:[%s352 + $0x6a8] sm:$0xff]
        %v719 = vld [vmem:[%s352 + $0x6b0] sm:$0xff]
        %v720 = vld [vmem:[%s352 + $0x6b8] sm:$0xff]
        %v721 = vld [vmem:[%s352 + $0x6c0] sm:$0xff]
        %v722 = vld [vmem:[%s352 + $0x6c8] sm:$0xff]
        %v723 = vld [vmem:[%s352 + $0x6d0] sm:$0xff]
        %v724 = vld [vmem:[%s352 + $0x6d8] sm:$0xff]
        %v725 = vld [vmem:[%s352 + $0x6e0] sm:$0xff]
        %v726 = vld [vmem:[%s352 + $0x6e8] sm:$0xff]
        %v727 = vld [vmem:[%s352 + $0x6f0] sm:$0xff]
        %v728 = vld [vmem:[%s352 + $0x6f8] sm:$0xff]
        %v729 = vld [vmem:[%s352 + $0x700] sm:$0xff]
        %v730 = vld [vmem:[%s352 + $0x708] sm:$0xff]
        %v731 = vld [vmem:[%s352 + $0x710] sm:$0xff]
        %v732 = vld [vmem:[%s352 + $0x718] sm:$0xff]
        %v733 = vld [vmem:[%s352 + $0x720] sm:$0xff]
        %v734 = vld [vmem:[%s352 + $0x728] sm:$0xff]
        %v735 = vld [vmem:[%s352 + $0x730] sm:$0xff]
        %v736 = vld [vmem:[%s352 + $0x738] sm:$0xff]
        %v737 = vld [vmem:[%s352 + $0x740] sm:$0xff]
        %v738 = vld [vmem:[%s352 + $0x748] sm:$0xff]
        %v739 = vld [vmem:[%s352 + $0x750] sm:$0xff]
        %v740 = vld [vmem:[%s352 + $0x758] sm:$0xff]
        %v741 = vld [vmem:[%s352 + $0x760] sm:$0xff]
        %v742 = vld [vmem:[%s352 + $0x768] sm:$0xff]
        %v743 = vld [vmem:[%s352 + $0x770] sm:$0xff]
        %v744 = vld [vmem:[%s352 + $0x778] sm:$0xff]
        %v745 = vld [vmem:[%s352 + $0x780] sm:$0xff]
        %v746 = vld [vmem:[%s352 + $0x788] sm:$0xff]
        %v747 = vld [vmem:[%s352 + $0x790] sm:$0xff]
        %v748 = vld [vmem:[%s352 + $0x798] sm:$0xff]
        %v749 = vld [vmem:[%s352 + $0x7a0] sm:$0xff]
        %v750 = vld [vmem:[%s352 + $0x7a8] sm:$0xff]
        %v751 = vld [vmem:[%s352 + $0x7b0] sm:$0xff]
        %v752 = vld [vmem:[%s352 + $0x7b8] sm:$0xff]
        %v753 = vld [vmem:[%s352 + $0x7c0] sm:$0xff]
        %v754 = vld [vmem:[%s352 + $0x7c8] sm:$0xff]
        %v755 = vld [vmem:[%s352 + $0x7d0] sm:$0xff]
        %v756 = vld [vmem:[%s352 + $0x7d8] sm:$0xff]
        %v757 = vld [vmem:[%s352 + $0x7e0] sm:$0xff]
        %v758 = vld [vmem:[%s352 + $0x7e8] sm:$0xff]
        %v759 = vld [vmem:[%s352 + $0x7f0] sm:$0xff]
        %v760 = vld [vmem:[%s352 + $0x7f8] sm:$0xff]
        %v761 = vld [vmem:[%s352 + $0x800] sm:$0xff]
        %v762 = vld [vmem:[%s352 + $0x808] sm:$0xff]
        %v763 = vld [vmem:[%s352 + $0x810] sm:$0xff]
        %v764 = vld [vmem:[%s352 + $0x818] sm:$0xff]
        %v765 = vld [vmem:[%s352 + $0x820] sm:$0xff]
        %v766 = vld [vmem:[%s352 + $0x828] sm:$0xff]
        %v767 = vld [vmem:[%s352 + $0x830] sm:$0xff]
        %v768 = vld [vmem:[%s352 + $0x838] sm:$0xff]
        %v769 = vld [vmem:[%s352 + $0x840] sm:$0xff]
        %v770 = vld [vmem:[%s352 + $0x848] sm:$0xff]
        %v771 = vld [vmem:[%s352 + $0x850] sm:$0xff]
        %v772 = vld [vmem:[%s352 + $0x858] sm:$0xff]
        %v773 = vld [vmem:[%s352 + $0x860] sm:$0xff]
        %v774 = vld [vmem:[%s352 + $0x868] sm:$0xff]
        %v775 = vld [vmem:[%s352 + $0x870] sm:$0xff]
        %v776 = vld [vmem:[%s352 + $0x878] sm:$0xff]
        %v777 = vld [vmem:[%s352 + $0x880] sm:$0xff]
        %v778 = vld [vmem:[%s352 + $0x888] sm:$0xff]
        %v779 = vld [vmem:[%s352 + $0x890] sm:$0xff]
        %v780 = vld [vmem:[%s352 + $0x898] sm:$0xff]
        %v781 = vld [vmem:[%s352 + $0x8a0] sm:$0xff]
        %v782 = vld [vmem:[%s352 + $0x8a8] sm:$0xff]
        %v783 = vld [vmem:[%s352 + $0x8b0] sm:$0xff]
        %v784 = vld [vmem:[%s352 + $0x8b8] sm:$0xff]
        %v785 = vld [vmem:[%s352 + $0x8c0] sm:$0xff]
        %v786 = vld [vmem:[%s352 + $0x8c8] sm:$0xff]
        %v787 = vld [vmem:[%s352 + $0x8d0] sm:$0xff]
        %v788 = vld [vmem:[%s352 + $0x8d8] sm:$0xff]
        %v789 = vld [vmem:[%s352 + $0x8e0] sm:$0xff]
        %v790 = vld [vmem:[%s352 + $0x8e8] sm:$0xff]
        %v791 = vld [vmem:[%s352 + $0x8f0] sm:$0xff]
        %v792 = vld [vmem:[%s352 + $0x8f8] sm:$0xff]
        %v793 = vld [vmem:[%s352 + $0x900] sm:$0xff]
        %v794 = vld [vmem:[%s352 + $0x908] sm:$0xff]
        %v795 = vld [vmem:[%s352 + $0x910] sm:$0xff]
        %v796 = vld [vmem:[%s352 + $0x918] sm:$0xff]
        %v797 = vld [vmem:[%s352 + $0x920] sm:$0xff]
        %v798 = vld [vmem:[%s352 + $0x928] sm:$0xff]
        %v799 = vld [vmem:[%s352 + $0x930] sm:$0xff]
        %v800 = vld [vmem:[%s352 + $0x938] sm:$0xff]
        %v801 = vld [vmem:[%s352 + $0x940] sm:$0xff]
        %v802 = vld [vmem:[%s352 + $0x948] sm:$0xff]
        %v803 = vld [vmem:[%s352 + $0x950] sm:$0xff]
        %v804 = vld [vmem:[%s352 + $0x958] sm:$0xff]
        %v805 = vld [vmem:[%s352 + $0x960] sm:$0xff]
        %v806 = vld [vmem:[%s352 + $0x968] sm:$0xff]
        %v807 = vld [vmem:[%s352 + $0x970] sm:$0xff]
        %v808 = vld [vmem:[%s352 + $0x978] sm:$0xff]
        %v809 = vld [vmem:[%s352 + $0x980] sm:$0xff]
        %v810 = vld [vmem:[%s352 + $0x988] sm:$0xff]
        %v811 = vld [vmem:[%s352 + $0x990] sm:$0xff]
        %v812 = vld [vmem:[%s352 + $0x998] sm:$0xff]
        %v813 = vld [vmem:[%s352 + $0x9a0] sm:$0xff]
        %v814 = vld [vmem:[%s352 + $0x9a8] sm:$0xff]
        %v815 = vld [vmem:[%s352 + $0x9b0] sm:$0xff]
        %v816 = vld [vmem:[%s352 + $0x9b8] sm:$0xff]
        %v817 = vld [vmem:[%s352 + $0x9c0] sm:$0xff]
        %v818 = vld [vmem:[%s352 + $0x9c8] sm:$0xff]
        %v819 = vld [vmem:[%s352 + $0x9d0] sm:$0xff]
        %v820 = vld [vmem:[%s352 + $0x9d8] sm:$0xff]
        %v821 = vld [vmem:[%s352 + $0x9e0] sm:$0xff]
        %v822 = vld [vmem:[%s352 + $0x9e8] sm:$0xff]
        %v823 = vld [vmem:[%s352 + $0x9f0] sm:$0xff]
        %v824 = vld [vmem:[%s352 + $0x9f8] sm:$0xff]
        %v825 = vld [vmem:[%s352 + $0xa00] sm:$0xff]
        %v826 = vld [vmem:[%s352 + $0xa08] sm:$0xff]
        %v827 = vld [vmem:[%s352 + $0xa10] sm:$0xff]
        %v828 = vld [vmem:[%s352 + $0xa18] sm:$0xff]
        %v829 = vld [vmem:[%s352 + $0xa20] sm:$0xff]
        %v830 = vld [vmem:[%s352 + $0xa28] sm:$0xff]
        %v831 = vld [vmem:[%s352 + $0xa30] sm:$0xff]
        %v832 = vld [vmem:[%s352 + $0xa38] sm:$0xff]
        %v833 = vld [vmem:[%s352 + $0xa40] sm:$0xff]
        %v834 = vld [vmem:[%s352 + $0xa48] sm:$0xff]
        %v835 = vld [vmem:[%s352 + $0xa50] sm:$0xff]
        %v836 = vld [vmem:[%s352 + $0xa58] sm:$0xff]
        %v837 = vld [vmem:[%s352 + $0xa60] sm:$0xff]
        %v838 = vld [vmem:[%s352 + $0xa68] sm:$0xff]
        %v839 = vld [vmem:[%s352 + $0xa70] sm:$0xff]
        %v840 = vld [vmem:[%s352 + $0xa78] sm:$0xff]
        %v841 = vld [vmem:[%s352 + $0xa80] sm:$0xff]
        %v842 = vld [vmem:[%s352 + $0xa88] sm:$0xff]
        %v843 = vld [vmem:[%s352 + $0xa90] sm:$0xff]
        %v844 = vld [vmem:[%s352 + $0xa98] sm:$0xff]
        %v845 = vld [vmem:[%s352 + $0xaa0] sm:$0xff]
        %v846 = vld [vmem:[%s352 + $0xaa8] sm:$0xff]
        %v847 = vld [vmem:[%s352 + $0xab0] sm:$0xff]
        %v848 = vld [vmem:[%s352 + $0xab8] sm:$0xff]
        %v849 = vld [vmem:[%s352 + $0xac0] sm:$0xff]
        %v850 = vld [vmem:[%s352 + $0xac8] sm:$0xff]
        %v851 = vld [vmem:[%s352 + $0xad0] sm:$0xff]
        %v852 = vld [vmem:[%s352 + $0xad8] sm:$0xff]
        %v853 = vld [vmem:[%s352 + $0xae0] sm:$0xff]
        %v854 = vld [vmem:[%s352 + $0xae8] sm:$0xff]
        %v855 = vld [vmem:[%s352 + $0xaf0] sm:$0xff]
        %v856 = vld [vmem:[%s352 + $0xaf8] sm:$0xff]
        %v857 = vld [vmem:[%s352 + $0xb00] sm:$0xff]
        %v858 = vld [vmem:[%s352 + $0xb08] sm:$0xff]
        %v859 = vld [vmem:[%s352 + $0xb10] sm:$0xff]
        %v860 = vld [vmem:[%s352 + $0xb18] sm:$0xff]
        %v861 = vld [vmem:[%s352 + $0xb20] sm:$0xff]
        %v862 = vld [vmem:[%s352 + $0xb28] sm:$0xff]
        %v863 = vld [vmem:[%s352 + $0xb30] sm:$0xff]
        %v864 = vld [vmem:[%s352 + $0xb38] sm:$0xff]
        %v865 = vld [vmem:[%s352 + $0xb40] sm:$0xff]
        %v866 = vld [vmem:[%s352 + $0xb48] sm:$0xff]
        %v867 = vld [vmem:[%s352 + $0xb50] sm:$0xff]
        %v868 = vld [vmem:[%s352 + $0xb58] sm:$0xff]
        %v869 = vld [vmem:[%s352 + $0xb60] sm:$0xff]
        %v870 = vld [vmem:[%s352 + $0xb68] sm:$0xff]
        %v871 = vld [vmem:[%s352 + $0xb70] sm:$0xff]
        %v872 = vld [vmem:[%s352 + $0xb78] sm:$0xff]
        %v873 = vld [vmem:[%s352 + $0xb80] sm:$0xff]
        %v874 = vld [vmem:[%s352 + $0xb88] sm:$0xff]
        %v875 = vld [vmem:[%s352 + $0xb90] sm:$0xff]
        %v876 = vld [vmem:[%s352 + $0xb98] sm:$0xff]
        %v877 = vld [vmem:[%s352 + $0xba0] sm:$0xff]
        %v878 = vld [vmem:[%s352 + $0xba8] sm:$0xff]
        %v879 = vld [vmem:[%s352 + $0xbb0] sm:$0xff]
        %v880 = vld [vmem:[%s352 + $0xbb8] sm:$0xff]
        %v881 = vld [vmem:[%s352 + $0xbc0] sm:$0xff]
        %v882 = vld [vmem:[%s352 + $0xbc8] sm:$0xff]
        %v883 = vld [vmem:[%s352 + $0xbd0] sm:$0xff]
        %v884 = vld [vmem:[%s352 + $0xbd8] sm:$0xff]
        %v885 = vld [vmem:[%s352 + $0xbe0] sm:$0xff]
        %v886 = vld [vmem:[%s352 + $0xbe8] sm:$0xff]
        %v887 = vld [vmem:[%s352 + $0xbf0] sm:$0xff]
        %v888 = vld [vmem:[%s352 + $0xbf8] sm:$0xff]
        %v889 = vld [vmem:[%s352 + $0xc00] sm:$0xff]
        %v890 = vld [vmem:[%s352 + $0xc08] sm:$0xff]
        %v891 = vld [vmem:[%s352 + $0xc10] sm:$0xff]
        %v892 = vld [vmem:[%s352 + $0xc18] sm:$0xff]
        %v893 = vld [vmem:[%s352 + $0xc20] sm:$0xff]
        %v894 = vld [vmem:[%s352 + $0xc28] sm:$0xff]
        %v895 = vld [vmem:[%s352 + $0xc30] sm:$0xff]
        %v896 = vld [vmem:[%s352 + $0xc38] sm:$0xff]
        %v897 = vld [vmem:[%s352 + $0xc40] sm:$0xff]
        %v898 = vld [vmem:[%s352 + $0xc48] sm:$0xff]
        %v899 = vld [vmem:[%s352 + $0xc50] sm:$0xff]
        %v900 = vld [vmem:[%s352 + $0xc58] sm:$0xff]
        %v901 = vld [vmem:[%s352 + $0xc60] sm:$0xff]
        %v902 = vld [vmem:[%s352 + $0xc68] sm:$0xff]
        %v903 = vld [vmem:[%s352 + $0xc70] sm:$0xff]
        %v904 = vld [vmem:[%s352 + $0xc78] sm:$0xff]
        %v905 = vld [vmem:[%s352 + $0xc80] sm:$0xff]
        %v906 = vld [vmem:[%s352 + $0xc88] sm:$0xff]
        %v907 = vld [vmem:[%s352 + $0xc90] sm:$0xff]
        %v908 = vld [vmem:[%s352 + $0xc98] sm:$0xff]
        %v909 = vld [vmem:[%s352 + $0xca0] sm:$0xff]
        %v910 = vld [vmem:[%s352 + $0xca8] sm:$0xff]
        %v911 = vld [vmem:[%s352 + $0xcb0] sm:$0xff]
        %v912 = vld [vmem:[%s352 + $0xcb8] sm:$0xff]
        %v913 = vld [vmem:[%s352 + $0xcc0] sm:$0xff]
        %v914 = vld [vmem:[%s352 + $0xcc8] sm:$0xff]
        %v915 = vld [vmem:[%s352 + $0xcd0] sm:$0xff]
        %v916 = vld [vmem:[%s352 + $0xcd8] sm:$0xff]
        %v917 = vld [vmem:[%s352 + $0xce0] sm:$0xff]
        %v918 = vld [vmem:[%s352 + $0xce8] sm:$0xff]
        %v919 = vld [vmem:[%s352 + $0xcf0] sm:$0xff]
        %v920 = vld [vmem:[%s352 + $0xcf8] sm:$0xff]
        %v921 = vld [vmem:[%s352 + $0xd00] sm:$0xff]
        %v922 = vld [vmem:[%s352 + $0xd08] sm:$0xff]
        %v923 = vld [vmem:[%s352 + $0xd10] sm:$0xff]
        %v924 = vld [vmem:[%s352 + $0xd18] sm:$0xff]
        %v925 = vld [vmem:[%s352 + $0xd20] sm:$0xff]
        %v926 = vld [vmem:[%s352 + $0xd28] sm:$0xff]
        %v927 = vld [vmem:[%s352 + $0xd30] sm:$0xff]
        %v928 = vld [vmem:[%s352 + $0xd38] sm:$0xff]
        %v929 = vld [vmem:[%s352 + $0xd40] sm:$0xff]
        %v930 = vld [vmem:[%s352 + $0xd48] sm:$0xff]
        %v931 = vld [vmem:[%s352 + $0xd50] sm:$0xff]
        %v932 = vld [vmem:[%s352 + $0xd58] sm:$0xff]
        %v933 = vld [vmem:[%s352 + $0xd60] sm:$0xff]
        %v934 = vld [vmem:[%s352 + $0xd68] sm:$0xff]
        %v935 = vld [vmem:[%s352 + $0xd70] sm:$0xff]
        %v936 = vld [vmem:[%s352 + $0xd78] sm:$0xff]
        %v937 = vld [vmem:[%s352 + $0xd80] sm:$0xff]
        %v938 = vld [vmem:[%s352 + $0xd88] sm:$0xff]
        %v939 = vld [vmem:[%s352 + $0xd90] sm:$0xff]
        %v940 = vld [vmem:[%s352 + $0xd98] sm:$0xff]
        %v941 = vld [vmem:[%s352 + $0xda0] sm:$0xff]
        %v942 = vld [vmem:[%s352 + $0xda8] sm:$0xff]
        %v943 = vld [vmem:[%s352 + $0xdb0] sm:$0xff]
        %v944 = vld [vmem:[%s352 + $0xdb8] sm:$0xff]
        %v945 = vld [vmem:[%s352 + $0xdc0] sm:$0xff]
        %v946 = vld [vmem:[%s352 + $0xdc8] sm:$0xff]
        %v947 = vld [vmem:[%s352 + $0xdd0] sm:$0xff]
        %v948 = vld [vmem:[%s352 + $0xdd8] sm:$0xff]
        %v949 = vld [vmem:[%s352 + $0xde0] sm:$0xff]
        %v950 = vld [vmem:[%s352 + $0xde8] sm:$0xff]
        %v951 = vld [vmem:[%s352 + $0xdf0] sm:$0xff]
        %v952 = vld [vmem:[%s352 + $0xdf8] sm:$0xff]
        %v953 = vld [vmem:[%s352 + $0xe00] sm:$0xff]
        %v954 = vld [vmem:[%s352 + $0xe08] sm:$0xff]
        %v955 = vld [vmem:[%s352 + $0xe10] sm:$0xff]
        %v956 = vld [vmem:[%s352 + $0xe18] sm:$0xff]
        %v957 = vld [vmem:[%s352 + $0xe20] sm:$0xff]
        %v958 = vld [vmem:[%s352 + $0xe28] sm:$0xff]
        %v959 = vld [vmem:[%s352 + $0xe30] sm:$0xff]
        %v960 = vld [vmem:[%s352 + $0xe38] sm:$0xff]
        %v961 = vld [vmem:[%s352 + $0xe40] sm:$0xff]
        %v962 = vld [vmem:[%s352 + $0xe48] sm:$0xff]
        %v963 = vld [vmem:[%s352 + $0xe50] sm:$0xff]
        %v964 = vld [vmem:[%s352 + $0xe58] sm:$0xff]
        %v965 = vld [vmem:[%s352 + $0xe60] sm:$0xff]
        %v966 = vld [vmem:[%s352 + $0xe68] sm:$0xff]
        %v967 = vld [vmem:[%s352 + $0xe70] sm:$0xff]
        %v968 = vld [vmem:[%s352 + $0xe78] sm:$0xff]
        %v969 = vld [vmem:[%s352 + $0xe80] sm:$0xff]
        %v970 = vld [vmem:[%s352 + $0xe88] sm:$0xff]
        %v971 = vld [vmem:[%s352 + $0xe90] sm:$0xff]
        %v972 = vld [vmem:[%s352 + $0xe98] sm:$0xff]
        %v973 = vld [vmem:[%s352 + $0xea0] sm:$0xff]
        %v974 = vld [vmem:[%s352 + $0xea8] sm:$0xff]
        %v975 = vld [vmem:[%s352 + $0xeb0] sm:$0xff]
        %v976 = vld [vmem:[%s352 + $0xeb8] sm:$0xff]
        %v977 = vld [vmem:[%s352 + $0xec0] sm:$0xff]
        %v978 = vld [vmem:[%s352 + $0xec8] sm:$0xff]
        %v979 = vld [vmem:[%s352 + $0xed0] sm:$0xff]
        %v980 = vld [vmem:[%s352 + $0xed8] sm:$0xff]
        %v981 = vld [vmem:[%s352 + $0xee0] sm:$0xff]
        %v982 = vld [vmem:[%s352 + $0xee8] sm:$0xff]
        %v983 = vld [vmem:[%s352 + $0xef0] sm:$0xff]
        %v984 = vld [vmem:[%s352 + $0xef8] sm:$0xff]
        %v985 = vld [vmem:[%s352 + $0xf00] sm:$0xff]
        %v986 = vld [vmem:[%s352 + $0xf08] sm:$0xff]
        %v987 = vld [vmem:[%s352 + $0xf10] sm:$0xff]
        %v988 = vld [vmem:[%s352 + $0xf18] sm:$0xff]
        %v989 = vld [vmem:[%s352 + $0xf20] sm:$0xff]
        %v990 = vld [vmem:[%s352 + $0xf28] sm:$0xff]
        %v991 = vld [vmem:[%s352 + $0xf30] sm:$0xff]
        %v992 = vld [vmem:[%s352 + $0xf38] sm:$0xff]
        %v993 = vld [vmem:[%s352 + $0xf40] sm:$0xff]
        %v994 = vld [vmem:[%s352 + $0xf48] sm:$0xff]
        %v995 = vld [vmem:[%s352 + $0xf50] sm:$0xff]
        %v996 = vld [vmem:[%s352 + $0xf58] sm:$0xff]
        %v997 = vld [vmem:[%s352 + $0xf60] sm:$0xff]
        %v998 = vld [vmem:[%s352 + $0xf68] sm:$0xff]
        %v999 = vld [vmem:[%s352 + $0xf70] sm:$0xff]
        %v1000 = vld [vmem:[%s352 + $0xf78] sm:$0xff]
        %v1001 = vld [vmem:[%s352 + $0xf80] sm:$0xff]
        %v1002 = vld [vmem:[%s352 + $0xf88] sm:$0xff]
        %v1003 = vld [vmem:[%s352 + $0xf90] sm:$0xff]
        %v1004 = vld [vmem:[%s352 + $0xf98] sm:$0xff]
        %v1005 = vld [vmem:[%s352 + $0xfa0] sm:$0xff]
        %v1006 = vld [vmem:[%s352 + $0xfa8] sm:$0xff]
        %v1007 = vld [vmem:[%s352 + $0xfb0] sm:$0xff]
        %v1008 = vld [vmem:[%s352 + $0xfb8] sm:$0xff]
        %v1009 = vld [vmem:[%s352 + $0xfc0] sm:$0xff]
        %v1010 = vld [vmem:[%s352 + $0xfc8] sm:$0xff]
        %v1011 = vld [vmem:[%s352 + $0xfd0] sm:$0xff]
        %v1012 = vld [vmem:[%s352 + $0xfd8] sm:$0xff]
        %v1013 = vld [vmem:[%s352 + $0xfe0] sm:$0xff]
        %v1014 = vld [vmem:[%s352 + $0xfe8] sm:$0xff]
        %v1015 = vld [vmem:[%s352 + $0xff0] sm:$0xff]
        %v1016 = vld [vmem:[%s352 + $0xff8] sm:$0xff]
        %v1017 = vld [vmem:[%s352 + $0x1000] sm:$0xff]
        %v1018 = vld [vmem:[%s352 + $0x1008] sm:$0xff]
        %v1019 = vld [vmem:[%s352 + $0x1010] sm:$0xff]
        %v1020 = vld [vmem:[%s352 + $0x1018] sm:$0xff]
        %v1021 = vld [vmem:[%s352 + $0x1020] sm:$0xff]
        %v1022 = vld [vmem:[%s352 + $0x1028] sm:$0xff]
        %v1023 = vld [vmem:[%s352 + $0x1030] sm:$0xff]
        %v1024 = vld [vmem:[%s352 + $0x1038] sm:$0xff]
        %v1025 = vld [vmem:[%s352 + $0x1040] sm:$0xff]
        %v1026 = vld [vmem:[%s352 + $0x1048] sm:$0xff]
        %v1027 = vld [vmem:[%s352 + $0x1050] sm:$0xff]
        %v1028 = vld [vmem:[%s352 + $0x1058] sm:$0xff]
        %v1029 = vld [vmem:[%s352 + $0x1060] sm:$0xff]
        %v1030 = vld [vmem:[%s352 + $0x1068] sm:$0xff]
        %v1031 = vld [vmem:[%s352 + $0x1070] sm:$0xff]
        %v1032 = vld [vmem:[%s352 + $0x1078] sm:$0xff]
        %v1033 = vld [vmem:[%s352 + $0x1080] sm:$0xff]
        %v1034 = vld [vmem:[%s352 + $0x1088] sm:$0xff]
        %v1035 = vld [vmem:[%s352 + $0x1090] sm:$0xff]
        %v1036 = vld [vmem:[%s352 + $0x1098] sm:$0xff]
        %v1037 = vld [vmem:[%s352 + $0x10a0] sm:$0xff]
        %v1038 = vld [vmem:[%s352 + $0x10a8] sm:$0xff]
        %v1039 = vld [vmem:[%s352 + $0x10b0] sm:$0xff]
        %v1040 = vld [vmem:[%s352 + $0x10b8] sm:$0xff]
        %v1041 = vld [vmem:[%s352 + $0x10c0] sm:$0xff]
        %v1042 = vld [vmem:[%s352 + $0x10c8] sm:$0xff]
        %v1043 = vld [vmem:[%s352 + $0x10d0] sm:$0xff]
        %v1044 = vld [vmem:[%s352 + $0x10d8] sm:$0xff]
        %v1045 = vld [vmem:[%s352 + $0x10e0] sm:$0xff]
        %v1046 = vld [vmem:[%s352 + $0x10e8] sm:$0xff]
        %v1047 = vld [vmem:[%s352 + $0x10f0] sm:$0xff]
        %v1048 = vld [vmem:[%s352 + $0x10f8] sm:$0xff]
        %v1049 = vld [vmem:[%s352 + $0x1100] sm:$0xff]
        %v1050 = vld [vmem:[%s352 + $0x1108] sm:$0xff]
        %v1051 = vld [vmem:[%s352 + $0x1110] sm:$0xff]
        %v1052 = vld [vmem:[%s352 + $0x1118] sm:$0xff]
        %v1053 = vld [vmem:[%s352 + $0x1120] sm:$0xff]
        %v1054 = vld [vmem:[%s352 + $0x1128] sm:$0xff]
        %v1055 = vld [vmem:[%s352 + $0x1130] sm:$0xff]
        %v1056 = vld [vmem:[%s352 + $0x1138] sm:$0xff]
        %v1057 = vld [vmem:[%s352 + $0x1140] sm:$0xff]
        %v1058 = vld [vmem:[%s352 + $0x1148] sm:$0xff]
        %v1059 = vld [vmem:[%s352 + $0x1150] sm:$0xff]
        %v1060 = vld [vmem:[%s352 + $0x1158] sm:$0xff]
        %v1061 = vld [vmem:[%s352 + $0x1160] sm:$0xff]
        %v1062 = vld [vmem:[%s352 + $0x1168] sm:$0xff]
        %v1063 = vld [vmem:[%s352 + $0x1170] sm:$0xff]
        %v1064 = vld [vmem:[%s352 + $0x1178] sm:$0xff]
        %v1065 = vld [vmem:[%s352 + $0x1180] sm:$0xff]
        %v1066 = vld [vmem:[%s352 + $0x1188] sm:$0xff]
        %v1067 = vld [vmem:[%s352 + $0x1190] sm:$0xff]
        %v1068 = vld [vmem:[%s352 + $0x1198] sm:$0xff]
        %v1069 = vld [vmem:[%s352 + $0x11a0] sm:$0xff]
        %v1070 = vld [vmem:[%s352 + $0x11a8] sm:$0xff]
        %v1071 = vld [vmem:[%s352 + $0x11b0] sm:$0xff]
        %v1072 = vld [vmem:[%s352 + $0x11b8] sm:$0xff]
        %v1073 = vld [vmem:[%s352 + $0x11c0] sm:$0xff]
        %v1074 = vld [vmem:[%s352 + $0x11c8] sm:$0xff]
        %v1075 = vld [vmem:[%s352 + $0x11d0] sm:$0xff]
        %v1076 = vld [vmem:[%s352 + $0x11d8] sm:$0xff]
        %v1077 = vld [vmem:[%s352 + $0x11e0] sm:$0xff]
        %v1078 = vld [vmem:[%s352 + $0x11e8] sm:$0xff]
        %v1079 = vld [vmem:[%s352 + $0x11f0] sm:$0xff]
        %v1080 = vld [vmem:[%s352 + $0x11f8] sm:$0xff]
        %v1081 = vld [vmem:[%s352 + $0x1200] sm:$0xff]
        %v1082 = vld [vmem:[%s352 + $0x1208] sm:$0xff]
        %v1083 = vld [vmem:[%s352 + $0x1210] sm:$0xff]
        %v1084 = vld [vmem:[%s352 + $0x1218] sm:$0xff]
        %v1085 = vld [vmem:[%s352 + $0x1220] sm:$0xff]
        %v1086 = vld [vmem:[%s352 + $0x1228] sm:$0xff]
        %v1087 = vld [vmem:[%s352 + $0x1230] sm:$0xff]
        %v1088 = vld [vmem:[%s352 + $0x1238] sm:$0xff]
        %v1089 = vld [vmem:[%s352 + $0x1240] sm:$0xff]
        %v1090 = vld [vmem:[%s352 + $0x1248] sm:$0xff]
        %v1091 = vld [vmem:[%s352 + $0x1250] sm:$0xff]
        %v1092 = vld [vmem:[%s352 + $0x1258] sm:$0xff]
        %v1093 = vld [vmem:[%s352 + $0x1260] sm:$0xff]
        %v1094 = vld [vmem:[%s352 + $0x1268] sm:$0xff]
        %v1095 = vld [vmem:[%s352 + $0x1270] sm:$0xff]
        %v1096 = vld [vmem:[%s352 + $0x1278] sm:$0xff]
        %v1097 = vld [vmem:[%s352 + $0x1280] sm:$0xff]
        %v1098 = vld [vmem:[%s352 + $0x1288] sm:$0xff]
        %v1099 = vld [vmem:[%s352 + $0x1290] sm:$0xff]
        %v1100 = vld [vmem:[%s352 + $0x1298] sm:$0xff]
        %v1101 = vld [vmem:[%s352 + $0x12a0] sm:$0xff]
        %v1102 = vld [vmem:[%s352 + $0x12a8] sm:$0xff]
        %v1103 = vld [vmem:[%s352 + $0x12b0] sm:$0xff]
        %v1104 = vld [vmem:[%s352 + $0x12b8] sm:$0xff]
        %v1105 = vld [vmem:[%s352 + $0x12c0] sm:$0xff]
        %v1106 = vld [vmem:[%s352 + $0x12c8] sm:$0xff]
        %v1107 = vld [vmem:[%s352 + $0x12d0] sm:$0xff]
        %v1108 = vld [vmem:[%s352 + $0x12d8] sm:$0xff]
        %v1109 = vld [vmem:[%s352 + $0x12e0] sm:$0xff]
        %v1110 = vld [vmem:[%s352 + $0x12e8] sm:$0xff]
        %v1111 = vld [vmem:[%s352 + $0x12f0] sm:$0xff]
        %v1112 = vld [vmem:[%s352 + $0x12f8] sm:$0xff]
        %v1113 = vld [vmem:[%s352 + $0x1300] sm:$0xff]
        %v1114 = vld [vmem:[%s352 + $0x1308] sm:$0xff]
        %v1115 = vld [vmem:[%s352 + $0x1310] sm:$0xff]
        %v1116 = vld [vmem:[%s352 + $0x1318] sm:$0xff]
        %v1117 = vld [vmem:[%s352 + $0x1320] sm:$0xff]
        %v1118 = vld [vmem:[%s352 + $0x1328] sm:$0xff]
        %v1119 = vld [vmem:[%s352 + $0x1330] sm:$0xff]
        %v1120 = vld [vmem:[%s352 + $0x1338] sm:$0xff]
        %v1121 = vld [vmem:[%s352 + $0x1340] sm:$0xff]
        %v1122 = vld [vmem:[%s352 + $0x1348] sm:$0xff]
        %v1123 = vld [vmem:[%s352 + $0x1350] sm:$0xff]
        %v1124 = vld [vmem:[%s352 + $0x1358] sm:$0xff]
        %v1125 = vld [vmem:[%s352 + $0x1360] sm:$0xff]
        %v1126 = vld [vmem:[%s352 + $0x1368] sm:$0xff]
        %v1127 = vld [vmem:[%s352 + $0x1370] sm:$0xff]
        %v1128 = vld [vmem:[%s352 + $0x1378] sm:$0xff]
        %v1129 = vld [vmem:[%s352 + $0x1380] sm:$0xff]
        %v1130 = vld [vmem:[%s352 + $0x1388] sm:$0xff]
        %v1131 = vld [vmem:[%s352 + $0x1390] sm:$0xff]
        %v1132 = vld [vmem:[%s352 + $0x1398] sm:$0xff]
        %v1133 = vld [vmem:[%s352 + $0x13a0] sm:$0xff]
        %v1134 = vld [vmem:[%s352 + $0x13a8] sm:$0xff]
        %v1135 = vld [vmem:[%s352 + $0x13b0] sm:$0xff]
        %v1136 = vld [vmem:[%s352 + $0x13b8] sm:$0xff]
        %v1137 = vld [vmem:[%s352 + $0x13c0] sm:$0xff]
        %v1138 = vld [vmem:[%s352 + $0x13c8] sm:$0xff]
        %v1139 = vld [vmem:[%s352 + $0x13d0] sm:$0xff]
        %v1140 = vld [vmem:[%s352 + $0x13d8] sm:$0xff]
        %v1141 = vld [vmem:[%s352 + $0x13e0] sm:$0xff]
        %v1142 = vld [vmem:[%s352 + $0x13e8] sm:$0xff]
        %v1143 = vld [vmem:[%s352 + $0x13f0] sm:$0xff]
        %v1144 = vld [vmem:[%s352 + $0x13f8] sm:$0xff]
        %v1145 = vld [vmem:[%s352 + $0x1400] sm:$0xff]
        %v1146 = vld [vmem:[%s352 + $0x1408] sm:$0xff]
        %v1147 = vld [vmem:[%s352 + $0x1410] sm:$0xff]
        %v1148 = vld [vmem:[%s352 + $0x1418] sm:$0xff]
        %v1149 = vld [vmem:[%s352 + $0x1420] sm:$0xff]
        %v1150 = vld [vmem:[%s352 + $0x1428] sm:$0xff]
        %v1151 = vld [vmem:[%s352 + $0x1430] sm:$0xff]
        %v1152 = vld [vmem:[%s352 + $0x1438] sm:$0xff]
        %v1153 = vld [vmem:[%s352 + $0x1440] sm:$0xff]
        %v1154 = vld [vmem:[%s352 + $0x1448] sm:$0xff]
        %v1155 = vld [vmem:[%s352 + $0x1450] sm:$0xff]
        %v1156 = vld [vmem:[%s352 + $0x1458] sm:$0xff]
        %v1157 = vld [vmem:[%s352 + $0x1460] sm:$0xff]
        %v1158 = vld [vmem:[%s352 + $0x1468] sm:$0xff]
        %v1159 = vld [vmem:[%s352 + $0x1470] sm:$0xff]
        %v1160 = vld [vmem:[%s352 + $0x1478] sm:$0xff]
        %v1161 = vld [vmem:[%s352 + $0x1480] sm:$0xff]
        %v1162 = vld [vmem:[%s352 + $0x1488] sm:$0xff]
        %v1163 = vld [vmem:[%s352 + $0x1490] sm:$0xff]
        %v1164 = vld [vmem:[%s352 + $0x1498] sm:$0xff]
        %v1165 = vld [vmem:[%s352 + $0x14a0] sm:$0xff]
        %v1166 = vld [vmem:[%s352 + $0x14a8] sm:$0xff]
        %v1167 = vld [vmem:[%s352 + $0x14b0] sm:$0xff]
        %v1168 = vld [vmem:[%s352 + $0x14b8] sm:$0xff]
        %v1169 = vld [vmem:[%s352 + $0x14c0] sm:$0xff]
        %v1170 = vld [vmem:[%s352 + $0x14c8] sm:$0xff]
        %v1171 = vld [vmem:[%s352 + $0x14d0] sm:$0xff]
        %v1172 = vld [vmem:[%s352 + $0x14d8] sm:$0xff]
        %v1173 = vld [vmem:[%s352 + $0x14e0] sm:$0xff]
        %v1174 = vld [vmem:[%s352 + $0x14e8] sm:$0xff]
        %v1175 = vld [vmem:[%s352 + $0x14f0] sm:$0xff]
        %v1176 = vld [vmem:[%s352 + $0x14f8] sm:$0xff]
        %v1177 = vld [vmem:[%s352 + $0x1500] sm:$0xff]
        %v1178 = vld [vmem:[%s352 + $0x1508] sm:$0xff]
        %v1179 = vld [vmem:[%s352 + $0x1510] sm:$0xff]
        %v1180 = vld [vmem:[%s352 + $0x1518] sm:$0xff]
        %v1181 = vld [vmem:[%s352 + $0x1520] sm:$0xff]
        %v1182 = vld [vmem:[%s352 + $0x1528] sm:$0xff]
        %v1183 = vld [vmem:[%s352 + $0x1530] sm:$0xff]
        %v1184 = vld [vmem:[%s352 + $0x1538] sm:$0xff]
        %v1185 = vld [vmem:[%s352 + $0x1540] sm:$0xff]
        %v1186 = vld [vmem:[%s352 + $0x1548] sm:$0xff]
        %v1187 = vld [vmem:[%s352 + $0x1550] sm:$0xff]
        %v1188 = vld [vmem:[%s352 + $0x1558] sm:$0xff]
        %v1189 = vld [vmem:[%s352 + $0x1560] sm:$0xff]
        %v1190 = vld [vmem:[%s352 + $0x1568] sm:$0xff]
        %v1191 = vld [vmem:[%s352 + $0x1570] sm:$0xff]
        %v1192 = vld [vmem:[%s352 + $0x1578] sm:$0xff]
        %v1193 = vld [vmem:[%s352 + $0x1580] sm:$0xff]
        %v1194 = vld [vmem:[%s352 + $0x1588] sm:$0xff]
        %v1195 = vld [vmem:[%s352 + $0x1590] sm:$0xff]
        %v1196 = vld [vmem:[%s352 + $0x1598] sm:$0xff]
        %v1197 = vld [vmem:[%s352 + $0x15a0] sm:$0xff]
        %v1198 = vld [vmem:[%s352 + $0x15a8] sm:$0xff]
        %v1199 = vld [vmem:[%s352 + $0x15b0] sm:$0xff]
        %v1200 = vld [vmem:[%s352 + $0x15b8] sm:$0xff]
        %v1201 = vld [vmem:[%s352 + $0x15c0] sm:$0xff]
        %v1202 = vld [vmem:[%s352 + $0x15c8] sm:$0xff]
        %v1203 = vld [vmem:[%s352 + $0x15d0] sm:$0xff]
        %v1204 = vld [vmem:[%s352 + $0x15d8] sm:$0xff]
        %v1205 = vld [vmem:[%s352 + $0x15e0] sm:$0xff]
        %v1206 = vld [vmem:[%s352 + $0x15e8] sm:$0xff]
        %v1207 = vld [vmem:[%s352 + $0x15f0] sm:$0xff]
        %v1208 = vld [vmem:[%s352 + $0x15f8] sm:$0xff]
        %v1209 = vld [vmem:[%s352 + $0x1600] sm:$0xff]
        %v1210 = vld [vmem:[%s352 + $0x1608] sm:$0xff]
        %v1211 = vld [vmem:[%s352 + $0x1610] sm:$0xff]
        %v1212 = vld [vmem:[%s352 + $0x1618] sm:$0xff]
        %v1213 = vld [vmem:[%s352 + $0x1620] sm:$0xff]
        %v1214 = vld [vmem:[%s352 + $0x1628] sm:$0xff]
        %v1215 = vld [vmem:[%s352 + $0x1630] sm:$0xff]
        %v1216 = vld [vmem:[%s352 + $0x1638] sm:$0xff]
        %v1217 = vld [vmem:[%s352 + $0x1640] sm:$0xff]
        %v1218 = vld [vmem:[%s352 + $0x1648] sm:$0xff]
        %v1219 = vld [vmem:[%s352 + $0x1650] sm:$0xff]
        %v1220 = vld [vmem:[%s352 + $0x1658] sm:$0xff]
        %v1221 = vld [vmem:[%s352 + $0x1660] sm:$0xff]
        %v1222 = vld [vmem:[%s352 + $0x1668] sm:$0xff]
        %v1223 = vld [vmem:[%s352 + $0x1670] sm:$0xff]
        %v1224 = vld [vmem:[%s352 + $0x1678] sm:$0xff]
        %v1225 = vld [vmem:[%s352 + $0x1680] sm:$0xff]
        %v1226 = vld [vmem:[%s352 + $0x1688] sm:$0xff]
        %v1227 = vld [vmem:[%s352 + $0x1690] sm:$0xff]
        %v1228 = vld [vmem:[%s352 + $0x1698] sm:$0xff]
        %v1229 = vld [vmem:[%s352 + $0x16a0] sm:$0xff]
        %v1230 = vld [vmem:[%s352 + $0x16a8] sm:$0xff]
        %v1231 = vld [vmem:[%s352 + $0x16b0] sm:$0xff]
        %v1232 = vld [vmem:[%s352 + $0x16b8] sm:$0xff]
        %v1233 = vld [vmem:[%s352 + $0x16c0] sm:$0xff]
        %v1234 = vld [vmem:[%s352 + $0x16c8] sm:$0xff]
        %v1235 = vld [vmem:[%s352 + $0x16d0] sm:$0xff]
        %v1236 = vld [vmem:[%s352 + $0x16d8] sm:$0xff]
        %v1237 = vld [vmem:[%s352 + $0x16e0] sm:$0xff]
        %v1238 = vld [vmem:[%s352 + $0x16e8] sm:$0xff]
        %v1239 = vld [vmem:[%s352 + $0x16f0] sm:$0xff]
        %v1240 = vld [vmem:[%s352 + $0x16f8] sm:$0xff]
        %v1241 = vld [vmem:[%s352 + $0x1700] sm:$0xff]
        %v1242 = vld [vmem:[%s352 + $0x1708] sm:$0xff]
        %v1243 = vld [vmem:[%s352 + $0x1710] sm:$0xff]
        %v1244 = vld [vmem:[%s352 + $0x1718] sm:$0xff]
        %v1245 = vld [vmem:[%s352 + $0x1720] sm:$0xff]
        %v1246 = vld [vmem:[%s352 + $0x1728] sm:$0xff]
        %v1247 = vld [vmem:[%s352 + $0x1730] sm:$0xff]
        %v1248 = vld [vmem:[%s352 + $0x1738] sm:$0xff]
        %v1249 = vld [vmem:[%s352 + $0x1740] sm:$0xff]
        %v1250 = vld [vmem:[%s352 + $0x1748] sm:$0xff]
        %v1251 = vld [vmem:[%s352 + $0x1750] sm:$0xff]
        %v1252 = vld [vmem:[%s352 + $0x1758] sm:$0xff]
        %v1253 = vld [vmem:[%s352 + $0x1760] sm:$0xff]
        %v1254 = vld [vmem:[%s352 + $0x1768] sm:$0xff]
        %v1255 = vld [vmem:[%s352 + $0x1770] sm:$0xff]
        %v1256 = vld [vmem:[%s352 + $0x1778] sm:$0xff]
        %v1257 = vld [vmem:[%s352 + $0x1780] sm:$0xff]
        %v1258 = vld [vmem:[%s352 + $0x1788] sm:$0xff]
        %v1259 = vld [vmem:[%s352 + $0x1790] sm:$0xff]
        %v1260 = vld [vmem:[%s352 + $0x1798] sm:$0xff]
        %v1261 = vld [vmem:[%s352 + $0x17a0] sm:$0xff]
        %v1262 = vld [vmem:[%s352 + $0x17a8] sm:$0xff]
        %v1263 = vld [vmem:[%s352 + $0x17b0] sm:$0xff]
        %v1264 = vld [vmem:[%s352 + $0x17b8] sm:$0xff]
        %v1265 = vld [vmem:[%s352 + $0x17c0] sm:$0xff]
        %v1266 = vld [vmem:[%s352 + $0x17c8] sm:$0xff]
        %v1267 = vld [vmem:[%s352 + $0x17d0] sm:$0xff]
        %v1268 = vld [vmem:[%s352 + $0x17d8] sm:$0xff]
        %v1269 = vld [vmem:[%s352 + $0x17e0] sm:$0xff]
        %v1270 = vld [vmem:[%s352 + $0x17e8] sm:$0xff]
        %v1271 = vld [vmem:[%s352 + $0x17f0] sm:$0xff]
        %v1272 = vld [vmem:[%s352 + $0x17f8] sm:$0xff]
        %v1273 = vld [vmem:[%s352 + $0x1800] sm:$0xff]
        %v1274 = vld [vmem:[%s352 + $0x1808] sm:$0xff]
        %v1275 = vld [vmem:[%s352 + $0x1810] sm:$0xff]
        %v1276 = vld [vmem:[%s352 + $0x1818] sm:$0xff]
        %v1277 = vld [vmem:[%s352 + $0x1820] sm:$0xff]
        %v1278 = vld [vmem:[%s352 + $0x1828] sm:$0xff]
        %v1279 = vld [vmem:[%s352 + $0x1830] sm:$0xff]
        %v1280 = vld [vmem:[%s352 + $0x1838] sm:$0xff]
        %v1281 = vld [vmem:[%s352 + $0x1840] sm:$0xff]
        %v1282 = vld [vmem:[%s352 + $0x1848] sm:$0xff]
        %v1283 = vld [vmem:[%s352 + $0x1850] sm:$0xff]
        %v1284 = vld [vmem:[%s352 + $0x1858] sm:$0xff]
        %v1285 = vld [vmem:[%s352 + $0x1860] sm:$0xff]
        %v1286 = vld [vmem:[%s352 + $0x1868] sm:$0xff]
        %v1287 = vld [vmem:[%s352 + $0x1870] sm:$0xff]
        %v1288 = vld [vmem:[%s352 + $0x1878] sm:$0xff]
        %v1289 = vld [vmem:[%s352 + $0x1880] sm:$0xff]
        %v1290 = vld [vmem:[%s352 + $0x1888] sm:$0xff]
        %v1291 = vld [vmem:[%s352 + $0x1890] sm:$0xff]
        %v1292 = vld [vmem:[%s352 + $0x1898] sm:$0xff]
        %v1293 = vld [vmem:[%s352 + $0x18a0] sm:$0xff]
        %v1294 = vld [vmem:[%s352 + $0x18a8] sm:$0xff]
        %v1295 = vld [vmem:[%s352 + $0x18b0] sm:$0xff]
        %v1296 = vld [vmem:[%s352 + $0x18b8] sm:$0xff]
        %v1297 = vld [vmem:[%s352 + $0x18c0] sm:$0xff]
        %v1298 = vld [vmem:[%s352 + $0x18c8] sm:$0xff]
        %v1299 = vld [vmem:[%s352 + $0x18d0] sm:$0xff]
        %v1300 = vld [vmem:[%s352 + $0x18d8] sm:$0xff]
        %v1301 = vld [vmem:[%s352 + $0x18e0] sm:$0xff]
        %v1302 = vld [vmem:[%s352 + $0x18e8] sm:$0xff]
        %v1303 = vld [vmem:[%s352 + $0x18f0] sm:$0xff]
        %v1304 = vld [vmem:[%s352 + $0x18f8] sm:$0xff]
        %v1305 = vld [vmem:[%s352 + $0x1900] sm:$0xff]
        %v1306 = vld [vmem:[%s352 + $0x1908] sm:$0xff]
        %v1307 = vld [vmem:[%s352 + $0x1910] sm:$0xff]
        %v1308 = vld [vmem:[%s352 + $0x1918] sm:$0xff]
        %v1309 = vld [vmem:[%s352 + $0x1920] sm:$0xff]
        %v1310 = vld [vmem:[%s352 + $0x1928] sm:$0xff]
        %v1311 = vld [vmem:[%s352 + $0x1930] sm:$0xff]
        %v1312 = vld [vmem:[%s352 + $0x1938] sm:$0xff]
        %v1313 = vld [vmem:[%s352 + $0x1940] sm:$0xff]
        %v1314 = vld [vmem:[%s352 + $0x1948] sm:$0xff]
        %v1315 = vld [vmem:[%s352 + $0x1950] sm:$0xff]
        %v1316 = vld [vmem:[%s352 + $0x1958] sm:$0xff]
        %v1317 = vld [vmem:[%s352 + $0x1960] sm:$0xff]
        %v1318 = vld [vmem:[%s352 + $0x1968] sm:$0xff]
        %v1319 = vld [vmem:[%s352 + $0x1970] sm:$0xff]
        %v1320 = vld [vmem:[%s352 + $0x1978] sm:$0xff]
        %v1321 = vld [vmem:[%s352 + $0x1980] sm:$0xff]
        %v1322 = vld [vmem:[%s352 + $0x1988] sm:$0xff]
        %v1323 = vld [vmem:[%s352 + $0x1990] sm:$0xff]
        %v1324 = vld [vmem:[%s352 + $0x1998] sm:$0xff]
        %v1325 = vld [vmem:[%s352 + $0x19a0] sm:$0xff]
        %v1326 = vld [vmem:[%s352 + $0x19a8] sm:$0xff]
        %v1327 = vld [vmem:[%s352 + $0x19b0] sm:$0xff]
        %v1328 = vld [vmem:[%s352 + $0x19b8] sm:$0xff]
        %v1329 = vld [vmem:[%s352 + $0x19c0] sm:$0xff]
        %v1330 = vld [vmem:[%s352 + $0x19c8] sm:$0xff]
        %v1331 = vld [vmem:[%s352 + $0x19d0] sm:$0xff]
        %v1332 = vld [vmem:[%s352 + $0x19d8] sm:$0xff]
        %v1333 = vld [vmem:[%s352 + $0x19e0] sm:$0xff]
        %v1334 = vld [vmem:[%s352 + $0x19e8] sm:$0xff]
        %v1335 = vld [vmem:[%s352 + $0x19f0] sm:$0xff]
        %v1336 = vld [vmem:[%s352 + $0x19f8] sm:$0xff]
        %v1337 = vld [vmem:[%s352 + $0x1a00] sm:$0xff]
        %v1338 = vld [vmem:[%s352 + $0x1a08] sm:$0xff]
        %v1339 = vld [vmem:[%s352 + $0x1a10] sm:$0xff]
        %v1340 = vld [vmem:[%s352 + $0x1a18] sm:$0xff]
        %v1341 = vld [vmem:[%s352 + $0x1a20] sm:$0xff]
        %v1342 = vld [vmem:[%s352 + $0x1a28] sm:$0xff]
        %v1343 = vld [vmem:[%s352 + $0x1a30] sm:$0xff]
        %v1344 = vld [vmem:[%s352 + $0x1a38] sm:$0xff]
        %v1345 = vld [vmem:[%s352 + $0x1a40] sm:$0xff]
        %v1346 = vld [vmem:[%s352 + $0x1a48] sm:$0xff]
        %v1347 = vld [vmem:[%s352 + $0x1a50] sm:$0xff]
        %v1348 = vld [vmem:[%s352 + $0x1a58] sm:$0xff]
        %v1349 = vld [vmem:[%s352 + $0x1a60] sm:$0xff]
        %v1350 = vld [vmem:[%s352 + $0x1a68] sm:$0xff]
        %v1351 = vld [vmem:[%s352 + $0x1a70] sm:$0xff]
        %v1352 = vld [vmem:[%s352 + $0x1a78] sm:$0xff]
        %v1353 = vld [vmem:[%s352 + $0x1a80] sm:$0xff]
        %v1354 = vld [vmem:[%s352 + $0x1a88] sm:$0xff]
        %v1355 = vld [vmem:[%s352 + $0x1a90] sm:$0xff]
        %v1356 = vld [vmem:[%s352 + $0x1a98] sm:$0xff]
        %v1357 = vld [vmem:[%s352 + $0x1aa0] sm:$0xff]
        %v1358 = vld [vmem:[%s352 + $0x1aa8] sm:$0xff]
        %v1359 = vld [vmem:[%s352 + $0x1ab0] sm:$0xff]
        %v1360 = vld [vmem:[%s352 + $0x1ab8] sm:$0xff]
        %v1361 = vld [vmem:[%s352 + $0x1ac0] sm:$0xff]
        %v1362 = vld [vmem:[%s352 + $0x1ac8] sm:$0xff]
        %v1363 = vld [vmem:[%s352 + $0x1ad0] sm:$0xff]
        %v1364 = vld [vmem:[%s352 + $0x1ad8] sm:$0xff]
        %v1365 = vld [vmem:[%s352 + $0x1ae0] sm:$0xff]
        %v1366 = vld [vmem:[%s352 + $0x1ae8] sm:$0xff]
        %v1367 = vld [vmem:[%s352 + $0x1af0] sm:$0xff]
        %v1368 = vld [vmem:[%s352 + $0x1af8] sm:$0xff]
        %v1369 = vld [vmem:[%s352 + $0x1b00] sm:$0xff]
        %v1370 = vld [vmem:[%s352 + $0x1b08] sm:$0xff]
        %v1371 = vld [vmem:[%s352 + $0x1b10] sm:$0xff]
        %v1372 = vld [vmem:[%s352 + $0x1b18] sm:$0xff]
        %v1373 = vld [vmem:[%s352 + $0x1b20] sm:$0xff]
        %v1374 = vld [vmem:[%s352 + $0x1b28] sm:$0xff]
        %v1375 = vld [vmem:[%s352 + $0x1b30] sm:$0xff]
        %v1376 = vld [vmem:[%s352 + $0x1b38] sm:$0xff]
        %v1377 = vld [vmem:[%s352 + $0x1b40] sm:$0xff]
        %v1378 = vld [vmem:[%s352 + $0x1b48] sm:$0xff]
        %v1379 = vld [vmem:[%s352 + $0x1b50] sm:$0xff]
        %v1380 = vld [vmem:[%s352 + $0x1b58] sm:$0xff]
        %v1381 = vld [vmem:[%s352 + $0x1b60] sm:$0xff]
        %v1382 = vld [vmem:[%s352 + $0x1b68] sm:$0xff]
        %v1383 = vld [vmem:[%s352 + $0x1b70] sm:$0xff]
        %v1384 = vld [vmem:[%s352 + $0x1b78] sm:$0xff]
        %v1385 = vld [vmem:[%s352 + $0x1b80] sm:$0xff]
        %v1386 = vld [vmem:[%s352 + $0x1b88] sm:$0xff]
        %v1387 = vld [vmem:[%s352 + $0x1b90] sm:$0xff]
        %v1388 = vld [vmem:[%s352 + $0x1b98] sm:$0xff]
        %v1389 = vld [vmem:[%s352 + $0x1ba0] sm:$0xff]
        %v1390 = vld [vmem:[%s352 + $0x1ba8] sm:$0xff]
        %v1391 = vld [vmem:[%s352 + $0x1bb0] sm:$0xff]
        %v1392 = vld [vmem:[%s352 + $0x1bb8] sm:$0xff]
        %v1393 = vld [vmem:[%s352 + $0x1bc0] sm:$0xff]
        %v1394 = vld [vmem:[%s352 + $0x1bc8] sm:$0xff]
        %v1395 = vld [vmem:[%s352 + $0x1bd0] sm:$0xff]
        %v1396 = vld [vmem:[%s352 + $0x1bd8] sm:$0xff]
        %v1397 = vld [vmem:[%s352 + $0x1be0] sm:$0xff]
        %v1398 = vld [vmem:[%s352 + $0x1be8] sm:$0xff]
        %v1399 = vld [vmem:[%s352 + $0x1bf0] sm:$0xff]
        %v1400 = vld [vmem:[%s352 + $0x1bf8] sm:$0xff]
        %v1457 = vunpack.c.l.b16 %v449
        %v1458 = vunpack.c.h.b16 %v449
        %v1459 = vunpack.c.l.b16 %v450
        %v1460 = vunpack.c.h.b16 %v450
        %v1461 = vunpack.c.l.b16 %v451
        %v1462 = vunpack.c.h.b16 %v451
        %v1463 = vunpack.c.l.b16 %v452
        %v1464 = vunpack.c.h.b16 %v452
        %v1465 = vunpack.c.l.b16 %v453
        %v1466 = vunpack.c.h.b16 %v453
        %v1467 = vunpack.c.l.b16 %v454
        %v1468 = vunpack.c.h.b16 %v454
        %v1469 = vunpack.c.l.b16 %v455
        %v1470 = vunpack.c.h.b16 %v455
        %v1471 = vunpack.c.l.b16 %v456
        %v1472 = vunpack.c.h.b16 %v456
        %v1473 = vunpack.c.l.b16 %v457
        %v1474 = vunpack.c.h.b16 %v457
        %v1475 = vunpack.c.l.b16 %v458
        %v1476 = vunpack.c.h.b16 %v458
        %v1477 = vunpack.c.l.b16 %v459
        %v1478 = vunpack.c.h.b16 %v459
        %v1479 = vunpack.c.l.b16 %v460
        %v1480 = vunpack.c.h.b16 %v460
        %v1481 = vunpack.c.l.b16 %v461
        %v1482 = vunpack.c.h.b16 %v461
        %v1483 = vunpack.c.l.b16 %v462
        %v1484 = vunpack.c.h.b16 %v462
        %v1485 = vunpack.c.l.b16 %v463
        %v1486 = vunpack.c.h.b16 %v463
        %v1487 = vunpack.c.l.b16 %v464
        %v1488 = vunpack.c.h.b16 %v464
        %v1489 = vunpack.c.l.b16 %v465
        %v1490 = vunpack.c.h.b16 %v465
        %v1491 = vunpack.c.l.b16 %v466
        %v1492 = vunpack.c.h.b16 %v466
        %v1493 = vunpack.c.l.b16 %v467
        %v1494 = vunpack.c.h.b16 %v467
        %v1495 = vunpack.c.l.b16 %v468
        %v1496 = vunpack.c.h.b16 %v468
        %v1497 = vunpack.c.l.b16 %v469
        %v1498 = vunpack.c.h.b16 %v469
        %v1499 = vunpack.c.l.b16 %v470
        %v1500 = vunpack.c.h.b16 %v470
        %v1501 = vunpack.c.l.b16 %v471
        %v1502 = vunpack.c.h.b16 %v471
        %v1503 = vunpack.c.l.b16 %v472
        %v1504 = vunpack.c.h.b16 %v472
        %v1505 = vunpack.c.l.b16 %v473
        %v1506 = vunpack.c.h.b16 %v473
        %v1507 = vunpack.c.l.b16 %v474
        %v1508 = vunpack.c.h.b16 %v474
        %v1509 = vunpack.c.l.b16 %v475
        %v1510 = vunpack.c.h.b16 %v475
        %v1511 = vunpack.c.l.b16 %v476
        %v1512 = vunpack.c.h.b16 %v476
        %v1513 = vunpack.c.l.b16 %v477
        %v1514 = vunpack.c.h.b16 %v477
        %v1515 = vunpack.c.l.b16 %v478
        %v1516 = vunpack.c.h.b16 %v478
        %v1517 = vunpack.c.l.b16 %v479
        %v1518 = vunpack.c.h.b16 %v479
        %v1519 = vunpack.c.l.b16 %v480
        %v1520 = vunpack.c.h.b16 %v480
        %v1521 = vunpack.c.l.b16 %v481
        %v1522 = vunpack.c.h.b16 %v481
        %v1523 = vunpack.c.l.b16 %v482
        %v1524 = vunpack.c.h.b16 %v482
        %v1525 = vunpack.c.l.b16 %v483
        %v1526 = vunpack.c.h.b16 %v483
        %v1527 = vunpack.c.l.b16 %v484
        %v1528 = vunpack.c.h.b16 %v484
        %v1529 = vunpack.c.l.b16 %v485
        %v1530 = vunpack.c.h.b16 %v485
        %v1531 = vunpack.c.l.b16 %v486
        %v1532 = vunpack.c.h.b16 %v486
        %v1533 = vunpack.c.l.b16 %v487
        %v1534 = vunpack.c.h.b16 %v487
        %v1535 = vunpack.c.l.b16 %v488
        %v1536 = vunpack.c.h.b16 %v488
        %v1537 = vunpack.c.l.b16 %v489
        %v1538 = vunpack.c.h.b16 %v489
        %v1539 = vunpack.c.l.b16 %v490
        %v1540 = vunpack.c.h.b16 %v490
        %v1541 = vunpack.c.l.b16 %v491
        %v1542 = vunpack.c.h.b16 %v491
        %v1543 = vunpack.c.l.b16 %v492
        %v1544 = vunpack.c.h.b16 %v492
        %v1545 = vunpack.c.l.b16 %v493
        %v1546 = vunpack.c.h.b16 %v493
        %v1547 = vunpack.c.l.b16 %v494
        %v1548 = vunpack.c.h.b16 %v494
        %v1549 = vunpack.c.l.b16 %v495
        %v1550 = vunpack.c.h.b16 %v495
        %v1551 = vunpack.c.l.b16 %v496
        %v1552 = vunpack.c.h.b16 %v496
        %v1553 = vunpack.c.l.b16 %v497
        %v1554 = vunpack.c.h.b16 %v497
        %v1555 = vunpack.c.l.b16 %v498
        %v1556 = vunpack.c.h.b16 %v498
        %v1557 = vunpack.c.l.b16 %v499
        %v1558 = vunpack.c.h.b16 %v499
        %v1559 = vunpack.c.l.b16 %v500
        %v1560 = vunpack.c.h.b16 %v500
        %v1561 = vunpack.c.l.b16 %v501
        %v1562 = vunpack.c.h.b16 %v501
        %v1563 = vunpack.c.l.b16 %v502
        %v1564 = vunpack.c.h.b16 %v502
        %v1565 = vunpack.c.l.b16 %v503
        %v1566 = vunpack.c.h.b16 %v503
        %v1567 = vunpack.c.l.b16 %v504
        %v1568 = vunpack.c.h.b16 %v504
        %v1569 = vpack.c.b16 %v1485, %v1457
        %v1570 = vpack.c.b16 %v1486, %v1458
        %v1571 = vpack.c.b16 %v1487, %v1459
        %v1572 = vpack.c.b16 %v1488, %v1460
        %v1573 = vpack.c.b16 %v1489, %v1461
        %v1574 = vpack.c.b16 %v1490, %v1462
        %v1575 = vpack.c.b16 %v1491, %v1463
        %v1576 = vpack.c.b16 %v1492, %v1464
        %v1577 = vpack.c.b16 %v1493, %v1465
        %v1578 = vpack.c.b16 %v1494, %v1466
        %v1579 = vpack.c.b16 %v1495, %v1467
        %v1580 = vpack.c.b16 %v1496, %v1468
        %v1581 = vpack.c.b16 %v1497, %v1469
        %v1582 = vpack.c.b16 %v1498, %v1470
        %v1583 = vpack.c.b16 %v1499, %v1471
        %v1584 = vpack.c.b16 %v1500, %v1472
        %v1585 = vpack.c.b16 %v1501, %v1473
        %v1586 = vpack.c.b16 %v1502, %v1474
        %v1587 = vpack.c.b16 %v1503, %v1475
        %v1588 = vpack.c.b16 %v1504, %v1476
        %v1589 = vpack.c.b16 %v1505, %v1477
        %v1590 = vpack.c.b16 %v1506, %v1478
        %v1591 = vpack.c.b16 %v1507, %v1479
        %v1592 = vpack.c.b16 %v1508, %v1480
        %v1593 = vpack.c.b16 %v1509, %v1481
        %v1594 = vpack.c.b16 %v1510, %v1482
        %v1595 = vpack.c.b16 %v1511, %v1483
        %v1596 = vpack.c.b16 %v1512, %v1484
        %v1597 = vpack.c.b16 %v1541, %v1513
        %v1598 = vpack.c.b16 %v1542, %v1514
        %v1599 = vpack.c.b16 %v1543, %v1515
        %v1600 = vpack.c.b16 %v1544, %v1516
        %v1601 = vpack.c.b16 %v1545, %v1517
        %v1602 = vpack.c.b16 %v1546, %v1518
        %v1603 = vpack.c.b16 %v1547, %v1519
        %v1604 = vpack.c.b16 %v1548, %v1520
        %v1605 = vpack.c.b16 %v1549, %v1521
        %v1606 = vpack.c.b16 %v1550, %v1522
        %v1607 = vpack.c.b16 %v1551, %v1523
        %v1608 = vpack.c.b16 %v1552, %v1524
        %v1609 = vpack.c.b16 %v1553, %v1525
        %v1610 = vpack.c.b16 %v1554, %v1526
        %v1611 = vpack.c.b16 %v1555, %v1527
        %v1612 = vpack.c.b16 %v1556, %v1528
        %v1613 = vpack.c.b16 %v1557, %v1529
        %v1614 = vpack.c.b16 %v1558, %v1530
        %v1615 = vpack.c.b16 %v1559, %v1531
        %v1616 = vpack.c.b16 %v1560, %v1532
        %v1617 = vpack.c.b16 %v1561, %v1533
        %v1618 = vpack.c.b16 %v1562, %v1534
        %v1619 = vpack.c.b16 %v1563, %v1535
        %v1620 = vpack.c.b16 %v1564, %v1536
        %v1621 = vpack.c.b16 %v1565, %v1537
        %v1622 = vpack.c.b16 %v1566, %v1538
        %v1623 = vpack.c.b16 %v1567, %v1539
        %v1624 = vpack.c.b16 %v1568, %v1540
        %v2577 = vunpack.c.l.b16 %v505
        %v2578 = vunpack.c.h.b16 %v505
        %v2579 = vunpack.c.l.b16 %v506
        %v2580 = vunpack.c.h.b16 %v506
        %v2581 = vunpack.c.l.b16 %v507
        %v2582 = vunpack.c.h.b16 %v507
        %v2583 = vunpack.c.l.b16 %v508
        %v2584 = vunpack.c.h.b16 %v508
        %v2585 = vunpack.c.l.b16 %v509
        %v2586 = vunpack.c.h.b16 %v509
        %v2587 = vunpack.c.l.b16 %v510
        %v2588 = vunpack.c.h.b16 %v510
        %v2589 = vunpack.c.l.b16 %v511
        %v2590 = vunpack.c.h.b16 %v511
        %v2591 = vunpack.c.l.b16 %v512
        %v2592 = vunpack.c.h.b16 %v512
        %v2593 = vunpack.c.l.b16 %v513
        %v2594 = vunpack.c.h.b16 %v513
        %v2595 = vunpack.c.l.b16 %v514
        %v2596 = vunpack.c.h.b16 %v514
        %v2597 = vunpack.c.l.b16 %v515
        %v2598 = vunpack.c.h.b16 %v515
        %v2599 = vunpack.c.l.b16 %v516
        %v2600 = vunpack.c.h.b16 %v516
        %v2601 = vunpack.c.l.b16 %v517
        %v2602 = vunpack.c.h.b16 %v517
        %v2603 = vunpack.c.l.b16 %v518
        %v2604 = vunpack.c.h.b16 %v518
        %v2605 = vunpack.c.l.b16 %v519
        %v2606 = vunpack.c.h.b16 %v519
        %v2607 = vunpack.c.l.b16 %v520
        %v2608 = vunpack.c.h.b16 %v520
        %v2609 = vunpack.c.l.b16 %v521
        %v2610 = vunpack.c.h.b16 %v521
        %v2611 = vunpack.c.l.b16 %v522
        %v2612 = vunpack.c.h.b16 %v522
        %v2613 = vunpack.c.l.b16 %v523
        %v2614 = vunpack.c.h.b16 %v523
        %v2615 = vunpack.c.l.b16 %v524
        %v2616 = vunpack.c.h.b16 %v524
        %v2617 = vunpack.c.l.b16 %v525
        %v2618 = vunpack.c.h.b16 %v525
        %v2619 = vunpack.c.l.b16 %v526
        %v2620 = vunpack.c.h.b16 %v526
        %v2621 = vunpack.c.l.b16 %v527
        %v2622 = vunpack.c.h.b16 %v527
        %v2623 = vunpack.c.l.b16 %v528
        %v2624 = vunpack.c.h.b16 %v528
        %v2625 = vunpack.c.l.b16 %v529
        %v2626 = vunpack.c.h.b16 %v529
        %v2627 = vunpack.c.l.b16 %v530
        %v2628 = vunpack.c.h.b16 %v530
        %v2629 = vunpack.c.l.b16 %v531
        %v2630 = vunpack.c.h.b16 %v531
        %v2631 = vunpack.c.l.b16 %v532
        %v2632 = vunpack.c.h.b16 %v532
        %v2633 = vunpack.c.l.b16 %v533
        %v2634 = vunpack.c.h.b16 %v533
        %v2635 = vunpack.c.l.b16 %v534
        %v2636 = vunpack.c.h.b16 %v534
        %v2637 = vunpack.c.l.b16 %v535
        %v2638 = vunpack.c.h.b16 %v535
        %v2639 = vunpack.c.l.b16 %v536
        %v2640 = vunpack.c.h.b16 %v536
        %v2641 = vunpack.c.l.b16 %v537
        %v2642 = vunpack.c.h.b16 %v537
        %v2643 = vunpack.c.l.b16 %v538
        %v2644 = vunpack.c.h.b16 %v538
        %v2645 = vunpack.c.l.b16 %v539
        %v2646 = vunpack.c.h.b16 %v539
        %v2647 = vunpack.c.l.b16 %v540
        %v2648 = vunpack.c.h.b16 %v540
        %v2649 = vunpack.c.l.b16 %v541
        %v2650 = vunpack.c.h.b16 %v541
        %v2651 = vunpack.c.l.b16 %v542
        %v2652 = vunpack.c.h.b16 %v542
        %v2653 = vunpack.c.l.b16 %v543
        %v2654 = vunpack.c.h.b16 %v543
        %v2655 = vunpack.c.l.b16 %v544
        %v2656 = vunpack.c.h.b16 %v544
        %v2657 = vunpack.c.l.b16 %v545
        %v2658 = vunpack.c.h.b16 %v545
        %v2659 = vunpack.c.l.b16 %v546
        %v2660 = vunpack.c.h.b16 %v546
        %v2661 = vunpack.c.l.b16 %v547
        %v2662 = vunpack.c.h.b16 %v547
        %v2663 = vunpack.c.l.b16 %v548
        %v2664 = vunpack.c.h.b16 %v548
        %v2665 = vunpack.c.l.b16 %v549
        %v2666 = vunpack.c.h.b16 %v549
        %v2667 = vunpack.c.l.b16 %v550
        %v2668 = vunpack.c.h.b16 %v550
        %v2669 = vunpack.c.l.b16 %v551
        %v2670 = vunpack.c.h.b16 %v551
        %v2671 = vunpack.c.l.b16 %v552
        %v2672 = vunpack.c.h.b16 %v552
        %v2673 = vunpack.c.l.b16 %v553
        %v2674 = vunpack.c.h.b16 %v553
        %v2675 = vunpack.c.l.b16 %v554
        %v2676 = vunpack.c.h.b16 %v554
        %v2677 = vunpack.c.l.b16 %v555
        %v2678 = vunpack.c.h.b16 %v555
        %v2679 = vunpack.c.l.b16 %v556
        %v2680 = vunpack.c.h.b16 %v556
        %v2681 = vunpack.c.l.b16 %v557
        %v2682 = vunpack.c.h.b16 %v557
        %v2683 = vunpack.c.l.b16 %v558
        %v2684 = vunpack.c.h.b16 %v558
        %v2685 = vunpack.c.l.b16 %v559
        %v2686 = vunpack.c.h.b16 %v559
        %v2687 = vunpack.c.l.b16 %v560
        %v2688 = vunpack.c.h.b16 %v560
        %v2689 = vunpack.c.l.b16 %v561
        %v2690 = vunpack.c.h.b16 %v561
        %v2691 = vunpack.c.l.b16 %v562
        %v2692 = vunpack.c.h.b16 %v562
        %v2693 = vunpack.c.l.b16 %v563
        %v2694 = vunpack.c.h.b16 %v563
        %v2695 = vunpack.c.l.b16 %v564
        %v2696 = vunpack.c.h.b16 %v564
        %v2697 = vunpack.c.l.b16 %v565
        %v2698 = vunpack.c.h.b16 %v565
        %v2699 = vunpack.c.l.b16 %v566
        %v2700 = vunpack.c.h.b16 %v566
        %v2701 = vunpack.c.l.b16 %v567
        %v2702 = vunpack.c.h.b16 %v567
        %v2703 = vunpack.c.l.b16 %v568
        %v2704 = vunpack.c.h.b16 %v568
        %v2705 = vunpack.c.l.b16 %v569
        %v2706 = vunpack.c.h.b16 %v569
        %v2707 = vunpack.c.l.b16 %v570
        %v2708 = vunpack.c.h.b16 %v570
        %v2709 = vunpack.c.l.b16 %v571
        %v2710 = vunpack.c.h.b16 %v571
        %v2711 = vunpack.c.l.b16 %v572
        %v2712 = vunpack.c.h.b16 %v572
        %v2713 = vunpack.c.l.b16 %v573
        %v2714 = vunpack.c.h.b16 %v573
        %v2715 = vunpack.c.l.b16 %v574
        %v2716 = vunpack.c.h.b16 %v574
        %v2717 = vunpack.c.l.b16 %v575
        %v2718 = vunpack.c.h.b16 %v575
        %v2719 = vunpack.c.l.b16 %v576
        %v2720 = vunpack.c.h.b16 %v576
        %v2721 = vunpack.c.l.b16 %v577
        %v2722 = vunpack.c.h.b16 %v577
        %v2723 = vunpack.c.l.b16 %v578
        %v2724 = vunpack.c.h.b16 %v578
        %v2725 = vunpack.c.l.b16 %v579
        %v2726 = vunpack.c.h.b16 %v579
        %v2727 = vunpack.c.l.b16 %v580
        %v2728 = vunpack.c.h.b16 %v580
        %v2729 = vunpack.c.l.b16 %v581
        %v2730 = vunpack.c.h.b16 %v581
        %v2731 = vunpack.c.l.b16 %v582
        %v2732 = vunpack.c.h.b16 %v582
        %v2733 = vunpack.c.l.b16 %v583
        %v2734 = vunpack.c.h.b16 %v583
        %v2735 = vunpack.c.l.b16 %v584
        %v2736 = vunpack.c.h.b16 %v584
        %v2737 = vunpack.c.l.b16 %v585
        %v2738 = vunpack.c.h.b16 %v585
        %v2739 = vunpack.c.l.b16 %v586
        %v2740 = vunpack.c.h.b16 %v586
        %v2741 = vunpack.c.l.b16 %v587
        %v2742 = vunpack.c.h.b16 %v587
        %v2743 = vunpack.c.l.b16 %v588
        %v2744 = vunpack.c.h.b16 %v588
        %v2745 = vunpack.c.l.b16 %v589
        %v2746 = vunpack.c.h.b16 %v589
        %v2747 = vunpack.c.l.b16 %v590
        %v2748 = vunpack.c.h.b16 %v590
        %v2749 = vunpack.c.l.b16 %v591
        %v2750 = vunpack.c.h.b16 %v591
        %v2751 = vunpack.c.l.b16 %v592
        %v2752 = vunpack.c.h.b16 %v592
        %v2753 = vunpack.c.l.b16 %v593
        %v2754 = vunpack.c.h.b16 %v593
        %v2755 = vunpack.c.l.b16 %v594
        %v2756 = vunpack.c.h.b16 %v594
        %v2757 = vunpack.c.l.b16 %v595
        %v2758 = vunpack.c.h.b16 %v595
        %v2759 = vunpack.c.l.b16 %v596
        %v2760 = vunpack.c.h.b16 %v596
        %v2761 = vunpack.c.l.b16 %v597
        %v2762 = vunpack.c.h.b16 %v597
        %v2763 = vunpack.c.l.b16 %v598
        %v2764 = vunpack.c.h.b16 %v598
        %v2765 = vunpack.c.l.b16 %v599
        %v2766 = vunpack.c.h.b16 %v599
        %v2767 = vunpack.c.l.b16 %v600
        %v2768 = vunpack.c.h.b16 %v600
        %v2769 = vunpack.c.l.b16 %v601
        %v2770 = vunpack.c.h.b16 %v601
        %v2771 = vunpack.c.l.b16 %v602
        %v2772 = vunpack.c.h.b16 %v602
        %v2773 = vunpack.c.l.b16 %v603
        %v2774 = vunpack.c.h.b16 %v603
        %v2775 = vunpack.c.l.b16 %v604
        %v2776 = vunpack.c.h.b16 %v604
        %v2777 = vunpack.c.l.b16 %v605
        %v2778 = vunpack.c.h.b16 %v605
        %v2779 = vunpack.c.l.b16 %v606
        %v2780 = vunpack.c.h.b16 %v606
        %v2781 = vunpack.c.l.b16 %v607
        %v2782 = vunpack.c.h.b16 %v607
        %v2783 = vunpack.c.l.b16 %v608
        %v2784 = vunpack.c.h.b16 %v608
        %v2785 = vunpack.c.l.b16 %v609
        %v2786 = vunpack.c.h.b16 %v609
        %v2787 = vunpack.c.l.b16 %v610
        %v2788 = vunpack.c.h.b16 %v610
        %v2789 = vunpack.c.l.b16 %v611
        %v2790 = vunpack.c.h.b16 %v611
        %v2791 = vunpack.c.l.b16 %v612
        %v2792 = vunpack.c.h.b16 %v612
        %v2793 = vunpack.c.l.b16 %v613
        %v2794 = vunpack.c.h.b16 %v613
        %v2795 = vunpack.c.l.b16 %v614
        %v2796 = vunpack.c.h.b16 %v614
        %v2797 = vunpack.c.l.b16 %v615
        %v2798 = vunpack.c.h.b16 %v615
        %v2799 = vunpack.c.l.b16 %v616
        %v2800 = vunpack.c.h.b16 %v616
        %v2801 = vunpack.c.l.b16 %v617
        %v2802 = vunpack.c.h.b16 %v617
        %v2803 = vunpack.c.l.b16 %v618
        %v2804 = vunpack.c.h.b16 %v618
        %v2805 = vunpack.c.l.b16 %v619
        %v2806 = vunpack.c.h.b16 %v619
        %v2807 = vunpack.c.l.b16 %v620
        %v2808 = vunpack.c.h.b16 %v620
        %v2809 = vunpack.c.l.b16 %v621
        %v2810 = vunpack.c.h.b16 %v621
        %v2811 = vunpack.c.l.b16 %v622
        %v2812 = vunpack.c.h.b16 %v622
        %v2813 = vunpack.c.l.b16 %v623
        %v2814 = vunpack.c.h.b16 %v623
        %v2815 = vunpack.c.l.b16 %v624
        %v2816 = vunpack.c.h.b16 %v624
        %v2817 = vunpack.c.l.b16 %v625
        %v2818 = vunpack.c.h.b16 %v625
        %v2819 = vunpack.c.l.b16 %v626
        %v2820 = vunpack.c.h.b16 %v626
        %v2821 = vunpack.c.l.b16 %v627
        %v2822 = vunpack.c.h.b16 %v627
        %v2823 = vunpack.c.l.b16 %v628
        %v2824 = vunpack.c.h.b16 %v628
        %v2825 = vunpack.c.l.b16 %v629
        %v2826 = vunpack.c.h.b16 %v629
        %v2827 = vunpack.c.l.b16 %v630
        %v2828 = vunpack.c.h.b16 %v630
        %v2829 = vunpack.c.l.b16 %v631
        %v2830 = vunpack.c.h.b16 %v631
        %v2831 = vunpack.c.l.b16 %v632
        %v2832 = vunpack.c.h.b16 %v632
        %v2833 = vunpack.c.l.b16 %v633
        %v2834 = vunpack.c.h.b16 %v633
        %v2835 = vunpack.c.l.b16 %v634
        %v2836 = vunpack.c.h.b16 %v634
        %v2837 = vunpack.c.l.b16 %v635
        %v2838 = vunpack.c.h.b16 %v635
        %v2839 = vunpack.c.l.b16 %v636
        %v2840 = vunpack.c.h.b16 %v636
        %v2841 = vunpack.c.l.b16 %v637
        %v2842 = vunpack.c.h.b16 %v637
        %v2843 = vunpack.c.l.b16 %v638
        %v2844 = vunpack.c.h.b16 %v638
        %v2845 = vunpack.c.l.b16 %v639
        %v2846 = vunpack.c.h.b16 %v639
        %v2847 = vunpack.c.l.b16 %v640
        %v2848 = vunpack.c.h.b16 %v640
        %v2849 = vunpack.c.l.b16 %v641
        %v2850 = vunpack.c.h.b16 %v641
        %v2851 = vunpack.c.l.b16 %v642
        %v2852 = vunpack.c.h.b16 %v642
        %v2853 = vunpack.c.l.b16 %v643
        %v2854 = vunpack.c.h.b16 %v643
        %v2855 = vunpack.c.l.b16 %v644
        %v2856 = vunpack.c.h.b16 %v644
        %v2857 = vunpack.c.l.b16 %v645
        %v2858 = vunpack.c.h.b16 %v645
        %v2859 = vunpack.c.l.b16 %v646
        %v2860 = vunpack.c.h.b16 %v646
        %v2861 = vunpack.c.l.b16 %v647
        %v2862 = vunpack.c.h.b16 %v647
        %v2863 = vunpack.c.l.b16 %v648
        %v2864 = vunpack.c.h.b16 %v648
        %v2865 = vunpack.c.l.b16 %v649
        %v2866 = vunpack.c.h.b16 %v649
        %v2867 = vunpack.c.l.b16 %v650
        %v2868 = vunpack.c.h.b16 %v650
        %v2869 = vunpack.c.l.b16 %v651
        %v2870 = vunpack.c.h.b16 %v651
        %v2871 = vunpack.c.l.b16 %v652
        %v2872 = vunpack.c.h.b16 %v652
        %v2873 = vunpack.c.l.b16 %v653
        %v2874 = vunpack.c.h.b16 %v653
        %v2875 = vunpack.c.l.b16 %v654
        %v2876 = vunpack.c.h.b16 %v654
        %v2877 = vunpack.c.l.b16 %v655
        %v2878 = vunpack.c.h.b16 %v655
        %v2879 = vunpack.c.l.b16 %v656
        %v2880 = vunpack.c.h.b16 %v656
        %v2881 = vunpack.c.l.b16 %v657
        %v2882 = vunpack.c.h.b16 %v657
        %v2883 = vunpack.c.l.b16 %v658
        %v2884 = vunpack.c.h.b16 %v658
        %v2885 = vunpack.c.l.b16 %v659
        %v2886 = vunpack.c.h.b16 %v659
        %v2887 = vunpack.c.l.b16 %v660
        %v2888 = vunpack.c.h.b16 %v660
        %v2889 = vunpack.c.l.b16 %v661
        %v2890 = vunpack.c.h.b16 %v661
        %v2891 = vunpack.c.l.b16 %v662
        %v2892 = vunpack.c.h.b16 %v662
        %v2893 = vunpack.c.l.b16 %v663
        %v2894 = vunpack.c.h.b16 %v663
        %v2895 = vunpack.c.l.b16 %v664
        %v2896 = vunpack.c.h.b16 %v664
        %v2897 = vunpack.c.l.b16 %v665
        %v2898 = vunpack.c.h.b16 %v665
        %v2899 = vunpack.c.l.b16 %v666
        %v2900 = vunpack.c.h.b16 %v666
        %v2901 = vunpack.c.l.b16 %v667
        %v2902 = vunpack.c.h.b16 %v667
        %v2903 = vunpack.c.l.b16 %v668
        %v2904 = vunpack.c.h.b16 %v668
        %v2905 = vunpack.c.l.b16 %v669
        %v2906 = vunpack.c.h.b16 %v669
        %v2907 = vunpack.c.l.b16 %v670
        %v2908 = vunpack.c.h.b16 %v670
        %v2909 = vunpack.c.l.b16 %v671
        %v2910 = vunpack.c.h.b16 %v671
        %v2911 = vunpack.c.l.b16 %v672
        %v2912 = vunpack.c.h.b16 %v672
        %v2913 = vunpack.c.l.b16 %v673
        %v2914 = vunpack.c.h.b16 %v673
        %v2915 = vunpack.c.l.b16 %v674
        %v2916 = vunpack.c.h.b16 %v674
        %v2917 = vunpack.c.l.b16 %v675
        %v2918 = vunpack.c.h.b16 %v675
        %v2919 = vunpack.c.l.b16 %v676
        %v2920 = vunpack.c.h.b16 %v676
        %v2921 = vunpack.c.l.b16 %v677
        %v2922 = vunpack.c.h.b16 %v677
        %v2923 = vunpack.c.l.b16 %v678
        %v2924 = vunpack.c.h.b16 %v678
        %v2925 = vunpack.c.l.b16 %v679
        %v2926 = vunpack.c.h.b16 %v679
        %v2927 = vunpack.c.l.b16 %v680
        %v2928 = vunpack.c.h.b16 %v680
        %v2929 = vunpack.c.l.b16 %v681
        %v2930 = vunpack.c.h.b16 %v681
        %v2931 = vunpack.c.l.b16 %v682
        %v2932 = vunpack.c.h.b16 %v682
        %v2933 = vunpack.c.l.b16 %v683
        %v2934 = vunpack.c.h.b16 %v683
        %v2935 = vunpack.c.l.b16 %v684
        %v2936 = vunpack.c.h.b16 %v684
        %v2937 = vunpack.c.l.b16 %v685
        %v2938 = vunpack.c.h.b16 %v685
        %v2939 = vunpack.c.l.b16 %v686
        %v2940 = vunpack.c.h.b16 %v686
        %v2941 = vunpack.c.l.b16 %v687
        %v2942 = vunpack.c.h.b16 %v687
        %v2943 = vunpack.c.l.b16 %v688
        %v2944 = vunpack.c.h.b16 %v688
        %v2945 = vunpack.c.l.b16 %v689
        %v2946 = vunpack.c.h.b16 %v689
        %v2947 = vunpack.c.l.b16 %v690
        %v2948 = vunpack.c.h.b16 %v690
        %v2949 = vunpack.c.l.b16 %v691
        %v2950 = vunpack.c.h.b16 %v691
        %v2951 = vunpack.c.l.b16 %v692
        %v2952 = vunpack.c.h.b16 %v692
        %v2953 = vunpack.c.l.b16 %v693
        %v2954 = vunpack.c.h.b16 %v693
        %v2955 = vunpack.c.l.b16 %v694
        %v2956 = vunpack.c.h.b16 %v694
        %v2957 = vunpack.c.l.b16 %v695
        %v2958 = vunpack.c.h.b16 %v695
        %v2959 = vunpack.c.l.b16 %v696
        %v2960 = vunpack.c.h.b16 %v696
        %v2961 = vunpack.c.l.b16 %v697
        %v2962 = vunpack.c.h.b16 %v697
        %v2963 = vunpack.c.l.b16 %v698
        %v2964 = vunpack.c.h.b16 %v698
        %v2965 = vunpack.c.l.b16 %v699
        %v2966 = vunpack.c.h.b16 %v699
        %v2967 = vunpack.c.l.b16 %v700
        %v2968 = vunpack.c.h.b16 %v700
        %v2969 = vunpack.c.l.b16 %v701
        %v2970 = vunpack.c.h.b16 %v701
        %v2971 = vunpack.c.l.b16 %v702
        %v2972 = vunpack.c.h.b16 %v702
        %v2973 = vunpack.c.l.b16 %v703
        %v2974 = vunpack.c.h.b16 %v703
        %v2975 = vunpack.c.l.b16 %v704
        %v2976 = vunpack.c.h.b16 %v704
        %v2977 = vunpack.c.l.b16 %v705
        %v2978 = vunpack.c.h.b16 %v705
        %v2979 = vunpack.c.l.b16 %v706
        %v2980 = vunpack.c.h.b16 %v706
        %v2981 = vunpack.c.l.b16 %v707
        %v2982 = vunpack.c.h.b16 %v707
        %v2983 = vunpack.c.l.b16 %v708
        %v2984 = vunpack.c.h.b16 %v708
        %v2985 = vunpack.c.l.b16 %v709
        %v2986 = vunpack.c.h.b16 %v709
        %v2987 = vunpack.c.l.b16 %v710
        %v2988 = vunpack.c.h.b16 %v710
        %v2989 = vunpack.c.l.b16 %v711
        %v2990 = vunpack.c.h.b16 %v711
        %v2991 = vunpack.c.l.b16 %v712
        %v2992 = vunpack.c.h.b16 %v712
        %v2993 = vunpack.c.l.b16 %v713
        %v2994 = vunpack.c.h.b16 %v713
        %v2995 = vunpack.c.l.b16 %v714
        %v2996 = vunpack.c.h.b16 %v714
        %v2997 = vunpack.c.l.b16 %v715
        %v2998 = vunpack.c.h.b16 %v715
        %v2999 = vunpack.c.l.b16 %v716
        %v3000 = vunpack.c.h.b16 %v716
        %v3001 = vunpack.c.l.b16 %v717
        %v3002 = vunpack.c.h.b16 %v717
        %v3003 = vunpack.c.l.b16 %v718
        %v3004 = vunpack.c.h.b16 %v718
        %v3005 = vunpack.c.l.b16 %v719
        %v3006 = vunpack.c.h.b16 %v719
        %v3007 = vunpack.c.l.b16 %v720
        %v3008 = vunpack.c.h.b16 %v720
        %v3009 = vunpack.c.l.b16 %v721
        %v3010 = vunpack.c.h.b16 %v721
        %v3011 = vunpack.c.l.b16 %v722
        %v3012 = vunpack.c.h.b16 %v722
        %v3013 = vunpack.c.l.b16 %v723
        %v3014 = vunpack.c.h.b16 %v723
        %v3015 = vunpack.c.l.b16 %v724
        %v3016 = vunpack.c.h.b16 %v724
        %v3017 = vunpack.c.l.b16 %v725
        %v3018 = vunpack.c.h.b16 %v725
        %v3019 = vunpack.c.l.b16 %v726
        %v3020 = vunpack.c.h.b16 %v726
        %v3021 = vunpack.c.l.b16 %v727
        %v3022 = vunpack.c.h.b16 %v727
        %v3023 = vunpack.c.l.b16 %v728
        %v3024 = vunpack.c.h.b16 %v728
        %v3025 = vunpack.c.l.b16 %v729
        %v3026 = vunpack.c.h.b16 %v729
        %v3027 = vunpack.c.l.b16 %v730
        %v3028 = vunpack.c.h.b16 %v730
        %v3029 = vunpack.c.l.b16 %v731
        %v3030 = vunpack.c.h.b16 %v731
        %v3031 = vunpack.c.l.b16 %v732
        %v3032 = vunpack.c.h.b16 %v732
        %v3033 = vunpack.c.l.b16 %v733
        %v3034 = vunpack.c.h.b16 %v733
        %v3035 = vunpack.c.l.b16 %v734
        %v3036 = vunpack.c.h.b16 %v734
        %v3037 = vunpack.c.l.b16 %v735
        %v3038 = vunpack.c.h.b16 %v735
        %v3039 = vunpack.c.l.b16 %v736
        %v3040 = vunpack.c.h.b16 %v736
        %v3041 = vunpack.c.l.b16 %v737
        %v3042 = vunpack.c.h.b16 %v737
        %v3043 = vunpack.c.l.b16 %v738
        %v3044 = vunpack.c.h.b16 %v738
        %v3045 = vunpack.c.l.b16 %v739
        %v3046 = vunpack.c.h.b16 %v739
        %v3047 = vunpack.c.l.b16 %v740
        %v3048 = vunpack.c.h.b16 %v740
        %v3049 = vunpack.c.l.b16 %v741
        %v3050 = vunpack.c.h.b16 %v741
        %v3051 = vunpack.c.l.b16 %v742
        %v3052 = vunpack.c.h.b16 %v742
        %v3053 = vunpack.c.l.b16 %v743
        %v3054 = vunpack.c.h.b16 %v743
        %v3055 = vunpack.c.l.b16 %v744
        %v3056 = vunpack.c.h.b16 %v744
        %v3057 = vunpack.c.l.b16 %v745
        %v3058 = vunpack.c.h.b16 %v745
        %v3059 = vunpack.c.l.b16 %v746
        %v3060 = vunpack.c.h.b16 %v746
        %v3061 = vunpack.c.l.b16 %v747
        %v3062 = vunpack.c.h.b16 %v747
        %v3063 = vunpack.c.l.b16 %v748
        %v3064 = vunpack.c.h.b16 %v748
        %v3065 = vunpack.c.l.b16 %v749
        %v3066 = vunpack.c.h.b16 %v749
        %v3067 = vunpack.c.l.b16 %v750
        %v3068 = vunpack.c.h.b16 %v750
        %v3069 = vunpack.c.l.b16 %v751
        %v3070 = vunpack.c.h.b16 %v751
        %v3071 = vunpack.c.l.b16 %v752
        %v3072 = vunpack.c.h.b16 %v752
        %v3073 = vunpack.c.l.b16 %v753
        %v3074 = vunpack.c.h.b16 %v753
        %v3075 = vunpack.c.l.b16 %v754
        %v3076 = vunpack.c.h.b16 %v754
        %v3077 = vunpack.c.l.b16 %v755
        %v3078 = vunpack.c.h.b16 %v755
        %v3079 = vunpack.c.l.b16 %v756
        %v3080 = vunpack.c.h.b16 %v756
        %v3081 = vunpack.c.l.b16 %v757
        %v3082 = vunpack.c.h.b16 %v757
        %v3083 = vunpack.c.l.b16 %v758
        %v3084 = vunpack.c.h.b16 %v758
        %v3085 = vunpack.c.l.b16 %v759
        %v3086 = vunpack.c.h.b16 %v759
        %v3087 = vunpack.c.l.b16 %v760
        %v3088 = vunpack.c.h.b16 %v760
        %v3089 = vunpack.c.l.b16 %v761
        %v3090 = vunpack.c.h.b16 %v761
        %v3091 = vunpack.c.l.b16 %v762
        %v3092 = vunpack.c.h.b16 %v762
        %v3093 = vunpack.c.l.b16 %v763
        %v3094 = vunpack.c.h.b16 %v763
        %v3095 = vunpack.c.l.b16 %v764
        %v3096 = vunpack.c.h.b16 %v764
        %v3097 = vunpack.c.l.b16 %v765
        %v3098 = vunpack.c.h.b16 %v765
        %v3099 = vunpack.c.l.b16 %v766
        %v3100 = vunpack.c.h.b16 %v766
        %v3101 = vunpack.c.l.b16 %v767
        %v3102 = vunpack.c.h.b16 %v767
        %v3103 = vunpack.c.l.b16 %v768
        %v3104 = vunpack.c.h.b16 %v768
        %v3105 = vunpack.c.l.b16 %v769
        %v3106 = vunpack.c.h.b16 %v769
        %v3107 = vunpack.c.l.b16 %v770
        %v3108 = vunpack.c.h.b16 %v770
        %v3109 = vunpack.c.l.b16 %v771
        %v3110 = vunpack.c.h.b16 %v771
        %v3111 = vunpack.c.l.b16 %v772
        %v3112 = vunpack.c.h.b16 %v772
        %v3113 = vunpack.c.l.b16 %v773
        %v3114 = vunpack.c.h.b16 %v773
        %v3115 = vunpack.c.l.b16 %v774
        %v3116 = vunpack.c.h.b16 %v774
        %v3117 = vunpack.c.l.b16 %v775
        %v3118 = vunpack.c.h.b16 %v775
        %v3119 = vunpack.c.l.b16 %v776
        %v3120 = vunpack.c.h.b16 %v776
        %v3121 = vunpack.c.l.b16 %v777
        %v3122 = vunpack.c.h.b16 %v777
        %v3123 = vunpack.c.l.b16 %v778
        %v3124 = vunpack.c.h.b16 %v778
        %v3125 = vunpack.c.l.b16 %v779
        %v3126 = vunpack.c.h.b16 %v779
        %v3127 = vunpack.c.l.b16 %v780
        %v3128 = vunpack.c.h.b16 %v780
        %v3129 = vunpack.c.l.b16 %v781
        %v3130 = vunpack.c.h.b16 %v781
        %v3131 = vunpack.c.l.b16 %v782
        %v3132 = vunpack.c.h.b16 %v782
        %v3133 = vunpack.c.l.b16 %v783
        %v3134 = vunpack.c.h.b16 %v783
        %v3135 = vunpack.c.l.b16 %v784
        %v3136 = vunpack.c.h.b16 %v784
        %v3137 = vunpack.c.l.b16 %v785
        %v3138 = vunpack.c.h.b16 %v785
        %v3139 = vunpack.c.l.b16 %v786
        %v3140 = vunpack.c.h.b16 %v786
        %v3141 = vunpack.c.l.b16 %v787
        %v3142 = vunpack.c.h.b16 %v787
        %v3143 = vunpack.c.l.b16 %v788
        %v3144 = vunpack.c.h.b16 %v788
        %v3145 = vunpack.c.l.b16 %v789
        %v3146 = vunpack.c.h.b16 %v789
        %v3147 = vunpack.c.l.b16 %v790
        %v3148 = vunpack.c.h.b16 %v790
        %v3149 = vunpack.c.l.b16 %v791
        %v3150 = vunpack.c.h.b16 %v791
        %v3151 = vunpack.c.l.b16 %v792
        %v3152 = vunpack.c.h.b16 %v792
        %v3153 = vunpack.c.l.b16 %v793
        %v3154 = vunpack.c.h.b16 %v793
        %v3155 = vunpack.c.l.b16 %v794
        %v3156 = vunpack.c.h.b16 %v794
        %v3157 = vunpack.c.l.b16 %v795
        %v3158 = vunpack.c.h.b16 %v795
        %v3159 = vunpack.c.l.b16 %v796
        %v3160 = vunpack.c.h.b16 %v796
        %v3161 = vunpack.c.l.b16 %v797
        %v3162 = vunpack.c.h.b16 %v797
        %v3163 = vunpack.c.l.b16 %v798
        %v3164 = vunpack.c.h.b16 %v798
        %v3165 = vunpack.c.l.b16 %v799
        %v3166 = vunpack.c.h.b16 %v799
        %v3167 = vunpack.c.l.b16 %v800
        %v3168 = vunpack.c.h.b16 %v800
        %v3169 = vunpack.c.l.b16 %v801
        %v3170 = vunpack.c.h.b16 %v801
        %v3171 = vunpack.c.l.b16 %v802
        %v3172 = vunpack.c.h.b16 %v802
        %v3173 = vunpack.c.l.b16 %v803
        %v3174 = vunpack.c.h.b16 %v803
        %v3175 = vunpack.c.l.b16 %v804
        %v3176 = vunpack.c.h.b16 %v804
        %v3177 = vunpack.c.l.b16 %v805
        %v3178 = vunpack.c.h.b16 %v805
        %v3179 = vunpack.c.l.b16 %v806
        %v3180 = vunpack.c.h.b16 %v806
        %v3181 = vunpack.c.l.b16 %v807
        %v3182 = vunpack.c.h.b16 %v807
        %v3183 = vunpack.c.l.b16 %v808
        %v3184 = vunpack.c.h.b16 %v808
        %v3185 = vunpack.c.l.b16 %v809
        %v3186 = vunpack.c.h.b16 %v809
        %v3187 = vunpack.c.l.b16 %v810
        %v3188 = vunpack.c.h.b16 %v810
        %v3189 = vunpack.c.l.b16 %v811
        %v3190 = vunpack.c.h.b16 %v811
        %v3191 = vunpack.c.l.b16 %v812
        %v3192 = vunpack.c.h.b16 %v812
        %v3193 = vunpack.c.l.b16 %v813
        %v3194 = vunpack.c.h.b16 %v813
        %v3195 = vunpack.c.l.b16 %v814
        %v3196 = vunpack.c.h.b16 %v814
        %v3197 = vunpack.c.l.b16 %v815
        %v3198 = vunpack.c.h.b16 %v815
        %v3199 = vunpack.c.l.b16 %v816
        %v3200 = vunpack.c.h.b16 %v816
        %v3201 = vunpack.c.l.b16 %v817
        %v3202 = vunpack.c.h.b16 %v817
        %v3203 = vunpack.c.l.b16 %v818
        %v3204 = vunpack.c.h.b16 %v818
        %v3205 = vunpack.c.l.b16 %v819
        %v3206 = vunpack.c.h.b16 %v819
        %v3207 = vunpack.c.l.b16 %v820
        %v3208 = vunpack.c.h.b16 %v820
        %v3209 = vunpack.c.l.b16 %v821
        %v3210 = vunpack.c.h.b16 %v821
        %v3211 = vunpack.c.l.b16 %v822
        %v3212 = vunpack.c.h.b16 %v822
        %v3213 = vunpack.c.l.b16 %v823
        %v3214 = vunpack.c.h.b16 %v823
        %v3215 = vunpack.c.l.b16 %v824
        %v3216 = vunpack.c.h.b16 %v824
        %v3217 = vunpack.c.l.b16 %v825
        %v3218 = vunpack.c.h.b16 %v825
        %v3219 = vunpack.c.l.b16 %v826
        %v3220 = vunpack.c.h.b16 %v826
        %v3221 = vunpack.c.l.b16 %v827
        %v3222 = vunpack.c.h.b16 %v827
        %v3223 = vunpack.c.l.b16 %v828
        %v3224 = vunpack.c.h.b16 %v828
        %v3225 = vunpack.c.l.b16 %v829
        %v3226 = vunpack.c.h.b16 %v829
        %v3227 = vunpack.c.l.b16 %v830
        %v3228 = vunpack.c.h.b16 %v830
        %v3229 = vunpack.c.l.b16 %v831
        %v3230 = vunpack.c.h.b16 %v831
        %v3231 = vunpack.c.l.b16 %v832
        %v3232 = vunpack.c.h.b16 %v832
        %v3233 = vunpack.c.l.b16 %v833
        %v3234 = vunpack.c.h.b16 %v833
        %v3235 = vunpack.c.l.b16 %v834
        %v3236 = vunpack.c.h.b16 %v834
        %v3237 = vunpack.c.l.b16 %v835
        %v3238 = vunpack.c.h.b16 %v835
        %v3239 = vunpack.c.l.b16 %v836
        %v3240 = vunpack.c.h.b16 %v836
        %v3241 = vunpack.c.l.b16 %v837
        %v3242 = vunpack.c.h.b16 %v837
        %v3243 = vunpack.c.l.b16 %v838
        %v3244 = vunpack.c.h.b16 %v838
        %v3245 = vunpack.c.l.b16 %v839
        %v3246 = vunpack.c.h.b16 %v839
        %v3247 = vunpack.c.l.b16 %v840
        %v3248 = vunpack.c.h.b16 %v840
        %v3249 = vunpack.c.l.b16 %v841
        %v3250 = vunpack.c.h.b16 %v841
        %v3251 = vunpack.c.l.b16 %v842
        %v3252 = vunpack.c.h.b16 %v842
        %v3253 = vunpack.c.l.b16 %v843
        %v3254 = vunpack.c.h.b16 %v843
        %v3255 = vunpack.c.l.b16 %v844
        %v3256 = vunpack.c.h.b16 %v844
        %v3257 = vunpack.c.l.b16 %v845
        %v3258 = vunpack.c.h.b16 %v845
        %v3259 = vunpack.c.l.b16 %v846
        %v3260 = vunpack.c.h.b16 %v846
        %v3261 = vunpack.c.l.b16 %v847
        %v3262 = vunpack.c.h.b16 %v847
        %v3263 = vunpack.c.l.b16 %v848
        %v3264 = vunpack.c.h.b16 %v848
        %v3265 = vunpack.c.l.b16 %v849
        %v3266 = vunpack.c.h.b16 %v849
        %v3267 = vunpack.c.l.b16 %v850
        %v3268 = vunpack.c.h.b16 %v850
        %v3269 = vunpack.c.l.b16 %v851
        %v3270 = vunpack.c.h.b16 %v851
        %v3271 = vunpack.c.l.b16 %v852
        %v3272 = vunpack.c.h.b16 %v852
        %v3273 = vunpack.c.l.b16 %v853
        %v3274 = vunpack.c.h.b16 %v853
        %v3275 = vunpack.c.l.b16 %v854
        %v3276 = vunpack.c.h.b16 %v854
        %v3277 = vunpack.c.l.b16 %v855
        %v3278 = vunpack.c.h.b16 %v855
        %v3279 = vunpack.c.l.b16 %v856
        %v3280 = vunpack.c.h.b16 %v856
        %v3281 = vunpack.c.l.b16 %v857
        %v3282 = vunpack.c.h.b16 %v857
        %v3283 = vunpack.c.l.b16 %v858
        %v3284 = vunpack.c.h.b16 %v858
        %v3285 = vunpack.c.l.b16 %v859
        %v3286 = vunpack.c.h.b16 %v859
        %v3287 = vunpack.c.l.b16 %v860
        %v3288 = vunpack.c.h.b16 %v860
        %v3289 = vunpack.c.l.b16 %v861
        %v3290 = vunpack.c.h.b16 %v861
        %v3291 = vunpack.c.l.b16 %v862
        %v3292 = vunpack.c.h.b16 %v862
        %v3293 = vunpack.c.l.b16 %v863
        %v3294 = vunpack.c.h.b16 %v863
        %v3295 = vunpack.c.l.b16 %v864
        %v3296 = vunpack.c.h.b16 %v864
        %v3297 = vunpack.c.l.b16 %v865
        %v3298 = vunpack.c.h.b16 %v865
        %v3299 = vunpack.c.l.b16 %v866
        %v3300 = vunpack.c.h.b16 %v866
        %v3301 = vunpack.c.l.b16 %v867
        %v3302 = vunpack.c.h.b16 %v867
        %v3303 = vunpack.c.l.b16 %v868
        %v3304 = vunpack.c.h.b16 %v868
        %v3305 = vunpack.c.l.b16 %v869
        %v3306 = vunpack.c.h.b16 %v869
        %v3307 = vunpack.c.l.b16 %v870
        %v3308 = vunpack.c.h.b16 %v870
        %v3309 = vunpack.c.l.b16 %v871
        %v3310 = vunpack.c.h.b16 %v871
        %v3311 = vunpack.c.l.b16 %v872
        %v3312 = vunpack.c.h.b16 %v872
        %v3313 = vunpack.c.l.b16 %v873
        %v3314 = vunpack.c.h.b16 %v873
        %v3315 = vunpack.c.l.b16 %v874
        %v3316 = vunpack.c.h.b16 %v874
        %v3317 = vunpack.c.l.b16 %v875
        %v3318 = vunpack.c.h.b16 %v875
        %v3319 = vunpack.c.l.b16 %v876
        %v3320 = vunpack.c.h.b16 %v876
        %v3321 = vunpack.c.l.b16 %v877
        %v3322 = vunpack.c.h.b16 %v877
        %v3323 = vunpack.c.l.b16 %v878
        %v3324 = vunpack.c.h.b16 %v878
        %v3325 = vunpack.c.l.b16 %v879
        %v3326 = vunpack.c.h.b16 %v879
        %v3327 = vunpack.c.l.b16 %v880
        %v3328 = vunpack.c.h.b16 %v880
        %v3329 = vunpack.c.l.b16 %v881
        %v3330 = vunpack.c.h.b16 %v881
        %v3331 = vunpack.c.l.b16 %v882
        %v3332 = vunpack.c.h.b16 %v882
        %v3333 = vunpack.c.l.b16 %v883
        %v3334 = vunpack.c.h.b16 %v883
        %v3335 = vunpack.c.l.b16 %v884
        %v3336 = vunpack.c.h.b16 %v884
        %v3337 = vunpack.c.l.b16 %v885
        %v3338 = vunpack.c.h.b16 %v885
        %v3339 = vunpack.c.l.b16 %v886
        %v3340 = vunpack.c.h.b16 %v886
        %v3341 = vunpack.c.l.b16 %v887
        %v3342 = vunpack.c.h.b16 %v887
        %v3343 = vunpack.c.l.b16 %v888
        %v3344 = vunpack.c.h.b16 %v888
        %v3345 = vunpack.c.l.b16 %v889
        %v3346 = vunpack.c.h.b16 %v889
        %v3347 = vunpack.c.l.b16 %v890
        %v3348 = vunpack.c.h.b16 %v890
        %v3349 = vunpack.c.l.b16 %v891
        %v3350 = vunpack.c.h.b16 %v891
        %v3351 = vunpack.c.l.b16 %v892
        %v3352 = vunpack.c.h.b16 %v892
        %v3353 = vunpack.c.l.b16 %v893
        %v3354 = vunpack.c.h.b16 %v893
        %v3355 = vunpack.c.l.b16 %v894
        %v3356 = vunpack.c.h.b16 %v894
        %v3357 = vunpack.c.l.b16 %v895
        %v3358 = vunpack.c.h.b16 %v895
        %v3359 = vunpack.c.l.b16 %v896
        %v3360 = vunpack.c.h.b16 %v896
        %v3361 = vunpack.c.l.b16 %v897
        %v3362 = vunpack.c.h.b16 %v897
        %v3363 = vunpack.c.l.b16 %v898
        %v3364 = vunpack.c.h.b16 %v898
        %v3365 = vunpack.c.l.b16 %v899
        %v3366 = vunpack.c.h.b16 %v899
        %v3367 = vunpack.c.l.b16 %v900
        %v3368 = vunpack.c.h.b16 %v900
        %v3369 = vunpack.c.l.b16 %v901
        %v3370 = vunpack.c.h.b16 %v901
        %v3371 = vunpack.c.l.b16 %v902
        %v3372 = vunpack.c.h.b16 %v902
        %v3373 = vunpack.c.l.b16 %v903
        %v3374 = vunpack.c.h.b16 %v903
        %v3375 = vunpack.c.l.b16 %v904
        %v3376 = vunpack.c.h.b16 %v904
        %v3377 = vunpack.c.l.b16 %v905
        %v3378 = vunpack.c.h.b16 %v905
        %v3379 = vunpack.c.l.b16 %v906
        %v3380 = vunpack.c.h.b16 %v906
        %v3381 = vunpack.c.l.b16 %v907
        %v3382 = vunpack.c.h.b16 %v907
        %v3383 = vunpack.c.l.b16 %v908
        %v3384 = vunpack.c.h.b16 %v908
        %v3385 = vunpack.c.l.b16 %v909
        %v3386 = vunpack.c.h.b16 %v909
        %v3387 = vunpack.c.l.b16 %v910
        %v3388 = vunpack.c.h.b16 %v910
        %v3389 = vunpack.c.l.b16 %v911
        %v3390 = vunpack.c.h.b16 %v911
        %v3391 = vunpack.c.l.b16 %v912
        %v3392 = vunpack.c.h.b16 %v912
        %v3393 = vunpack.c.l.b16 %v913
        %v3394 = vunpack.c.h.b16 %v913
        %v3395 = vunpack.c.l.b16 %v914
        %v3396 = vunpack.c.h.b16 %v914
        %v3397 = vunpack.c.l.b16 %v915
        %v3398 = vunpack.c.h.b16 %v915
        %v3399 = vunpack.c.l.b16 %v916
        %v3400 = vunpack.c.h.b16 %v916
        %v3401 = vunpack.c.l.b16 %v917
        %v3402 = vunpack.c.h.b16 %v917
        %v3403 = vunpack.c.l.b16 %v918
        %v3404 = vunpack.c.h.b16 %v918
        %v3405 = vunpack.c.l.b16 %v919
        %v3406 = vunpack.c.h.b16 %v919
        %v3407 = vunpack.c.l.b16 %v920
        %v3408 = vunpack.c.h.b16 %v920
        %v3409 = vunpack.c.l.b16 %v921
        %v3410 = vunpack.c.h.b16 %v921
        %v3411 = vunpack.c.l.b16 %v922
        %v3412 = vunpack.c.h.b16 %v922
        %v3413 = vunpack.c.l.b16 %v923
        %v3414 = vunpack.c.h.b16 %v923
        %v3415 = vunpack.c.l.b16 %v924
        %v3416 = vunpack.c.h.b16 %v924
        %v3417 = vunpack.c.l.b16 %v925
        %v3418 = vunpack.c.h.b16 %v925
        %v3419 = vunpack.c.l.b16 %v926
        %v3420 = vunpack.c.h.b16 %v926
        %v3421 = vunpack.c.l.b16 %v927
        %v3422 = vunpack.c.h.b16 %v927
        %v3423 = vunpack.c.l.b16 %v928
        %v3424 = vunpack.c.h.b16 %v928
        %v3425 = vunpack.c.l.b16 %v929
        %v3426 = vunpack.c.h.b16 %v929
        %v3427 = vunpack.c.l.b16 %v930
        %v3428 = vunpack.c.h.b16 %v930
        %v3429 = vunpack.c.l.b16 %v931
        %v3430 = vunpack.c.h.b16 %v931
        %v3431 = vunpack.c.l.b16 %v932
        %v3432 = vunpack.c.h.b16 %v932
        %v3433 = vunpack.c.l.b16 %v933
        %v3434 = vunpack.c.h.b16 %v933
        %v3435 = vunpack.c.l.b16 %v934
        %v3436 = vunpack.c.h.b16 %v934
        %v3437 = vunpack.c.l.b16 %v935
        %v3438 = vunpack.c.h.b16 %v935
        %v3439 = vunpack.c.l.b16 %v936
        %v3440 = vunpack.c.h.b16 %v936
        %v3441 = vunpack.c.l.b16 %v937
        %v3442 = vunpack.c.h.b16 %v937
        %v3443 = vunpack.c.l.b16 %v938
        %v3444 = vunpack.c.h.b16 %v938
        %v3445 = vunpack.c.l.b16 %v939
        %v3446 = vunpack.c.h.b16 %v939
        %v3447 = vunpack.c.l.b16 %v940
        %v3448 = vunpack.c.h.b16 %v940
        %v3449 = vunpack.c.l.b16 %v941
        %v3450 = vunpack.c.h.b16 %v941
        %v3451 = vunpack.c.l.b16 %v942
        %v3452 = vunpack.c.h.b16 %v942
        %v3453 = vunpack.c.l.b16 %v943
        %v3454 = vunpack.c.h.b16 %v943
        %v3455 = vunpack.c.l.b16 %v944
        %v3456 = vunpack.c.h.b16 %v944
        %v3457 = vunpack.c.l.b16 %v945
        %v3458 = vunpack.c.h.b16 %v945
        %v3459 = vunpack.c.l.b16 %v946
        %v3460 = vunpack.c.h.b16 %v946
        %v3461 = vunpack.c.l.b16 %v947
        %v3462 = vunpack.c.h.b16 %v947
        %v3463 = vunpack.c.l.b16 %v948
        %v3464 = vunpack.c.h.b16 %v948
        %v3465 = vunpack.c.l.b16 %v949
        %v3466 = vunpack.c.h.b16 %v949
        %v3467 = vunpack.c.l.b16 %v950
        %v3468 = vunpack.c.h.b16 %v950
        %v3469 = vunpack.c.l.b16 %v951
        %v3470 = vunpack.c.h.b16 %v951
        %v3471 = vunpack.c.l.b16 %v952
        %v3472 = vunpack.c.h.b16 %v952
        %v3473 = vunpack.c.l.b16 %v953
        %v3474 = vunpack.c.h.b16 %v953
        %v3475 = vunpack.c.l.b16 %v954
        %v3476 = vunpack.c.h.b16 %v954
        %v3477 = vunpack.c.l.b16 %v955
        %v3478 = vunpack.c.h.b16 %v955
        %v3479 = vunpack.c.l.b16 %v956
        %v3480 = vunpack.c.h.b16 %v956
        %v3481 = vunpack.c.l.b16 %v957
        %v3482 = vunpack.c.h.b16 %v957
        %v3483 = vunpack.c.l.b16 %v958
        %v3484 = vunpack.c.h.b16 %v958
        %v3485 = vunpack.c.l.b16 %v959
        %v3486 = vunpack.c.h.b16 %v959
        %v3487 = vunpack.c.l.b16 %v960
        %v3488 = vunpack.c.h.b16 %v960
        %v3489 = vunpack.c.l.b16 %v961
        %v3490 = vunpack.c.h.b16 %v961
        %v3491 = vunpack.c.l.b16 %v962
        %v3492 = vunpack.c.h.b16 %v962
        %v3493 = vunpack.c.l.b16 %v963
        %v3494 = vunpack.c.h.b16 %v963
        %v3495 = vunpack.c.l.b16 %v964
        %v3496 = vunpack.c.h.b16 %v964
        %v3497 = vunpack.c.l.b16 %v965
        %v3498 = vunpack.c.h.b16 %v965
        %v3499 = vunpack.c.l.b16 %v966
        %v3500 = vunpack.c.h.b16 %v966
        %v3501 = vunpack.c.l.b16 %v967
        %v3502 = vunpack.c.h.b16 %v967
        %v3503 = vunpack.c.l.b16 %v968
        %v3504 = vunpack.c.h.b16 %v968
        %v3505 = vunpack.c.l.b16 %v969
        %v3506 = vunpack.c.h.b16 %v969
        %v3507 = vunpack.c.l.b16 %v970
        %v3508 = vunpack.c.h.b16 %v970
        %v3509 = vunpack.c.l.b16 %v971
        %v3510 = vunpack.c.h.b16 %v971
        %v3511 = vunpack.c.l.b16 %v972
        %v3512 = vunpack.c.h.b16 %v972
        %v3513 = vunpack.c.l.b16 %v973
        %v3514 = vunpack.c.h.b16 %v973
        %v3515 = vunpack.c.l.b16 %v974
        %v3516 = vunpack.c.h.b16 %v974
        %v3517 = vunpack.c.l.b16 %v975
        %v3518 = vunpack.c.h.b16 %v975
        %v3519 = vunpack.c.l.b16 %v976
        %v3520 = vunpack.c.h.b16 %v976
        %v3521 = vunpack.c.l.b16 %v977
        %v3522 = vunpack.c.h.b16 %v977
        %v3523 = vunpack.c.l.b16 %v978
        %v3524 = vunpack.c.h.b16 %v978
        %v3525 = vunpack.c.l.b16 %v979
        %v3526 = vunpack.c.h.b16 %v979
        %v3527 = vunpack.c.l.b16 %v980
        %v3528 = vunpack.c.h.b16 %v980
        %v3529 = vunpack.c.l.b16 %v981
        %v3530 = vunpack.c.h.b16 %v981
        %v3531 = vunpack.c.l.b16 %v982
        %v3532 = vunpack.c.h.b16 %v982
        %v3533 = vunpack.c.l.b16 %v983
        %v3534 = vunpack.c.h.b16 %v983
        %v3535 = vunpack.c.l.b16 %v984
        %v3536 = vunpack.c.h.b16 %v984
        %v3537 = vunpack.c.l.b16 %v985
        %v3538 = vunpack.c.h.b16 %v985
        %v3539 = vunpack.c.l.b16 %v986
        %v3540 = vunpack.c.h.b16 %v986
        %v3541 = vunpack.c.l.b16 %v987
        %v3542 = vunpack.c.h.b16 %v987
        %v3543 = vunpack.c.l.b16 %v988
        %v3544 = vunpack.c.h.b16 %v988
        %v3545 = vunpack.c.l.b16 %v989
        %v3546 = vunpack.c.h.b16 %v989
        %v3547 = vunpack.c.l.b16 %v990
        %v3548 = vunpack.c.h.b16 %v990
        %v3549 = vunpack.c.l.b16 %v991
        %v3550 = vunpack.c.h.b16 %v991
        %v3551 = vunpack.c.l.b16 %v992
        %v3552 = vunpack.c.h.b16 %v992
        %v3553 = vunpack.c.l.b16 %v993
        %v3554 = vunpack.c.h.b16 %v993
        %v3555 = vunpack.c.l.b16 %v994
        %v3556 = vunpack.c.h.b16 %v994
        %v3557 = vunpack.c.l.b16 %v995
        %v3558 = vunpack.c.h.b16 %v995
        %v3559 = vunpack.c.l.b16 %v996
        %v3560 = vunpack.c.h.b16 %v996
        %v3561 = vunpack.c.l.b16 %v997
        %v3562 = vunpack.c.h.b16 %v997
        %v3563 = vunpack.c.l.b16 %v998
        %v3564 = vunpack.c.h.b16 %v998
        %v3565 = vunpack.c.l.b16 %v999
        %v3566 = vunpack.c.h.b16 %v999
        %v3567 = vunpack.c.l.b16 %v1000
        %v3568 = vunpack.c.h.b16 %v1000
        %v3569 = vunpack.c.l.b16 %v1001
        %v3570 = vunpack.c.h.b16 %v1001
        %v3571 = vunpack.c.l.b16 %v1002
        %v3572 = vunpack.c.h.b16 %v1002
        %v3573 = vunpack.c.l.b16 %v1003
        %v3574 = vunpack.c.h.b16 %v1003
        %v3575 = vunpack.c.l.b16 %v1004
        %v3576 = vunpack.c.h.b16 %v1004
        %v3577 = vunpack.c.l.b16 %v1005
        %v3578 = vunpack.c.h.b16 %v1005
        %v3579 = vunpack.c.l.b16 %v1006
        %v3580 = vunpack.c.h.b16 %v1006
        %v3581 = vunpack.c.l.b16 %v1007
        %v3582 = vunpack.c.h.b16 %v1007
        %v3583 = vunpack.c.l.b16 %v1008
        %v3584 = vunpack.c.h.b16 %v1008
        %v3585 = vunpack.c.l.b16 %v1009
        %v3586 = vunpack.c.h.b16 %v1009
        %v3587 = vunpack.c.l.b16 %v1010
        %v3588 = vunpack.c.h.b16 %v1010
        %v3589 = vunpack.c.l.b16 %v1011
        %v3590 = vunpack.c.h.b16 %v1011
        %v3591 = vunpack.c.l.b16 %v1012
        %v3592 = vunpack.c.h.b16 %v1012
        %v3593 = vunpack.c.l.b16 %v1013
        %v3594 = vunpack.c.h.b16 %v1013
        %v3595 = vunpack.c.l.b16 %v1014
        %v3596 = vunpack.c.h.b16 %v1014
        %v3597 = vunpack.c.l.b16 %v1015
        %v3598 = vunpack.c.h.b16 %v1015
        %v3599 = vunpack.c.l.b16 %v1016
        %v3600 = vunpack.c.h.b16 %v1016
        %v3601 = vunpack.c.l.b16 %v1017
        %v3602 = vunpack.c.h.b16 %v1017
        %v3603 = vunpack.c.l.b16 %v1018
        %v3604 = vunpack.c.h.b16 %v1018
        %v3605 = vunpack.c.l.b16 %v1019
        %v3606 = vunpack.c.h.b16 %v1019
        %v3607 = vunpack.c.l.b16 %v1020
        %v3608 = vunpack.c.h.b16 %v1020
        %v3609 = vunpack.c.l.b16 %v1021
        %v3610 = vunpack.c.h.b16 %v1021
        %v3611 = vunpack.c.l.b16 %v1022
        %v3612 = vunpack.c.h.b16 %v1022
        %v3613 = vunpack.c.l.b16 %v1023
        %v3614 = vunpack.c.h.b16 %v1023
        %v3615 = vunpack.c.l.b16 %v1024
        %v3616 = vunpack.c.h.b16 %v1024
        %v3617 = vunpack.c.l.b16 %v1025
        %v3618 = vunpack.c.h.b16 %v1025
        %v3619 = vunpack.c.l.b16 %v1026
        %v3620 = vunpack.c.h.b16 %v1026
        %v3621 = vunpack.c.l.b16 %v1027
        %v3622 = vunpack.c.h.b16 %v1027
        %v3623 = vunpack.c.l.b16 %v1028
        %v3624 = vunpack.c.h.b16 %v1028
        %v3625 = vunpack.c.l.b16 %v1029
        %v3626 = vunpack.c.h.b16 %v1029
        %v3627 = vunpack.c.l.b16 %v1030
        %v3628 = vunpack.c.h.b16 %v1030
        %v3629 = vunpack.c.l.b16 %v1031
        %v3630 = vunpack.c.h.b16 %v1031
        %v3631 = vunpack.c.l.b16 %v1032
        %v3632 = vunpack.c.h.b16 %v1032
        %v3633 = vunpack.c.l.b16 %v1033
        %v3634 = vunpack.c.h.b16 %v1033
        %v3635 = vunpack.c.l.b16 %v1034
        %v3636 = vunpack.c.h.b16 %v1034
        %v3637 = vunpack.c.l.b16 %v1035
        %v3638 = vunpack.c.h.b16 %v1035
        %v3639 = vunpack.c.l.b16 %v1036
        %v3640 = vunpack.c.h.b16 %v1036
        %v3641 = vunpack.c.l.b16 %v1037
        %v3642 = vunpack.c.h.b16 %v1037
        %v3643 = vunpack.c.l.b16 %v1038
        %v3644 = vunpack.c.h.b16 %v1038
        %v3645 = vunpack.c.l.b16 %v1039
        %v3646 = vunpack.c.h.b16 %v1039
        %v3647 = vunpack.c.l.b16 %v1040
        %v3648 = vunpack.c.h.b16 %v1040
        %v3649 = vunpack.c.l.b16 %v1041
        %v3650 = vunpack.c.h.b16 %v1041
        %v3651 = vunpack.c.l.b16 %v1042
        %v3652 = vunpack.c.h.b16 %v1042
        %v3653 = vunpack.c.l.b16 %v1043
        %v3654 = vunpack.c.h.b16 %v1043
        %v3655 = vunpack.c.l.b16 %v1044
        %v3656 = vunpack.c.h.b16 %v1044
        %v3657 = vunpack.c.l.b16 %v1045
        %v3658 = vunpack.c.h.b16 %v1045
        %v3659 = vunpack.c.l.b16 %v1046
        %v3660 = vunpack.c.h.b16 %v1046
        %v3661 = vunpack.c.l.b16 %v1047
        %v3662 = vunpack.c.h.b16 %v1047
        %v3663 = vunpack.c.l.b16 %v1048
        %v3664 = vunpack.c.h.b16 %v1048
        %v3665 = vunpack.c.l.b16 %v1049
        %v3666 = vunpack.c.h.b16 %v1049
        %v3667 = vunpack.c.l.b16 %v1050
        %v3668 = vunpack.c.h.b16 %v1050
        %v3669 = vunpack.c.l.b16 %v1051
        %v3670 = vunpack.c.h.b16 %v1051
        %v3671 = vunpack.c.l.b16 %v1052
        %v3672 = vunpack.c.h.b16 %v1052
        %v3673 = vunpack.c.l.b16 %v1053
        %v3674 = vunpack.c.h.b16 %v1053
        %v3675 = vunpack.c.l.b16 %v1054
        %v3676 = vunpack.c.h.b16 %v1054
        %v3677 = vunpack.c.l.b16 %v1055
        %v3678 = vunpack.c.h.b16 %v1055
        %v3679 = vunpack.c.l.b16 %v1056
        %v3680 = vunpack.c.h.b16 %v1056
        %v3681 = vunpack.c.l.b16 %v1057
        %v3682 = vunpack.c.h.b16 %v1057
        %v3683 = vunpack.c.l.b16 %v1058
        %v3684 = vunpack.c.h.b16 %v1058
        %v3685 = vunpack.c.l.b16 %v1059
        %v3686 = vunpack.c.h.b16 %v1059
        %v3687 = vunpack.c.l.b16 %v1060
        %v3688 = vunpack.c.h.b16 %v1060
        %v3689 = vunpack.c.l.b16 %v1061
        %v3690 = vunpack.c.h.b16 %v1061
        %v3691 = vunpack.c.l.b16 %v1062
        %v3692 = vunpack.c.h.b16 %v1062
        %v3693 = vunpack.c.l.b16 %v1063
        %v3694 = vunpack.c.h.b16 %v1063
        %v3695 = vunpack.c.l.b16 %v1064
        %v3696 = vunpack.c.h.b16 %v1064
        %v3697 = vunpack.c.l.b16 %v1065
        %v3698 = vunpack.c.h.b16 %v1065
        %v3699 = vunpack.c.l.b16 %v1066
        %v3700 = vunpack.c.h.b16 %v1066
        %v3701 = vunpack.c.l.b16 %v1067
        %v3702 = vunpack.c.h.b16 %v1067
        %v3703 = vunpack.c.l.b16 %v1068
        %v3704 = vunpack.c.h.b16 %v1068
        %v3705 = vunpack.c.l.b16 %v1069
        %v3706 = vunpack.c.h.b16 %v1069
        %v3707 = vunpack.c.l.b16 %v1070
        %v3708 = vunpack.c.h.b16 %v1070
        %v3709 = vunpack.c.l.b16 %v1071
        %v3710 = vunpack.c.h.b16 %v1071
        %v3711 = vunpack.c.l.b16 %v1072
        %v3712 = vunpack.c.h.b16 %v1072
        %v3713 = vunpack.c.l.b16 %v1073
        %v3714 = vunpack.c.h.b16 %v1073
        %v3715 = vunpack.c.l.b16 %v1074
        %v3716 = vunpack.c.h.b16 %v1074
        %v3717 = vunpack.c.l.b16 %v1075
        %v3718 = vunpack.c.h.b16 %v1075
        %v3719 = vunpack.c.l.b16 %v1076
        %v3720 = vunpack.c.h.b16 %v1076
        %v3721 = vunpack.c.l.b16 %v1077
        %v3722 = vunpack.c.h.b16 %v1077
        %v3723 = vunpack.c.l.b16 %v1078
        %v3724 = vunpack.c.h.b16 %v1078
        %v3725 = vunpack.c.l.b16 %v1079
        %v3726 = vunpack.c.h.b16 %v1079
        %v3727 = vunpack.c.l.b16 %v1080
        %v3728 = vunpack.c.h.b16 %v1080
        %v3729 = vunpack.c.l.b16 %v1081
        %v3730 = vunpack.c.h.b16 %v1081
        %v3731 = vunpack.c.l.b16 %v1082
        %v3732 = vunpack.c.h.b16 %v1082
        %v3733 = vunpack.c.l.b16 %v1083
        %v3734 = vunpack.c.h.b16 %v1083
        %v3735 = vunpack.c.l.b16 %v1084
        %v3736 = vunpack.c.h.b16 %v1084
        %v3737 = vunpack.c.l.b16 %v1085
        %v3738 = vunpack.c.h.b16 %v1085
        %v3739 = vunpack.c.l.b16 %v1086
        %v3740 = vunpack.c.h.b16 %v1086
        %v3741 = vunpack.c.l.b16 %v1087
        %v3742 = vunpack.c.h.b16 %v1087
        %v3743 = vunpack.c.l.b16 %v1088
        %v3744 = vunpack.c.h.b16 %v1088
        %v3745 = vunpack.c.l.b16 %v1089
        %v3746 = vunpack.c.h.b16 %v1089
        %v3747 = vunpack.c.l.b16 %v1090
        %v3748 = vunpack.c.h.b16 %v1090
        %v3749 = vunpack.c.l.b16 %v1091
        %v3750 = vunpack.c.h.b16 %v1091
        %v3751 = vunpack.c.l.b16 %v1092
        %v3752 = vunpack.c.h.b16 %v1092
        %v3753 = vunpack.c.l.b16 %v1093
        %v3754 = vunpack.c.h.b16 %v1093
        %v3755 = vunpack.c.l.b16 %v1094
        %v3756 = vunpack.c.h.b16 %v1094
        %v3757 = vunpack.c.l.b16 %v1095
        %v3758 = vunpack.c.h.b16 %v1095
        %v3759 = vunpack.c.l.b16 %v1096
        %v3760 = vunpack.c.h.b16 %v1096
        %v3761 = vunpack.c.l.b16 %v1097
        %v3762 = vunpack.c.h.b16 %v1097
        %v3763 = vunpack.c.l.b16 %v1098
        %v3764 = vunpack.c.h.b16 %v1098
        %v3765 = vunpack.c.l.b16 %v1099
        %v3766 = vunpack.c.h.b16 %v1099
        %v3767 = vunpack.c.l.b16 %v1100
        %v3768 = vunpack.c.h.b16 %v1100
        %v3769 = vunpack.c.l.b16 %v1101
        %v3770 = vunpack.c.h.b16 %v1101
        %v3771 = vunpack.c.l.b16 %v1102
        %v3772 = vunpack.c.h.b16 %v1102
        %v3773 = vunpack.c.l.b16 %v1103
        %v3774 = vunpack.c.h.b16 %v1103
        %v3775 = vunpack.c.l.b16 %v1104
        %v3776 = vunpack.c.h.b16 %v1104
        %v3777 = vunpack.c.l.b16 %v1105
        %v3778 = vunpack.c.h.b16 %v1105
        %v3779 = vunpack.c.l.b16 %v1106
        %v3780 = vunpack.c.h.b16 %v1106
        %v3781 = vunpack.c.l.b16 %v1107
        %v3782 = vunpack.c.h.b16 %v1107
        %v3783 = vunpack.c.l.b16 %v1108
        %v3784 = vunpack.c.h.b16 %v1108
        %v3785 = vunpack.c.l.b16 %v1109
        %v3786 = vunpack.c.h.b16 %v1109
        %v3787 = vunpack.c.l.b16 %v1110
        %v3788 = vunpack.c.h.b16 %v1110
        %v3789 = vunpack.c.l.b16 %v1111
        %v3790 = vunpack.c.h.b16 %v1111
        %v3791 = vunpack.c.l.b16 %v1112
        %v3792 = vunpack.c.h.b16 %v1112
        %v3793 = vunpack.c.l.b16 %v1113
        %v3794 = vunpack.c.h.b16 %v1113
        %v3795 = vunpack.c.l.b16 %v1114
        %v3796 = vunpack.c.h.b16 %v1114
        %v3797 = vunpack.c.l.b16 %v1115
        %v3798 = vunpack.c.h.b16 %v1115
        %v3799 = vunpack.c.l.b16 %v1116
        %v3800 = vunpack.c.h.b16 %v1116
        %v3801 = vunpack.c.l.b16 %v1117
        %v3802 = vunpack.c.h.b16 %v1117
        %v3803 = vunpack.c.l.b16 %v1118
        %v3804 = vunpack.c.h.b16 %v1118
        %v3805 = vunpack.c.l.b16 %v1119
        %v3806 = vunpack.c.h.b16 %v1119
        %v3807 = vunpack.c.l.b16 %v1120
        %v3808 = vunpack.c.h.b16 %v1120
        %v3809 = vunpack.c.l.b16 %v1121
        %v3810 = vunpack.c.h.b16 %v1121
        %v3811 = vunpack.c.l.b16 %v1122
        %v3812 = vunpack.c.h.b16 %v1122
        %v3813 = vunpack.c.l.b16 %v1123
        %v3814 = vunpack.c.h.b16 %v1123
        %v3815 = vunpack.c.l.b16 %v1124
        %v3816 = vunpack.c.h.b16 %v1124
        %v3817 = vunpack.c.l.b16 %v1125
        %v3818 = vunpack.c.h.b16 %v1125
        %v3819 = vunpack.c.l.b16 %v1126
        %v3820 = vunpack.c.h.b16 %v1126
        %v3821 = vunpack.c.l.b16 %v1127
        %v3822 = vunpack.c.h.b16 %v1127
        %v3823 = vunpack.c.l.b16 %v1128
        %v3824 = vunpack.c.h.b16 %v1128
        %v3825 = vunpack.c.l.b16 %v1129
        %v3826 = vunpack.c.h.b16 %v1129
        %v3827 = vunpack.c.l.b16 %v1130
        %v3828 = vunpack.c.h.b16 %v1130
        %v3829 = vunpack.c.l.b16 %v1131
        %v3830 = vunpack.c.h.b16 %v1131
        %v3831 = vunpack.c.l.b16 %v1132
        %v3832 = vunpack.c.h.b16 %v1132
        %v3833 = vunpack.c.l.b16 %v1133
        %v3834 = vunpack.c.h.b16 %v1133
        %v3835 = vunpack.c.l.b16 %v1134
        %v3836 = vunpack.c.h.b16 %v1134
        %v3837 = vunpack.c.l.b16 %v1135
        %v3838 = vunpack.c.h.b16 %v1135
        %v3839 = vunpack.c.l.b16 %v1136
        %v3840 = vunpack.c.h.b16 %v1136
        %v3841 = vunpack.c.l.b16 %v1137
        %v3842 = vunpack.c.h.b16 %v1137
        %v3843 = vunpack.c.l.b16 %v1138
        %v3844 = vunpack.c.h.b16 %v1138
        %v3845 = vunpack.c.l.b16 %v1139
        %v3846 = vunpack.c.h.b16 %v1139
        %v3847 = vunpack.c.l.b16 %v1140
        %v3848 = vunpack.c.h.b16 %v1140
        %v3849 = vunpack.c.l.b16 %v1141
        %v3850 = vunpack.c.h.b16 %v1141
        %v3851 = vunpack.c.l.b16 %v1142
        %v3852 = vunpack.c.h.b16 %v1142
        %v3853 = vunpack.c.l.b16 %v1143
        %v3854 = vunpack.c.h.b16 %v1143
        %v3855 = vunpack.c.l.b16 %v1144
        %v3856 = vunpack.c.h.b16 %v1144
        %v3857 = vunpack.c.l.b16 %v1145
        %v3858 = vunpack.c.h.b16 %v1145
        %v3859 = vunpack.c.l.b16 %v1146
        %v3860 = vunpack.c.h.b16 %v1146
        %v3861 = vunpack.c.l.b16 %v1147
        %v3862 = vunpack.c.h.b16 %v1147
        %v3863 = vunpack.c.l.b16 %v1148
        %v3864 = vunpack.c.h.b16 %v1148
        %v3865 = vunpack.c.l.b16 %v1149
        %v3866 = vunpack.c.h.b16 %v1149
        %v3867 = vunpack.c.l.b16 %v1150
        %v3868 = vunpack.c.h.b16 %v1150
        %v3869 = vunpack.c.l.b16 %v1151
        %v3870 = vunpack.c.h.b16 %v1151
        %v3871 = vunpack.c.l.b16 %v1152
        %v3872 = vunpack.c.h.b16 %v1152
        %v3873 = vunpack.c.l.b16 %v1153
        %v3874 = vunpack.c.h.b16 %v1153
        %v3875 = vunpack.c.l.b16 %v1154
        %v3876 = vunpack.c.h.b16 %v1154
        %v3877 = vunpack.c.l.b16 %v1155
        %v3878 = vunpack.c.h.b16 %v1155
        %v3879 = vunpack.c.l.b16 %v1156
        %v3880 = vunpack.c.h.b16 %v1156
        %v3881 = vunpack.c.l.b16 %v1157
        %v3882 = vunpack.c.h.b16 %v1157
        %v3883 = vunpack.c.l.b16 %v1158
        %v3884 = vunpack.c.h.b16 %v1158
        %v3885 = vunpack.c.l.b16 %v1159
        %v3886 = vunpack.c.h.b16 %v1159
        %v3887 = vunpack.c.l.b16 %v1160
        %v3888 = vunpack.c.h.b16 %v1160
        %v3889 = vunpack.c.l.b16 %v1161
        %v3890 = vunpack.c.h.b16 %v1161
        %v3891 = vunpack.c.l.b16 %v1162
        %v3892 = vunpack.c.h.b16 %v1162
        %v3893 = vunpack.c.l.b16 %v1163
        %v3894 = vunpack.c.h.b16 %v1163
        %v3895 = vunpack.c.l.b16 %v1164
        %v3896 = vunpack.c.h.b16 %v1164
        %v3897 = vunpack.c.l.b16 %v1165
        %v3898 = vunpack.c.h.b16 %v1165
        %v3899 = vunpack.c.l.b16 %v1166
        %v3900 = vunpack.c.h.b16 %v1166
        %v3901 = vunpack.c.l.b16 %v1167
        %v3902 = vunpack.c.h.b16 %v1167
        %v3903 = vunpack.c.l.b16 %v1168
        %v3904 = vunpack.c.h.b16 %v1168
        %v3905 = vunpack.c.l.b16 %v1169
        %v3906 = vunpack.c.h.b16 %v1169
        %v3907 = vunpack.c.l.b16 %v1170
        %v3908 = vunpack.c.h.b16 %v1170
        %v3909 = vunpack.c.l.b16 %v1171
        %v3910 = vunpack.c.h.b16 %v1171
        %v3911 = vunpack.c.l.b16 %v1172
        %v3912 = vunpack.c.h.b16 %v1172
        %v3913 = vunpack.c.l.b16 %v1173
        %v3914 = vunpack.c.h.b16 %v1173
        %v3915 = vunpack.c.l.b16 %v1174
        %v3916 = vunpack.c.h.b16 %v1174
        %v3917 = vunpack.c.l.b16 %v1175
        %v3918 = vunpack.c.h.b16 %v1175
        %v3919 = vunpack.c.l.b16 %v1176
        %v3920 = vunpack.c.h.b16 %v1176
        %v3921 = vunpack.c.l.b16 %v1177
        %v3922 = vunpack.c.h.b16 %v1177
        %v3923 = vunpack.c.l.b16 %v1178
        %v3924 = vunpack.c.h.b16 %v1178
        %v3925 = vunpack.c.l.b16 %v1179
        %v3926 = vunpack.c.h.b16 %v1179
        %v3927 = vunpack.c.l.b16 %v1180
        %v3928 = vunpack.c.h.b16 %v1180
        %v3929 = vunpack.c.l.b16 %v1181
        %v3930 = vunpack.c.h.b16 %v1181
        %v3931 = vunpack.c.l.b16 %v1182
        %v3932 = vunpack.c.h.b16 %v1182
        %v3933 = vunpack.c.l.b16 %v1183
        %v3934 = vunpack.c.h.b16 %v1183
        %v3935 = vunpack.c.l.b16 %v1184
        %v3936 = vunpack.c.h.b16 %v1184
        %v3937 = vunpack.c.l.b16 %v1185
        %v3938 = vunpack.c.h.b16 %v1185
        %v3939 = vunpack.c.l.b16 %v1186
        %v3940 = vunpack.c.h.b16 %v1186
        %v3941 = vunpack.c.l.b16 %v1187
        %v3942 = vunpack.c.h.b16 %v1187
        %v3943 = vunpack.c.l.b16 %v1188
        %v3944 = vunpack.c.h.b16 %v1188
        %v3945 = vunpack.c.l.b16 %v1189
        %v3946 = vunpack.c.h.b16 %v1189
        %v3947 = vunpack.c.l.b16 %v1190
        %v3948 = vunpack.c.h.b16 %v1190
        %v3949 = vunpack.c.l.b16 %v1191
        %v3950 = vunpack.c.h.b16 %v1191
        %v3951 = vunpack.c.l.b16 %v1192
        %v3952 = vunpack.c.h.b16 %v1192
        %v3953 = vunpack.c.l.b16 %v1193
        %v3954 = vunpack.c.h.b16 %v1193
        %v3955 = vunpack.c.l.b16 %v1194
        %v3956 = vunpack.c.h.b16 %v1194
        %v3957 = vunpack.c.l.b16 %v1195
        %v3958 = vunpack.c.h.b16 %v1195
        %v3959 = vunpack.c.l.b16 %v1196
        %v3960 = vunpack.c.h.b16 %v1196
        %v3961 = vunpack.c.l.b16 %v1197
        %v3962 = vunpack.c.h.b16 %v1197
        %v3963 = vunpack.c.l.b16 %v1198
        %v3964 = vunpack.c.h.b16 %v1198
        %v3965 = vunpack.c.l.b16 %v1199
        %v3966 = vunpack.c.h.b16 %v1199
        %v3967 = vunpack.c.l.b16 %v1200
        %v3968 = vunpack.c.h.b16 %v1200
        %v3969 = vunpack.c.l.b16 %v1201
        %v3970 = vunpack.c.h.b16 %v1201
        %v3971 = vunpack.c.l.b16 %v1202
        %v3972 = vunpack.c.h.b16 %v1202
        %v3973 = vunpack.c.l.b16 %v1203
        %v3974 = vunpack.c.h.b16 %v1203
        %v3975 = vunpack.c.l.b16 %v1204
        %v3976 = vunpack.c.h.b16 %v1204
        %v3977 = vunpack.c.l.b16 %v1205
        %v3978 = vunpack.c.h.b16 %v1205
        %v3979 = vunpack.c.l.b16 %v1206
        %v3980 = vunpack.c.h.b16 %v1206
        %v3981 = vunpack.c.l.b16 %v1207
        %v3982 = vunpack.c.h.b16 %v1207
        %v3983 = vunpack.c.l.b16 %v1208
        %v3984 = vunpack.c.h.b16 %v1208
        %v3985 = vunpack.c.l.b16 %v1209
        %v3986 = vunpack.c.h.b16 %v1209
        %v3987 = vunpack.c.l.b16 %v1210
        %v3988 = vunpack.c.h.b16 %v1210
        %v3989 = vunpack.c.l.b16 %v1211
        %v3990 = vunpack.c.h.b16 %v1211
        %v3991 = vunpack.c.l.b16 %v1212
        %v3992 = vunpack.c.h.b16 %v1212
        %v3993 = vunpack.c.l.b16 %v1213
        %v3994 = vunpack.c.h.b16 %v1213
        %v3995 = vunpack.c.l.b16 %v1214
        %v3996 = vunpack.c.h.b16 %v1214
        %v3997 = vunpack.c.l.b16 %v1215
        %v3998 = vunpack.c.h.b16 %v1215
        %v3999 = vunpack.c.l.b16 %v1216
        %v4000 = vunpack.c.h.b16 %v1216
        %v4001 = vunpack.c.l.b16 %v1217
        %v4002 = vunpack.c.h.b16 %v1217
        %v4003 = vunpack.c.l.b16 %v1218
        %v4004 = vunpack.c.h.b16 %v1218
        %v4005 = vunpack.c.l.b16 %v1219
        %v4006 = vunpack.c.h.b16 %v1219
        %v4007 = vunpack.c.l.b16 %v1220
        %v4008 = vunpack.c.h.b16 %v1220
        %v4009 = vunpack.c.l.b16 %v1221
        %v4010 = vunpack.c.h.b16 %v1221
        %v4011 = vunpack.c.l.b16 %v1222
        %v4012 = vunpack.c.h.b16 %v1222
        %v4013 = vunpack.c.l.b16 %v1223
        %v4014 = vunpack.c.h.b16 %v1223
        %v4015 = vunpack.c.l.b16 %v1224
        %v4016 = vunpack.c.h.b16 %v1224
        %v4017 = vunpack.c.l.b16 %v1225
        %v4018 = vunpack.c.h.b16 %v1225
        %v4019 = vunpack.c.l.b16 %v1226
        %v4020 = vunpack.c.h.b16 %v1226
        %v4021 = vunpack.c.l.b16 %v1227
        %v4022 = vunpack.c.h.b16 %v1227
        %v4023 = vunpack.c.l.b16 %v1228
        %v4024 = vunpack.c.h.b16 %v1228
        %v4025 = vunpack.c.l.b16 %v1229
        %v4026 = vunpack.c.h.b16 %v1229
        %v4027 = vunpack.c.l.b16 %v1230
        %v4028 = vunpack.c.h.b16 %v1230
        %v4029 = vunpack.c.l.b16 %v1231
        %v4030 = vunpack.c.h.b16 %v1231
        %v4031 = vunpack.c.l.b16 %v1232
        %v4032 = vunpack.c.h.b16 %v1232
        %v4033 = vunpack.c.l.b16 %v1233
        %v4034 = vunpack.c.h.b16 %v1233
        %v4035 = vunpack.c.l.b16 %v1234
        %v4036 = vunpack.c.h.b16 %v1234
        %v4037 = vunpack.c.l.b16 %v1235
        %v4038 = vunpack.c.h.b16 %v1235
        %v4039 = vunpack.c.l.b16 %v1236
        %v4040 = vunpack.c.h.b16 %v1236
        %v4041 = vunpack.c.l.b16 %v1237
        %v4042 = vunpack.c.h.b16 %v1237
        %v4043 = vunpack.c.l.b16 %v1238
        %v4044 = vunpack.c.h.b16 %v1238
        %v4045 = vunpack.c.l.b16 %v1239
        %v4046 = vunpack.c.h.b16 %v1239
        %v4047 = vunpack.c.l.b16 %v1240
        %v4048 = vunpack.c.h.b16 %v1240
        %v4049 = vunpack.c.l.b16 %v1241
        %v4050 = vunpack.c.h.b16 %v1241
        %v4051 = vunpack.c.l.b16 %v1242
        %v4052 = vunpack.c.h.b16 %v1242
        %v4053 = vunpack.c.l.b16 %v1243
        %v4054 = vunpack.c.h.b16 %v1243
        %v4055 = vunpack.c.l.b16 %v1244
        %v4056 = vunpack.c.h.b16 %v1244
        %v4057 = vunpack.c.l.b16 %v1245
        %v4058 = vunpack.c.h.b16 %v1245
        %v4059 = vunpack.c.l.b16 %v1246
        %v4060 = vunpack.c.h.b16 %v1246
        %v4061 = vunpack.c.l.b16 %v1247
        %v4062 = vunpack.c.h.b16 %v1247
        %v4063 = vunpack.c.l.b16 %v1248
        %v4064 = vunpack.c.h.b16 %v1248
        %v4065 = vunpack.c.l.b16 %v1249
        %v4066 = vunpack.c.h.b16 %v1249
        %v4067 = vunpack.c.l.b16 %v1250
        %v4068 = vunpack.c.h.b16 %v1250
        %v4069 = vunpack.c.l.b16 %v1251
        %v4070 = vunpack.c.h.b16 %v1251
        %v4071 = vunpack.c.l.b16 %v1252
        %v4072 = vunpack.c.h.b16 %v1252
        %v4073 = vunpack.c.l.b16 %v1253
        %v4074 = vunpack.c.h.b16 %v1253
        %v4075 = vunpack.c.l.b16 %v1254
        %v4076 = vunpack.c.h.b16 %v1254
        %v4077 = vunpack.c.l.b16 %v1255
        %v4078 = vunpack.c.h.b16 %v1255
        %v4079 = vunpack.c.l.b16 %v1256
        %v4080 = vunpack.c.h.b16 %v1256
        %v4081 = vunpack.c.l.b16 %v1257
        %v4082 = vunpack.c.h.b16 %v1257
        %v4083 = vunpack.c.l.b16 %v1258
        %v4084 = vunpack.c.h.b16 %v1258
        %v4085 = vunpack.c.l.b16 %v1259
        %v4086 = vunpack.c.h.b16 %v1259
        %v4087 = vunpack.c.l.b16 %v1260
        %v4088 = vunpack.c.h.b16 %v1260
        %v4089 = vunpack.c.l.b16 %v1261
        %v4090 = vunpack.c.h.b16 %v1261
        %v4091 = vunpack.c.l.b16 %v1262
        %v4092 = vunpack.c.h.b16 %v1262
        %v4093 = vunpack.c.l.b16 %v1263
        %v4094 = vunpack.c.h.b16 %v1263
        %v4095 = vunpack.c.l.b16 %v1264
        %v4096 = vunpack.c.h.b16 %v1264
        %v4097 = vunpack.c.l.b16 %v1265
        %v4098 = vunpack.c.h.b16 %v1265
        %v4099 = vunpack.c.l.b16 %v1266
        %v4100 = vunpack.c.h.b16 %v1266
        %v4101 = vunpack.c.l.b16 %v1267
        %v4102 = vunpack.c.h.b16 %v1267
        %v4103 = vunpack.c.l.b16 %v1268
        %v4104 = vunpack.c.h.b16 %v1268
        %v4105 = vunpack.c.l.b16 %v1269
        %v4106 = vunpack.c.h.b16 %v1269
        %v4107 = vunpack.c.l.b16 %v1270
        %v4108 = vunpack.c.h.b16 %v1270
        %v4109 = vunpack.c.l.b16 %v1271
        %v4110 = vunpack.c.h.b16 %v1271
        %v4111 = vunpack.c.l.b16 %v1272
        %v4112 = vunpack.c.h.b16 %v1272
        %v4113 = vunpack.c.l.b16 %v1273
        %v4114 = vunpack.c.h.b16 %v1273
        %v4115 = vunpack.c.l.b16 %v1274
        %v4116 = vunpack.c.h.b16 %v1274
        %v4117 = vunpack.c.l.b16 %v1275
        %v4118 = vunpack.c.h.b16 %v1275
        %v4119 = vunpack.c.l.b16 %v1276
        %v4120 = vunpack.c.h.b16 %v1276
        %v4121 = vunpack.c.l.b16 %v1277
        %v4122 = vunpack.c.h.b16 %v1277
        %v4123 = vunpack.c.l.b16 %v1278
        %v4124 = vunpack.c.h.b16 %v1278
        %v4125 = vunpack.c.l.b16 %v1279
        %v4126 = vunpack.c.h.b16 %v1279
        %v4127 = vunpack.c.l.b16 %v1280
        %v4128 = vunpack.c.h.b16 %v1280
        %v4129 = vunpack.c.l.b16 %v1281
        %v4130 = vunpack.c.h.b16 %v1281
        %v4131 = vunpack.c.l.b16 %v1282
        %v4132 = vunpack.c.h.b16 %v1282
        %v4133 = vunpack.c.l.b16 %v1283
        %v4134 = vunpack.c.h.b16 %v1283
        %v4135 = vunpack.c.l.b16 %v1284
        %v4136 = vunpack.c.h.b16 %v1284
        %v4137 = vunpack.c.l.b16 %v1285
        %v4138 = vunpack.c.h.b16 %v1285
        %v4139 = vunpack.c.l.b16 %v1286
        %v4140 = vunpack.c.h.b16 %v1286
        %v4141 = vunpack.c.l.b16 %v1287
        %v4142 = vunpack.c.h.b16 %v1287
        %v4143 = vunpack.c.l.b16 %v1288
        %v4144 = vunpack.c.h.b16 %v1288
        %v4145 = vunpack.c.l.b16 %v1289
        %v4146 = vunpack.c.h.b16 %v1289
        %v4147 = vunpack.c.l.b16 %v1290
        %v4148 = vunpack.c.h.b16 %v1290
        %v4149 = vunpack.c.l.b16 %v1291
        %v4150 = vunpack.c.h.b16 %v1291
        %v4151 = vunpack.c.l.b16 %v1292
        %v4152 = vunpack.c.h.b16 %v1292
        %v4153 = vunpack.c.l.b16 %v1293
        %v4154 = vunpack.c.h.b16 %v1293
        %v4155 = vunpack.c.l.b16 %v1294
        %v4156 = vunpack.c.h.b16 %v1294
        %v4157 = vunpack.c.l.b16 %v1295
        %v4158 = vunpack.c.h.b16 %v1295
        %v4159 = vunpack.c.l.b16 %v1296
        %v4160 = vunpack.c.h.b16 %v1296
        %v4161 = vunpack.c.l.b16 %v1297
        %v4162 = vunpack.c.h.b16 %v1297
        %v4163 = vunpack.c.l.b16 %v1298
        %v4164 = vunpack.c.h.b16 %v1298
        %v4165 = vunpack.c.l.b16 %v1299
        %v4166 = vunpack.c.h.b16 %v1299
        %v4167 = vunpack.c.l.b16 %v1300
        %v4168 = vunpack.c.h.b16 %v1300
        %v4169 = vunpack.c.l.b16 %v1301
        %v4170 = vunpack.c.h.b16 %v1301
        %v4171 = vunpack.c.l.b16 %v1302
        %v4172 = vunpack.c.h.b16 %v1302
        %v4173 = vunpack.c.l.b16 %v1303
        %v4174 = vunpack.c.h.b16 %v1303
        %v4175 = vunpack.c.l.b16 %v1304
        %v4176 = vunpack.c.h.b16 %v1304
        %v4177 = vunpack.c.l.b16 %v1305
        %v4178 = vunpack.c.h.b16 %v1305
        %v4179 = vunpack.c.l.b16 %v1306
        %v4180 = vunpack.c.h.b16 %v1306
        %v4181 = vunpack.c.l.b16 %v1307
        %v4182 = vunpack.c.h.b16 %v1307
        %v4183 = vunpack.c.l.b16 %v1308
        %v4184 = vunpack.c.h.b16 %v1308
        %v4185 = vunpack.c.l.b16 %v1309
        %v4186 = vunpack.c.h.b16 %v1309
        %v4187 = vunpack.c.l.b16 %v1310
        %v4188 = vunpack.c.h.b16 %v1310
        %v4189 = vunpack.c.l.b16 %v1311
        %v4190 = vunpack.c.h.b16 %v1311
        %v4191 = vunpack.c.l.b16 %v1312
        %v4192 = vunpack.c.h.b16 %v1312
        %v4193 = vunpack.c.l.b16 %v1313
        %v4194 = vunpack.c.h.b16 %v1313
        %v4195 = vunpack.c.l.b16 %v1314
        %v4196 = vunpack.c.h.b16 %v1314
        %v4197 = vunpack.c.l.b16 %v1315
        %v4198 = vunpack.c.h.b16 %v1315
        %v4199 = vunpack.c.l.b16 %v1316
        %v4200 = vunpack.c.h.b16 %v1316
        %v4201 = vunpack.c.l.b16 %v1317
        %v4202 = vunpack.c.h.b16 %v1317
        %v4203 = vunpack.c.l.b16 %v1318
        %v4204 = vunpack.c.h.b16 %v1318
        %v4205 = vunpack.c.l.b16 %v1319
        %v4206 = vunpack.c.h.b16 %v1319
        %v4207 = vunpack.c.l.b16 %v1320
        %v4208 = vunpack.c.h.b16 %v1320
        %v4209 = vunpack.c.l.b16 %v1321
        %v4210 = vunpack.c.h.b16 %v1321
        %v4211 = vunpack.c.l.b16 %v1322
        %v4212 = vunpack.c.h.b16 %v1322
        %v4213 = vunpack.c.l.b16 %v1323
        %v4214 = vunpack.c.h.b16 %v1323
        %v4215 = vunpack.c.l.b16 %v1324
        %v4216 = vunpack.c.h.b16 %v1324
        %v4217 = vunpack.c.l.b16 %v1325
        %v4218 = vunpack.c.h.b16 %v1325
        %v4219 = vunpack.c.l.b16 %v1326
        %v4220 = vunpack.c.h.b16 %v1326
        %v4221 = vunpack.c.l.b16 %v1327
        %v4222 = vunpack.c.h.b16 %v1327
        %v4223 = vunpack.c.l.b16 %v1328
        %v4224 = vunpack.c.h.b16 %v1328
        %v4225 = vunpack.c.l.b16 %v1329
        %v4226 = vunpack.c.h.b16 %v1329
        %v4227 = vunpack.c.l.b16 %v1330
        %v4228 = vunpack.c.h.b16 %v1330
        %v4229 = vunpack.c.l.b16 %v1331
        %v4230 = vunpack.c.h.b16 %v1331
        %v4231 = vunpack.c.l.b16 %v1332
        %v4232 = vunpack.c.h.b16 %v1332
        %v4233 = vunpack.c.l.b16 %v1333
        %v4234 = vunpack.c.h.b16 %v1333
        %v4235 = vunpack.c.l.b16 %v1334
        %v4236 = vunpack.c.h.b16 %v1334
        %v4237 = vunpack.c.l.b16 %v1335
        %v4238 = vunpack.c.h.b16 %v1335
        %v4239 = vunpack.c.l.b16 %v1336
        %v4240 = vunpack.c.h.b16 %v1336
        %v4241 = vunpack.c.l.b16 %v1337
        %v4242 = vunpack.c.h.b16 %v1337
        %v4243 = vunpack.c.l.b16 %v1338
        %v4244 = vunpack.c.h.b16 %v1338
        %v4245 = vunpack.c.l.b16 %v1339
        %v4246 = vunpack.c.h.b16 %v1339
        %v4247 = vunpack.c.l.b16 %v1340
        %v4248 = vunpack.c.h.b16 %v1340
        %v4249 = vunpack.c.l.b16 %v1341
        %v4250 = vunpack.c.h.b16 %v1341
        %v4251 = vunpack.c.l.b16 %v1342
        %v4252 = vunpack.c.h.b16 %v1342
        %v4253 = vunpack.c.l.b16 %v1343
        %v4254 = vunpack.c.h.b16 %v1343
        %v4255 = vunpack.c.l.b16 %v1344
        %v4256 = vunpack.c.h.b16 %v1344
        %v4257 = vunpack.c.l.b16 %v1345
        %v4258 = vunpack.c.h.b16 %v1345
        %v4259 = vunpack.c.l.b16 %v1346
        %v4260 = vunpack.c.h.b16 %v1346
        %v4261 = vunpack.c.l.b16 %v1347
        %v4262 = vunpack.c.h.b16 %v1347
        %v4263 = vunpack.c.l.b16 %v1348
        %v4264 = vunpack.c.h.b16 %v1348
        %v4265 = vunpack.c.l.b16 %v1349
        %v4266 = vunpack.c.h.b16 %v1349
        %v4267 = vunpack.c.l.b16 %v1350
        %v4268 = vunpack.c.h.b16 %v1350
        %v4269 = vunpack.c.l.b16 %v1351
        %v4270 = vunpack.c.h.b16 %v1351
        %v4271 = vunpack.c.l.b16 %v1352
        %v4272 = vunpack.c.h.b16 %v1352
        %v4273 = vunpack.c.l.b16 %v1353
        %v4274 = vunpack.c.h.b16 %v1353
        %v4275 = vunpack.c.l.b16 %v1354
        %v4276 = vunpack.c.h.b16 %v1354
        %v4277 = vunpack.c.l.b16 %v1355
        %v4278 = vunpack.c.h.b16 %v1355
        %v4279 = vunpack.c.l.b16 %v1356
        %v4280 = vunpack.c.h.b16 %v1356
        %v4281 = vunpack.c.l.b16 %v1357
        %v4282 = vunpack.c.h.b16 %v1357
        %v4283 = vunpack.c.l.b16 %v1358
        %v4284 = vunpack.c.h.b16 %v1358
        %v4285 = vunpack.c.l.b16 %v1359
        %v4286 = vunpack.c.h.b16 %v1359
        %v4287 = vunpack.c.l.b16 %v1360
        %v4288 = vunpack.c.h.b16 %v1360
        %v4289 = vunpack.c.l.b16 %v1361
        %v4290 = vunpack.c.h.b16 %v1361
        %v4291 = vunpack.c.l.b16 %v1362
        %v4292 = vunpack.c.h.b16 %v1362
        %v4293 = vunpack.c.l.b16 %v1363
        %v4294 = vunpack.c.h.b16 %v1363
        %v4295 = vunpack.c.l.b16 %v1364
        %v4296 = vunpack.c.h.b16 %v1364
        %v4297 = vunpack.c.l.b16 %v1365
        %v4298 = vunpack.c.h.b16 %v1365
        %v4299 = vunpack.c.l.b16 %v1366
        %v4300 = vunpack.c.h.b16 %v1366
        %v4301 = vunpack.c.l.b16 %v1367
        %v4302 = vunpack.c.h.b16 %v1367
        %v4303 = vunpack.c.l.b16 %v1368
        %v4304 = vunpack.c.h.b16 %v1368
        %v4305 = vunpack.c.l.b16 %v1369
        %v4306 = vunpack.c.h.b16 %v1369
        %v4307 = vunpack.c.l.b16 %v1370
        %v4308 = vunpack.c.h.b16 %v1370
        %v4309 = vunpack.c.l.b16 %v1371
        %v4310 = vunpack.c.h.b16 %v1371
        %v4311 = vunpack.c.l.b16 %v1372
        %v4312 = vunpack.c.h.b16 %v1372
        %v4313 = vunpack.c.l.b16 %v1373
        %v4314 = vunpack.c.h.b16 %v1373
        %v4315 = vunpack.c.l.b16 %v1374
        %v4316 = vunpack.c.h.b16 %v1374
        %v4317 = vunpack.c.l.b16 %v1375
        %v4318 = vunpack.c.h.b16 %v1375
        %v4319 = vunpack.c.l.b16 %v1376
        %v4320 = vunpack.c.h.b16 %v1376
        %v4321 = vunpack.c.l.b16 %v1377
        %v4322 = vunpack.c.h.b16 %v1377
        %v4323 = vunpack.c.l.b16 %v1378
        %v4324 = vunpack.c.h.b16 %v1378
        %v4325 = vunpack.c.l.b16 %v1379
        %v4326 = vunpack.c.h.b16 %v1379
        %v4327 = vunpack.c.l.b16 %v1380
        %v4328 = vunpack.c.h.b16 %v1380
        %v4329 = vunpack.c.l.b16 %v1381
        %v4330 = vunpack.c.h.b16 %v1381
        %v4331 = vunpack.c.l.b16 %v1382
        %v4332 = vunpack.c.h.b16 %v1382
        %v4333 = vunpack.c.l.b16 %v1383
        %v4334 = vunpack.c.h.b16 %v1383
        %v4335 = vunpack.c.l.b16 %v1384
        %v4336 = vunpack.c.h.b16 %v1384
        %v4337 = vunpack.c.l.b16 %v1385
        %v4338 = vunpack.c.h.b16 %v1385
        %v4339 = vunpack.c.l.b16 %v1386
        %v4340 = vunpack.c.h.b16 %v1386
        %v4341 = vunpack.c.l.b16 %v1387
        %v4342 = vunpack.c.h.b16 %v1387
        %v4343 = vunpack.c.l.b16 %v1388
        %v4344 = vunpack.c.h.b16 %v1388
        %v4345 = vunpack.c.l.b16 %v1389
        %v4346 = vunpack.c.h.b16 %v1389
        %v4347 = vunpack.c.l.b16 %v1390
        %v4348 = vunpack.c.h.b16 %v1390
        %v4349 = vunpack.c.l.b16 %v1391
        %v4350 = vunpack.c.h.b16 %v1391
        %v4351 = vunpack.c.l.b16 %v1392
        %v4352 = vunpack.c.h.b16 %v1392
        %v4353 = vunpack.c.l.b16 %v1393
        %v4354 = vunpack.c.h.b16 %v1393
        %v4355 = vunpack.c.l.b16 %v1394
        %v4356 = vunpack.c.h.b16 %v1394
        %v4357 = vunpack.c.l.b16 %v1395
        %v4358 = vunpack.c.h.b16 %v1395
        %v4359 = vunpack.c.l.b16 %v1396
        %v4360 = vunpack.c.h.b16 %v1396
        %v4361 = vunpack.c.l.b16 %v1397
        %v4362 = vunpack.c.h.b16 %v1397
        %v4363 = vunpack.c.l.b16 %v1398
        %v4364 = vunpack.c.h.b16 %v1398
        %v4365 = vunpack.c.l.b16 %v1399
        %v4366 = vunpack.c.h.b16 %v1399
        %v4367 = vunpack.c.l.b16 %v1400
        %v4368 = vunpack.c.h.b16 %v1400
        %v4369 = vpack.c.b16 %v2581, %v2577
        %v4370 = vpack.c.b16 %v2582, %v2578
        %v4371 = vpack.c.b16 %v2583, %v2579
        %v4372 = vpack.c.b16 %v2584, %v2580
        %v4373 = vpack.c.b16 %v2589, %v2585
        %v4374 = vpack.c.b16 %v2590, %v2586
        %v4375 = vpack.c.b16 %v2591, %v2587
        %v4376 = vpack.c.b16 %v2592, %v2588
        %v4377 = vpack.c.b16 %v2597, %v2593
        %v4378 = vpack.c.b16 %v2598, %v2594
        %v4379 = vpack.c.b16 %v2599, %v2595
        %v4380 = vpack.c.b16 %v2600, %v2596
        %v4381 = vpack.c.b16 %v2605, %v2601
        %v4382 = vpack.c.b16 %v2606, %v2602
        %v4383 = vpack.c.b16 %v2607, %v2603
        %v4384 = vpack.c.b16 %v2608, %v2604
        %v4385 = vpack.c.b16 %v2613, %v2609
        %v4386 = vpack.c.b16 %v2614, %v2610
        %v4387 = vpack.c.b16 %v2615, %v2611
        %v4388 = vpack.c.b16 %v2616, %v2612
        %v4389 = vpack.c.b16 %v2621, %v2617
        %v4390 = vpack.c.b16 %v2622, %v2618
        %v4391 = vpack.c.b16 %v2623, %v2619
        %v4392 = vpack.c.b16 %v2624, %v2620
        %v4393 = vpack.c.b16 %v2629, %v2625
        %v4394 = vpack.c.b16 %v2630, %v2626
        %v4395 = vpack.c.b16 %v2631, %v2627
        %v4396 = vpack.c.b16 %v2632, %v2628
        %v4397 = vpack.c.b16 %v2637, %v2633
        %v4398 = vpack.c.b16 %v2638, %v2634
        %v4399 = vpack.c.b16 %v2639, %v2635
        %v4400 = vpack.c.b16 %v2640, %v2636
        %v4401 = vpack.c.b16 %v2645, %v2641
        %v4402 = vpack.c.b16 %v2646, %v2642
        %v4403 = vpack.c.b16 %v2647, %v2643
        %v4404 = vpack.c.b16 %v2648, %v2644
        %v4405 = vpack.c.b16 %v2653, %v2649
        %v4406 = vpack.c.b16 %v2654, %v2650
        %v4407 = vpack.c.b16 %v2655, %v2651
        %v4408 = vpack.c.b16 %v2656, %v2652
        %v4409 = vpack.c.b16 %v2661, %v2657
        %v4410 = vpack.c.b16 %v2662, %v2658
        %v4411 = vpack.c.b16 %v2663, %v2659
        %v4412 = vpack.c.b16 %v2664, %v2660
        %v4413 = vpack.c.b16 %v2669, %v2665
        %v4414 = vpack.c.b16 %v2670, %v2666
        %v4415 = vpack.c.b16 %v2671, %v2667
        %v4416 = vpack.c.b16 %v2672, %v2668
        %v4417 = vpack.c.b16 %v2677, %v2673
        %v4418 = vpack.c.b16 %v2678, %v2674
        %v4419 = vpack.c.b16 %v2679, %v2675
        %v4420 = vpack.c.b16 %v2680, %v2676
        %v4421 = vpack.c.b16 %v2685, %v2681
        %v4422 = vpack.c.b16 %v2686, %v2682
        %v4423 = vpack.c.b16 %v2687, %v2683
        %v4424 = vpack.c.b16 %v2688, %v2684
        %v4425 = vpack.c.b16 %v2693, %v2689
        %v4426 = vpack.c.b16 %v2694, %v2690
        %v4427 = vpack.c.b16 %v2695, %v2691
        %v4428 = vpack.c.b16 %v2696, %v2692
        %v4429 = vpack.c.b16 %v2701, %v2697
        %v4430 = vpack.c.b16 %v2702, %v2698
        %v4431 = vpack.c.b16 %v2703, %v2699
        %v4432 = vpack.c.b16 %v2704, %v2700
        %v4433 = vpack.c.b16 %v2709, %v2705
        %v4434 = vpack.c.b16 %v2710, %v2706
        %v4435 = vpack.c.b16 %v2711, %v2707
        %v4436 = vpack.c.b16 %v2712, %v2708
        %v4437 = vpack.c.b16 %v2717, %v2713
        %v4438 = vpack.c.b16 %v2718, %v2714
        %v4439 = vpack.c.b16 %v2719, %v2715
        %v4440 = vpack.c.b16 %v2720, %v2716
        %v4441 = vpack.c.b16 %v2725, %v2721
        %v4442 = vpack.c.b16 %v2726, %v2722
        %v4443 = vpack.c.b16 %v2727, %v2723
        %v4444 = vpack.c.b16 %v2728, %v2724
        %v4445 = vpack.c.b16 %v2733, %v2729
        %v4446 = vpack.c.b16 %v2734, %v2730
        %v4447 = vpack.c.b16 %v2735, %v2731
        %v4448 = vpack.c.b16 %v2736, %v2732
        %v4449 = vpack.c.b16 %v2741, %v2737
        %v4450 = vpack.c.b16 %v2742, %v2738
        %v4451 = vpack.c.b16 %v2743, %v2739
        %v4452 = vpack.c.b16 %v2744, %v2740
        %v4453 = vpack.c.b16 %v2749, %v2745
        %v4454 = vpack.c.b16 %v2750, %v2746
        %v4455 = vpack.c.b16 %v2751, %v2747
        %v4456 = vpack.c.b16 %v2752, %v2748
        %v4457 = vpack.c.b16 %v2757, %v2753
        %v4458 = vpack.c.b16 %v2758, %v2754
        %v4459 = vpack.c.b16 %v2759, %v2755
        %v4460 = vpack.c.b16 %v2760, %v2756
        %v4461 = vpack.c.b16 %v2765, %v2761
        %v4462 = vpack.c.b16 %v2766, %v2762
        %v4463 = vpack.c.b16 %v2767, %v2763
        %v4464 = vpack.c.b16 %v2768, %v2764
        %v4465 = vpack.c.b16 %v2773, %v2769
        %v4466 = vpack.c.b16 %v2774, %v2770
        %v4467 = vpack.c.b16 %v2775, %v2771
        %v4468 = vpack.c.b16 %v2776, %v2772
        %v4469 = vpack.c.b16 %v2781, %v2777
        %v4470 = vpack.c.b16 %v2782, %v2778
        %v4471 = vpack.c.b16 %v2783, %v2779
        %v4472 = vpack.c.b16 %v2784, %v2780
        %v4473 = vpack.c.b16 %v2789, %v2785
        %v4474 = vpack.c.b16 %v2790, %v2786
        %v4475 = vpack.c.b16 %v2791, %v2787
        %v4476 = vpack.c.b16 %v2792, %v2788
        %v4477 = vpack.c.b16 %v2797, %v2793
        %v4478 = vpack.c.b16 %v2798, %v2794
        %v4479 = vpack.c.b16 %v2799, %v2795
        %v4480 = vpack.c.b16 %v2800, %v2796
        %v4481 = vpack.c.b16 %v2805, %v2801
        %v4482 = vpack.c.b16 %v2806, %v2802
        %v4483 = vpack.c.b16 %v2807, %v2803
        %v4484 = vpack.c.b16 %v2808, %v2804
        %v4485 = vpack.c.b16 %v2813, %v2809
        %v4486 = vpack.c.b16 %v2814, %v2810
        %v4487 = vpack.c.b16 %v2815, %v2811
        %v4488 = vpack.c.b16 %v2816, %v2812
        %v4489 = vpack.c.b16 %v2821, %v2817
        %v4490 = vpack.c.b16 %v2822, %v2818
        %v4491 = vpack.c.b16 %v2823, %v2819
        %v4492 = vpack.c.b16 %v2824, %v2820
        %v4493 = vpack.c.b16 %v2829, %v2825
        %v4494 = vpack.c.b16 %v2830, %v2826
        %v4495 = vpack.c.b16 %v2831, %v2827
        %v4496 = vpack.c.b16 %v2832, %v2828
        %v4497 = vpack.c.b16 %v2837, %v2833
        %v4498 = vpack.c.b16 %v2838, %v2834
        %v4499 = vpack.c.b16 %v2839, %v2835
        %v4500 = vpack.c.b16 %v2840, %v2836
        %v4501 = vpack.c.b16 %v2845, %v2841
        %v4502 = vpack.c.b16 %v2846, %v2842
        %v4503 = vpack.c.b16 %v2847, %v2843
        %v4504 = vpack.c.b16 %v2848, %v2844
        %v4505 = vpack.c.b16 %v2853, %v2849
        %v4506 = vpack.c.b16 %v2854, %v2850
        %v4507 = vpack.c.b16 %v2855, %v2851
        %v4508 = vpack.c.b16 %v2856, %v2852
        %v4509 = vpack.c.b16 %v2861, %v2857
        %v4510 = vpack.c.b16 %v2862, %v2858
        %v4511 = vpack.c.b16 %v2863, %v2859
        %v4512 = vpack.c.b16 %v2864, %v2860
        %v4513 = vpack.c.b16 %v2869, %v2865
        %v4514 = vpack.c.b16 %v2870, %v2866
        %v4515 = vpack.c.b16 %v2871, %v2867
        %v4516 = vpack.c.b16 %v2872, %v2868
        %v4517 = vpack.c.b16 %v2877, %v2873
        %v4518 = vpack.c.b16 %v2878, %v2874
        %v4519 = vpack.c.b16 %v2879, %v2875
        %v4520 = vpack.c.b16 %v2880, %v2876
        %v4521 = vpack.c.b16 %v2885, %v2881
        %v4522 = vpack.c.b16 %v2886, %v2882
        %v4523 = vpack.c.b16 %v2887, %v2883
        %v4524 = vpack.c.b16 %v2888, %v2884
        %v4525 = vpack.c.b16 %v2893, %v2889
        %v4526 = vpack.c.b16 %v2894, %v2890
        %v4527 = vpack.c.b16 %v2895, %v2891
        %v4528 = vpack.c.b16 %v2896, %v2892
        %v4529 = vpack.c.b16 %v2901, %v2897
        %v4530 = vpack.c.b16 %v2902, %v2898
        %v4531 = vpack.c.b16 %v2903, %v2899
        %v4532 = vpack.c.b16 %v2904, %v2900
        %v4533 = vpack.c.b16 %v2909, %v2905
        %v4534 = vpack.c.b16 %v2910, %v2906
        %v4535 = vpack.c.b16 %v2911, %v2907
        %v4536 = vpack.c.b16 %v2912, %v2908
        %v4537 = vpack.c.b16 %v2917, %v2913
        %v4538 = vpack.c.b16 %v2918, %v2914
        %v4539 = vpack.c.b16 %v2919, %v2915
        %v4540 = vpack.c.b16 %v2920, %v2916
        %v4541 = vpack.c.b16 %v2925, %v2921
        %v4542 = vpack.c.b16 %v2926, %v2922
        %v4543 = vpack.c.b16 %v2927, %v2923
        %v4544 = vpack.c.b16 %v2928, %v2924
        %v4545 = vpack.c.b16 %v2933, %v2929
        %v4546 = vpack.c.b16 %v2934, %v2930
        %v4547 = vpack.c.b16 %v2935, %v2931
        %v4548 = vpack.c.b16 %v2936, %v2932
        %v4549 = vpack.c.b16 %v2941, %v2937
        %v4550 = vpack.c.b16 %v2942, %v2938
        %v4551 = vpack.c.b16 %v2943, %v2939
        %v4552 = vpack.c.b16 %v2944, %v2940
        %v4553 = vpack.c.b16 %v2949, %v2945
        %v4554 = vpack.c.b16 %v2950, %v2946
        %v4555 = vpack.c.b16 %v2951, %v2947
        %v4556 = vpack.c.b16 %v2952, %v2948
        %v4557 = vpack.c.b16 %v2957, %v2953
        %v4558 = vpack.c.b16 %v2958, %v2954
        %v4559 = vpack.c.b16 %v2959, %v2955
        %v4560 = vpack.c.b16 %v2960, %v2956
        %v4561 = vpack.c.b16 %v2965, %v2961
        %v4562 = vpack.c.b16 %v2966, %v2962
        %v4563 = vpack.c.b16 %v2967, %v2963
        %v4564 = vpack.c.b16 %v2968, %v2964
        %v4565 = vpack.c.b16 %v2973, %v2969
        %v4566 = vpack.c.b16 %v2974, %v2970
        %v4567 = vpack.c.b16 %v2975, %v2971
        %v4568 = vpack.c.b16 %v2976, %v2972
        %v4569 = vpack.c.b16 %v2981, %v2977
        %v4570 = vpack.c.b16 %v2982, %v2978
        %v4571 = vpack.c.b16 %v2983, %v2979
        %v4572 = vpack.c.b16 %v2984, %v2980
        %v4573 = vpack.c.b16 %v2989, %v2985
        %v4574 = vpack.c.b16 %v2990, %v2986
        %v4575 = vpack.c.b16 %v2991, %v2987
        %v4576 = vpack.c.b16 %v2992, %v2988
        %v4577 = vpack.c.b16 %v2997, %v2993
        %v4578 = vpack.c.b16 %v2998, %v2994
        %v4579 = vpack.c.b16 %v2999, %v2995
        %v4580 = vpack.c.b16 %v3000, %v2996
        %v4581 = vpack.c.b16 %v3005, %v3001
        %v4582 = vpack.c.b16 %v3006, %v3002
        %v4583 = vpack.c.b16 %v3007, %v3003
        %v4584 = vpack.c.b16 %v3008, %v3004
        %v4585 = vpack.c.b16 %v3013, %v3009
        %v4586 = vpack.c.b16 %v3014, %v3010
        %v4587 = vpack.c.b16 %v3015, %v3011
        %v4588 = vpack.c.b16 %v3016, %v3012
        %v4589 = vpack.c.b16 %v3021, %v3017
        %v4590 = vpack.c.b16 %v3022, %v3018
        %v4591 = vpack.c.b16 %v3023, %v3019
        %v4592 = vpack.c.b16 %v3024, %v3020
        %v4593 = vpack.c.b16 %v3029, %v3025
        %v4594 = vpack.c.b16 %v3030, %v3026
        %v4595 = vpack.c.b16 %v3031, %v3027
        %v4596 = vpack.c.b16 %v3032, %v3028
        %v4597 = vpack.c.b16 %v3037, %v3033
        %v4598 = vpack.c.b16 %v3038, %v3034
        %v4599 = vpack.c.b16 %v3039, %v3035
        %v4600 = vpack.c.b16 %v3040, %v3036
        %v4601 = vpack.c.b16 %v3045, %v3041
        %v4602 = vpack.c.b16 %v3046, %v3042
        %v4603 = vpack.c.b16 %v3047, %v3043
        %v4604 = vpack.c.b16 %v3048, %v3044
        %v4605 = vpack.c.b16 %v3053, %v3049
        %v4606 = vpack.c.b16 %v3054, %v3050
        %v4607 = vpack.c.b16 %v3055, %v3051
        %v4608 = vpack.c.b16 %v3056, %v3052
        %v4609 = vpack.c.b16 %v3061, %v3057
        %v4610 = vpack.c.b16 %v3062, %v3058
        %v4611 = vpack.c.b16 %v3063, %v3059
        %v4612 = vpack.c.b16 %v3064, %v3060
        %v4613 = vpack.c.b16 %v3069, %v3065
        %v4614 = vpack.c.b16 %v3070, %v3066
        %v4615 = vpack.c.b16 %v3071, %v3067
        %v4616 = vpack.c.b16 %v3072, %v3068
        %v4617 = vpack.c.b16 %v3077, %v3073
        %v4618 = vpack.c.b16 %v3078, %v3074
        %v4619 = vpack.c.b16 %v3079, %v3075
        %v4620 = vpack.c.b16 %v3080, %v3076
        %v4621 = vpack.c.b16 %v3085, %v3081
        %v4622 = vpack.c.b16 %v3086, %v3082
        %v4623 = vpack.c.b16 %v3087, %v3083
        %v4624 = vpack.c.b16 %v3088, %v3084
        %v4625 = vpack.c.b16 %v3093, %v3089
        %v4626 = vpack.c.b16 %v3094, %v3090
        %v4627 = vpack.c.b16 %v3095, %v3091
        %v4628 = vpack.c.b16 %v3096, %v3092
        %v4629 = vpack.c.b16 %v3101, %v3097
        %v4630 = vpack.c.b16 %v3102, %v3098
        %v4631 = vpack.c.b16 %v3103, %v3099
        %v4632 = vpack.c.b16 %v3104, %v3100
        %v4633 = vpack.c.b16 %v3109, %v3105
        %v4634 = vpack.c.b16 %v3110, %v3106
        %v4635 = vpack.c.b16 %v3111, %v3107
        %v4636 = vpack.c.b16 %v3112, %v3108
        %v4637 = vpack.c.b16 %v3117, %v3113
        %v4638 = vpack.c.b16 %v3118, %v3114
        %v4639 = vpack.c.b16 %v3119, %v3115
        %v4640 = vpack.c.b16 %v3120, %v3116
        %v4641 = vpack.c.b16 %v3125, %v3121
        %v4642 = vpack.c.b16 %v3126, %v3122
        %v4643 = vpack.c.b16 %v3127, %v3123
        %v4644 = vpack.c.b16 %v3128, %v3124
        %v4645 = vpack.c.b16 %v3133, %v3129
        %v4646 = vpack.c.b16 %v3134, %v3130
        %v4647 = vpack.c.b16 %v3135, %v3131
        %v4648 = vpack.c.b16 %v3136, %v3132
        %v4649 = vpack.c.b16 %v3141, %v3137
        %v4650 = vpack.c.b16 %v3142, %v3138
        %v4651 = vpack.c.b16 %v3143, %v3139
        %v4652 = vpack.c.b16 %v3144, %v3140
        %v4653 = vpack.c.b16 %v3149, %v3145
        %v4654 = vpack.c.b16 %v3150, %v3146
        %v4655 = vpack.c.b16 %v3151, %v3147
        %v4656 = vpack.c.b16 %v3152, %v3148
        %v4657 = vpack.c.b16 %v3157, %v3153
        %v4658 = vpack.c.b16 %v3158, %v3154
        %v4659 = vpack.c.b16 %v3159, %v3155
        %v4660 = vpack.c.b16 %v3160, %v3156
        %v4661 = vpack.c.b16 %v3165, %v3161
        %v4662 = vpack.c.b16 %v3166, %v3162
        %v4663 = vpack.c.b16 %v3167, %v3163
        %v4664 = vpack.c.b16 %v3168, %v3164
        %v4665 = vpack.c.b16 %v3173, %v3169
        %v4666 = vpack.c.b16 %v3174, %v3170
        %v4667 = vpack.c.b16 %v3175, %v3171
        %v4668 = vpack.c.b16 %v3176, %v3172
        %v4669 = vpack.c.b16 %v3181, %v3177
        %v4670 = vpack.c.b16 %v3182, %v3178
        %v4671 = vpack.c.b16 %v3183, %v3179
        %v4672 = vpack.c.b16 %v3184, %v3180
        %v4673 = vpack.c.b16 %v3189, %v3185
        %v4674 = vpack.c.b16 %v3190, %v3186
        %v4675 = vpack.c.b16 %v3191, %v3187
        %v4676 = vpack.c.b16 %v3192, %v3188
        %v4677 = vpack.c.b16 %v3197, %v3193
        %v4678 = vpack.c.b16 %v3198, %v3194
        %v4679 = vpack.c.b16 %v3199, %v3195
        %v4680 = vpack.c.b16 %v3200, %v3196
        %v4681 = vpack.c.b16 %v3205, %v3201
        %v4682 = vpack.c.b16 %v3206, %v3202
        %v4683 = vpack.c.b16 %v3207, %v3203
        %v4684 = vpack.c.b16 %v3208, %v3204
        %v4685 = vpack.c.b16 %v3213, %v3209
        %v4686 = vpack.c.b16 %v3214, %v3210
        %v4687 = vpack.c.b16 %v3215, %v3211
        %v4688 = vpack.c.b16 %v3216, %v3212
        %v4689 = vpack.c.b16 %v3221, %v3217
        %v4690 = vpack.c.b16 %v3222, %v3218
        %v4691 = vpack.c.b16 %v3223, %v3219
        %v4692 = vpack.c.b16 %v3224, %v3220
        %v4693 = vpack.c.b16 %v3229, %v3225
        %v4694 = vpack.c.b16 %v3230, %v3226
        %v4695 = vpack.c.b16 %v3231, %v3227
        %v4696 = vpack.c.b16 %v3232, %v3228
        %v4697 = vpack.c.b16 %v3237, %v3233
        %v4698 = vpack.c.b16 %v3238, %v3234
        %v4699 = vpack.c.b16 %v3239, %v3235
        %v4700 = vpack.c.b16 %v3240, %v3236
        %v4701 = vpack.c.b16 %v3245, %v3241
        %v4702 = vpack.c.b16 %v3246, %v3242
        %v4703 = vpack.c.b16 %v3247, %v3243
        %v4704 = vpack.c.b16 %v3248, %v3244
        %v4705 = vpack.c.b16 %v3253, %v3249
        %v4706 = vpack.c.b16 %v3254, %v3250
        %v4707 = vpack.c.b16 %v3255, %v3251
        %v4708 = vpack.c.b16 %v3256, %v3252
        %v4709 = vpack.c.b16 %v3261, %v3257
        %v4710 = vpack.c.b16 %v3262, %v3258
        %v4711 = vpack.c.b16 %v3263, %v3259
        %v4712 = vpack.c.b16 %v3264, %v3260
        %v4713 = vpack.c.b16 %v3269, %v3265
        %v4714 = vpack.c.b16 %v3270, %v3266
        %v4715 = vpack.c.b16 %v3271, %v3267
        %v4716 = vpack.c.b16 %v3272, %v3268
        %v4717 = vpack.c.b16 %v3277, %v3273
        %v4718 = vpack.c.b16 %v3278, %v3274
        %v4719 = vpack.c.b16 %v3279, %v3275
        %v4720 = vpack.c.b16 %v3280, %v3276
        %v4721 = vpack.c.b16 %v3285, %v3281
        %v4722 = vpack.c.b16 %v3286, %v3282
        %v4723 = vpack.c.b16 %v3287, %v3283
        %v4724 = vpack.c.b16 %v3288, %v3284
        %v4725 = vpack.c.b16 %v3293, %v3289
        %v4726 = vpack.c.b16 %v3294, %v3290
        %v4727 = vpack.c.b16 %v3295, %v3291
        %v4728 = vpack.c.b16 %v3296, %v3292
        %v4729 = vpack.c.b16 %v3301, %v3297
        %v4730 = vpack.c.b16 %v3302, %v3298
        %v4731 = vpack.c.b16 %v3303, %v3299
        %v4732 = vpack.c.b16 %v3304, %v3300
        %v4733 = vpack.c.b16 %v3309, %v3305
        %v4734 = vpack.c.b16 %v3310, %v3306
        %v4735 = vpack.c.b16 %v3311, %v3307
        %v4736 = vpack.c.b16 %v3312, %v3308
        %v4737 = vpack.c.b16 %v3317, %v3313
        %v4738 = vpack.c.b16 %v3318, %v3314
        %v4739 = vpack.c.b16 %v3319, %v3315
        %v4740 = vpack.c.b16 %v3320, %v3316
        %v4741 = vpack.c.b16 %v3325, %v3321
        %v4742 = vpack.c.b16 %v3326, %v3322
        %v4743 = vpack.c.b16 %v3327, %v3323
        %v4744 = vpack.c.b16 %v3328, %v3324
        %v4745 = vpack.c.b16 %v3333, %v3329
        %v4746 = vpack.c.b16 %v3334, %v3330
        %v4747 = vpack.c.b16 %v3335, %v3331
        %v4748 = vpack.c.b16 %v3336, %v3332
        %v4749 = vpack.c.b16 %v3341, %v3337
        %v4750 = vpack.c.b16 %v3342, %v3338
        %v4751 = vpack.c.b16 %v3343, %v3339
        %v4752 = vpack.c.b16 %v3344, %v3340
        %v4753 = vpack.c.b16 %v3349, %v3345
        %v4754 = vpack.c.b16 %v3350, %v3346
        %v4755 = vpack.c.b16 %v3351, %v3347
        %v4756 = vpack.c.b16 %v3352, %v3348
        %v4757 = vpack.c.b16 %v3357, %v3353
        %v4758 = vpack.c.b16 %v3358, %v3354
        %v4759 = vpack.c.b16 %v3359, %v3355
        %v4760 = vpack.c.b16 %v3360, %v3356
        %v4761 = vpack.c.b16 %v3365, %v3361
        %v4762 = vpack.c.b16 %v3366, %v3362
        %v4763 = vpack.c.b16 %v3367, %v3363
        %v4764 = vpack.c.b16 %v3368, %v3364
        %v4765 = vpack.c.b16 %v3373, %v3369
        %v4766 = vpack.c.b16 %v3374, %v3370
        %v4767 = vpack.c.b16 %v3375, %v3371
        %v4768 = vpack.c.b16 %v3376, %v3372
        %v4769 = vpack.c.b16 %v3381, %v3377
        %v4770 = vpack.c.b16 %v3382, %v3378
        %v4771 = vpack.c.b16 %v3383, %v3379
        %v4772 = vpack.c.b16 %v3384, %v3380
        %v4773 = vpack.c.b16 %v3389, %v3385
        %v4774 = vpack.c.b16 %v3390, %v3386
        %v4775 = vpack.c.b16 %v3391, %v3387
        %v4776 = vpack.c.b16 %v3392, %v3388
        %v4777 = vpack.c.b16 %v3397, %v3393
        %v4778 = vpack.c.b16 %v3398, %v3394
        %v4779 = vpack.c.b16 %v3399, %v3395
        %v4780 = vpack.c.b16 %v3400, %v3396
        %v4781 = vpack.c.b16 %v3405, %v3401
        %v4782 = vpack.c.b16 %v3406, %v3402
        %v4783 = vpack.c.b16 %v3407, %v3403
        %v4784 = vpack.c.b16 %v3408, %v3404
        %v4785 = vpack.c.b16 %v3413, %v3409
        %v4786 = vpack.c.b16 %v3414, %v3410
        %v4787 = vpack.c.b16 %v3415, %v3411
        %v4788 = vpack.c.b16 %v3416, %v3412
        %v4789 = vpack.c.b16 %v3421, %v3417
        %v4790 = vpack.c.b16 %v3422, %v3418
        %v4791 = vpack.c.b16 %v3423, %v3419
        %v4792 = vpack.c.b16 %v3424, %v3420
        %v4793 = vpack.c.b16 %v3429, %v3425
        %v4794 = vpack.c.b16 %v3430, %v3426
        %v4795 = vpack.c.b16 %v3431, %v3427
        %v4796 = vpack.c.b16 %v3432, %v3428
        %v4797 = vpack.c.b16 %v3437, %v3433
        %v4798 = vpack.c.b16 %v3438, %v3434
        %v4799 = vpack.c.b16 %v3439, %v3435
        %v4800 = vpack.c.b16 %v3440, %v3436
        %v4801 = vpack.c.b16 %v3445, %v3441
        %v4802 = vpack.c.b16 %v3446, %v3442
        %v4803 = vpack.c.b16 %v3447, %v3443
        %v4804 = vpack.c.b16 %v3448, %v3444
        %v4805 = vpack.c.b16 %v3453, %v3449
        %v4806 = vpack.c.b16 %v3454, %v3450
        %v4807 = vpack.c.b16 %v3455, %v3451
        %v4808 = vpack.c.b16 %v3456, %v3452
        %v4809 = vpack.c.b16 %v3461, %v3457
        %v4810 = vpack.c.b16 %v3462, %v3458
        %v4811 = vpack.c.b16 %v3463, %v3459
        %v4812 = vpack.c.b16 %v3464, %v3460
        %v4813 = vpack.c.b16 %v3469, %v3465
        %v4814 = vpack.c.b16 %v3470, %v3466
        %v4815 = vpack.c.b16 %v3471, %v3467
        %v4816 = vpack.c.b16 %v3472, %v3468
        %v4817 = vpack.c.b16 %v3477, %v3473
        %v4818 = vpack.c.b16 %v3478, %v3474
        %v4819 = vpack.c.b16 %v3479, %v3475
        %v4820 = vpack.c.b16 %v3480, %v3476
        %v4821 = vpack.c.b16 %v3485, %v3481
        %v4822 = vpack.c.b16 %v3486, %v3482
        %v4823 = vpack.c.b16 %v3487, %v3483
        %v4824 = vpack.c.b16 %v3488, %v3484
        %v4825 = vpack.c.b16 %v3493, %v3489
        %v4826 = vpack.c.b16 %v3494, %v3490
        %v4827 = vpack.c.b16 %v3495, %v3491
        %v4828 = vpack.c.b16 %v3496, %v3492
        %v4829 = vpack.c.b16 %v3501, %v3497
        %v4830 = vpack.c.b16 %v3502, %v3498
        %v4831 = vpack.c.b16 %v3503, %v3499
        %v4832 = vpack.c.b16 %v3504, %v3500
        %v4833 = vpack.c.b16 %v3509, %v3505
        %v4834 = vpack.c.b16 %v3510, %v3506
        %v4835 = vpack.c.b16 %v3511, %v3507
        %v4836 = vpack.c.b16 %v3512, %v3508
        %v4837 = vpack.c.b16 %v3517, %v3513
        %v4838 = vpack.c.b16 %v3518, %v3514
        %v4839 = vpack.c.b16 %v3519, %v3515
        %v4840 = vpack.c.b16 %v3520, %v3516
        %v4841 = vpack.c.b16 %v3525, %v3521
        %v4842 = vpack.c.b16 %v3526, %v3522
        %v4843 = vpack.c.b16 %v3527, %v3523
        %v4844 = vpack.c.b16 %v3528, %v3524
        %v4845 = vpack.c.b16 %v3533, %v3529
        %v4846 = vpack.c.b16 %v3534, %v3530
        %v4847 = vpack.c.b16 %v3535, %v3531
        %v4848 = vpack.c.b16 %v3536, %v3532
        %v4849 = vpack.c.b16 %v3541, %v3537
        %v4850 = vpack.c.b16 %v3542, %v3538
        %v4851 = vpack.c.b16 %v3543, %v3539
        %v4852 = vpack.c.b16 %v3544, %v3540
        %v4853 = vpack.c.b16 %v3549, %v3545
        %v4854 = vpack.c.b16 %v3550, %v3546
        %v4855 = vpack.c.b16 %v3551, %v3547
        %v4856 = vpack.c.b16 %v3552, %v3548
        %v4857 = vpack.c.b16 %v3557, %v3553
        %v4858 = vpack.c.b16 %v3558, %v3554
        %v4859 = vpack.c.b16 %v3559, %v3555
        %v4860 = vpack.c.b16 %v3560, %v3556
        %v4861 = vpack.c.b16 %v3565, %v3561
        %v4862 = vpack.c.b16 %v3566, %v3562
        %v4863 = vpack.c.b16 %v3567, %v3563
        %v4864 = vpack.c.b16 %v3568, %v3564
        %v4865 = vpack.c.b16 %v3573, %v3569
        %v4866 = vpack.c.b16 %v3574, %v3570
        %v4867 = vpack.c.b16 %v3575, %v3571
        %v4868 = vpack.c.b16 %v3576, %v3572
        %v4869 = vpack.c.b16 %v3581, %v3577
        %v4870 = vpack.c.b16 %v3582, %v3578
        %v4871 = vpack.c.b16 %v3583, %v3579
        %v4872 = vpack.c.b16 %v3584, %v3580
        %v4873 = vpack.c.b16 %v3589, %v3585
        %v4874 = vpack.c.b16 %v3590, %v3586
        %v4875 = vpack.c.b16 %v3591, %v3587
        %v4876 = vpack.c.b16 %v3592, %v3588
        %v4877 = vpack.c.b16 %v3597, %v3593
        %v4878 = vpack.c.b16 %v3598, %v3594
        %v4879 = vpack.c.b16 %v3599, %v3595
        %v4880 = vpack.c.b16 %v3600, %v3596
        %v4881 = vpack.c.b16 %v3605, %v3601
        %v4882 = vpack.c.b16 %v3606, %v3602
        %v4883 = vpack.c.b16 %v3607, %v3603
        %v4884 = vpack.c.b16 %v3608, %v3604
        %v4885 = vpack.c.b16 %v3613, %v3609
        %v4886 = vpack.c.b16 %v3614, %v3610
        %v4887 = vpack.c.b16 %v3615, %v3611
        %v4888 = vpack.c.b16 %v3616, %v3612
        %v4889 = vpack.c.b16 %v3621, %v3617
        %v4890 = vpack.c.b16 %v3622, %v3618
        %v4891 = vpack.c.b16 %v3623, %v3619
        %v4892 = vpack.c.b16 %v3624, %v3620
        %v4893 = vpack.c.b16 %v3629, %v3625
        %v4894 = vpack.c.b16 %v3630, %v3626
        %v4895 = vpack.c.b16 %v3631, %v3627
        %v4896 = vpack.c.b16 %v3632, %v3628
        %v4897 = vpack.c.b16 %v3637, %v3633
        %v4898 = vpack.c.b16 %v3638, %v3634
        %v4899 = vpack.c.b16 %v3639, %v3635
        %v4900 = vpack.c.b16 %v3640, %v3636
        %v4901 = vpack.c.b16 %v3645, %v3641
        %v4902 = vpack.c.b16 %v3646, %v3642
        %v4903 = vpack.c.b16 %v3647, %v3643
        %v4904 = vpack.c.b16 %v3648, %v3644
        %v4905 = vpack.c.b16 %v3653, %v3649
        %v4906 = vpack.c.b16 %v3654, %v3650
        %v4907 = vpack.c.b16 %v3655, %v3651
        %v4908 = vpack.c.b16 %v3656, %v3652
        %v4909 = vpack.c.b16 %v3661, %v3657
        %v4910 = vpack.c.b16 %v3662, %v3658
        %v4911 = vpack.c.b16 %v3663, %v3659
        %v4912 = vpack.c.b16 %v3664, %v3660
        %v4913 = vpack.c.b16 %v3669, %v3665
        %v4914 = vpack.c.b16 %v3670, %v3666
        %v4915 = vpack.c.b16 %v3671, %v3667
        %v4916 = vpack.c.b16 %v3672, %v3668
        %v4917 = vpack.c.b16 %v3677, %v3673
        %v4918 = vpack.c.b16 %v3678, %v3674
        %v4919 = vpack.c.b16 %v3679, %v3675
        %v4920 = vpack.c.b16 %v3680, %v3676
        %v4921 = vpack.c.b16 %v3685, %v3681
        %v4922 = vpack.c.b16 %v3686, %v3682
        %v4923 = vpack.c.b16 %v3687, %v3683
        %v4924 = vpack.c.b16 %v3688, %v3684
        %v4925 = vpack.c.b16 %v3693, %v3689
        %v4926 = vpack.c.b16 %v3694, %v3690
        %v4927 = vpack.c.b16 %v3695, %v3691
        %v4928 = vpack.c.b16 %v3696, %v3692
        %v4929 = vpack.c.b16 %v3701, %v3697
        %v4930 = vpack.c.b16 %v3702, %v3698
        %v4931 = vpack.c.b16 %v3703, %v3699
        %v4932 = vpack.c.b16 %v3704, %v3700
        %v4933 = vpack.c.b16 %v3709, %v3705
        %v4934 = vpack.c.b16 %v3710, %v3706
        %v4935 = vpack.c.b16 %v3711, %v3707
        %v4936 = vpack.c.b16 %v3712, %v3708
        %v4937 = vpack.c.b16 %v3717, %v3713
        %v4938 = vpack.c.b16 %v3718, %v3714
        %v4939 = vpack.c.b16 %v3719, %v3715
        %v4940 = vpack.c.b16 %v3720, %v3716
        %v4941 = vpack.c.b16 %v3725, %v3721
        %v4942 = vpack.c.b16 %v3726, %v3722
        %v4943 = vpack.c.b16 %v3727, %v3723
        %v4944 = vpack.c.b16 %v3728, %v3724
        %v4945 = vpack.c.b16 %v3733, %v3729
        %v4946 = vpack.c.b16 %v3734, %v3730
        %v4947 = vpack.c.b16 %v3735, %v3731
        %v4948 = vpack.c.b16 %v3736, %v3732
        %v4949 = vpack.c.b16 %v3741, %v3737
        %v4950 = vpack.c.b16 %v3742, %v3738
        %v4951 = vpack.c.b16 %v3743, %v3739
        %v4952 = vpack.c.b16 %v3744, %v3740
        %v4953 = vpack.c.b16 %v3749, %v3745
        %v4954 = vpack.c.b16 %v3750, %v3746
        %v4955 = vpack.c.b16 %v3751, %v3747
        %v4956 = vpack.c.b16 %v3752, %v3748
        %v4957 = vpack.c.b16 %v3757, %v3753
        %v4958 = vpack.c.b16 %v3758, %v3754
        %v4959 = vpack.c.b16 %v3759, %v3755
        %v4960 = vpack.c.b16 %v3760, %v3756
        %v4961 = vpack.c.b16 %v3765, %v3761
        %v4962 = vpack.c.b16 %v3766, %v3762
        %v4963 = vpack.c.b16 %v3767, %v3763
        %v4964 = vpack.c.b16 %v3768, %v3764
        %v4965 = vpack.c.b16 %v3773, %v3769
        %v4966 = vpack.c.b16 %v3774, %v3770
        %v4967 = vpack.c.b16 %v3775, %v3771
        %v4968 = vpack.c.b16 %v3776, %v3772
        %v4969 = vpack.c.b16 %v3781, %v3777
        %v4970 = vpack.c.b16 %v3782, %v3778
        %v4971 = vpack.c.b16 %v3783, %v3779
        %v4972 = vpack.c.b16 %v3784, %v3780
        %v4973 = vpack.c.b16 %v3789, %v3785
        %v4974 = vpack.c.b16 %v3790, %v3786
        %v4975 = vpack.c.b16 %v3791, %v3787
        %v4976 = vpack.c.b16 %v3792, %v3788
        %v4977 = vpack.c.b16 %v3797, %v3793
        %v4978 = vpack.c.b16 %v3798, %v3794
        %v4979 = vpack.c.b16 %v3799, %v3795
        %v4980 = vpack.c.b16 %v3800, %v3796
        %v4981 = vpack.c.b16 %v3805, %v3801
        %v4982 = vpack.c.b16 %v3806, %v3802
        %v4983 = vpack.c.b16 %v3807, %v3803
        %v4984 = vpack.c.b16 %v3808, %v3804
        %v4985 = vpack.c.b16 %v3813, %v3809
        %v4986 = vpack.c.b16 %v3814, %v3810
        %v4987 = vpack.c.b16 %v3815, %v3811
        %v4988 = vpack.c.b16 %v3816, %v3812
        %v4989 = vpack.c.b16 %v3821, %v3817
        %v4990 = vpack.c.b16 %v3822, %v3818
        %v4991 = vpack.c.b16 %v3823, %v3819
        %v4992 = vpack.c.b16 %v3824, %v3820
        %v4993 = vpack.c.b16 %v3829, %v3825
        %v4994 = vpack.c.b16 %v3830, %v3826
        %v4995 = vpack.c.b16 %v3831, %v3827
        %v4996 = vpack.c.b16 %v3832, %v3828
        %v4997 = vpack.c.b16 %v3837, %v3833
        %v4998 = vpack.c.b16 %v3838, %v3834
        %v4999 = vpack.c.b16 %v3839, %v3835
        %v5000 = vpack.c.b16 %v3840, %v3836
        %v5001 = vpack.c.b16 %v3845, %v3841
        %v5002 = vpack.c.b16 %v3846, %v3842
        %v5003 = vpack.c.b16 %v3847, %v3843
        %v5004 = vpack.c.b16 %v3848, %v3844
        %v5005 = vpack.c.b16 %v3853, %v3849
        %v5006 = vpack.c.b16 %v3854, %v3850
        %v5007 = vpack.c.b16 %v3855, %v3851
        %v5008 = vpack.c.b16 %v3856, %v3852
        %v5009 = vpack.c.b16 %v3861, %v3857
        %v5010 = vpack.c.b16 %v3862, %v3858
        %v5011 = vpack.c.b16 %v3863, %v3859
        %v5012 = vpack.c.b16 %v3864, %v3860
        %v5013 = vpack.c.b16 %v3869, %v3865
        %v5014 = vpack.c.b16 %v3870, %v3866
        %v5015 = vpack.c.b16 %v3871, %v3867
        %v5016 = vpack.c.b16 %v3872, %v3868
        %v5017 = vpack.c.b16 %v3877, %v3873
        %v5018 = vpack.c.b16 %v3878, %v3874
        %v5019 = vpack.c.b16 %v3879, %v3875
        %v5020 = vpack.c.b16 %v3880, %v3876
        %v5021 = vpack.c.b16 %v3885, %v3881
        %v5022 = vpack.c.b16 %v3886, %v3882
        %v5023 = vpack.c.b16 %v3887, %v3883
        %v5024 = vpack.c.b16 %v3888, %v3884
        %v5025 = vpack.c.b16 %v3893, %v3889
        %v5026 = vpack.c.b16 %v3894, %v3890
        %v5027 = vpack.c.b16 %v3895, %v3891
        %v5028 = vpack.c.b16 %v3896, %v3892
        %v5029 = vpack.c.b16 %v3901, %v3897
        %v5030 = vpack.c.b16 %v3902, %v3898
        %v5031 = vpack.c.b16 %v3903, %v3899
        %v5032 = vpack.c.b16 %v3904, %v3900
        %v5033 = vpack.c.b16 %v3909, %v3905
        %v5034 = vpack.c.b16 %v3910, %v3906
        %v5035 = vpack.c.b16 %v3911, %v3907
        %v5036 = vpack.c.b16 %v3912, %v3908
        %v5037 = vpack.c.b16 %v3917, %v3913
        %v5038 = vpack.c.b16 %v3918, %v3914
        %v5039 = vpack.c.b16 %v3919, %v3915
        %v5040 = vpack.c.b16 %v3920, %v3916
        %v5041 = vpack.c.b16 %v3925, %v3921
        %v5042 = vpack.c.b16 %v3926, %v3922
        %v5043 = vpack.c.b16 %v3927, %v3923
        %v5044 = vpack.c.b16 %v3928, %v3924
        %v5045 = vpack.c.b16 %v3933, %v3929
        %v5046 = vpack.c.b16 %v3934, %v3930
        %v5047 = vpack.c.b16 %v3935, %v3931
        %v5048 = vpack.c.b16 %v3936, %v3932
        %v5049 = vpack.c.b16 %v3941, %v3937
        %v5050 = vpack.c.b16 %v3942, %v3938
        %v5051 = vpack.c.b16 %v3943, %v3939
        %v5052 = vpack.c.b16 %v3944, %v3940
        %v5053 = vpack.c.b16 %v3949, %v3945
        %v5054 = vpack.c.b16 %v3950, %v3946
        %v5055 = vpack.c.b16 %v3951, %v3947
        %v5056 = vpack.c.b16 %v3952, %v3948
        %v5057 = vpack.c.b16 %v3957, %v3953
        %v5058 = vpack.c.b16 %v3958, %v3954
        %v5059 = vpack.c.b16 %v3959, %v3955
        %v5060 = vpack.c.b16 %v3960, %v3956
        %v5061 = vpack.c.b16 %v3965, %v3961
        %v5062 = vpack.c.b16 %v3966, %v3962
        %v5063 = vpack.c.b16 %v3967, %v3963
        %v5064 = vpack.c.b16 %v3968, %v3964
        %v5065 = vpack.c.b16 %v3973, %v3969
        %v5066 = vpack.c.b16 %v3974, %v3970
        %v5067 = vpack.c.b16 %v3975, %v3971
        %v5068 = vpack.c.b16 %v3976, %v3972
        %v5069 = vpack.c.b16 %v3981, %v3977
        %v5070 = vpack.c.b16 %v3982, %v3978
        %v5071 = vpack.c.b16 %v3983, %v3979
        %v5072 = vpack.c.b16 %v3984, %v3980
        %v5073 = vpack.c.b16 %v3989, %v3985
        %v5074 = vpack.c.b16 %v3990, %v3986
        %v5075 = vpack.c.b16 %v3991, %v3987
        %v5076 = vpack.c.b16 %v3992, %v3988
        %v5077 = vpack.c.b16 %v3997, %v3993
        %v5078 = vpack.c.b16 %v3998, %v3994
        %v5079 = vpack.c.b16 %v3999, %v3995
        %v5080 = vpack.c.b16 %v4000, %v3996
        %v5081 = vpack.c.b16 %v4005, %v4001
        %v5082 = vpack.c.b16 %v4006, %v4002
        %v5083 = vpack.c.b16 %v4007, %v4003
        %v5084 = vpack.c.b16 %v4008, %v4004
        %v5085 = vpack.c.b16 %v4013, %v4009
        %v5086 = vpack.c.b16 %v4014, %v4010
        %v5087 = vpack.c.b16 %v4015, %v4011
        %v5088 = vpack.c.b16 %v4016, %v4012
        %v5089 = vpack.c.b16 %v4021, %v4017
        %v5090 = vpack.c.b16 %v4022, %v4018
        %v5091 = vpack.c.b16 %v4023, %v4019
        %v5092 = vpack.c.b16 %v4024, %v4020
        %v5093 = vpack.c.b16 %v4029, %v4025
        %v5094 = vpack.c.b16 %v4030, %v4026
        %v5095 = vpack.c.b16 %v4031, %v4027
        %v5096 = vpack.c.b16 %v4032, %v4028
        %v5097 = vpack.c.b16 %v4037, %v4033
        %v5098 = vpack.c.b16 %v4038, %v4034
        %v5099 = vpack.c.b16 %v4039, %v4035
        %v5100 = vpack.c.b16 %v4040, %v4036
        %v5101 = vpack.c.b16 %v4045, %v4041
        %v5102 = vpack.c.b16 %v4046, %v4042
        %v5103 = vpack.c.b16 %v4047, %v4043
        %v5104 = vpack.c.b16 %v4048, %v4044
        %v5105 = vpack.c.b16 %v4053, %v4049
        %v5106 = vpack.c.b16 %v4054, %v4050
        %v5107 = vpack.c.b16 %v4055, %v4051
        %v5108 = vpack.c.b16 %v4056, %v4052
        %v5109 = vpack.c.b16 %v4061, %v4057
        %v5110 = vpack.c.b16 %v4062, %v4058
        %v5111 = vpack.c.b16 %v4063, %v4059
        %v5112 = vpack.c.b16 %v4064, %v4060
        %v5113 = vpack.c.b16 %v4069, %v4065
        %v5114 = vpack.c.b16 %v4070, %v4066
        %v5115 = vpack.c.b16 %v4071, %v4067
        %v5116 = vpack.c.b16 %v4072, %v4068
        %v5117 = vpack.c.b16 %v4077, %v4073
        %v5118 = vpack.c.b16 %v4078, %v4074
        %v5119 = vpack.c.b16 %v4079, %v4075
        %v5120 = vpack.c.b16 %v4080, %v4076
        %v5121 = vpack.c.b16 %v4085, %v4081
        %v5122 = vpack.c.b16 %v4086, %v4082
        %v5123 = vpack.c.b16 %v4087, %v4083
        %v5124 = vpack.c.b16 %v4088, %v4084
        %v5125 = vpack.c.b16 %v4093, %v4089
        %v5126 = vpack.c.b16 %v4094, %v4090
        %v5127 = vpack.c.b16 %v4095, %v4091
        %v5128 = vpack.c.b16 %v4096, %v4092
        %v5129 = vpack.c.b16 %v4101, %v4097
        %v5130 = vpack.c.b16 %v4102, %v4098
        %v5131 = vpack.c.b16 %v4103, %v4099
        %v5132 = vpack.c.b16 %v4104, %v4100
        %v5133 = vpack.c.b16 %v4109, %v4105
        %v5134 = vpack.c.b16 %v4110, %v4106
        %v5135 = vpack.c.b16 %v4111, %v4107
        %v5136 = vpack.c.b16 %v4112, %v4108
        %v5137 = vpack.c.b16 %v4117, %v4113
        %v5138 = vpack.c.b16 %v4118, %v4114
        %v5139 = vpack.c.b16 %v4119, %v4115
        %v5140 = vpack.c.b16 %v4120, %v4116
        %v5141 = vpack.c.b16 %v4125, %v4121
        %v5142 = vpack.c.b16 %v4126, %v4122
        %v5143 = vpack.c.b16 %v4127, %v4123
        %v5144 = vpack.c.b16 %v4128, %v4124
        %v5145 = vpack.c.b16 %v4133, %v4129
        %v5146 = vpack.c.b16 %v4134, %v4130
        %v5147 = vpack.c.b16 %v4135, %v4131
        %v5148 = vpack.c.b16 %v4136, %v4132
        %v5149 = vpack.c.b16 %v4141, %v4137
        %v5150 = vpack.c.b16 %v4142, %v4138
        %v5151 = vpack.c.b16 %v4143, %v4139
        %v5152 = vpack.c.b16 %v4144, %v4140
        %v5153 = vpack.c.b16 %v4149, %v4145
        %v5154 = vpack.c.b16 %v4150, %v4146
        %v5155 = vpack.c.b16 %v4151, %v4147
        %v5156 = vpack.c.b16 %v4152, %v4148
        %v5157 = vpack.c.b16 %v4157, %v4153
        %v5158 = vpack.c.b16 %v4158, %v4154
        %v5159 = vpack.c.b16 %v4159, %v4155
        %v5160 = vpack.c.b16 %v4160, %v4156
        %v5161 = vpack.c.b16 %v4165, %v4161
        %v5162 = vpack.c.b16 %v4166, %v4162
        %v5163 = vpack.c.b16 %v4167, %v4163
        %v5164 = vpack.c.b16 %v4168, %v4164
        %v5165 = vpack.c.b16 %v4173, %v4169
        %v5166 = vpack.c.b16 %v4174, %v4170
        %v5167 = vpack.c.b16 %v4175, %v4171
        %v5168 = vpack.c.b16 %v4176, %v4172
        %v5169 = vpack.c.b16 %v4181, %v4177
        %v5170 = vpack.c.b16 %v4182, %v4178
        %v5171 = vpack.c.b16 %v4183, %v4179
        %v5172 = vpack.c.b16 %v4184, %v4180
        %v5173 = vpack.c.b16 %v4189, %v4185
        %v5174 = vpack.c.b16 %v4190, %v4186
        %v5175 = vpack.c.b16 %v4191, %v4187
        %v5176 = vpack.c.b16 %v4192, %v4188
        %v5177 = vpack.c.b16 %v4197, %v4193
        %v5178 = vpack.c.b16 %v4198, %v4194
        %v5179 = vpack.c.b16 %v4199, %v4195
        %v5180 = vpack.c.b16 %v4200, %v4196
        %v5181 = vpack.c.b16 %v4205, %v4201
        %v5182 = vpack.c.b16 %v4206, %v4202
        %v5183 = vpack.c.b16 %v4207, %v4203
        %v5184 = vpack.c.b16 %v4208, %v4204
        %v5185 = vpack.c.b16 %v4213, %v4209
        %v5186 = vpack.c.b16 %v4214, %v4210
        %v5187 = vpack.c.b16 %v4215, %v4211
        %v5188 = vpack.c.b16 %v4216, %v4212
        %v5189 = vpack.c.b16 %v4221, %v4217
        %v5190 = vpack.c.b16 %v4222, %v4218
        %v5191 = vpack.c.b16 %v4223, %v4219
        %v5192 = vpack.c.b16 %v4224, %v4220
        %v5193 = vpack.c.b16 %v4229, %v4225
        %v5194 = vpack.c.b16 %v4230, %v4226
        %v5195 = vpack.c.b16 %v4231, %v4227
        %v5196 = vpack.c.b16 %v4232, %v4228
        %v5197 = vpack.c.b16 %v4237, %v4233
        %v5198 = vpack.c.b16 %v4238, %v4234
        %v5199 = vpack.c.b16 %v4239, %v4235
        %v5200 = vpack.c.b16 %v4240, %v4236
        %v5201 = vpack.c.b16 %v4245, %v4241
        %v5202 = vpack.c.b16 %v4246, %v4242
        %v5203 = vpack.c.b16 %v4247, %v4243
        %v5204 = vpack.c.b16 %v4248, %v4244
        %v5205 = vpack.c.b16 %v4253, %v4249
        %v5206 = vpack.c.b16 %v4254, %v4250
        %v5207 = vpack.c.b16 %v4255, %v4251
        %v5208 = vpack.c.b16 %v4256, %v4252
        %v5209 = vpack.c.b16 %v4261, %v4257
        %v5210 = vpack.c.b16 %v4262, %v4258
        %v5211 = vpack.c.b16 %v4263, %v4259
        %v5212 = vpack.c.b16 %v4264, %v4260
        %v5213 = vpack.c.b16 %v4269, %v4265
        %v5214 = vpack.c.b16 %v4270, %v4266
        %v5215 = vpack.c.b16 %v4271, %v4267
        %v5216 = vpack.c.b16 %v4272, %v4268
        %v5217 = vpack.c.b16 %v4277, %v4273
        %v5218 = vpack.c.b16 %v4278, %v4274
        %v5219 = vpack.c.b16 %v4279, %v4275
        %v5220 = vpack.c.b16 %v4280, %v4276
        %v5221 = vpack.c.b16 %v4285, %v4281
        %v5222 = vpack.c.b16 %v4286, %v4282
        %v5223 = vpack.c.b16 %v4287, %v4283
        %v5224 = vpack.c.b16 %v4288, %v4284
        %v5225 = vpack.c.b16 %v4293, %v4289
        %v5226 = vpack.c.b16 %v4294, %v4290
        %v5227 = vpack.c.b16 %v4295, %v4291
        %v5228 = vpack.c.b16 %v4296, %v4292
        %v5229 = vpack.c.b16 %v4301, %v4297
        %v5230 = vpack.c.b16 %v4302, %v4298
        %v5231 = vpack.c.b16 %v4303, %v4299
        %v5232 = vpack.c.b16 %v4304, %v4300
        %v5233 = vpack.c.b16 %v4309, %v4305
        %v5234 = vpack.c.b16 %v4310, %v4306
        %v5235 = vpack.c.b16 %v4311, %v4307
        %v5236 = vpack.c.b16 %v4312, %v4308
        %v5237 = vpack.c.b16 %v4317, %v4313
        %v5238 = vpack.c.b16 %v4318, %v4314
        %v5239 = vpack.c.b16 %v4319, %v4315
        %v5240 = vpack.c.b16 %v4320, %v4316
        %v5241 = vpack.c.b16 %v4325, %v4321
        %v5242 = vpack.c.b16 %v4326, %v4322
        %v5243 = vpack.c.b16 %v4327, %v4323
        %v5244 = vpack.c.b16 %v4328, %v4324
        %v5245 = vpack.c.b16 %v4333, %v4329
        %v5246 = vpack.c.b16 %v4334, %v4330
        %v5247 = vpack.c.b16 %v4335, %v4331
        %v5248 = vpack.c.b16 %v4336, %v4332
        %v5249 = vpack.c.b16 %v4341, %v4337
        %v5250 = vpack.c.b16 %v4342, %v4338
        %v5251 = vpack.c.b16 %v4343, %v4339
        %v5252 = vpack.c.b16 %v4344, %v4340
        %v5253 = vpack.c.b16 %v4349, %v4345
        %v5254 = vpack.c.b16 %v4350, %v4346
        %v5255 = vpack.c.b16 %v4351, %v4347
        %v5256 = vpack.c.b16 %v4352, %v4348
        %v5257 = vpack.c.b16 %v4357, %v4353
        %v5258 = vpack.c.b16 %v4358, %v4354
        %v5259 = vpack.c.b16 %v4359, %v4355
        %v5260 = vpack.c.b16 %v4360, %v4356
        %v5261 = vpack.c.b16 %v4365, %v4361
        %v5262 = vpack.c.b16 %v4366, %v4362
        %v5263 = vpack.c.b16 %v4367, %v4363
        %v5264 = vpack.c.b16 %v4368, %v4364
        %6161 = vmatprep.subr.bf16.mxu0 %v4370
        %6162 = vmatpush1.bf16.msra.mxu0 %v4369
        %6163 = vmatprep.subr.bf16.mxu0 %v4374
        %6164 = vmatpush1.bf16.msra.mxu0 %v4373
        %6165 = vmatprep.subr.bf16.mxu0 %v4378
        %6166 = vmatpush1.bf16.msra.mxu0 %v4377
        %6167 = vmatprep.subr.bf16.mxu0 %v4382
        %6168 = vmatpush1.bf16.msra.mxu0 %v4381
        %6169 = vmatprep.subr.bf16.mxu0 %v4386
        %6170 = vmatpush1.bf16.msra.mxu0 %v4385
        %6171 = vmatprep.subr.bf16.mxu0 %v4390
        %6172 = vmatpush1.bf16.msra.mxu0 %v4389
        %6173 = vmatprep.subr.bf16.mxu0 %v4394
        %6174 = vmatpush1.bf16.msra.mxu0 %v4393
        %6175 = vmatprep.subr.bf16.mxu0 %v4398
        %6176 = vmatpush1.bf16.msra.mxu0 %v4397
        %6177 = vmatprep.subr.bf16.mxu0 %v4402
        %6178 = vmatpush1.bf16.msra.mxu0 %v4401
        %6179 = vmatprep.subr.bf16.mxu0 %v4406
        %6180 = vmatpush1.bf16.msra.mxu0 %v4405
        %6181 = vmatprep.subr.bf16.mxu0 %v4410
        %6182 = vmatpush1.bf16.msra.mxu0 %v4409
        %6183 = vmatprep.subr.bf16.mxu0 %v4414
        %6184 = vmatpush1.bf16.msra.mxu0 %v4413
        %6185 = vmatprep.subr.bf16.mxu0 %v4418
        %6186 = vmatpush1.bf16.msra.mxu0 %v4417
        %6187 = vmatprep.subr.bf16.mxu0 %v4422
        %6188 = vmatpush1.bf16.msra.mxu0 %v4421
        %6189 = vmatprep.subr.bf16.mxu0 %v4426
        %6190 = vmatpush1.bf16.msra.mxu0 %v4425
        %6191 = vmatprep.subr.bf16.mxu0 %v4430
        %6192 = vmatpush1.bf16.msra.mxu0 %v4429
        %6193 = vmatprep.mubr.bf16.mxu0 %v1570
        %6194 = vmatmul.mubr.bf16.gmra.mrb[0].mxu0 %v1569
        %v6195 = vpop.f32.mrb[0].mxu0
        %v6196 = vadd.f32 0.0, %v6195
        %v6197 = vpop.f32.mrb[0].mxu0
        %v6198 = vadd.f32 0.0, %v6197
        %v6199 = vpop.f32.mrb[0].mxu0
        %v6200 = vadd.f32 0.0, %v6199
        %v6201 = vpop.f32.mrb[0].mxu0
        %v6202 = vadd.f32 0.0, %v6201
        %6203 = vmatprep.mubr.bf16.mxu0 %v1598
        %6204 = vmatmul.mubr.bf16.gmra.mrb[0].mxu0 %v1597
        %v6205 = vpop.f32.mrb[0].mxu0
        %v6206 = vadd.f32 0.0, %v6205
        %v6207 = vpop.f32.mrb[0].mxu0
        %v6208 = vadd.f32 0.0, %v6207
        %v6209 = vpop.f32.mrb[0].mxu0
        %v6210 = vadd.f32 0.0, %v6209
        %v6211 = vpop.f32.mrb[0].mxu0
        %v6212 = vadd.f32 0.0, %v6211
        %6213 = vdwg.mxu0
        %6214 = vmatprep.subr.bf16.mxu0 %v4434
        %6215 = vmatpush1.bf16.msra.mxu0 %v4433
        %6216 = vmatprep.subr.bf16.mxu0 %v4438
        %6217 = vmatpush1.bf16.msra.mxu0 %v4437
        %6218 = vmatprep.subr.bf16.mxu0 %v4442
        %6219 = vmatpush1.bf16.msra.mxu0 %v4441
        %6220 = vmatprep.subr.bf16.mxu0 %v4446
        %6221 = vmatpush1.bf16.msra.mxu0 %v4445
        %6222 = vmatprep.subr.bf16.mxu0 %v4450
        %6223 = vmatpush1.bf16.msra.mxu0 %v4449
        %6224 = vmatprep.subr.bf16.mxu0 %v4454
        %6225 = vmatpush1.bf16.msra.mxu0 %v4453
        %6226 = vmatprep.subr.bf16.mxu0 %v4458
        %6227 = vmatpush1.bf16.msra.mxu0 %v4457
        %6228 = vmatprep.subr.bf16.mxu0 %v4462
        %6229 = vmatpush1.bf16.msra.mxu0 %v4461
        %6230 = vmatprep.subr.bf16.mxu0 %v4466
        %6231 = vmatpush1.bf16.msra.mxu0 %v4465
        %6232 = vmatprep.subr.bf16.mxu0 %v4470
        %6233 = vmatpush1.bf16.msra.mxu0 %v4469
        %6234 = vmatprep.subr.bf16.mxu0 %v4474
        %6235 = vmatpush1.bf16.msra.mxu0 %v4473
        %6236 = vmatprep.subr.bf16.mxu0 %v4478
        %6237 = vmatpush1.bf16.msra.mxu0 %v4477
        %6238 = vmatprep.subr.bf16.mxu0 %v4482
        %6239 = vmatpush1.bf16.msra.mxu0 %v4481
        %6240 = vmatprep.subr.bf16.mxu0 %v4486
        %6241 = vmatpush1.bf16.msra.mxu0 %v4485
        %6242 = vmatprep.subr.bf16.mxu0 %v4490
        %6243 = vmatpush1.bf16.msra.mxu0 %v4489
        %6244 = vmatprep.subr.bf16.mxu0 %v4494
        %6245 = vmatpush1.bf16.msra.mxu0 %v4493
        %6246 = vmatprep.mubr.bf16.mxu0 %v1572
        %6247 = vmatmul.mubr.bf16.gmra.mrb[0].mxu0 %v1571
        %v6248 = vpop.f32.mrb[0].mxu0
        %v6249 = vadd.f32 %v6196, %v6248
        %v6250 = vpop.f32.mrb[0].mxu0
        %v6251 = vadd.f32 %v6198, %v6250
        %v6252 = vpop.f32.mrb[0].mxu0
        %v6253 = vadd.f32 %v6200, %v6252
        %v6254 = vpop.f32.mrb[0].mxu0
        %v6255 = vadd.f32 %v6202, %v6254
        %6256 = vmatprep.mubr.bf16.mxu0 %v1600
        %6257 = vmatmul.mubr.bf16.gmra.mrb[0].mxu0 %v1599
        %v6258 = vpop.f32.mrb[0].mxu0
        %v6259 = vadd.f32 %v6206, %v6258
        %v6260 = vpop.f32.mrb[0].mxu0
        %v6261 = vadd.f32 %v6208, %v6260
        %v6262 = vpop.f32.mrb[0].mxu0
        %v6263 = vadd.f32 %v6210, %v6262
        %v6264 = vpop.f32.mrb[0].mxu0
        %v6265 = vadd.f32 %v6212, %v6264
        %6266 = vdwg.mxu0
        %6267 = vmatprep.subr.bf16.mxu0 %v4498
        %6268 = vmatpush1.bf16.msra.mxu0 %v4497
        %6269 = vmatprep.subr.bf16.mxu0 %v4502
        %6270 = vmatpush1.bf16.msra.mxu0 %v4501
        %6271 = vmatprep.subr.bf16.mxu0 %v4506
        %6272 = vmatpush1.bf16.msra.mxu0 %v4505
        %6273 = vmatprep.subr.bf16.mxu0 %v4510
        %6274 = vmatpush1.bf16.msra.mxu0 %v4509
        %6275 = vmatprep.subr.bf16.mxu0 %v4514
        %6276 = vmatpush1.bf16.msra.mxu0 %v4513
        %6277 = vmatprep.subr.bf16.mxu0 %v4518
        %6278 = vmatpush1.bf16.msra.mxu0 %v4517
        %6279 = vmatprep.subr.bf16.mxu0 %v4522
        %6280 = vmatpush1.bf16.msra.mxu0 %v4521
        %6281 = vmatprep.subr.bf16.mxu0 %v4526
        %6282 = vmatpush1.bf16.msra.mxu0 %v4525
        %6283 = vmatprep.subr.bf16.mxu0 %v4530
        %6284 = vmatpush1.bf16.msra.mxu0 %v4529
        %6285 = vmatprep.subr.bf16.mxu0 %v4534
        %6286 = vmatpush1.bf16.msra.mxu0 %v4533
        %6287 = vmatprep.subr.bf16.mxu0 %v4538
        %6288 = vmatpush1.bf16.msra.mxu0 %v4537
        %6289 = vmatprep.subr.bf16.mxu0 %v4542
        %6290 = vmatpush1.bf16.msra.mxu0 %v4541
        %6291 = vmatprep.subr.bf16.mxu0 %v4546
        %6292 = vmatpush1.bf16.msra.mxu0 %v4545
        %6293 = vmatprep.subr.bf16.mxu0 %v4550
        %6294 = vmatpush1.bf16.msra.mxu0 %v4549
        %6295 = vmatprep.subr.bf16.mxu0 %v4554
        %6296 = vmatpush1.bf16.msra.mxu0 %v4553
        %6297 = vmatprep.subr.bf16.mxu0 %v4558
        %6298 = vmatpush1.bf16.msra.mxu0 %v4557
        %6299 = vmatprep.mubr.bf16.mxu0 %v1574
        %6300 = vmatmul.mubr.bf16.gmra.mrb[0].mxu0 %v1573
        %v6301 = vpop.f32.mrb[0].mxu0
        %v6302 = vadd.f32 %v6249, %v6301
        %v6303 = vpop.f32.mrb[0].mxu0
        %v6304 = vadd.f32 %v6251, %v6303
        %v6305 = vpop.f32.mrb[0].mxu0
        %v6306 = vadd.f32 %v6253, %v6305
        %v6307 = vpop.f32.mrb[0].mxu0
        %v6308 = vadd.f32 %v6255, %v6307
        %6309 = vmatprep.mubr.bf16.mxu0 %v1602
        %6310 = vmatmul.mubr.bf16.gmra.mrb[0].mxu0 %v1601
        %v6311 = vpop.f32.mrb[0].mxu0
        %v6312 = vadd.f32 %v6259, %v6311
        %v6313 = vpop.f32.mrb[0].mxu0
        %v6314 = vadd.f32 %v6261, %v6313
        %v6315 = vpop.f32.mrb[0].mxu0
        %v6316 = vadd.f32 %v6263, %v6315
        %v6317 = vpop.f32.mrb[0].mxu0
        %v6318 = vadd.f32 %v6265, %v6317
        %6319 = vdwg.mxu0
        %6320 = vmatprep.subr.bf16.mxu0 %v4562
        %6321 = vmatpush1.bf16.msra.mxu0 %v4561
        %6322 = vmatprep.subr.bf16.mxu0 %v4566
        %6323 = vmatpush1.bf16.msra.mxu0 %v4565
        %6324 = vmatprep.subr.bf16.mxu0 %v4570
        %6325 = vmatpush1.bf16.msra.mxu0 %v4569
        %6326 = vmatprep.subr.bf16.mxu0 %v4574
        %6327 = vmatpush1.bf16.msra.mxu0 %v4573
        %6328 = vmatprep.subr.bf16.mxu0 %v4578
        %6329 = vmatpush1.bf16.msra.mxu0 %v4577
        %6330 = vmatprep.subr.bf16.mxu0 %v4582
        %6331 = vmatpush1.bf16.msra.mxu0 %v4581
        %6332 = vmatprep.subr.bf16.mxu0 %v4586
        %6333 = vmatpush1.bf16.msra.mxu0 %v4585
        %6334 = vmatprep.subr.bf16.mxu0 %v4590
        %6335 = vmatpush1.bf16.msra.mxu0 %v4589
        %6336 = vmatprep.subr.bf16.mxu0 %v4594
        %6337 = vmatpush1.bf16.msra.mxu0 %v4593
        %6338 = vmatprep.subr.bf16.mxu0 %v4598
        %6339 = vmatpush1.bf16.msra.mxu0 %v4597
        %6340 = vmatprep.subr.bf16.mxu0 %v4602
        %6341 = vmatpush1.bf16.msra.mxu0 %v4601
        %6342 = vmatprep.subr.bf16.mxu0 %v4606
        %6343 = vmatpush1.bf16.msra.mxu0 %v4605
        %6344 = vmatprep.subr.bf16.mxu0 %v4610
        %6345 = vmatpush1.bf16.msra.mxu0 %v4609
        %6346 = vmatprep.subr.bf16.mxu0 %v4614
        %6347 = vmatpush1.bf16.msra.mxu0 %v4613
        %6348 = vmatprep.subr.bf16.mxu0 %v4618
        %6349 = vmatpush1.bf16.msra.mxu0 %v4617
        %6350 = vmatprep.subr.bf16.mxu0 %v4622
        %6351 = vmatpush1.bf16.msra.mxu0 %v4621
        %6352 = vmatprep.mubr.bf16.mxu0 %v1576
        %6353 = vmatmul.mubr.bf16.gmra.mrb[0].mxu0 %v1575
        %v6354 = vpop.f32.mrb[0].mxu0
        %v6355 = vadd.f32 %v6302, %v6354
        %v6356 = vpop.f32.mrb[0].mxu0
        %v6357 = vadd.f32 %v6304, %v6356
        %v6358 = vpop.f32.mrb[0].mxu0
        %v6359 = vadd.f32 %v6306, %v6358
        %v6360 = vpop.f32.mrb[0].mxu0
        %v6361 = vadd.f32 %v6308, %v6360
        %6362 = vmatprep.mubr.bf16.mxu0 %v1604
        %6363 = vmatmul.mubr.bf16.gmra.mrb[0].mxu0 %v1603
        %v6364 = vpop.f32.mrb[0].mxu0
        %v6365 = vadd.f32 %v6312, %v6364
        %v6366 = vpop.f32.mrb[0].mxu0
        %v6367 = vadd.f32 %v6314, %v6366
        %v6368 = vpop.f32.mrb[0].mxu0
        %v6369 = vadd.f32 %v6316, %v6368
        %v6370 = vpop.f32.mrb[0].mxu0
        %v6371 = vadd.f32 %v6318, %v6370
        %6372 = vdwg.mxu0
        %6373 = vmatprep.subr.bf16.mxu0 %v4626
        %6374 = vmatpush1.bf16.msra.mxu0 %v4625
        %6375 = vmatprep.subr.bf16.mxu0 %v4630
        %6376 = vmatpush1.bf16.msra.mxu0 %v4629
        %6377 = vmatprep.subr.bf16.mxu0 %v4634
        %6378 = vmatpush1.bf16.msra.mxu0 %v4633
        %6379 = vmatprep.subr.bf16.mxu0 %v4638
        %6380 = vmatpush1.bf16.msra.mxu0 %v4637
        %6381 = vmatprep.subr.bf16.mxu0 %v4642
        %6382 = vmatpush1.bf16.msra.mxu0 %v4641
        %6383 = vmatprep.subr.bf16.mxu0 %v4646
        %6384 = vmatpush1.bf16.msra.mxu0 %v4645
        %6385 = vmatprep.subr.bf16.mxu0 %v4650
        %6386 = vmatpush1.bf16.msra.mxu0 %v4649
        %6387 = vmatprep.subr.bf16.mxu0 %v4654
        %6388 = vmatpush1.bf16.msra.mxu0 %v4653
        %6389 = vmatprep.subr.bf16.mxu0 %v4658
        %6390 = vmatpush1.bf16.msra.mxu0 %v4657
        %6391 = vmatprep.subr.bf16.mxu0 %v4662
        %6392 = vmatpush1.bf16.msra.mxu0 %v4661
        %6393 = vmatprep.subr.bf16.mxu0 %v4666
        %6394 = vmatpush1.bf16.msra.mxu0 %v4665
        %6395 = vmatprep.subr.bf16.mxu0 %v4670
        %6396 = vmatpush1.bf16.msra.mxu0 %v4669
        %6397 = vmatprep.subr.bf16.mxu0 %v4674
        %6398 = vmatpush1.bf16.msra.mxu0 %v4673
        %6399 = vmatprep.subr.bf16.mxu0 %v4678
        %6400 = vmatpush1.bf16.msra.mxu0 %v4677
        %6401 = vmatprep.subr.bf16.mxu0 %v4682
        %6402 = vmatpush1.bf16.msra.mxu0 %v4681
        %6403 = vmatprep.subr.bf16.mxu0 %v4686
        %6404 = vmatpush1.bf16.msra.mxu0 %v4685
        %6405 = vmatprep.mubr.bf16.mxu0 %v1578
        %6406 = vmatmul.mubr.bf16.gmra.mrb[0].mxu0 %v1577
        %v6407 = vpop.f32.mrb[0].mxu0
        %v6408 = vadd.f32 %v6355, %v6407
        %v6409 = vpop.f32.mrb[0].mxu0
        %v6410 = vadd.f32 %v6357, %v6409
        %v6411 = vpop.f32.mrb[0].mxu0
        %v6412 = vadd.f32 %v6359, %v6411
        %v6413 = vpop.f32.mrb[0].mxu0
        %v6414 = vadd.f32 %v6361, %v6413
        %6415 = vmatprep.mubr.bf16.mxu0 %v1606
        %6416 = vmatmul.mubr.bf16.gmra.mrb[0].mxu0 %v1605
        %v6417 = vpop.f32.mrb[0].mxu0
        %v6418 = vadd.f32 %v6365, %v6417
        %v6419 = vpop.f32.mrb[0].mxu0
        %v6420 = vadd.f32 %v6367, %v6419
        %v6421 = vpop.f32.mrb[0].mxu0
        %v6422 = vadd.f32 %v6369, %v6421
        %v6423 = vpop.f32.mrb[0].mxu0
        %v6424 = vadd.f32 %v6371, %v6423
        %6425 = vdwg.mxu0
        %6426 = vmatprep.subr.bf16.mxu0 %v4690
        %6427 = vmatpush1.bf16.msra.mxu0 %v4689
        %6428 = vmatprep.subr.bf16.mxu0 %v4694
        %6429 = vmatpush1.bf16.msra.mxu0 %v4693
        %6430 = vmatprep.subr.bf16.mxu0 %v4698
        %6431 = vmatpush1.bf16.msra.mxu0 %v4697
        %6432 = vmatprep.subr.bf16.mxu0 %v4702
        %6433 = vmatpush1.bf16.msra.mxu0 %v4701
        %6434 = vmatprep.subr.bf16.mxu0 %v4706
        %6435 = vmatpush1.bf16.msra.mxu0 %v4705
        %6436 = vmatprep.subr.bf16.mxu0 %v4710
        %6437 = vmatpush1.bf16.msra.mxu0 %v4709
        %6438 = vmatprep.subr.bf16.mxu0 %v4714
        %6439 = vmatpush1.bf16.msra.mxu0 %v4713
        %6440 = vmatprep.subr.bf16.mxu0 %v4718
        %6441 = vmatpush1.bf16.msra.mxu0 %v4717
        %6442 = vmatprep.subr.bf16.mxu0 %v4722
        %6443 = vmatpush1.bf16.msra.mxu0 %v4721
        %6444 = vmatprep.subr.bf16.mxu0 %v4726
        %6445 = vmatpush1.bf16.msra.mxu0 %v4725
        %6446 = vmatprep.subr.bf16.mxu0 %v4730
        %6447 = vmatpush1.bf16.msra.mxu0 %v4729
        %6448 = vmatprep.subr.bf16.mxu0 %v4734
        %6449 = vmatpush1.bf16.msra.mxu0 %v4733
        %6450 = vmatprep.subr.bf16.mxu0 %v4738
        %6451 = vmatpush1.bf16.msra.mxu0 %v4737
        %6452 = vmatprep.subr.bf16.mxu0 %v4742
        %6453 = vmatpush1.bf16.msra.mxu0 %v4741
        %6454 = vmatprep.subr.bf16.mxu0 %v4746
        %6455 = vmatpush1.bf16.msra.mxu0 %v4745
        %6456 = vmatprep.subr.bf16.mxu0 %v4750
        %6457 = vmatpush1.bf16.msra.mxu0 %v4749
        %6458 = vmatprep.mubr.bf16.mxu0 %v1580
        %6459 = vmatmul.mubr.bf16.gmra.mrb[0].mxu0 %v1579
        %v6460 = vpop.f32.mrb[0].mxu0
        %v6461 = vadd.f32 %v6408, %v6460
        %v6462 = vpop.f32.mrb[0].mxu0
        %v6463 = vadd.f32 %v6410, %v6462
        %v6464 = vpop.f32.mrb[0].mxu0
        %v6465 = vadd.f32 %v6412, %v6464
        %v6466 = vpop.f32.mrb[0].mxu0
        %v6467 = vadd.f32 %v6414, %v6466
        %6468 = vmatprep.mubr.bf16.mxu0 %v1608
        %6469 = vmatmul.mubr.bf16.gmra.mrb[0].mxu0 %v1607
        %v6470 = vpop.f32.mrb[0].mxu0
        %v6471 = vadd.f32 %v6418, %v6470
        %v6472 = vpop.f32.mrb[0].mxu0
        %v6473 = vadd.f32 %v6420, %v6472
        %v6474 = vpop.f32.mrb[0].mxu0
        %v6475 = vadd.f32 %v6422, %v6474
        %v6476 = vpop.f32.mrb[0].mxu0
        %v6477 = vadd.f32 %v6424, %v6476
        %6478 = vdwg.mxu0
        %6479 = vmatprep.subr.bf16.mxu0 %v4754
        %6480 = vmatpush1.bf16.msra.mxu0 %v4753
        %6481 = vmatprep.subr.bf16.mxu0 %v4758
        %6482 = vmatpush1.bf16.msra.mxu0 %v4757
        %6483 = vmatprep.subr.bf16.mxu0 %v4762
        %6484 = vmatpush1.bf16.msra.mxu0 %v4761
        %6485 = vmatprep.subr.bf16.mxu0 %v4766
        %6486 = vmatpush1.bf16.msra.mxu0 %v4765
        %6487 = vmatprep.subr.bf16.mxu0 %v4770
        %6488 = vmatpush1.bf16.msra.mxu0 %v4769
        %6489 = vmatprep.subr.bf16.mxu0 %v4774
        %6490 = vmatpush1.bf16.msra.mxu0 %v4773
        %6491 = vmatprep.subr.bf16.mxu0 %v4778
        %6492 = vmatpush1.bf16.msra.mxu0 %v4777
        %6493 = vmatprep.subr.bf16.mxu0 %v4782
        %6494 = vmatpush1.bf16.msra.mxu0 %v4781
        %6495 = vmatprep.subr.bf16.mxu0 %v4786
        %6496 = vmatpush1.bf16.msra.mxu0 %v4785
        %6497 = vmatprep.subr.bf16.mxu0 %v4790
        %6498 = vmatpush1.bf16.msra.mxu0 %v4789
        %6499 = vmatprep.subr.bf16.mxu0 %v4794
        %6500 = vmatpush1.bf16.msra.mxu0 %v4793
        %6501 = vmatprep.subr.bf16.mxu0 %v4798
        %6502 = vmatpush1.bf16.msra.mxu0 %v4797
        %6503 = vmatprep.subr.bf16.mxu0 %v4802
        %6504 = vmatpush1.bf16.msra.mxu0 %v4801
        %6505 = vmatprep.subr.bf16.mxu0 %v4806
        %6506 = vmatpush1.bf16.msra.mxu0 %v4805
        %6507 = vmatprep.subr.bf16.mxu0 %v4810
        %6508 = vmatpush1.bf16.msra.mxu0 %v4809
        %6509 = vmatprep.subr.bf16.mxu0 %v4814
        %6510 = vmatpush1.bf16.msra.mxu0 %v4813
        %6511 = vmatprep.mubr.bf16.mxu0 %v1582
        %6512 = vmatmul.mubr.bf16.gmra.mrb[0].mxu0 %v1581
        %v6513 = vpop.f32.mrb[0].mxu0
        %v6514 = vadd.f32 %v6461, %v6513
        %v6515 = vpop.f32.mrb[0].mxu0
        %v6516 = vadd.f32 %v6463, %v6515
        %v6517 = vpop.f32.mrb[0].mxu0
        %v6518 = vadd.f32 %v6465, %v6517
        %v6519 = vpop.f32.mrb[0].mxu0
        %v6520 = vadd.f32 %v6467, %v6519
        %6521 = vmatprep.mubr.bf16.mxu0 %v1610
        %6522 = vmatmul.mubr.bf16.gmra.mrb[0].mxu0 %v1609
        %v6523 = vpop.f32.mrb[0].mxu0
        %v6524 = vadd.f32 %v6471, %v6523
        %v6525 = vpop.f32.mrb[0].mxu0
        %v6526 = vadd.f32 %v6473, %v6525
        %v6527 = vpop.f32.mrb[0].mxu0
        %v6528 = vadd.f32 %v6475, %v6527
        %v6529 = vpop.f32.mrb[0].mxu0
        %v6530 = vadd.f32 %v6477, %v6529
        %6531 = vdwg.mxu0
        %6532 = vmatprep.subr.bf16.mxu0 %v4818
        %6533 = vmatpush1.bf16.msra.mxu0 %v4817
        %6534 = vmatprep.subr.bf16.mxu0 %v4822
        %6535 = vmatpush1.bf16.msra.mxu0 %v4821
        %6536 = vmatprep.subr.bf16.mxu0 %v4826
        %6537 = vmatpush1.bf16.msra.mxu0 %v4825
        %6538 = vmatprep.subr.bf16.mxu0 %v4830
        %6539 = vmatpush1.bf16.msra.mxu0 %v4829
        %6540 = vmatprep.subr.bf16.mxu0 %v4834
        %6541 = vmatpush1.bf16.msra.mxu0 %v4833
        %6542 = vmatprep.subr.bf16.mxu0 %v4838
        %6543 = vmatpush1.bf16.msra.mxu0 %v4837
        %6544 = vmatprep.subr.bf16.mxu0 %v4842
        %6545 = vmatpush1.bf16.msra.mxu0 %v4841
        %6546 = vmatprep.subr.bf16.mxu0 %v4846
        %6547 = vmatpush1.bf16.msra.mxu0 %v4845
        %6548 = vmatprep.subr.bf16.mxu0 %v4850
        %6549 = vmatpush1.bf16.msra.mxu0 %v4849
        %6550 = vmatprep.subr.bf16.mxu0 %v4854
        %6551 = vmatpush1.bf16.msra.mxu0 %v4853
        %6552 = vmatprep.subr.bf16.mxu0 %v4858
        %6553 = vmatpush1.bf16.msra.mxu0 %v4857
        %6554 = vmatprep.subr.bf16.mxu0 %v4862
        %6555 = vmatpush1.bf16.msra.mxu0 %v4861
        %6556 = vmatprep.subr.bf16.mxu0 %v4866
        %6557 = vmatpush1.bf16.msra.mxu0 %v4865
        %6558 = vmatprep.subr.bf16.mxu0 %v4870
        %6559 = vmatpush1.bf16.msra.mxu0 %v4869
        %6560 = vmatprep.subr.bf16.mxu0 %v4874
        %6561 = vmatpush1.bf16.msra.mxu0 %v4873
        %6562 = vmatprep.subr.bf16.mxu0 %v4878
        %6563 = vmatpush1.bf16.msra.mxu0 %v4877
        %6564 = vmatprep.mubr.bf16.mxu0 %v1584
        %6565 = vmatmul.mubr.bf16.gmra.mrb[0].mxu0 %v1583
        %v6566 = vpop.f32.mrb[0].mxu0
        %v6567 = vadd.f32 %v6514, %v6566
        %v6568 = vpop.f32.mrb[0].mxu0
        %v6569 = vadd.f32 %v6516, %v6568
        %v6570 = vpop.f32.mrb[0].mxu0
        %v6571 = vadd.f32 %v6518, %v6570
        %v6572 = vpop.f32.mrb[0].mxu0
        %v6573 = vadd.f32 %v6520, %v6572
        %6574 = vmatprep.mubr.bf16.mxu0 %v1612
        %6575 = vmatmul.mubr.bf16.gmra.mrb[0].mxu0 %v1611
        %v6576 = vpop.f32.mrb[0].mxu0
        %v6577 = vadd.f32 %v6524, %v6576
        %v6578 = vpop.f32.mrb[0].mxu0
        %v6579 = vadd.f32 %v6526, %v6578
        %v6580 = vpop.f32.mrb[0].mxu0
        %v6581 = vadd.f32 %v6528, %v6580
        %v6582 = vpop.f32.mrb[0].mxu0
        %v6583 = vadd.f32 %v6530, %v6582
        %6584 = vdwg.mxu0
        %6585 = vmatprep.subr.bf16.mxu0 %v4882
        %6586 = vmatpush1.bf16.msra.mxu0 %v4881
        %6587 = vmatprep.subr.bf16.mxu0 %v4886
        %6588 = vmatpush1.bf16.msra.mxu0 %v4885
        %6589 = vmatprep.subr.bf16.mxu0 %v4890
        %6590 = vmatpush1.bf16.msra.mxu0 %v4889
        %6591 = vmatprep.subr.bf16.mxu0 %v4894
        %6592 = vmatpush1.bf16.msra.mxu0 %v4893
        %6593 = vmatprep.subr.bf16.mxu0 %v4898
        %6594 = vmatpush1.bf16.msra.mxu0 %v4897
        %6595 = vmatprep.subr.bf16.mxu0 %v4902
        %6596 = vmatpush1.bf16.msra.mxu0 %v4901
        %6597 = vmatprep.subr.bf16.mxu0 %v4906
        %6598 = vmatpush1.bf16.msra.mxu0 %v4905
        %6599 = vmatprep.subr.bf16.mxu0 %v4910
        %6600 = vmatpush1.bf16.msra.mxu0 %v4909
        %6601 = vmatprep.subr.bf16.mxu0 %v4914
        %6602 = vmatpush1.bf16.msra.mxu0 %v4913
        %6603 = vmatprep.subr.bf16.mxu0 %v4918
        %6604 = vmatpush1.bf16.msra.mxu0 %v4917
        %6605 = vmatprep.subr.bf16.mxu0 %v4922
        %6606 = vmatpush1.bf16.msra.mxu0 %v4921
        %6607 = vmatprep.subr.bf16.mxu0 %v4926
        %6608 = vmatpush1.bf16.msra.mxu0 %v4925
        %6609 = vmatprep.subr.bf16.mxu0 %v4930
        %6610 = vmatpush1.bf16.msra.mxu0 %v4929
        %6611 = vmatprep.subr.bf16.mxu0 %v4934
        %6612 = vmatpush1.bf16.msra.mxu0 %v4933
        %6613 = vmatprep.subr.bf16.mxu0 %v4938
        %6614 = vmatpush1.bf16.msra.mxu0 %v4937
        %6615 = vmatprep.subr.bf16.mxu0 %v4942
        %6616 = vmatpush1.bf16.msra.mxu0 %v4941
        %6617 = vmatprep.mubr.bf16.mxu0 %v1586
        %6618 = vmatmul.mubr.bf16.gmra.mrb[0].mxu0 %v1585
        %v6619 = vpop.f32.mrb[0].mxu0
        %v6620 = vadd.f32 %v6567, %v6619
        %v6621 = vpop.f32.mrb[0].mxu0
        %v6622 = vadd.f32 %v6569, %v6621
        %v6623 = vpop.f32.mrb[0].mxu0
        %v6624 = vadd.f32 %v6571, %v6623
        %v6625 = vpop.f32.mrb[0].mxu0
        %v6626 = vadd.f32 %v6573, %v6625
        %6627 = vmatprep.mubr.bf16.mxu0 %v1614
        %6628 = vmatmul.mubr.bf16.gmra.mrb[0].mxu0 %v1613
        %v6629 = vpop.f32.mrb[0].mxu0
        %v6630 = vadd.f32 %v6577, %v6629
        %v6631 = vpop.f32.mrb[0].mxu0
        %v6632 = vadd.f32 %v6579, %v6631
        %v6633 = vpop.f32.mrb[0].mxu0
        %v6634 = vadd.f32 %v6581, %v6633
        %v6635 = vpop.f32.mrb[0].mxu0
        %v6636 = vadd.f32 %v6583, %v6635
        %6637 = vdwg.mxu0
        %6638 = vmatprep.subr.bf16.mxu0 %v4946
        %6639 = vmatpush1.bf16.msra.mxu0 %v4945
        %6640 = vmatprep.subr.bf16.mxu0 %v4950
        %6641 = vmatpush1.bf16.msra.mxu0 %v4949
        %6642 = vmatprep.subr.bf16.mxu0 %v4954
        %6643 = vmatpush1.bf16.msra.mxu0 %v4953
        %6644 = vmatprep.subr.bf16.mxu0 %v4958
        %6645 = vmatpush1.bf16.msra.mxu0 %v4957
        %6646 = vmatprep.subr.bf16.mxu0 %v4962
        %6647 = vmatpush1.bf16.msra.mxu0 %v4961
        %6648 = vmatprep.subr.bf16.mxu0 %v4966
        %6649 = vmatpush1.bf16.msra.mxu0 %v4965
        %6650 = vmatprep.subr.bf16.mxu0 %v4970
        %6651 = vmatpush1.bf16.msra.mxu0 %v4969
        %6652 = vmatprep.subr.bf16.mxu0 %v4974
        %6653 = vmatpush1.bf16.msra.mxu0 %v4973
        %6654 = vmatprep.subr.bf16.mxu0 %v4978
        %6655 = vmatpush1.bf16.msra.mxu0 %v4977
        %6656 = vmatprep.subr.bf16.mxu0 %v4982
        %6657 = vmatpush1.bf16.msra.mxu0 %v4981
        %6658 = vmatprep.subr.bf16.mxu0 %v4986
        %6659 = vmatpush1.bf16.msra.mxu0 %v4985
        %6660 = vmatprep.subr.bf16.mxu0 %v4990
        %6661 = vmatpush1.bf16.msra.mxu0 %v4989
        %6662 = vmatprep.subr.bf16.mxu0 %v4994
        %6663 = vmatpush1.bf16.msra.mxu0 %v4993
        %6664 = vmatprep.subr.bf16.mxu0 %v4998
        %6665 = vmatpush1.bf16.msra.mxu0 %v4997
        %6666 = vmatprep.subr.bf16.mxu0 %v5002
        %6667 = vmatpush1.bf16.msra.mxu0 %v5001
        %6668 = vmatprep.subr.bf16.mxu0 %v5006
        %6669 = vmatpush1.bf16.msra.mxu0 %v5005
        %6670 = vmatprep.mubr.bf16.mxu0 %v1588
        %6671 = vmatmul.mubr.bf16.gmra.mrb[0].mxu0 %v1587
        %v6672 = vpop.f32.mrb[0].mxu0
        %v6673 = vadd.f32 %v6620, %v6672
        %v6674 = vpop.f32.mrb[0].mxu0
        %v6675 = vadd.f32 %v6622, %v6674
        %v6676 = vpop.f32.mrb[0].mxu0
        %v6677 = vadd.f32 %v6624, %v6676
        %v6678 = vpop.f32.mrb[0].mxu0
        %v6679 = vadd.f32 %v6626, %v6678
        %6680 = vmatprep.mubr.bf16.mxu0 %v1616
        %6681 = vmatmul.mubr.bf16.gmra.mrb[0].mxu0 %v1615
        %v6682 = vpop.f32.mrb[0].mxu0
        %v6683 = vadd.f32 %v6630, %v6682
        %v6684 = vpop.f32.mrb[0].mxu0
        %v6685 = vadd.f32 %v6632, %v6684
        %v6686 = vpop.f32.mrb[0].mxu0
        %v6687 = vadd.f32 %v6634, %v6686
        %v6688 = vpop.f32.mrb[0].mxu0
        %v6689 = vadd.f32 %v6636, %v6688
        %6690 = vdwg.mxu0
        %6691 = vmatprep.subr.bf16.mxu0 %v5010
        %6692 = vmatpush1.bf16.msra.mxu0 %v5009
        %6693 = vmatprep.subr.bf16.mxu0 %v5014
        %6694 = vmatpush1.bf16.msra.mxu0 %v5013
        %6695 = vmatprep.subr.bf16.mxu0 %v5018
        %6696 = vmatpush1.bf16.msra.mxu0 %v5017
        %6697 = vmatprep.subr.bf16.mxu0 %v5022
        %6698 = vmatpush1.bf16.msra.mxu0 %v5021
        %6699 = vmatprep.subr.bf16.mxu0 %v5026
        %6700 = vmatpush1.bf16.msra.mxu0 %v5025
        %6701 = vmatprep.subr.bf16.mxu0 %v5030
        %6702 = vmatpush1.bf16.msra.mxu0 %v5029
        %6703 = vmatprep.subr.bf16.mxu0 %v5034
        %6704 = vmatpush1.bf16.msra.mxu0 %v5033
        %6705 = vmatprep.subr.bf16.mxu0 %v5038
        %6706 = vmatpush1.bf16.msra.mxu0 %v5037
        %6707 = vmatprep.subr.bf16.mxu0 %v5042
        %6708 = vmatpush1.bf16.msra.mxu0 %v5041
        %6709 = vmatprep.subr.bf16.mxu0 %v5046
        %6710 = vmatpush1.bf16.msra.mxu0 %v5045
        %6711 = vmatprep.subr.bf16.mxu0 %v5050
        %6712 = vmatpush1.bf16.msra.mxu0 %v5049
        %6713 = vmatprep.subr.bf16.mxu0 %v5054
        %6714 = vmatpush1.bf16.msra.mxu0 %v5053
        %6715 = vmatprep.subr.bf16.mxu0 %v5058
        %6716 = vmatpush1.bf16.msra.mxu0 %v5057
        %6717 = vmatprep.subr.bf16.mxu0 %v5062
        %6718 = vmatpush1.bf16.msra.mxu0 %v5061
        %6719 = vmatprep.subr.bf16.mxu0 %v5066
        %6720 = vmatpush1.bf16.msra.mxu0 %v5065
        %6721 = vmatprep.subr.bf16.mxu0 %v5070
        %6722 = vmatpush1.bf16.msra.mxu0 %v5069
        %6723 = vmatprep.mubr.bf16.mxu0 %v1590
        %6724 = vmatmul.mubr.bf16.gmra.mrb[0].mxu0 %v1589
        %v6725 = vpop.f32.mrb[0].mxu0
        %v6726 = vadd.f32 %v6673, %v6725
        %v6727 = vpop.f32.mrb[0].mxu0
        %v6728 = vadd.f32 %v6675, %v6727
        %v6729 = vpop.f32.mrb[0].mxu0
        %v6730 = vadd.f32 %v6677, %v6729
        %v6731 = vpop.f32.mrb[0].mxu0
        %v6732 = vadd.f32 %v6679, %v6731
        %6733 = vmatprep.mubr.bf16.mxu0 %v1618
        %6734 = vmatmul.mubr.bf16.gmra.mrb[0].mxu0 %v1617
        %v6735 = vpop.f32.mrb[0].mxu0
        %v6736 = vadd.f32 %v6683, %v6735
        %v6737 = vpop.f32.mrb[0].mxu0
        %v6738 = vadd.f32 %v6685, %v6737
        %v6739 = vpop.f32.mrb[0].mxu0
        %v6740 = vadd.f32 %v6687, %v6739
        %v6741 = vpop.f32.mrb[0].mxu0
        %v6742 = vadd.f32 %v6689, %v6741
        %6743 = vdwg.mxu0
        %6744 = vmatprep.subr.bf16.mxu0 %v5074
        %6745 = vmatpush1.bf16.msra.mxu0 %v5073
        %6746 = vmatprep.subr.bf16.mxu0 %v5078
        %6747 = vmatpush1.bf16.msra.mxu0 %v5077
        %6748 = vmatprep.subr.bf16.mxu0 %v5082
        %6749 = vmatpush1.bf16.msra.mxu0 %v5081
        %6750 = vmatprep.subr.bf16.mxu0 %v5086
        %6751 = vmatpush1.bf16.msra.mxu0 %v5085
        %6752 = vmatprep.subr.bf16.mxu0 %v5090
        %6753 = vmatpush1.bf16.msra.mxu0 %v5089
        %6754 = vmatprep.subr.bf16.mxu0 %v5094
        %6755 = vmatpush1.bf16.msra.mxu0 %v5093
        %6756 = vmatprep.subr.bf16.mxu0 %v5098
        %6757 = vmatpush1.bf16.msra.mxu0 %v5097
        %6758 = vmatprep.subr.bf16.mxu0 %v5102
        %6759 = vmatpush1.bf16.msra.mxu0 %v5101
        %6760 = vmatprep.subr.bf16.mxu0 %v5106
        %6761 = vmatpush1.bf16.msra.mxu0 %v5105
        %6762 = vmatprep.subr.bf16.mxu0 %v5110
        %6763 = vmatpush1.bf16.msra.mxu0 %v5109
        %6764 = vmatprep.subr.bf16.mxu0 %v5114
        %6765 = vmatpush1.bf16.msra.mxu0 %v5113
        %6766 = vmatprep.subr.bf16.mxu0 %v5118
        %6767 = vmatpush1.bf16.msra.mxu0 %v5117
        %6768 = vmatprep.subr.bf16.mxu0 %v5122
        %6769 = vmatpush1.bf16.msra.mxu0 %v5121
        %6770 = vmatprep.subr.bf16.mxu0 %v5126
        %6771 = vmatpush1.bf16.msra.mxu0 %v5125
        %6772 = vmatprep.subr.bf16.mxu0 %v5130
        %6773 = vmatpush1.bf16.msra.mxu0 %v5129
        %6774 = vmatprep.subr.bf16.mxu0 %v5134
        %6775 = vmatpush1.bf16.msra.mxu0 %v5133
        %6776 = vmatprep.mubr.bf16.mxu0 %v1592
        %6777 = vmatmul.mubr.bf16.gmra.mrb[0].mxu0 %v1591
        %v6778 = vpop.f32.mrb[0].mxu0
        %v6779 = vadd.f32 %v6726, %v6778
        %v6780 = vpop.f32.mrb[0].mxu0
        %v6781 = vadd.f32 %v6728, %v6780
        %v6782 = vpop.f32.mrb[0].mxu0
        %v6783 = vadd.f32 %v6730, %v6782
        %v6784 = vpop.f32.mrb[0].mxu0
        %v6785 = vadd.f32 %v6732, %v6784
        %6786 = vmatprep.mubr.bf16.mxu0 %v1620
        %6787 = vmatmul.mubr.bf16.gmra.mrb[0].mxu0 %v1619
        %v6788 = vpop.f32.mrb[0].mxu0
        %v6789 = vadd.f32 %v6736, %v6788
        %v6790 = vpop.f32.mrb[0].mxu0
        %v6791 = vadd.f32 %v6738, %v6790
        %v6792 = vpop.f32.mrb[0].mxu0
        %v6793 = vadd.f32 %v6740, %v6792
        %v6794 = vpop.f32.mrb[0].mxu0
        %v6795 = vadd.f32 %v6742, %v6794
        %6796 = vdwg.mxu0
        %6797 = vmatprep.subr.bf16.mxu0 %v5138
        %6798 = vmatpush1.bf16.msra.mxu0 %v5137
        %6799 = vmatprep.subr.bf16.mxu0 %v5142
        %6800 = vmatpush1.bf16.msra.mxu0 %v5141
        %6801 = vmatprep.subr.bf16.mxu0 %v5146
        %6802 = vmatpush1.bf16.msra.mxu0 %v5145
        %6803 = vmatprep.subr.bf16.mxu0 %v5150
        %6804 = vmatpush1.bf16.msra.mxu0 %v5149
        %6805 = vmatprep.subr.bf16.mxu0 %v5154
        %6806 = vmatpush1.bf16.msra.mxu0 %v5153
        %6807 = vmatprep.subr.bf16.mxu0 %v5158
        %6808 = vmatpush1.bf16.msra.mxu0 %v5157
        %6809 = vmatprep.subr.bf16.mxu0 %v5162
        %6810 = vmatpush1.bf16.msra.mxu0 %v5161
        %6811 = vmatprep.subr.bf16.mxu0 %v5166
        %6812 = vmatpush1.bf16.msra.mxu0 %v5165
        %6813 = vmatprep.subr.bf16.mxu0 %v5170
        %6814 = vmatpush1.bf16.msra.mxu0 %v5169
        %6815 = vmatprep.subr.bf16.mxu0 %v5174
        %6816 = vmatpush1.bf16.msra.mxu0 %v5173
        %6817 = vmatprep.subr.bf16.mxu0 %v5178
        %6818 = vmatpush1.bf16.msra.mxu0 %v5177
        %6819 = vmatprep.subr.bf16.mxu0 %v5182
        %6820 = vmatpush1.bf16.msra.mxu0 %v5181
        %6821 = vmatprep.subr.bf16.mxu0 %v5186
        %6822 = vmatpush1.bf16.msra.mxu0 %v5185
        %6823 = vmatprep.subr.bf16.mxu0 %v5190
        %6824 = vmatpush1.bf16.msra.mxu0 %v5189
        %6825 = vmatprep.subr.bf16.mxu0 %v5194
        %6826 = vmatpush1.bf16.msra.mxu0 %v5193
        %6827 = vmatprep.subr.bf16.mxu0 %v5198
        %6828 = vmatpush1.bf16.msra.mxu0 %v5197
        %6829 = vmatprep.mubr.bf16.mxu0 %v1594
        %6830 = vmatmul.mubr.bf16.gmra.mrb[0].mxu0 %v1593
        %v6831 = vpop.f32.mrb[0].mxu0
        %v6832 = vadd.f32 %v6779, %v6831
        %v6833 = vpop.f32.mrb[0].mxu0
        %v6834 = vadd.f32 %v6781, %v6833
        %v6835 = vpop.f32.mrb[0].mxu0
        %v6836 = vadd.f32 %v6783, %v6835
        %v6837 = vpop.f32.mrb[0].mxu0
        %v6838 = vadd.f32 %v6785, %v6837
        %6839 = vmatprep.mubr.bf16.mxu0 %v1622
        %6840 = vmatmul.mubr.bf16.gmra.mrb[0].mxu0 %v1621
        %v6841 = vpop.f32.mrb[0].mxu0
        %v6842 = vadd.f32 %v6789, %v6841
        %v6843 = vpop.f32.mrb[0].mxu0
        %v6844 = vadd.f32 %v6791, %v6843
        %v6845 = vpop.f32.mrb[0].mxu0
        %v6846 = vadd.f32 %v6793, %v6845
        %v6847 = vpop.f32.mrb[0].mxu0
        %v6848 = vadd.f32 %v6795, %v6847
        %6849 = vdwg.mxu0
        %6850 = vmatprep.subr.bf16.mxu0 %v5202
        %6851 = vmatpush1.bf16.msra.mxu0 %v5201
        %6852 = vmatprep.subr.bf16.mxu0 %v5206
        %6853 = vmatpush1.bf16.msra.mxu0 %v5205
        %6854 = vmatprep.subr.bf16.mxu0 %v5210
        %6855 = vmatpush1.bf16.msra.mxu0 %v5209
        %6856 = vmatprep.subr.bf16.mxu0 %v5214
        %6857 = vmatpush1.bf16.msra.mxu0 %v5213
        %6858 = vmatprep.subr.bf16.mxu0 %v5218
        %6859 = vmatpush1.bf16.msra.mxu0 %v5217
        %6860 = vmatprep.subr.bf16.mxu0 %v5222
        %6861 = vmatpush1.bf16.msra.mxu0 %v5221
        %6862 = vmatprep.subr.bf16.mxu0 %v5226
        %6863 = vmatpush1.bf16.msra.mxu0 %v5225
        %6864 = vmatprep.subr.bf16.mxu0 %v5230
        %6865 = vmatpush1.bf16.msra.mxu0 %v5229
        %6866 = vmatprep.subr.bf16.mxu0 %v5234
        %6867 = vmatpush1.bf16.msra.mxu0 %v5233
        %6868 = vmatprep.subr.bf16.mxu0 %v5238
        %6869 = vmatpush1.bf16.msra.mxu0 %v5237
        %6870 = vmatprep.subr.bf16.mxu0 %v5242
        %6871 = vmatpush1.bf16.msra.mxu0 %v5241
        %6872 = vmatprep.subr.bf16.mxu0 %v5246
        %6873 = vmatpush1.bf16.msra.mxu0 %v5245
        %6874 = vmatprep.subr.bf16.mxu0 %v5250
        %6875 = vmatpush1.bf16.msra.mxu0 %v5249
        %6876 = vmatprep.subr.bf16.mxu0 %v5254
        %6877 = vmatpush1.bf16.msra.mxu0 %v5253
        %6878 = vmatprep.subr.bf16.mxu0 %v5258
        %6879 = vmatpush1.bf16.msra.mxu0 %v5257
        %6880 = vmatprep.subr.bf16.mxu0 %v5262
        %6881 = vmatpush1.bf16.msra.mxu0 %v5261
        %6882 = vmatprep.mubr.bf16.mxu0 %v1596
        %6883 = vmatmul.mubr.bf16.gmra.mrb[0].mxu0 %v1595
        %v6884 = vpop.f32.mrb[0].mxu0
        %v6885 = vadd.f32 %v6832, %v6884
        %v6886 = vpop.f32.mrb[0].mxu0
        %v6887 = vadd.f32 %v6834, %v6886
        %v6888 = vpop.f32.mrb[0].mxu0
        %v6889 = vadd.f32 %v6836, %v6888
        %v6890 = vpop.f32.mrb[0].mxu0
        %v6891 = vadd.f32 %v6838, %v6890
        %6892 = vmatprep.mubr.bf16.mxu0 %v1624
        %6893 = vmatmul.mubr.bf16.gmra.mrb[0].mxu0 %v1623
        %v6894 = vpop.f32.mrb[0].mxu0
        %v6895 = vadd.f32 %v6842, %v6894
        %v6896 = vpop.f32.mrb[0].mxu0
        %v6897 = vadd.f32 %v6844, %v6896
        %v6898 = vpop.f32.mrb[0].mxu0
        %v6899 = vadd.f32 %v6846, %v6898
        %v6900 = vpop.f32.mrb[0].mxu0
        %v6901 = vadd.f32 %v6848, %v6900
        %6902 = vdwg.mxu0
        %6903 = vmatprep.subr.bf16.mxu0 %v4372
        %6904 = vmatpush1.bf16.msra.mxu0 %v4371
        %6905 = vmatprep.subr.bf16.mxu0 %v4376
        %6906 = vmatpush1.bf16.msra.mxu0 %v4375
        %6907 = vmatprep.subr.bf16.mxu0 %v4380
        %6908 = vmatpush1.bf16.msra.mxu0 %v4379
        %6909 = vmatprep.subr.bf16.mxu0 %v4384
        %6910 = vmatpush1.bf16.msra.mxu0 %v4383
        %6911 = vmatprep.subr.bf16.mxu0 %v4388
        %6912 = vmatpush1.bf16.msra.mxu0 %v4387
        %6913 = vmatprep.subr.bf16.mxu0 %v4392
        %6914 = vmatpush1.bf16.msra.mxu0 %v4391
        %6915 = vmatprep.subr.bf16.mxu0 %v4396
        %6916 = vmatpush1.bf16.msra.mxu0 %v4395
        %6917 = vmatprep.subr.bf16.mxu0 %v4400
        %6918 = vmatpush1.bf16.msra.mxu0 %v4399
        %6919 = vmatprep.subr.bf16.mxu0 %v4404
        %6920 = vmatpush1.bf16.msra.mxu0 %v4403
        %6921 = vmatprep.subr.bf16.mxu0 %v4408
        %6922 = vmatpush1.bf16.msra.mxu0 %v4407
        %6923 = vmatprep.subr.bf16.mxu0 %v4412
        %6924 = vmatpush1.bf16.msra.mxu0 %v4411
        %6925 = vmatprep.subr.bf16.mxu0 %v4416
        %6926 = vmatpush1.bf16.msra.mxu0 %v4415
        %6927 = vmatprep.subr.bf16.mxu0 %v4420
        %6928 = vmatpush1.bf16.msra.mxu0 %v4419
        %6929 = vmatprep.subr.bf16.mxu0 %v4424
        %6930 = vmatpush1.bf16.msra.mxu0 %v4423
        %6931 = vmatprep.subr.bf16.mxu0 %v4428
        %6932 = vmatpush1.bf16.msra.mxu0 %v4427
        %6933 = vmatprep.subr.bf16.mxu0 %v4432
        %6934 = vmatpush1.bf16.msra.mxu0 %v4431
        %6935 = vmatprep.mubr.bf16.mxu0 %v1570
        %6936 = vmatmul.mubr.bf16.gmra.mrb[0].mxu0 %v1569
        %v6937 = vpop.f32.mrb[0].mxu0
        %v6938 = vadd.f32 0.0, %v6937
        %v6939 = vpop.f32.mrb[0].mxu0
        %v6940 = vadd.f32 0.0, %v6939
        %v6941 = vpop.f32.mrb[0].mxu0
        %v6942 = vadd.f32 0.0, %v6941
        %v6943 = vpop.f32.mrb[0].mxu0
        %v6944 = vadd.f32 0.0, %v6943
        %6945 = vmatprep.mubr.bf16.mxu0 %v1598
        %6946 = vmatmul.mubr.bf16.gmra.mrb[0].mxu0 %v1597
        %v6947 = vpop.f32.mrb[0].mxu0
        %v6948 = vadd.f32 0.0, %v6947
        %v6949 = vpop.f32.mrb[0].mxu0
        %v6950 = vadd.f32 0.0, %v6949
        %v6951 = vpop.f32.mrb[0].mxu0
        %v6952 = vadd.f32 0.0, %v6951
        %v6953 = vpop.f32.mrb[0].mxu0
        %v6954 = vadd.f32 0.0, %v6953
        %6955 = vdwg.mxu0
        %6956 = vmatprep.subr.bf16.mxu0 %v4436
        %6957 = vmatpush1.bf16.msra.mxu0 %v4435
        %6958 = vmatprep.subr.bf16.mxu0 %v4440
        %6959 = vmatpush1.bf16.msra.mxu0 %v4439
        %6960 = vmatprep.subr.bf16.mxu0 %v4444
        %6961 = vmatpush1.bf16.msra.mxu0 %v4443
        %6962 = vmatprep.subr.bf16.mxu0 %v4448
        %6963 = vmatpush1.bf16.msra.mxu0 %v4447
        %6964 = vmatprep.subr.bf16.mxu0 %v4452
        %6965 = vmatpush1.bf16.msra.mxu0 %v4451
        %6966 = vmatprep.subr.bf16.mxu0 %v4456
        %6967 = vmatpush1.bf16.msra.mxu0 %v4455
        %6968 = vmatprep.subr.bf16.mxu0 %v4460
        %6969 = vmatpush1.bf16.msra.mxu0 %v4459
        %6970 = vmatprep.subr.bf16.mxu0 %v4464
        %6971 = vmatpush1.bf16.msra.mxu0 %v4463
        %6972 = vmatprep.subr.bf16.mxu0 %v4468
        %6973 = vmatpush1.bf16.msra.mxu0 %v4467
        %6974 = vmatprep.subr.bf16.mxu0 %v4472
        %6975 = vmatpush1.bf16.msra.mxu0 %v4471
        %6976 = vmatprep.subr.bf16.mxu0 %v4476
        %6977 = vmatpush1.bf16.msra.mxu0 %v4475
        %6978 = vmatprep.subr.bf16.mxu0 %v4480
        %6979 = vmatpush1.bf16.msra.mxu0 %v4479
        %6980 = vmatprep.subr.bf16.mxu0 %v4484
        %6981 = vmatpush1.bf16.msra.mxu0 %v4483
        %6982 = vmatprep.subr.bf16.mxu0 %v4488
        %6983 = vmatpush1.bf16.msra.mxu0 %v4487
        %6984 = vmatprep.subr.bf16.mxu0 %v4492
        %6985 = vmatpush1.bf16.msra.mxu0 %v4491
        %6986 = vmatprep.subr.bf16.mxu0 %v4496
        %6987 = vmatpush1.bf16.msra.mxu0 %v4495
        %6988 = vmatprep.mubr.bf16.mxu0 %v1572
        %6989 = vmatmul.mubr.bf16.gmra.mrb[0].mxu0 %v1571
        %v6990 = vpop.f32.mrb[0].mxu0
        %v6991 = vadd.f32 %v6938, %v6990
        %v6992 = vpop.f32.mrb[0].mxu0
        %v6993 = vadd.f32 %v6940, %v6992
        %v6994 = vpop.f32.mrb[0].mxu0
        %v6995 = vadd.f32 %v6942, %v6994
        %v6996 = vpop.f32.mrb[0].mxu0
        %v6997 = vadd.f32 %v6944, %v6996
        %6998 = vmatprep.mubr.bf16.mxu0 %v1600
        %6999 = vmatmul.mubr.bf16.gmra.mrb[0].mxu0 %v1599
        %v7000 = vpop.f32.mrb[0].mxu0
        %v7001 = vadd.f32 %v6948, %v7000
        %v7002 = vpop.f32.mrb[0].mxu0
        %v7003 = vadd.f32 %v6950, %v7002
        %v7004 = vpop.f32.mrb[0].mxu0
        %v7005 = vadd.f32 %v6952, %v7004
        %v7006 = vpop.f32.mrb[0].mxu0
        %v7007 = vadd.f32 %v6954, %v7006
        %7008 = vdwg.mxu0
        %7009 = vmatprep.subr.bf16.mxu0 %v4500
        %7010 = vmatpush1.bf16.msra.mxu0 %v4499
        %7011 = vmatprep.subr.bf16.mxu0 %v4504
        %7012 = vmatpush1.bf16.msra.mxu0 %v4503
        %7013 = vmatprep.subr.bf16.mxu0 %v4508
        %7014 = vmatpush1.bf16.msra.mxu0 %v4507
        %7015 = vmatprep.subr.bf16.mxu0 %v4512
        %7016 = vmatpush1.bf16.msra.mxu0 %v4511
        %7017 = vmatprep.subr.bf16.mxu0 %v4516
        %7018 = vmatpush1.bf16.msra.mxu0 %v4515
        %7019 = vmatprep.subr.bf16.mxu0 %v4520
        %7020 = vmatpush1.bf16.msra.mxu0 %v4519
        %7021 = vmatprep.subr.bf16.mxu0 %v4524
        %7022 = vmatpush1.bf16.msra.mxu0 %v4523
        %7023 = vmatprep.subr.bf16.mxu0 %v4528
        %7024 = vmatpush1.bf16.msra.mxu0 %v4527
        %7025 = vmatprep.subr.bf16.mxu0 %v4532
        %7026 = vmatpush1.bf16.msra.mxu0 %v4531
        %7027 = vmatprep.subr.bf16.mxu0 %v4536
        %7028 = vmatpush1.bf16.msra.mxu0 %v4535
        %7029 = vmatprep.subr.bf16.mxu0 %v4540
        %7030 = vmatpush1.bf16.msra.mxu0 %v4539
        %7031 = vmatprep.subr.bf16.mxu0 %v4544
        %7032 = vmatpush1.bf16.msra.mxu0 %v4543
        %7033 = vmatprep.subr.bf16.mxu0 %v4548
        %7034 = vmatpush1.bf16.msra.mxu0 %v4547
        %7035 = vmatprep.subr.bf16.mxu0 %v4552
        %7036 = vmatpush1.bf16.msra.mxu0 %v4551
        %7037 = vmatprep.subr.bf16.mxu0 %v4556
        %7038 = vmatpush1.bf16.msra.mxu0 %v4555
        %7039 = vmatprep.subr.bf16.mxu0 %v4560
        %7040 = vmatpush1.bf16.msra.mxu0 %v4559
        %7041 = vmatprep.mubr.bf16.mxu0 %v1574
        %7042 = vmatmul.mubr.bf16.gmra.mrb[0].mxu0 %v1573
        %v7043 = vpop.f32.mrb[0].mxu0
        %v7044 = vadd.f32 %v6991, %v7043
        %v7045 = vpop.f32.mrb[0].mxu0
        %v7046 = vadd.f32 %v6993, %v7045
        %v7047 = vpop.f32.mrb[0].mxu0
        %v7048 = vadd.f32 %v6995, %v7047
        %v7049 = vpop.f32.mrb[0].mxu0
        %v7050 = vadd.f32 %v6997, %v7049
        %7051 = vmatprep.mubr.bf16.mxu0 %v1602
        %7052 = vmatmul.mubr.bf16.gmra.mrb[0].mxu0 %v1601
        %v7053 = vpop.f32.mrb[0].mxu0
        %v7054 = vadd.f32 %v7001, %v7053
        %v7055 = vpop.f32.mrb[0].mxu0
        %v7056 = vadd.f32 %v7003, %v7055
        %v7057 = vpop.f32.mrb[0].mxu0
        %v7058 = vadd.f32 %v7005, %v7057
        %v7059 = vpop.f32.mrb[0].mxu0
        %v7060 = vadd.f32 %v7007, %v7059
        %7061 = vdwg.mxu0
        %7062 = vmatprep.subr.bf16.mxu0 %v4564
        %7063 = vmatpush1.bf16.msra.mxu0 %v4563
        %7064 = vmatprep.subr.bf16.mxu0 %v4568
        %7065 = vmatpush1.bf16.msra.mxu0 %v4567
        %7066 = vmatprep.subr.bf16.mxu0 %v4572
        %7067 = vmatpush1.bf16.msra.mxu0 %v4571
        %7068 = vmatprep.subr.bf16.mxu0 %v4576
        %7069 = vmatpush1.bf16.msra.mxu0 %v4575
        %7070 = vmatprep.subr.bf16.mxu0 %v4580
        %7071 = vmatpush1.bf16.msra.mxu0 %v4579
        %7072 = vmatprep.subr.bf16.mxu0 %v4584
        %7073 = vmatpush1.bf16.msra.mxu0 %v4583
        %7074 = vmatprep.subr.bf16.mxu0 %v4588
        %7075 = vmatpush1.bf16.msra.mxu0 %v4587
        %7076 = vmatprep.subr.bf16.mxu0 %v4592
        %7077 = vmatpush1.bf16.msra.mxu0 %v4591
        %7078 = vmatprep.subr.bf16.mxu0 %v4596
        %7079 = vmatpush1.bf16.msra.mxu0 %v4595
        %7080 = vmatprep.subr.bf16.mxu0 %v4600
        %7081 = vmatpush1.bf16.msra.mxu0 %v4599
        %7082 = vmatprep.subr.bf16.mxu0 %v4604
        %7083 = vmatpush1.bf16.msra.mxu0 %v4603
        %7084 = vmatprep.subr.bf16.mxu0 %v4608
        %7085 = vmatpush1.bf16.msra.mxu0 %v4607
        %7086 = vmatprep.subr.bf16.mxu0 %v4612
        %7087 = vmatpush1.bf16.msra.mxu0 %v4611
        %7088 = vmatprep.subr.bf16.mxu0 %v4616
        %7089 = vmatpush1.bf16.msra.mxu0 %v4615
        %7090 = vmatprep.subr.bf16.mxu0 %v4620
        %7091 = vmatpush1.bf16.msra.mxu0 %v4619
        %7092 = vmatprep.subr.bf16.mxu0 %v4624
        %7093 = vmatpush1.bf16.msra.mxu0 %v4623
        %7094 = vmatprep.mubr.bf16.mxu0 %v1576
        %7095 = vmatmul.mubr.bf16.gmra.mrb[0].mxu0 %v1575
        %v7096 = vpop.f32.mrb[0].mxu0
        %v7097 = vadd.f32 %v7044, %v7096
        %v7098 = vpop.f32.mrb[0].mxu0
        %v7099 = vadd.f32 %v7046, %v7098
        %v7100 = vpop.f32.mrb[0].mxu0
        %v7101 = vadd.f32 %v7048, %v7100
        %v7102 = vpop.f32.mrb[0].mxu0
        %v7103 = vadd.f32 %v7050, %v7102
        %7104 = vmatprep.mubr.bf16.mxu0 %v1604
        %7105 = vmatmul.mubr.bf16.gmra.mrb[0].mxu0 %v1603
        %v7106 = vpop.f32.mrb[0].mxu0
        %v7107 = vadd.f32 %v7054, %v7106
        %v7108 = vpop.f32.mrb[0].mxu0
        %v7109 = vadd.f32 %v7056, %v7108
        %v7110 = vpop.f32.mrb[0].mxu0
        %v7111 = vadd.f32 %v7058, %v7110
        %v7112 = vpop.f32.mrb[0].mxu0
        %v7113 = vadd.f32 %v7060, %v7112
        %7114 = vdwg.mxu0
        %7115 = vmatprep.subr.bf16.mxu0 %v4628
        %7116 = vmatpush1.bf16.msra.mxu0 %v4627
        %7117 = vmatprep.subr.bf16.mxu0 %v4632
        %7118 = vmatpush1.bf16.msra.mxu0 %v4631
        %7119 = vmatprep.subr.bf16.mxu0 %v4636
        %7120 = vmatpush1.bf16.msra.mxu0 %v4635
        %7121 = vmatprep.subr.bf16.mxu0 %v4640
        %7122 = vmatpush1.bf16.msra.mxu0 %v4639
        %7123 = vmatprep.subr.bf16.mxu0 %v4644
        %7124 = vmatpush1.bf16.msra.mxu0 %v4643
        %7125 = vmatprep.subr.bf16.mxu0 %v4648
        %7126 = vmatpush1.bf16.msra.mxu0 %v4647
        %7127 = vmatprep.subr.bf16.mxu0 %v4652
        %7128 = vmatpush1.bf16.msra.mxu0 %v4651
        %7129 = vmatprep.subr.bf16.mxu0 %v4656
        %7130 = vmatpush1.bf16.msra.mxu0 %v4655
        %7131 = vmatprep.subr.bf16.mxu0 %v4660
        %7132 = vmatpush1.bf16.msra.mxu0 %v4659
        %7133 = vmatprep.subr.bf16.mxu0 %v4664
        %7134 = vmatpush1.bf16.msra.mxu0 %v4663
        %7135 = vmatprep.subr.bf16.mxu0 %v4668
        %7136 = vmatpush1.bf16.msra.mxu0 %v4667
        %7137 = vmatprep.subr.bf16.mxu0 %v4672
        %7138 = vmatpush1.bf16.msra.mxu0 %v4671
        %7139 = vmatprep.subr.bf16.mxu0 %v4676
        %7140 = vmatpush1.bf16.msra.mxu0 %v4675
        %7141 = vmatprep.subr.bf16.mxu0 %v4680
        %7142 = vmatpush1.bf16.msra.mxu0 %v4679
        %7143 = vmatprep.subr.bf16.mxu0 %v4684
        %7144 = vmatpush1.bf16.msra.mxu0 %v4683
        %7145 = vmatprep.subr.bf16.mxu0 %v4688
        %7146 = vmatpush1.bf16.msra.mxu0 %v4687
        %7147 = vmatprep.mubr.bf16.mxu0 %v1578
        %7148 = vmatmul.mubr.bf16.gmra.mrb[0].mxu0 %v1577
        %v7149 = vpop.f32.mrb[0].mxu0
        %v7150 = vadd.f32 %v7097, %v7149
        %v7151 = vpop.f32.mrb[0].mxu0
        %v7152 = vadd.f32 %v7099, %v7151
        %v7153 = vpop.f32.mrb[0].mxu0
        %v7154 = vadd.f32 %v7101, %v7153
        %v7155 = vpop.f32.mrb[0].mxu0
        %v7156 = vadd.f32 %v7103, %v7155
        %7157 = vmatprep.mubr.bf16.mxu0 %v1606
        %7158 = vmatmul.mubr.bf16.gmra.mrb[0].mxu0 %v1605
        %v7159 = vpop.f32.mrb[0].mxu0
        %v7160 = vadd.f32 %v7107, %v7159
        %v7161 = vpop.f32.mrb[0].mxu0
        %v7162 = vadd.f32 %v7109, %v7161
        %v7163 = vpop.f32.mrb[0].mxu0
        %v7164 = vadd.f32 %v7111, %v7163
        %v7165 = vpop.f32.mrb[0].mxu0
        %v7166 = vadd.f32 %v7113, %v7165
        %7167 = vdwg.mxu0
        %7168 = vmatprep.subr.bf16.mxu0 %v4692
        %7169 = vmatpush1.bf16.msra.mxu0 %v4691
        %7170 = vmatprep.subr.bf16.mxu0 %v4696
        %7171 = vmatpush1.bf16.msra.mxu0 %v4695
        %7172 = vmatprep.subr.bf16.mxu0 %v4700
        %7173 = vmatpush1.bf16.msra.mxu0 %v4699
        %7174 = vmatprep.subr.bf16.mxu0 %v4704
        %7175 = vmatpush1.bf16.msra.mxu0 %v4703
        %7176 = vmatprep.subr.bf16.mxu0 %v4708
        %7177 = vmatpush1.bf16.msra.mxu0 %v4707
        %7178 = vmatprep.subr.bf16.mxu0 %v4712
        %7179 = vmatpush1.bf16.msra.mxu0 %v4711
        %7180 = vmatprep.subr.bf16.mxu0 %v4716
        %7181 = vmatpush1.bf16.msra.mxu0 %v4715
        %7182 = vmatprep.subr.bf16.mxu0 %v4720
        %7183 = vmatpush1.bf16.msra.mxu0 %v4719
        %7184 = vmatprep.subr.bf16.mxu0 %v4724
        %7185 = vmatpush1.bf16.msra.mxu0 %v4723
        %7186 = vmatprep.subr.bf16.mxu0 %v4728
        %7187 = vmatpush1.bf16.msra.mxu0 %v4727
        %7188 = vmatprep.subr.bf16.mxu0 %v4732
        %7189 = vmatpush1.bf16.msra.mxu0 %v4731
        %7190 = vmatprep.subr.bf16.mxu0 %v4736
        %7191 = vmatpush1.bf16.msra.mxu0 %v4735
        %7192 = vmatprep.subr.bf16.mxu0 %v4740
        %7193 = vmatpush1.bf16.msra.mxu0 %v4739
        %7194 = vmatprep.subr.bf16.mxu0 %v4744
        %7195 = vmatpush1.bf16.msra.mxu0 %v4743
        %7196 = vmatprep.subr.bf16.mxu0 %v4748
        %7197 = vmatpush1.bf16.msra.mxu0 %v4747
        %7198 = vmatprep.subr.bf16.mxu0 %v4752
        %7199 = vmatpush1.bf16.msra.mxu0 %v4751
        %7200 = vmatprep.mubr.bf16.mxu0 %v1580
        %7201 = vmatmul.mubr.bf16.gmra.mrb[0].mxu0 %v1579
        %v7202 = vpop.f32.mrb[0].mxu0
        %v7203 = vadd.f32 %v7150, %v7202
        %v7204 = vpop.f32.mrb[0].mxu0
        %v7205 = vadd.f32 %v7152, %v7204
        %v7206 = vpop.f32.mrb[0].mxu0
        %v7207 = vadd.f32 %v7154, %v7206
        %v7208 = vpop.f32.mrb[0].mxu0
        %v7209 = vadd.f32 %v7156, %v7208
        %7210 = vmatprep.mubr.bf16.mxu0 %v1608
        %7211 = vmatmul.mubr.bf16.gmra.mrb[0].mxu0 %v1607
        %v7212 = vpop.f32.mrb[0].mxu0
        %v7213 = vadd.f32 %v7160, %v7212
        %v7214 = vpop.f32.mrb[0].mxu0
        %v7215 = vadd.f32 %v7162, %v7214
        %v7216 = vpop.f32.mrb[0].mxu0
        %v7217 = vadd.f32 %v7164, %v7216
        %v7218 = vpop.f32.mrb[0].mxu0
        %v7219 = vadd.f32 %v7166, %v7218
        %7220 = vdwg.mxu0
        %7221 = vmatprep.subr.bf16.mxu0 %v4756
        %7222 = vmatpush1.bf16.msra.mxu0 %v4755
        %7223 = vmatprep.subr.bf16.mxu0 %v4760
        %7224 = vmatpush1.bf16.msra.mxu0 %v4759
        %7225 = vmatprep.subr.bf16.mxu0 %v4764
        %7226 = vmatpush1.bf16.msra.mxu0 %v4763
        %7227 = vmatprep.subr.bf16.mxu0 %v4768
        %7228 = vmatpush1.bf16.msra.mxu0 %v4767
        %7229 = vmatprep.subr.bf16.mxu0 %v4772
        %7230 = vmatpush1.bf16.msra.mxu0 %v4771
        %7231 = vmatprep.subr.bf16.mxu0 %v4776
        %7232 = vmatpush1.bf16.msra.mxu0 %v4775
        %7233 = vmatprep.subr.bf16.mxu0 %v4780
        %7234 = vmatpush1.bf16.msra.mxu0 %v4779
        %7235 = vmatprep.subr.bf16.mxu0 %v4784
        %7236 = vmatpush1.bf16.msra.mxu0 %v4783
        %7237 = vmatprep.subr.bf16.mxu0 %v4788
        %7238 = vmatpush1.bf16.msra.mxu0 %v4787
        %7239 = vmatprep.subr.bf16.mxu0 %v4792
        %7240 = vmatpush1.bf16.msra.mxu0 %v4791
        %7241 = vmatprep.subr.bf16.mxu0 %v4796
        %7242 = vmatpush1.bf16.msra.mxu0 %v4795
        %7243 = vmatprep.subr.bf16.mxu0 %v4800
        %7244 = vmatpush1.bf16.msra.mxu0 %v4799
        %7245 = vmatprep.subr.bf16.mxu0 %v4804
        %7246 = vmatpush1.bf16.msra.mxu0 %v4803
        %7247 = vmatprep.subr.bf16.mxu0 %v4808
        %7248 = vmatpush1.bf16.msra.mxu0 %v4807
        %7249 = vmatprep.subr.bf16.mxu0 %v4812
        %7250 = vmatpush1.bf16.msra.mxu0 %v4811
        %7251 = vmatprep.subr.bf16.mxu0 %v4816
        %7252 = vmatpush1.bf16.msra.mxu0 %v4815
        %7253 = vmatprep.mubr.bf16.mxu0 %v1582
        %7254 = vmatmul.mubr.bf16.gmra.mrb[0].mxu0 %v1581
        %v7255 = vpop.f32.mrb[0].mxu0
        %v7256 = vadd.f32 %v7203, %v7255
        %v7257 = vpop.f32.mrb[0].mxu0
        %v7258 = vadd.f32 %v7205, %v7257
        %v7259 = vpop.f32.mrb[0].mxu0
        %v7260 = vadd.f32 %v7207, %v7259
        %v7261 = vpop.f32.mrb[0].mxu0
        %v7262 = vadd.f32 %v7209, %v7261
        %7263 = vmatprep.mubr.bf16.mxu0 %v1610
        %7264 = vmatmul.mubr.bf16.gmra.mrb[0].mxu0 %v1609
        %v7265 = vpop.f32.mrb[0].mxu0
        %v7266 = vadd.f32 %v7213, %v7265
        %v7267 = vpop.f32.mrb[0].mxu0
        %v7268 = vadd.f32 %v7215, %v7267
        %v7269 = vpop.f32.mrb[0].mxu0
        %v7270 = vadd.f32 %v7217, %v7269
        %v7271 = vpop.f32.mrb[0].mxu0
        %v7272 = vadd.f32 %v7219, %v7271
        %7273 = vdwg.mxu0
        %7274 = vmatprep.subr.bf16.mxu0 %v4820
        %7275 = vmatpush1.bf16.msra.mxu0 %v4819
        %7276 = vmatprep.subr.bf16.mxu0 %v4824
        %7277 = vmatpush1.bf16.msra.mxu0 %v4823
        %7278 = vmatprep.subr.bf16.mxu0 %v4828
        %7279 = vmatpush1.bf16.msra.mxu0 %v4827
        %7280 = vmatprep.subr.bf16.mxu0 %v4832
        %7281 = vmatpush1.bf16.msra.mxu0 %v4831
        %7282 = vmatprep.subr.bf16.mxu0 %v4836
        %7283 = vmatpush1.bf16.msra.mxu0 %v4835
        %7284 = vmatprep.subr.bf16.mxu0 %v4840
        %7285 = vmatpush1.bf16.msra.mxu0 %v4839
        %7286 = vmatprep.subr.bf16.mxu0 %v4844
        %7287 = vmatpush1.bf16.msra.mxu0 %v4843
        %7288 = vmatprep.subr.bf16.mxu0 %v4848
        %7289 = vmatpush1.bf16.msra.mxu0 %v4847
        %7290 = vmatprep.subr.bf16.mxu0 %v4852
        %7291 = vmatpush1.bf16.msra.mxu0 %v4851
        %7292 = vmatprep.subr.bf16.mxu0 %v4856
        %7293 = vmatpush1.bf16.msra.mxu0 %v4855
        %7294 = vmatprep.subr.bf16.mxu0 %v4860
        %7295 = vmatpush1.bf16.msra.mxu0 %v4859
        %7296 = vmatprep.subr.bf16.mxu0 %v4864
        %7297 = vmatpush1.bf16.msra.mxu0 %v4863
        %7298 = vmatprep.subr.bf16.mxu0 %v4868
        %7299 = vmatpush1.bf16.msra.mxu0 %v4867
        %7300 = vmatprep.subr.bf16.mxu0 %v4872
        %7301 = vmatpush1.bf16.msra.mxu0 %v4871
        %7302 = vmatprep.subr.bf16.mxu0 %v4876
        %7303 = vmatpush1.bf16.msra.mxu0 %v4875
        %7304 = vmatprep.subr.bf16.mxu0 %v4880
        %7305 = vmatpush1.bf16.msra.mxu0 %v4879
        %7306 = vmatprep.mubr.bf16.mxu0 %v1584
        %7307 = vmatmul.mubr.bf16.gmra.mrb[0].mxu0 %v1583
        %v7308 = vpop.f32.mrb[0].mxu0
        %v7309 = vadd.f32 %v7256, %v7308
        %v7310 = vpop.f32.mrb[0].mxu0
        %v7311 = vadd.f32 %v7258, %v7310
        %v7312 = vpop.f32.mrb[0].mxu0
        %v7313 = vadd.f32 %v7260, %v7312
        %v7314 = vpop.f32.mrb[0].mxu0
        %v7315 = vadd.f32 %v7262, %v7314
        %7316 = vmatprep.mubr.bf16.mxu0 %v1612
        %7317 = vmatmul.mubr.bf16.gmra.mrb[0].mxu0 %v1611
        %v7318 = vpop.f32.mrb[0].mxu0
        %v7319 = vadd.f32 %v7266, %v7318
        %v7320 = vpop.f32.mrb[0].mxu0
        %v7321 = vadd.f32 %v7268, %v7320
        %v7322 = vpop.f32.mrb[0].mxu0
        %v7323 = vadd.f32 %v7270, %v7322
        %v7324 = vpop.f32.mrb[0].mxu0
        %v7325 = vadd.f32 %v7272, %v7324
        %7326 = vdwg.mxu0
        %7327 = vmatprep.subr.bf16.mxu0 %v4884
        %7328 = vmatpush1.bf16.msra.mxu0 %v4883
        %7329 = vmatprep.subr.bf16.mxu0 %v4888
        %7330 = vmatpush1.bf16.msra.mxu0 %v4887
        %7331 = vmatprep.subr.bf16.mxu0 %v4892
        %7332 = vmatpush1.bf16.msra.mxu0 %v4891
        %7333 = vmatprep.subr.bf16.mxu0 %v4896
        %7334 = vmatpush1.bf16.msra.mxu0 %v4895
        %7335 = vmatprep.subr.bf16.mxu0 %v4900
        %7336 = vmatpush1.bf16.msra.mxu0 %v4899
        %7337 = vmatprep.subr.bf16.mxu0 %v4904
        %7338 = vmatpush1.bf16.msra.mxu0 %v4903
        %7339 = vmatprep.subr.bf16.mxu0 %v4908
        %7340 = vmatpush1.bf16.msra.mxu0 %v4907
        %7341 = vmatprep.subr.bf16.mxu0 %v4912
        %7342 = vmatpush1.bf16.msra.mxu0 %v4911
        %7343 = vmatprep.subr.bf16.mxu0 %v4916
        %7344 = vmatpush1.bf16.msra.mxu0 %v4915
        %7345 = vmatprep.subr.bf16.mxu0 %v4920
        %7346 = vmatpush1.bf16.msra.mxu0 %v4919
        %7347 = vmatprep.subr.bf16.mxu0 %v4924
        %7348 = vmatpush1.bf16.msra.mxu0 %v4923
        %7349 = vmatprep.subr.bf16.mxu0 %v4928
        %7350 = vmatpush1.bf16.msra.mxu0 %v4927
        %7351 = vmatprep.subr.bf16.mxu0 %v4932
        %7352 = vmatpush1.bf16.msra.mxu0 %v4931
        %7353 = vmatprep.subr.bf16.mxu0 %v4936
        %7354 = vmatpush1.bf16.msra.mxu0 %v4935
        %7355 = vmatprep.subr.bf16.mxu0 %v4940
        %7356 = vmatpush1.bf16.msra.mxu0 %v4939
        %7357 = vmatprep.subr.bf16.mxu0 %v4944
        %7358 = vmatpush1.bf16.msra.mxu0 %v4943
        %7359 = vmatprep.mubr.bf16.mxu0 %v1586
        %7360 = vmatmul.mubr.bf16.gmra.mrb[0].mxu0 %v1585
        %v7361 = vpop.f32.mrb[0].mxu0
        %v7362 = vadd.f32 %v7309, %v7361
        %v7363 = vpop.f32.mrb[0].mxu0
        %v7364 = vadd.f32 %v7311, %v7363
        %v7365 = vpop.f32.mrb[0].mxu0
        %v7366 = vadd.f32 %v7313, %v7365
        %v7367 = vpop.f32.mrb[0].mxu0
        %v7368 = vadd.f32 %v7315, %v7367
        %7369 = vmatprep.mubr.bf16.mxu0 %v1614
        %7370 = vmatmul.mubr.bf16.gmra.mrb[0].mxu0 %v1613
        %v7371 = vpop.f32.mrb[0].mxu0
        %v7372 = vadd.f32 %v7319, %v7371
        %v7373 = vpop.f32.mrb[0].mxu0
        %v7374 = vadd.f32 %v7321, %v7373
        %v7375 = vpop.f32.mrb[0].mxu0
        %v7376 = vadd.f32 %v7323, %v7375
        %v7377 = vpop.f32.mrb[0].mxu0
        %v7378 = vadd.f32 %v7325, %v7377
        %7379 = vdwg.mxu0
        %7380 = vmatprep.subr.bf16.mxu0 %v4948
        %7381 = vmatpush1.bf16.msra.mxu0 %v4947
        %7382 = vmatprep.subr.bf16.mxu0 %v4952
        %7383 = vmatpush1.bf16.msra.mxu0 %v4951
        %7384 = vmatprep.subr.bf16.mxu0 %v4956
        %7385 = vmatpush1.bf16.msra.mxu0 %v4955
        %7386 = vmatprep.subr.bf16.mxu0 %v4960
        %7387 = vmatpush1.bf16.msra.mxu0 %v4959
        %7388 = vmatprep.subr.bf16.mxu0 %v4964
        %7389 = vmatpush1.bf16.msra.mxu0 %v4963
        %7390 = vmatprep.subr.bf16.mxu0 %v4968
        %7391 = vmatpush1.bf16.msra.mxu0 %v4967
        %7392 = vmatprep.subr.bf16.mxu0 %v4972
        %7393 = vmatpush1.bf16.msra.mxu0 %v4971
        %7394 = vmatprep.subr.bf16.mxu0 %v4976
        %7395 = vmatpush1.bf16.msra.mxu0 %v4975
        %7396 = vmatprep.subr.bf16.mxu0 %v4980
        %7397 = vmatpush1.bf16.msra.mxu0 %v4979
        %7398 = vmatprep.subr.bf16.mxu0 %v4984
        %7399 = vmatpush1.bf16.msra.mxu0 %v4983
        %7400 = vmatprep.subr.bf16.mxu0 %v4988
        %7401 = vmatpush1.bf16.msra.mxu0 %v4987
        %7402 = vmatprep.subr.bf16.mxu0 %v4992
        %7403 = vmatpush1.bf16.msra.mxu0 %v4991
        %7404 = vmatprep.subr.bf16.mxu0 %v4996
        %7405 = vmatpush1.bf16.msra.mxu0 %v4995
        %7406 = vmatprep.subr.bf16.mxu0 %v5000
        %7407 = vmatpush1.bf16.msra.mxu0 %v4999
        %7408 = vmatprep.subr.bf16.mxu0 %v5004
        %7409 = vmatpush1.bf16.msra.mxu0 %v5003
        %7410 = vmatprep.subr.bf16.mxu0 %v5008
        %7411 = vmatpush1.bf16.msra.mxu0 %v5007
        %7412 = vmatprep.mubr.bf16.mxu0 %v1588
        %7413 = vmatmul.mubr.bf16.gmra.mrb[0].mxu0 %v1587
        %v7414 = vpop.f32.mrb[0].mxu0
        %v7415 = vadd.f32 %v7362, %v7414
        %v7416 = vpop.f32.mrb[0].mxu0
        %v7417 = vadd.f32 %v7364, %v7416
        %v7418 = vpop.f32.mrb[0].mxu0
        %v7419 = vadd.f32 %v7366, %v7418
        %v7420 = vpop.f32.mrb[0].mxu0
        %v7421 = vadd.f32 %v7368, %v7420
        %7422 = vmatprep.mubr.bf16.mxu0 %v1616
        %7423 = vmatmul.mubr.bf16.gmra.mrb[0].mxu0 %v1615
        %v7424 = vpop.f32.mrb[0].mxu0
        %v7425 = vadd.f32 %v7372, %v7424
        %v7426 = vpop.f32.mrb[0].mxu0
        %v7427 = vadd.f32 %v7374, %v7426
        %v7428 = vpop.f32.mrb[0].mxu0
        %v7429 = vadd.f32 %v7376, %v7428
        %v7430 = vpop.f32.mrb[0].mxu0
        %v7431 = vadd.f32 %v7378, %v7430
        %7432 = vdwg.mxu0
        %7433 = vmatprep.subr.bf16.mxu0 %v5012
        %7434 = vmatpush1.bf16.msra.mxu0 %v5011
        %7435 = vmatprep.subr.bf16.mxu0 %v5016
        %7436 = vmatpush1.bf16.msra.mxu0 %v5015
        %7437 = vmatprep.subr.bf16.mxu0 %v5020
        %7438 = vmatpush1.bf16.msra.mxu0 %v5019
        %7439 = vmatprep.subr.bf16.mxu0 %v5024
        %7440 = vmatpush1.bf16.msra.mxu0 %v5023
        %7441 = vmatprep.subr.bf16.mxu0 %v5028
        %7442 = vmatpush1.bf16.msra.mxu0 %v5027
        %7443 = vmatprep.subr.bf16.mxu0 %v5032
        %7444 = vmatpush1.bf16.msra.mxu0 %v5031
        %7445 = vmatprep.subr.bf16.mxu0 %v5036
        %7446 = vmatpush1.bf16.msra.mxu0 %v5035
        %7447 = vmatprep.subr.bf16.mxu0 %v5040
        %7448 = vmatpush1.bf16.msra.mxu0 %v5039
        %7449 = vmatprep.subr.bf16.mxu0 %v5044
        %7450 = vmatpush1.bf16.msra.mxu0 %v5043
        %7451 = vmatprep.subr.bf16.mxu0 %v5048
        %7452 = vmatpush1.bf16.msra.mxu0 %v5047
        %7453 = vmatprep.subr.bf16.mxu0 %v5052
        %7454 = vmatpush1.bf16.msra.mxu0 %v5051
        %7455 = vmatprep.subr.bf16.mxu0 %v5056
        %7456 = vmatpush1.bf16.msra.mxu0 %v5055
        %7457 = vmatprep.subr.bf16.mxu0 %v5060
        %7458 = vmatpush1.bf16.msra.mxu0 %v5059
        %7459 = vmatprep.subr.bf16.mxu0 %v5064
        %7460 = vmatpush1.bf16.msra.mxu0 %v5063
        %7461 = vmatprep.subr.bf16.mxu0 %v5068
        %7462 = vmatpush1.bf16.msra.mxu0 %v5067
        %7463 = vmatprep.subr.bf16.mxu0 %v5072
        %7464 = vmatpush1.bf16.msra.mxu0 %v5071
        %7465 = vmatprep.mubr.bf16.mxu0 %v1590
        %7466 = vmatmul.mubr.bf16.gmra.mrb[0].mxu0 %v1589
        %v7467 = vpop.f32.mrb[0].mxu0
        %v7468 = vadd.f32 %v7415, %v7467
        %v7469 = vpop.f32.mrb[0].mxu0
        %v7470 = vadd.f32 %v7417, %v7469
        %v7471 = vpop.f32.mrb[0].mxu0
        %v7472 = vadd.f32 %v7419, %v7471
        %v7473 = vpop.f32.mrb[0].mxu0
        %v7474 = vadd.f32 %v7421, %v7473
        %7475 = vmatprep.mubr.bf16.mxu0 %v1618
        %7476 = vmatmul.mubr.bf16.gmra.mrb[0].mxu0 %v1617
        %v7477 = vpop.f32.mrb[0].mxu0
        %v7478 = vadd.f32 %v7425, %v7477
        %v7479 = vpop.f32.mrb[0].mxu0
        %v7480 = vadd.f32 %v7427, %v7479
        %v7481 = vpop.f32.mrb[0].mxu0
        %v7482 = vadd.f32 %v7429, %v7481
        %v7483 = vpop.f32.mrb[0].mxu0
        %v7484 = vadd.f32 %v7431, %v7483
        %7485 = vdwg.mxu0
        %7486 = vmatprep.subr.bf16.mxu0 %v5076
        %7487 = vmatpush1.bf16.msra.mxu0 %v5075
        %7488 = vmatprep.subr.bf16.mxu0 %v5080
        %7489 = vmatpush1.bf16.msra.mxu0 %v5079
        %7490 = vmatprep.subr.bf16.mxu0 %v5084
        %7491 = vmatpush1.bf16.msra.mxu0 %v5083
        %7492 = vmatprep.subr.bf16.mxu0 %v5088
        %7493 = vmatpush1.bf16.msra.mxu0 %v5087
        %7494 = vmatprep.subr.bf16.mxu0 %v5092
        %7495 = vmatpush1.bf16.msra.mxu0 %v5091
        %7496 = vmatprep.subr.bf16.mxu0 %v5096
        %7497 = vmatpush1.bf16.msra.mxu0 %v5095
        %7498 = vmatprep.subr.bf16.mxu0 %v5100
        %7499 = vmatpush1.bf16.msra.mxu0 %v5099
        %7500 = vmatprep.subr.bf16.mxu0 %v5104
        %7501 = vmatpush1.bf16.msra.mxu0 %v5103
        %7502 = vmatprep.subr.bf16.mxu0 %v5108
        %7503 = vmatpush1.bf16.msra.mxu0 %v5107
        %7504 = vmatprep.subr.bf16.mxu0 %v5112
        %7505 = vmatpush1.bf16.msra.mxu0 %v5111
        %7506 = vmatprep.subr.bf16.mxu0 %v5116
        %7507 = vmatpush1.bf16.msra.mxu0 %v5115
        %7508 = vmatprep.subr.bf16.mxu0 %v5120
        %7509 = vmatpush1.bf16.msra.mxu0 %v5119
        %7510 = vmatprep.subr.bf16.mxu0 %v5124
        %7511 = vmatpush1.bf16.msra.mxu0 %v5123
        %7512 = vmatprep.subr.bf16.mxu0 %v5128
        %7513 = vmatpush1.bf16.msra.mxu0 %v5127
        %7514 = vmatprep.subr.bf16.mxu0 %v5132
        %7515 = vmatpush1.bf16.msra.mxu0 %v5131
        %7516 = vmatprep.subr.bf16.mxu0 %v5136
        %7517 = vmatpush1.bf16.msra.mxu0 %v5135
        %7518 = vmatprep.mubr.bf16.mxu0 %v1592
        %7519 = vmatmul.mubr.bf16.gmra.mrb[0].mxu0 %v1591
        %v7520 = vpop.f32.mrb[0].mxu0
        %v7521 = vadd.f32 %v7468, %v7520
        %v7522 = vpop.f32.mrb[0].mxu0
        %v7523 = vadd.f32 %v7470, %v7522
        %v7524 = vpop.f32.mrb[0].mxu0
        %v7525 = vadd.f32 %v7472, %v7524
        %v7526 = vpop.f32.mrb[0].mxu0
        %v7527 = vadd.f32 %v7474, %v7526
        %7528 = vmatprep.mubr.bf16.mxu0 %v1620
        %7529 = vmatmul.mubr.bf16.gmra.mrb[0].mxu0 %v1619
        %v7530 = vpop.f32.mrb[0].mxu0
        %v7531 = vadd.f32 %v7478, %v7530
        %v7532 = vpop.f32.mrb[0].mxu0
        %v7533 = vadd.f32 %v7480, %v7532
        %v7534 = vpop.f32.mrb[0].mxu0
        %v7535 = vadd.f32 %v7482, %v7534
        %v7536 = vpop.f32.mrb[0].mxu0
        %v7537 = vadd.f32 %v7484, %v7536
        %7538 = vdwg.mxu0
        %7539 = vmatprep.subr.bf16.mxu0 %v5140
        %7540 = vmatpush1.bf16.msra.mxu0 %v5139
        %7541 = vmatprep.subr.bf16.mxu0 %v5144
        %7542 = vmatpush1.bf16.msra.mxu0 %v5143
        %7543 = vmatprep.subr.bf16.mxu0 %v5148
        %7544 = vmatpush1.bf16.msra.mxu0 %v5147
        %7545 = vmatprep.subr.bf16.mxu0 %v5152
        %7546 = vmatpush1.bf16.msra.mxu0 %v5151
        %7547 = vmatprep.subr.bf16.mxu0 %v5156
        %7548 = vmatpush1.bf16.msra.mxu0 %v5155
        %7549 = vmatprep.subr.bf16.mxu0 %v5160
        %7550 = vmatpush1.bf16.msra.mxu0 %v5159
        %7551 = vmatprep.subr.bf16.mxu0 %v5164
        %7552 = vmatpush1.bf16.msra.mxu0 %v5163
        %7553 = vmatprep.subr.bf16.mxu0 %v5168
        %7554 = vmatpush1.bf16.msra.mxu0 %v5167
        %7555 = vmatprep.subr.bf16.mxu0 %v5172
        %7556 = vmatpush1.bf16.msra.mxu0 %v5171
        %7557 = vmatprep.subr.bf16.mxu0 %v5176
        %7558 = vmatpush1.bf16.msra.mxu0 %v5175
        %7559 = vmatprep.subr.bf16.mxu0 %v5180
        %7560 = vmatpush1.bf16.msra.mxu0 %v5179
        %7561 = vmatprep.subr.bf16.mxu0 %v5184
        %7562 = vmatpush1.bf16.msra.mxu0 %v5183
        %7563 = vmatprep.subr.bf16.mxu0 %v5188
        %7564 = vmatpush1.bf16.msra.mxu0 %v5187
        %7565 = vmatprep.subr.bf16.mxu0 %v5192
        %7566 = vmatpush1.bf16.msra.mxu0 %v5191
        %7567 = vmatprep.subr.bf16.mxu0 %v5196
        %7568 = vmatpush1.bf16.msra.mxu0 %v5195
        %7569 = vmatprep.subr.bf16.mxu0 %v5200
        %7570 = vmatpush1.bf16.msra.mxu0 %v5199
        %7571 = vmatprep.mubr.bf16.mxu0 %v1594
        %7572 = vmatmul.mubr.bf16.gmra.mrb[0].mxu0 %v1593
        %v7573 = vpop.f32.mrb[0].mxu0
        %v7574 = vadd.f32 %v7521, %v7573
        %v7575 = vpop.f32.mrb[0].mxu0
        %v7576 = vadd.f32 %v7523, %v7575
        %v7577 = vpop.f32.mrb[0].mxu0
        %v7578 = vadd.f32 %v7525, %v7577
        %v7579 = vpop.f32.mrb[0].mxu0
        %v7580 = vadd.f32 %v7527, %v7579
        %7581 = vmatprep.mubr.bf16.mxu0 %v1622
        %7582 = vmatmul.mubr.bf16.gmra.mrb[0].mxu0 %v1621
        %v7583 = vpop.f32.mrb[0].mxu0
        %v7584 = vadd.f32 %v7531, %v7583
        %v7585 = vpop.f32.mrb[0].mxu0
        %v7586 = vadd.f32 %v7533, %v7585
        %v7587 = vpop.f32.mrb[0].mxu0
        %v7588 = vadd.f32 %v7535, %v7587
        %v7589 = vpop.f32.mrb[0].mxu0
        %v7590 = vadd.f32 %v7537, %v7589
        %7591 = vdwg.mxu0
        %7592 = vmatprep.subr.bf16.mxu0 %v5204
        %7593 = vmatpush1.bf16.msra.mxu0 %v5203
        %7594 = vmatprep.subr.bf16.mxu0 %v5208
        %7595 = vmatpush1.bf16.msra.mxu0 %v5207
        %7596 = vmatprep.subr.bf16.mxu0 %v5212
        %7597 = vmatpush1.bf16.msra.mxu0 %v5211
        %7598 = vmatprep.subr.bf16.mxu0 %v5216
        %7599 = vmatpush1.bf16.msra.mxu0 %v5215
        %7600 = vmatprep.subr.bf16.mxu0 %v5220
        %7601 = vmatpush1.bf16.msra.mxu0 %v5219
        %7602 = vmatprep.subr.bf16.mxu0 %v5224
        %7603 = vmatpush1.bf16.msra.mxu0 %v5223
        %7604 = vmatprep.subr.bf16.mxu0 %v5228
        %7605 = vmatpush1.bf16.msra.mxu0 %v5227
        %7606 = vmatprep.subr.bf16.mxu0 %v5232
        %7607 = vmatpush1.bf16.msra.mxu0 %v5231
        %7608 = vmatprep.subr.bf16.mxu0 %v5236
        %7609 = vmatpush1.bf16.msra.mxu0 %v5235
        %7610 = vmatprep.subr.bf16.mxu0 %v5240
        %7611 = vmatpush1.bf16.msra.mxu0 %v5239
        %7612 = vmatprep.subr.bf16.mxu0 %v5244
        %7613 = vmatpush1.bf16.msra.mxu0 %v5243
        %7614 = vmatprep.subr.bf16.mxu0 %v5248
        %7615 = vmatpush1.bf16.msra.mxu0 %v5247
        %7616 = vmatprep.subr.bf16.mxu0 %v5252
        %7617 = vmatpush1.bf16.msra.mxu0 %v5251
        %7618 = vmatprep.subr.bf16.mxu0 %v5256
        %7619 = vmatpush1.bf16.msra.mxu0 %v5255
        %7620 = vmatprep.subr.bf16.mxu0 %v5260
        %7621 = vmatpush1.bf16.msra.mxu0 %v5259
        %7622 = vmatprep.subr.bf16.mxu0 %v5264
        %7623 = vmatpush1.bf16.msra.mxu0 %v5263
        %7624 = vmatprep.mubr.bf16.mxu0 %v1596
        %7625 = vmatmul.mubr.bf16.gmra.mrb[0].mxu0 %v1595
        %v7626 = vpop.f32.mrb[0].mxu0
        %v7627 = vadd.f32 %v7574, %v7626
        %v7628 = vpop.f32.mrb[0].mxu0
        %v7629 = vadd.f32 %v7576, %v7628
        %v7630 = vpop.f32.mrb[0].mxu0
        %v7631 = vadd.f32 %v7578, %v7630
        %v7632 = vpop.f32.mrb[0].mxu0
        %v7633 = vadd.f32 %v7580, %v7632
        %7634 = vmatprep.mubr.bf16.mxu0 %v1624
        %7635 = vmatmul.mubr.bf16.gmra.mrb[0].mxu0 %v1623
        %v7636 = vpop.f32.mrb[0].mxu0
        %v7637 = vadd.f32 %v7584, %v7636
        %v7638 = vpop.f32.mrb[0].mxu0
        %v7639 = vadd.f32 %v7586, %v7638
        %v7640 = vpop.f32.mrb[0].mxu0
        %v7641 = vadd.f32 %v7588, %v7640
        %v7642 = vpop.f32.mrb[0].mxu0
        %v7643 = vadd.f32 %v7590, %v7642
        %7644 = vdwg.mxu0
        %v7645 = vadd.f32 %v433, %v6885
        %v7646 = vadd.f32 %v434, %v6887
        %v7647 = vadd.f32 %v435, %v7627
        %v7648 = vadd.f32 %v436, %v7629
        %v7649 = vadd.f32 %v437, %v6889
        %v7650 = vadd.f32 %v438, %v6891
        %v7651 = vadd.f32 %v439, %v7631
        %v7652 = vadd.f32 %v440, %v7633
        %v7653 = vadd.f32 %v441, %v6895
        %v7654 = vadd.f32 %v442, %v6897
        %v7655 = vadd.f32 %v443, %v7637
        %v7656 = vadd.f32 %v444, %v7639
        %v7657 = vadd.f32 %v445, %v6899
        %v7658 = vadd.f32 %v446, %v6901
        %v7659 = vadd.f32 %v447, %v7641
        %v7660 = vadd.f32 %v448, %v7643
        %7661 = vst [vmem:[#allocation2] sm:$0xff] %v7645
        %7662 = vst [vmem:[#allocation2 + $0x8] sm:$0xff] %v7646
        %7663 = vst [vmem:[#allocation2 + $0x10] sm:$0xff] %v7647
        %7664 = vst [vmem:[#allocation2 + $0x18] sm:$0xff] %v7648
        %7665 = vst [vmem:[#allocation2 + $0x20] sm:$0xff] %v7649
        %7666 = vst [vmem:[#allocation2 + $0x28] sm:$0xff] %v7650
        %7667 = vst [vmem:[#allocation2 + $0x30] sm:$0xff] %v7651
        %7668 = vst [vmem:[#allocation2 + $0x38] sm:$0xff] %v7652
        %7669 = vst [vmem:[#allocation2 + $0x40] sm:$0xff] %v7653
        %7670 = vst [vmem:[#allocation2 + $0x48] sm:$0xff] %v7654
        %7671 = vst [vmem:[#allocation2 + $0x50] sm:$0xff] %v7655
        %7672 = vst [vmem:[#allocation2 + $0x58] sm:$0xff] %v7656
        %7673 = vst [vmem:[#allocation2 + $0x60] sm:$0xff] %v7657
        %7674 = vst [vmem:[#allocation2 + $0x68] sm:$0xff] %v7658
        %7675 = vst [vmem:[#allocation2 + $0x70] sm:$0xff] %v7659
        %7676 = vst [vmem:[#allocation2 + $0x78] sm:$0xff] %v7660
        %p7677 = scmp.eq.s32.totalorder %s25, 1
        // Predicated region
        $region68: #{pretrain_forward.1} parent=50 // pred_check
          %p7678 = pneg %p7677
        $region69: #{pretrain_forward.1} parent=50 // pred_check_branch
          %7680 = sbr.rel (%p7678) target = $region71
        $region70: #{pretrain_forward.1} parent=50 // pred_region
          %v7681 = vld [vmem:[#allocation2] sm:$0xff]
          %v7682 = vld [vmem:[#allocation2 + $0x8] sm:$0xff]
          %v7683 = vld [vmem:[#allocation2 + $0x10] sm:$0xff]
          %v7684 = vld [vmem:[#allocation2 + $0x18] sm:$0xff]
          %v7685 = vld [vmem:[#allocation2 + $0x20] sm:$0xff]
          %v7686 = vld [vmem:[#allocation2 + $0x28] sm:$0xff]
          %v7687 = vld [vmem:[#allocation2 + $0x30] sm:$0xff]
          %v7688 = vld [vmem:[#allocation2 + $0x38] sm:$0xff]
          %v7689 = vld [vmem:[#allocation2 + $0x40] sm:$0xff]
          %v7690 = vld [vmem:[#allocation2 + $0x48] sm:$0xff]
          %v7691 = vld [vmem:[#allocation2 + $0x50] sm:$0xff]
          %v7692 = vld [vmem:[#allocation2 + $0x58] sm:$0xff]
          %v7693 = vld [vmem:[#allocation2 + $0x60] sm:$0xff]
          %v7694 = vld [vmem:[#allocation2 + $0x68] sm:$0xff]
          %v7695 = vld [vmem:[#allocation2 + $0x70] sm:$0xff]
          %v7696 = vld [vmem:[#allocation2 + $0x78] sm:$0xff]
          %7697 = vst [vmem:[%s391] sm:$0xff] %v7681
          %7698 = vst [vmem:[%s391 + $0x8] sm:$0xff] %v7682
          %7699 = vst [vmem:[%s391 + $0x10] sm:$0xff] %v7683
          %7700 = vst [vmem:[%s391 + $0x18] sm:$0xff] %v7684
          %7701 = vst [vmem:[%s391 + $0x20] sm:$0xff] %v7685
          %7702 = vst [vmem:[%s391 + $0x28] sm:$0xff] %v7686
          %7703 = vst [vmem:[%s391 + $0x30] sm:$0xff] %v7687
          %7704 = vst [vmem:[%s391 + $0x38] sm:$0xff] %v7688
          %7705 = vst [vmem:[%s391 + $0x40] sm:$0xff] %v7689
          %7706 = vst [vmem:[%s391 + $0x48] sm:$0xff] %v7690
          %7707 = vst [vmem:[%s391 + $0x50] sm:$0xff] %v7691
          %7708 = vst [vmem:[%s391 + $0x58] sm:$0xff] %v7692
          %7709 = vst [vmem:[%s391 + $0x60] sm:$0xff] %v7693
          %7710 = vst [vmem:[%s391 + $0x68] sm:$0xff] %v7694
          %7711 = vst [vmem:[%s391 + $0x70] sm:$0xff] %v7695
          %7712 = vst [vmem:[%s391 + $0x78] sm:$0xff] %v7696
        $region71: #{pretrain_forward.1} parent=50 // pred_fallthru
          _
        %s7713 = sand.u32 %s120, 1
        %s7714 = sand.u32 %s120, 1
        %s7715 = smul.addr %s7714, 128
        %s7716 = scalar_lea.vmem [#allocation8], %s7715
        // Predicated region
        $region72: #{pretrain_forward.1} parent=50 // pred_check
          %p7717 = pneg %p130
        $region73: #{pretrain_forward.1} parent=50 // pred_check_branch
          %7719 = sbr.rel (%p7717) target = $region75
        $region74: #{pretrain_forward.1} parent=50 // pred_region
          %s7720 = smul.u32 4, %s24
          %s7721 = smul.addr %s7720, 8
          %s7722 = scalar_lea.vmem %s3, %s7721
          // Predicated region
          $region76: #{pretrain_forward.1} parent=74 // pred_check
            _
          $region77: #{pretrain_forward.1} parent=74 // pred_check_branch
            %7724 = sbr.rel (0) target = $region79
          $region78: #{pretrain_forward.1} parent=74 // pred_region
            // Predicated region
            $region80: #{pretrain_forward.1} parent=78 // pred_check
              _
            $region81: #{pretrain_forward.1} parent=78 // pred_check_branch
              %7726 = sbr.rel (0) target = $region83
            $region82: #{pretrain_forward.1} parent=78 // pred_region
              loop: start=0, step=1, limit=1
              $region84: #{pretrain_forward.1} parent=82 // loop_pre_header
                _
              $region85: #{pretrain_forward.1} parent=82 // loop_header
                %s7728 = sphi 0, %s7732
                %p7729 = scmp.ge.s32.totalorder %s7728, 1
                %s7733 = sphi %s7716, %s7716
                %s7734 = sphi %s7722, %s7722
              $region86: #{pretrain_forward.1} parent=82 // loop_header_branch
                %7731 = sbr.rel (%p7729) target = $region90
              $region87: #{pretrain_forward.1} parent=82 // loop_body
                %v7735 = vld [vmem:[%s7733] sm:$0xff]
                %7736 = vst [vmem:[%s7734] sm:$0xff] %v7735
                %v7737 = vld [vmem:[%s7733 + $0x8] sm:$0xff]
                %7738 = vst [vmem:[%s7734 + $0x8] sm:$0xff] %v7737
                %v7739 = vld [vmem:[%s7733 + $0x10] sm:$0xff]
                %7740 = vst [vmem:[%s7734 + $0x10] sm:$0xff] %v7739
                %v7741 = vld [vmem:[%s7733 + $0x18] sm:$0xff]
                %7742 = vst [vmem:[%s7734 + $0x18] sm:$0xff] %v7741
                %v7743 = vld [vmem:[%s7733 + $0x20] sm:$0xff]
                %7744 = vst [vmem:[%s7734 + $0x40] sm:$0xff] %v7743
                %v7745 = vld [vmem:[%s7733 + $0x28] sm:$0xff]
                %7746 = vst [vmem:[%s7734 + $0x48] sm:$0xff] %v7745
                %v7747 = vld [vmem:[%s7733 + $0x30] sm:$0xff]
                %7748 = vst [vmem:[%s7734 + $0x50] sm:$0xff] %v7747
                %v7749 = vld [vmem:[%s7733 + $0x38] sm:$0xff]
                %7750 = vst [vmem:[%s7734 + $0x58] sm:$0xff] %v7749
                %v7751 = vld [vmem:[%s7733 + $0x40] sm:$0xff]
                %7752 = vst [vmem:[%s7734 + $0x80] sm:$0xff] %v7751
                %v7753 = vld [vmem:[%s7733 + $0x48] sm:$0xff]
                %7754 = vst [vmem:[%s7734 + $0x88] sm:$0xff] %v7753
                %v7755 = vld [vmem:[%s7733 + $0x50] sm:$0xff]
                %7756 = vst [vmem:[%s7734 + $0x90] sm:$0xff] %v7755
                %v7757 = vld [vmem:[%s7733 + $0x58] sm:$0xff]
                %7758 = vst [vmem:[%s7734 + $0x98] sm:$0xff] %v7757
                %v7759 = vld [vmem:[%s7733 + $0x60] sm:$0xff]
                %7760 = vst [vmem:[%s7734 + $0xc0] sm:$0xff] %v7759
                %v7761 = vld [vmem:[%s7733 + $0x68] sm:$0xff]
                %7762 = vst [vmem:[%s7734 + $0xc8] sm:$0xff] %v7761
                %v7763 = vld [vmem:[%s7733 + $0x70] sm:$0xff]
                %7764 = vst [vmem:[%s7734 + $0xd0] sm:$0xff] %v7763
                %v7765 = vld [vmem:[%s7733 + $0x78] sm:$0xff]
                %7766 = vst [vmem:[%s7734 + $0xd8] sm:$0xff] %v7765
              $region88: #{pretrain_forward.1} parent=82 // loop_footer
                %s7732 = sadd.s32 1, %s7728
              $region89: #{pretrain_forward.1} parent=82 // loop_footer_branch
                %7727 = sbr.rel target = $region85
              $region90: #{pretrain_forward.1} parent=82 // loop_exit
                _
            $region83: #{pretrain_forward.1} parent=78 // pred_fallthru
              _
            // Predicated region
            $region91: #{pretrain_forward.1} parent=78 // pred_check
              _
            $region92: #{pretrain_forward.1} parent=78 // pred_check_branch
              %7768 = sbr.rel target = $region94
            $region93: #{pretrain_forward.1} parent=78 // pred_region
              _
            $region94: #{pretrain_forward.1} parent=78 // pred_fallthru
              _
          $region79: #{pretrain_forward.1} parent=74 // pred_fallthru
            _
          %7769 = vnop
        $region75: #{pretrain_forward.1} parent=50 // pred_fallthru
          _
      $region51: #{pretrain_forward.1} parent=5 // pred_fallthru
        _
      %p7770 = scmp.le.s32.totalorder 2, %s15
      // Predicated region
      $region95: #{pretrain_forward.1} parent=5 // pred_check
        %p7771 = pneg %p7770
      $region96: #{pretrain_forward.1} parent=5 // pred_check_branch
        %7773 = sbr.rel (%p7771) target = $region98
      $region97: #{pretrain_forward.1} parent=5 // pred_region
        %s7774 = ssub.s32 %s15, 2
        // Predicated region
        $region99: #{pretrain_forward.1} parent=97 // pred_check
          %p7775 = pneg %p136
        $region100: #{pretrain_forward.1} parent=97 // pred_check_branch
          %7777 = sbr.rel (%p7775) target = $region102
        $region101: #{pretrain_forward.1} parent=97 // pred_region
          %s7778 = sand.u32 %s121, 1
          %s7779 = sand.u32 %s121, 1
          %s7780 = smul.addr %s7779, 128
          %s7781 = scalar_lea.vmem [#allocation8], %s7780
        $region102: #{pretrain_forward.1} parent=97 // pred_fallthru
          _
      $region98: #{pretrain_forward.1} parent=5 // pred_fallthru
        _
    $region6: #{pretrain_forward.1} parent=1 // loop_footer
      %s19 = sadd.s32 1, %s15
    $region7: #{pretrain_forward.1} parent=1 // loop_footer_branch
      %14 = sbr.rel target = $region3
    $region8: #{pretrain_forward.1} parent=1 // loop_exit
      _
    %7782 = vsyncpa [#allocation5], 1
    %s7783 = scalar_lea.sflag [#allocation5], 1
    %7784 = vsyncpa %s7783, 1
    %7785 = vsyncpa [#allocation7], 1
    %s7786 = scalar_lea.sflag [#allocation7], 1
    %7787 = vsyncpa %s7786, 1

</llo_original>
